<compile_context>
chip_gen: v5e
topology: v5e:2x2
jax: 0.10.0
libtpu: 0.0.40
codegen_flags: <defaults>
</compile_context>

<pallas_src>
import numpy as np
import jax
import jax.numpy as jnp
from jax import lax
from jax.experimental import pallas as pl
from jax.experimental.pallas import tpu as pltpu

F32 = jnp.float32

# ----------------------------- config (small shapes) -----------------------------
B = 2                  # batch
N_EMB = 9              # n_embeddings == attention sequence length
EMB_DIM = 32           # embedding_dim == d_model
D_MODEL = EMB_DIM
D_INNER = 64
N_LAYERS = 2
N_HEAD = 4
D_K = 8
D_V = 8
N_POSITION = 9         # 3*3 target spatial size flattened
LN_EPS = 1e-6
LP = 16                # padded sequence length (sublane aligned)
R = B * LP             # stacked rows of one activation slab (32)
HR = N_HEAD * R        # head-stacked rows (128)
NPL = N_POSITION * LP  # Kron embedding contraction width (144)
OUT_PAD = 16           # padded output lane width (9 -> 16)
SCALE = 1.0 / float(np.sqrt(D_K))
NEG = -1e9
VEC_WIDTH = 64
VEC_ROWS_PAD = 32


# ----------------------------- static slab layouts -----------------------------
def _build_wd_order():
    order = []
    for li in range(N_LAYERS):
        order += [(f"enc_qkv_{li}", 3 * D_MODEL), (f"enc_fc_{li}", D_MODEL),
                  (f"enc_ffn_w1_{li}", D_INNER)]
    order += [("vae_w", 2 * D_MODEL)]
    for li in range(N_LAYERS):
        order += [(f"dec_slf_qkv_{li}", 3 * D_MODEL), (f"dec_slf_fc_{li}", D_MODEL),
                  (f"dec_crs_q_{li}", D_MODEL), (f"dec_crs_fc_{li}", D_MODEL),
                  (f"dec_ffn_w1_{li}", D_INNER)]
    order += [("dec_crs_kv", 2 * N_LAYERS * D_MODEL)]
    return order


WD_ORDER = _build_wd_order()
WD_OFF = {}
_off = 0
for _name, _w in WD_ORDER:
    WD_OFF[_name] = (_off, _w)
    _off += _w
WD_LANES = _off                                   # 1088


def _build_vec_order():
    order = []
    for li in range(N_LAYERS):
        order += [f"enc_attn_ln_g_{li}", f"enc_attn_ln_b_{li}",
                  f"enc_ffn_b1_{li}", f"enc_ffn_b2_{li}",
                  f"enc_ffn_ln_g_{li}", f"enc_ffn_ln_b_{li}"]
    order += ["vae_b"]
    for li in range(N_LAYERS):
        order += [f"dec_slf_ln_g_{li}", f"dec_slf_ln_b_{li}",
                  f"dec_crs_ln_g_{li}", f"dec_crs_ln_b_{li}",
                  f"dec_ffn_b1_{li}", f"dec_ffn_b2_{li}",
                  f"dec_ffn_ln_g_{li}", f"dec_ffn_ln_b_{li}"]
    order += ["prj_b"]
    return order


VEC_ORDER = _build_vec_order()
VEC_ROW = {name: i for i, name in enumerate(VEC_ORDER)}


# ----------------------------- the single fused kernel -----------------------------
def _fused_kernel(emb_a_ref, biases_ref, eps_ref, w_d_ref, w64_ref, w_tall_ref,
                  vecs_ref, aux_ref, out_ref, kl_ref):
    inv_d = jnp.full((D_MODEL, 1), 1.0 / D_MODEL, dtype=F32)   # hoisted, reused by every LN

    def wd(name):
        off, width = WD_OFF[name]
        return w_d_ref[:, off:off + width]

    def vec(name, width=D_MODEL):
        r = VEC_ROW[name]
        return vecs_ref[r:r + 1, 0:width]

    def ln(x, g, b):
        # LayerNorm with the two row reductions on the (otherwise idle) MXU.
        m = jnp.dot(x, inv_d, preferred_element_type=F32)
        msq = jnp.dot(x * x, inv_d, preferred_element_type=F32)
        var = jnp.maximum(msq - m * m, 0.0)
        return (x - m) * lax.rsqrt(var + LN_EPS) * g + b

    def stack_heads(m):
        # (R, N_HEAD*D_K) heads-in-lanes -> (N_HEAD*R, D_K) heads-in-sublanes.
        return jnp.concatenate(
            [m[:, h * D_K:(h + 1) * D_K] for h in range(N_HEAD)], axis=0)

    def attend(q, k, v, resid, w_fc, bias_big, g, b):
        # All heads fused: one score matmul, one 128-lane softmax, one PV matmul,
        # one fc matmul.  bias_big carries pad/causal/batch masks plus the head
        # block-diagonal (cross-head lanes are -1e9 -> softmax weight 0).
        q_st = stack_heads(q)
        k_st = stack_heads(k)
        v_st = stack_heads(v)
        s = lax.dot_general(q_st, k_st, (((1,), (1,)), ((), ())),
                            preferred_element_type=F32) + bias_big          # (HR, HR)
        s = s - jnp.max(s, axis=-1, keepdims=True)
        p = jnp.exp(s)
        p = p * pl.reciprocal(jnp.sum(p, axis=-1, keepdims=True), approx=True)
        o_st = jnp.dot(p, v_st, preferred_element_type=F32)                 # (HR, D_V)
        o = jnp.concatenate(
            [o_st[h * R:(h + 1) * R, :] for h in range(N_HEAD)], axis=1)    # (R, D)
        y = resid + jnp.dot(o, w_fc, preferred_element_type=F32)
        return ln(y, g, b)

    def ffn(x, w1, b1, w2, b2, g, b):
        h = jnp.maximum(jnp.dot(x, w1, preferred_element_type=F32) + b1, 0.0)
        y = jnp.dot(h, w2, preferred_element_type=F32) + b2 + x
        return ln(y, g, b)

    enc_bias = biases_ref[:, 0:HR]                                          # (HR, HR)
    dec_bias = biases_ref[:, HR:2 * HR]                                     # (HR, HR)

    # ---- src + trg embeddings: ONE (2R, 288) x (288, D) matmul + pos/bias + LN ----
    emb = jnp.dot(emb_a_ref[...], w_tall_ref[:, 0:D_MODEL],
                  preferred_element_type=F32) + aux_ref[:, 0:D_MODEL]
    emb = ln(emb, aux_ref[:, D_MODEL:2 * D_MODEL],
             aux_ref[:, 2 * D_MODEL:3 * D_MODEL])
    x = emb[0:R, :]            # encoder activation slab
    y = emb[R:2 * R, :]        # decoder activation slab

    # ---- encoder layers ----
    for li in range(N_LAYERS):
        qkv = jnp.dot(x, wd(f"enc_qkv_{li}"), preferred_element_type=F32)   # (R, 3D)
        x = attend(qkv[:, 0:D_MODEL], qkv[:, D_MODEL:2 * D_MODEL],
                   qkv[:, 2 * D_MODEL:3 * D_MODEL], x, wd(f"enc_fc_{li}"),
                   enc_bias, vec(f"enc_attn_ln_g_{li}"), vec(f"enc_attn_ln_b_{li}"))
        x = ffn(x, wd(f"enc_ffn_w1_{li}"), vec(f"enc_ffn_b1_{li}", D_INNER),
                w64_ref[:, li * D_MODEL:(li + 1) * D_MODEL],
                vec(f"enc_ffn_b2_{li}"),
                vec(f"enc_ffn_ln_g_{li}"), vec(f"enc_ffn_ln_b_{li}"))

    # ---- VAE reparameterization + KL (mu/logvar fused into one matmul) ----
    mlv = jnp.dot(x, wd("vae_w"), preferred_element_type=F32) + vec("vae_b", 2 * D_MODEL)
    mu = mlv[:, 0:D_MODEL]
    logvar = mlv[:, D_MODEL:2 * D_MODEL]
    z = mu + jnp.exp(0.5 * logvar) * eps_ref[...]
    valid = aux_ref[0:R, 3 * D_MODEL:3 * D_MODEL + 1]                        # (R, 1)
    kl_terms = (1.0 + logvar - mu * mu - jnp.exp(logvar)) * valid
    kl_ref[...] = (-0.5 / float(B * N_EMB * D_MODEL)) * jnp.sum(
        kl_terms, axis=(0, 1), keepdims=True)

    # ---- decoder cross-attention K/V for BOTH layers, hoisted out of the loop ----
    crs_kv = jnp.dot(z, wd("dec_crs_kv"), preferred_element_type=F32)        # (R, 4D)

    # ---- decoder layers (self-attn, cross-attn to z, FFN) ----
    for li in range(N_LAYERS):
        qkv = jnp.dot(y, wd(f"dec_slf_qkv_{li}"), preferred_element_type=F32)
        y = attend(qkv[:, 0:D_MODEL], qkv[:, D_MODEL:2 * D_MODEL],
                   qkv[:, 2 * D_MODEL:3 * D_MODEL], y, wd(f"dec_slf_fc_{li}"),
                   dec_bias, vec(f"dec_slf_ln_g_{li}"), vec(f"dec_slf_ln_b_{li}"))
        q = jnp.dot(y, wd(f"dec_crs_q_{li}"), preferred_element_type=F32)
        base = li * 2 * D_MODEL
        y = attend(q, crs_kv[:, base:base + D_MODEL],
                   crs_kv[:, base + D_MODEL:base + 2 * D_MODEL], y,
                   wd(f"dec_crs_fc_{li}"), enc_bias,
                   vec(f"dec_crs_ln_g_{li}"), vec(f"dec_crs_ln_b_{li}"))
        y = ffn(y, wd(f"dec_ffn_w1_{li}"), vec(f"dec_ffn_b1_{li}", D_INNER),
                w64_ref[:, (N_LAYERS + li) * D_MODEL:(N_LAYERS + li + 1) * D_MODEL],
                vec(f"dec_ffn_b2_{li}"),
                vec(f"dec_ffn_ln_g_{li}"), vec(f"dec_ffn_ln_b_{li}"))

    # ---- output projection: ConvTranspose2d(288, 1, 3) on a 1x1 input ----
    # 9 batched (B, D) x (D, 16) matmuls accumulated in a value; single store.
    w_prj = w_tall_ref[:, D_MODEL:D_MODEL + OUT_PAD]                          # (288, 16)
    y0 = y[0:LP, :]
    y1 = y[LP:2 * LP, :]
    acc = None
    for l in range(N_EMB):
        rows = jnp.concatenate([y0[l:l + 1, :], y1[l:l + 1, :]], axis=0)      # (B, D)
        c = jnp.dot(rows, w_prj[l * D_MODEL:(l + 1) * D_MODEL, :],
                    preferred_element_type=F32)                               # (B, 16)
        acc = c if acc is None else acc + c
    out_ref[...] = acc + vec("prj_b", OUT_PAD)


# ----------------------------- host wrapper -----------------------------
def transformer_forward(params, src_seq, trg_seq, vae_key):
    src = src_seq.astype(F32)                                  # (B, 9)
    trg = trg_seq.reshape(B, N_EMB).astype(F32)                # (B,1,3,3) -> (B, 9)

    src_pad = jnp.pad(src, ((0, 0), (0, LP - N_POSITION)))     # (B, LP)
    trg_pad = jnp.pad(trg, ((0, 0), (0, LP - N_POSITION)))

    # Keep-masks over the stacked (R, R) rows (block-diagonal across batches).
    batch_eq = (jnp.arange(B)[:, None, None, None] ==
                jnp.arange(B)[None, None, :, None])                          # (B,1,B,1)
    src_keep = (src_pad != 0.0)[None, None, :, :]                            # (1,1,B,LP)
    enc_keep = jnp.broadcast_to(batch_eq & src_keep, (B, LP, B, LP)).reshape(R, R)
    trg_keep = (trg_pad != 0.0)[None, None, :, :]
    causal = (jnp.arange(LP)[None, :, None, None] >=
              jnp.arange(LP)[None, None, None, :])                           # (1,LP,1,LP)
    dec_keep = jnp.broadcast_to(batch_eq & trg_keep & causal,
                                (B, LP, B, LP)).reshape(R, R)

    def expand_heads(keep_rr):
        # (R,R) keep-mask -> (HR,HR) additive bias with head block-diagonal.
        head_eq = jnp.eye(N_HEAD, dtype=bool)[:, None, :, None]              # (H,1,H,1)
        big = head_eq & keep_rr[None, :, None, :]                            # (H,R,H,R)
        return jnp.where(big, 0.0, NEG).astype(F32).reshape(HR, HR)

    biases = jnp.concatenate([expand_heads(enc_keep), expand_heads(dec_keep)],
                             axis=1)                                          # (HR, 2HR)

    # Kronecker embedding LHS: emb_a[b*LP+l, p*LP+l'] = src[b,p] * (l==l') (src block),
    # same for trg in the second row/lane block -> one matmul does both embeddings.
    eye_lp = jnp.eye(LP, dtype=F32)
    a_src = (src[:, None, :, None] * eye_lp[None, :, None, :]).reshape(R, NPL)
    a_trg = (trg[:, None, :, None] * eye_lp[None, :, None, :]).reshape(R, NPL)
    zeros = jnp.zeros((R, NPL), F32)
    emb_a = jnp.concatenate(
        [jnp.concatenate([a_src, zeros], axis=1),
         jnp.concatenate([zeros, a_trg], axis=1)], axis=0)                    # (2R, 2NPL)

    eps = jax.random.normal(vae_key, (R, D_MODEL), dtype=F32)

    out_pad, kl = pl.pallas_call(
        _fused_kernel,
        out_shape=(jax.ShapeDtypeStruct((B, OUT_PAD), F32),
                   jax.ShapeDtypeStruct((1, 1), F32)),
        in_specs=[pl.BlockSpec(memory_space=pltpu.MemorySpace.VMEM)] * 8,
        out_specs=(pl.BlockSpec(memory_space=pltpu.MemorySpace.VMEM),
                   pl.BlockSpec(memory_space=pltpu.MemorySpace.VMEM)),
    )(emb_a, biases, eps, params["W_D"], params["W_64"], params["W_TALL"],
      params["VECS"], params["AUX"])

    seq_recon = out_pad[:, :N_EMB].reshape(B, 1, 3, 3)
    return seq_recon, kl.reshape(())


# ----------------------------- parameter init -----------------------------
def sinusoid_table(n_position, d_hid):
    pos = np.arange(n_position)[:, None].astype(np.float64)
    hid = np.arange(d_hid)[None, :]
    angle = pos / np.power(10000.0, 2 * (hid // 2) / d_hid)
    table = np.zeros((n_position, d_hid), dtype=np.float64)
    table[:, 0::2] = np.sin(angle[:, 0::2])
    table[:, 1::2] = np.cos(angle[:, 1::2])
    return jnp.asarray(table, dtype=F32)


def init_params(key):
    xavier = jax.nn.initializers.xavier_uniform()
    kit = iter(jax.random.split(key, 48))

    def nk():
        return next(kit)

    def attn_weights():
        # 1/sqrt(d_k) folded into the Q weight (review item: delete in-kernel scale).
        wq = xavier(nk(), (D_MODEL, N_HEAD * D_K), F32) * SCALE
        wk = xavier(nk(), (D_MODEL, N_HEAD * D_K), F32)
        wv = xavier(nk(), (D_MODEL, N_HEAD * D_V), F32)
        fc = xavier(nk(), (N_HEAD * D_V, D_MODEL), F32)
        return wq, wk, wv, fc

    wd_cols = {}
    vec_rows = {}
    enc_w2, dec_w2, crs_kv_cols = [], [], []

    for li in range(N_LAYERS):
        wq, wk, wv, fc = attn_weights()
        wd_cols[f"enc_qkv_{li}"] = jnp.concatenate([wq, wk, wv], axis=1)
        wd_cols[f"enc_fc_{li}"] = fc
        vec_rows[f"enc_attn_ln_g_{li}"] = jnp.ones((1, D_MODEL), F32)
        vec_rows[f"enc_attn_ln_b_{li}"] = jnp.zeros((1, D_MODEL), F32)
        wd_cols[f"enc_ffn_w1_{li}"] = xavier(nk(), (D_MODEL, D_INNER), F32)
        enc_w2.append(xavier(nk(), (D_INNER, D_MODEL), F32))
        vec_rows[f"enc_ffn_b1_{li}"] = jnp.zeros((1, D_INNER), F32)
        vec_rows[f"enc_ffn_b2_{li}"] = jnp.zeros((1, D_MODEL), F32)
        vec_rows[f"enc_ffn_ln_g_{li}"] = jnp.ones((1, D_MODEL), F32)
        vec_rows[f"enc_ffn_ln_b_{li}"] = jnp.zeros((1, D_MODEL), F32)

    wd_cols["vae_w"] = jnp.concatenate([xavier(nk(), (D_MODEL, D_MODEL), F32),
                                        xavier(nk(), (D_MODEL, D_MODEL), F32)], axis=1)
    vec_rows["vae_b"] = jnp.zeros((1, 2 * D_MODEL), F32)

    for li in range(N_LAYERS):
        wq, wk, wv, fc = attn_weights()
        wd_cols[f"dec_slf_qkv_{li}"] = jnp.concatenate([wq, wk, wv], axis=1)
        wd_cols[f"dec_slf_fc_{li}"] = fc
        vec_rows[f"dec_slf_ln_g_{li}"] = jnp.ones((1, D_MODEL), F32)
        vec_rows[f"dec_slf_ln_b_{li}"] = jnp.zeros((1, D_MODEL), F32)
        cq, ck, cv, cfc = attn_weights()
        wd_cols[f"dec_crs_q_{li}"] = cq
        wd_cols[f"dec_crs_fc_{li}"] = cfc
        crs_kv_cols.append(jnp.concatenate([ck, cv], axis=1))
        vec_rows[f"dec_crs_ln_g_{li}"] = jnp.ones((1, D_MODEL), F32)
        vec_rows[f"dec_crs_ln_b_{li}"] = jnp.zeros((1, D_MODEL), F32)
        wd_cols[f"dec_ffn_w1_{li}"] = xavier(nk(), (D_MODEL, D_INNER), F32)
        dec_w2.append(xavier(nk(), (D_INNER, D_MODEL), F32))
        vec_rows[f"dec_ffn_b1_{li}"] = jnp.zeros((1, D_INNER), F32)
        vec_rows[f"dec_ffn_b2_{li}"] = jnp.zeros((1, D_MODEL), F32)
        vec_rows[f"dec_ffn_ln_g_{li}"] = jnp.ones((1, D_MODEL), F32)
        vec_rows[f"dec_ffn_ln_b_{li}"] = jnp.zeros((1, D_MODEL), F32)

    wd_cols["dec_crs_kv"] = jnp.concatenate(crs_kv_cols, axis=1)   # (D, 2*L*D)
    vec_rows["prj_b"] = jnp.zeros((1, OUT_PAD), F32)               # ConvT bias (scalar)

    # --- assemble W_D (D, 1088) following the static layout ---
    for name, width in WD_ORDER:
        assert wd_cols[name].shape == (D_MODEL, width), name
    w_d = jnp.concatenate([wd_cols[name] for name, _ in WD_ORDER], axis=1)

    # --- W_64: the four FFN second matrices lane-concatenated -> (64, 128) ---
    w_64 = jnp.concatenate(enc_w2 + dec_w2, axis=1)

    # --- W_TALL (288, 48): [embedding Kron weights (32 lanes) | output proj (16)] ---
    w_src = xavier(nk(), (N_POSITION, N_EMB * EMB_DIM), F32)       # Linear(9 -> 288)
    w_trg = xavier(nk(), (N_POSITION, N_EMB * EMB_DIM), F32)       # Conv2d(1,288,3) weight

    def to_emb2(w):                                                # (9,288) -> (144,32)
        w3 = w.reshape(N_POSITION, N_EMB, EMB_DIM)
        w3 = jnp.pad(w3, ((0, 0), (0, LP - N_EMB), (0, 0)))
        return w3.reshape(NPL, EMB_DIM)

    w_emb2 = jnp.concatenate([to_emb2(w_src), to_emb2(w_trg)], axis=0)   # (288, 32)
    w_prj = xavier(nk(), (N_EMB * EMB_DIM, N_EMB), F32)                  # ConvT(288,1,3)
    w_prj = jnp.pad(w_prj, ((0, 0), (0, OUT_PAD - N_EMB)))               # (288, 16)
    w_tall = jnp.concatenate([w_emb2, w_prj], axis=1)                    # (288, 48)

    # --- VECS (32, 64): every LN gamma/beta and bias row ---
    rows = []
    for name in VEC_ORDER:
        v = vec_rows[name]
        rows.append(jnp.pad(v, ((0, 0), (0, VEC_WIDTH - v.shape[1]))))
    vecs = jnp.concatenate(rows, axis=0)
    vecs = jnp.pad(vecs, ((0, VEC_ROWS_PAD - vecs.shape[0]), (0, 0)))

    # --- AUX (64, 128): [pos+conv-bias | emb LN gamma | emb LN beta | valid col | 0] ---
    pos = sinusoid_table(N_POSITION, EMB_DIM)
    pos_pad = jnp.pad(pos, ((0, LP - N_POSITION), (0, 0)))               # (LP, D)
    trg_b = jax.random.uniform(nk(), (N_EMB, EMB_DIM), F32, -1.0 / 3, 1.0 / 3)
    trg_b_pad = jnp.pad(trg_b, ((0, LP - N_EMB), (0, 0)))
    pos_both = jnp.concatenate([jnp.tile(pos_pad, (B, 1)),
                                jnp.tile(pos_pad + trg_b_pad, (B, 1))], axis=0)
    enc_g, enc_b = jnp.ones((1, D_MODEL), F32), jnp.zeros((1, D_MODEL), F32)
    dec_g, dec_b = jnp.ones((1, D_MODEL), F32), jnp.zeros((1, D_MODEL), F32)
    g_emb = jnp.concatenate([jnp.tile(enc_g, (R, 1)), jnp.tile(dec_g, (R, 1))], axis=0)
    b_emb = jnp.concatenate([jnp.tile(enc_b, (R, 1)), jnp.tile(dec_b, (R, 1))], axis=0)
    valid = jnp.asarray(((np.arange(R) % LP) < N_EMB).astype(np.float32)).reshape(R, 1)
    valid_col = jnp.concatenate([valid, jnp.zeros((R, 1), F32)], axis=0)
    aux = jnp.concatenate([pos_both, g_emb, b_emb, valid_col,
                           jnp.zeros((2 * R, D_MODEL - 1), F32)], axis=1)   # (64, 128)

    return {"W_D": w_d, "W_64": w_64, "W_TALL": w_tall, "VECS": vecs, "AUX": aux}


# ----------------------------- main -----------------------------
if __name__ == "__main__":
    key = jax.random.PRNGKey(0)
    k_param, k_src, k_trg, k_vae = jax.random.split(key, 4)

    params = init_params(k_param)

    src_seq = jax.random.normal(k_src, (B, N_POSITION), dtype=F32)
    src_seq = src_seq.at[0, -1].set(0.0)            # exercise the pad mask
    trg_seq = jax.random.normal(k_trg, (B, 1, 3, 3), dtype=F32)   # NCHW
    trg_seq = trg_seq.at[1, 0, 2, 2].set(0.0)       # exercise the pad mask

    fwd = jax.jit(transformer_forward)
    seq_recon, kl = fwd(params, src_seq, trg_seq, k_vae)
    jax.block_until_ready((seq_recon, kl))

    assert seq_recon.shape == (B, 1, 3, 3)
    assert kl.shape == ()
    assert bool(jnp.all(jnp.isfinite(seq_recon))) and bool(jnp.isfinite(kl))
    print("KERNEL_OK")
</pallas_src>

<mosaic_0001>
module attributes {stable_mosaic.version = 11 : i64} {
  func.func @_fused_kernel(%arg0: memref<64x288xf32, #tpu.memory_space<vmem>>, %arg1: memref<128x256xf32, #tpu.memory_space<vmem>>, %arg2: memref<32x32xf32, #tpu.memory_space<vmem>>, %arg3: memref<32x1088xf32, #tpu.memory_space<vmem>>, %arg4: memref<64x128xf32, #tpu.memory_space<vmem>>, %arg5: memref<288x48xf32, #tpu.memory_space<vmem>>, %arg6: memref<32x64xf32, #tpu.memory_space<vmem>>, %arg7: memref<64x128xf32, #tpu.memory_space<vmem>>, %arg8: memref<2x16xf32, #tpu.memory_space<vmem>>, %arg9: memref<1x1xf32, #tpu.memory_space<vmem>>) attributes {dimension_semantics = [], scalar_prefetch = 0 : i64, scratch_operands = 0 : i64, tpu.core_type = #tpu.core_type<tc>} {
    %cst = arith.constant 3.125000e-02 : f32
    %0 = vector.broadcast %cst : f32 to vector<32x1xf32>
    %c0 = arith.constant 0 : index
    %c0_0 = arith.constant 0 : index
    %1 = vector.load %arg1[%c0, %c0_0] : memref<128x256xf32, #tpu.memory_space<vmem>>, vector<128x128xf32>
    %c0_1 = arith.constant 0 : index
    %c128 = arith.constant 128 : index
    %2 = vector.load %arg1[%c0_1, %c128] : memref<128x256xf32, #tpu.memory_space<vmem>>, vector<128x128xf32>
    %c0_2 = arith.constant 0 : index
    %c0_3 = arith.constant 0 : index
    %3 = vector.load %arg0[%c0_2, %c0_3] : memref<64x288xf32, #tpu.memory_space<vmem>>, vector<64x288xf32>
    %c0_4 = arith.constant 0 : index
    %c0_5 = arith.constant 0 : index
    %4 = vector.load %arg5[%c0_4, %c0_5] : memref<288x48xf32, #tpu.memory_space<vmem>>, vector<288x32xf32>
    %cst_6 = arith.constant dense<0.000000e+00> : vector<64x32xf32>
    %5 = tpu.matmul %3, %4, %cst_6 {dimension_numbers = #tpu.dot_dimension_numbers<[1], [0], [0], [1], [0, 0, 1, 1], [], []>} : vector<64x288xf32>, vector<288x32xf32>, vector<64x32xf32> -> vector<64x32xf32>
    %c0_7 = arith.constant 0 : index
    %c0_8 = arith.constant 0 : index
    %6 = vector.load %arg7[%c0_7, %c0_8] : memref<64x128xf32, #tpu.memory_space<vmem>>, vector<64x32xf32>
    %7 = arith.addf %5, %6 : vector<64x32xf32>
    %c0_9 = arith.constant 0 : index
    %c32 = arith.constant 32 : index
    %8 = vector.load %arg7[%c0_9, %c32] : memref<64x128xf32, #tpu.memory_space<vmem>>, vector<64x32xf32>
    %c0_10 = arith.constant 0 : index
    %c64 = arith.constant 64 : index
    %9 = vector.load %arg7[%c0_10, %c64] : memref<64x128xf32, #tpu.memory_space<vmem>>, vector<64x32xf32>
    %cst_11 = arith.constant dense<0.000000e+00> : vector<64x1xf32>
    %10 = tpu.matmul %7, %0, %cst_11 {dimension_numbers = #tpu.dot_dimension_numbers<[1], [0], [0], [1], [0, 0, 1, 1], [], []>} : vector<64x32xf32>, vector<32x1xf32>, vector<64x1xf32> -> vector<64x1xf32>
    %11 = arith.mulf %7, %7 : vector<64x32xf32>
    %cst_12 = arith.constant dense<0.000000e+00> : vector<64x1xf32>
    %12 = tpu.matmul %11, %0, %cst_12 {dimension_numbers = #tpu.dot_dimension_numbers<[1], [0], [0], [1], [0, 0, 1, 1], [], []>} : vector<64x32xf32>, vector<32x1xf32>, vector<64x1xf32> -> vector<64x1xf32>
    %13 = arith.mulf %10, %10 : vector<64x1xf32>
    %14 = arith.subf %12, %13 : vector<64x1xf32>
    %cst_13 = arith.constant 0.000000e+00 : f32
    %15 = vector.broadcast %cst_13 : f32 to vector<64x1xf32>
    %16 = arith.maximumf %14, %15 : vector<64x1xf32>
    %17 = vector.broadcast %10 : vector<64x1xf32> to vector<64x32xf32>
    %18 = arith.subf %7, %17 : vector<64x32xf32>
    %cst_14 = arith.constant 9.99999997E-7 : f32
    %19 = vector.broadcast %cst_14 : f32 to vector<64x1xf32>
    %20 = arith.addf %16, %19 : vector<64x1xf32>
    %21 = math.rsqrt %20 : vector<64x1xf32>
    %22 = vector.broadcast %21 : vector<64x1xf32> to vector<64x32xf32>
    %23 = arith.mulf %18, %22 : vector<64x32xf32>
    %24 = arith.mulf %23, %8 : vector<64x32xf32>
    %25 = arith.addf %24, %9 : vector<64x32xf32>
    %26 = vector.extract_strided_slice %25 {offsets = [0, 0], sizes = [32, 32], strides = [1, 1]} : vector<64x32xf32> to vector<32x32xf32>
    %27 = vector.extract_strided_slice %25 {offsets = [32, 0], sizes = [32, 32], strides = [1, 1]} : vector<64x32xf32> to vector<32x32xf32>
    %c0_15 = arith.constant 0 : index
    %c0_16 = arith.constant 0 : index
    %28 = vector.load %arg3[%c0_15, %c0_16] : memref<32x1088xf32, #tpu.memory_space<vmem>>, vector<32x96xf32>
    %cst_17 = arith.constant dense<0.000000e+00> : vector<32x96xf32>
    %29 = tpu.matmul %26, %28, %cst_17 {dimension_numbers = #tpu.dot_dimension_numbers<[1], [0], [0], [1], [0, 0, 1, 1], [], []>} : vector<32x32xf32>, vector<32x96xf32>, vector<32x96xf32> -> vector<32x96xf32>
    %30 = vector.extract_strided_slice %29 {offsets = [0, 0], sizes = [32, 32], strides = [1, 1]} : vector<32x96xf32> to vector<32x32xf32>
    %31 = vector.extract_strided_slice %29 {offsets = [0, 32], sizes = [32, 32], strides = [1, 1]} : vector<32x96xf32> to vector<32x32xf32>
    %32 = vector.extract_strided_slice %29 {offsets = [0, 64], sizes = [32, 32], strides = [1, 1]} : vector<32x96xf32> to vector<32x32xf32>
    %c0_18 = arith.constant 0 : index
    %c96 = arith.constant 96 : index
    %33 = vector.load %arg3[%c0_18, %c96] : memref<32x1088xf32, #tpu.memory_space<vmem>>, vector<32x32xf32>
    %c0_19 = arith.constant 0 : index
    %c0_20 = arith.constant 0 : index
    %34 = vector.load %arg6[%c0_19, %c0_20] : memref<32x64xf32, #tpu.memory_space<vmem>>, vector<1x32xf32>
    %c1 = arith.constant 1 : index
    %c0_21 = arith.constant 0 : index
    %35 = vector.load %arg6[%c1, %c0_21] : memref<32x64xf32, #tpu.memory_space<vmem>>, vector<1x32xf32>
    %36 = vector.extract_strided_slice %30 {offsets = [0, 0], sizes = [32, 8], strides = [1, 1]} : vector<32x32xf32> to vector<32x8xf32>
    %37 = vector.extract_strided_slice %30 {offsets = [0, 8], sizes = [32, 8], strides = [1, 1]} : vector<32x32xf32> to vector<32x8xf32>
    %38 = vector.extract_strided_slice %30 {offsets = [0, 16], sizes = [32, 8], strides = [1, 1]} : vector<32x32xf32> to vector<32x8xf32>
    %39 = vector.extract_strided_slice %30 {offsets = [0, 24], sizes = [32, 8], strides = [1, 1]} : vector<32x32xf32> to vector<32x8xf32>
    %40 = tpu.concatenate %36, %37, %38, %39 in 0 : vector<32x8xf32>, vector<32x8xf32>, vector<32x8xf32>, vector<32x8xf32> -> vector<128x8xf32>
    %41 = vector.extract_strided_slice %31 {offsets = [0, 0], sizes = [32, 8], strides = [1, 1]} : vector<32x32xf32> to vector<32x8xf32>
    %42 = vector.extract_strided_slice %31 {offsets = [0, 8], sizes = [32, 8], strides = [1, 1]} : vector<32x32xf32> to vector<32x8xf32>
    %43 = vector.extract_strided_slice %31 {offsets = [0, 16], sizes = [32, 8], strides = [1, 1]} : vector<32x32xf32> to vector<32x8xf32>
    %44 = vector.extract_strided_slice %31 {offsets = [0, 24], sizes = [32, 8], strides = [1, 1]} : vector<32x32xf32> to vector<32x8xf32>
    %45 = tpu.concatenate %41, %42, %43, %44 in 0 : vector<32x8xf32>, vector<32x8xf32>, vector<32x8xf32>, vector<32x8xf32> -> vector<128x8xf32>
    %46 = vector.extract_strided_slice %32 {offsets = [0, 0], sizes = [32, 8], strides = [1, 1]} : vector<32x32xf32> to vector<32x8xf32>
    %47 = vector.extract_strided_slice %32 {offsets = [0, 8], sizes = [32, 8], strides = [1, 1]} : vector<32x32xf32> to vector<32x8xf32>
    %48 = vector.extract_strided_slice %32 {offsets = [0, 16], sizes = [32, 8], strides = [1, 1]} : vector<32x32xf32> to vector<32x8xf32>
    %49 = vector.extract_strided_slice %32 {offsets = [0, 24], sizes = [32, 8], strides = [1, 1]} : vector<32x32xf32> to vector<32x8xf32>
    %50 = tpu.concatenate %46, %47, %48, %49 in 0 : vector<32x8xf32>, vector<32x8xf32>, vector<32x8xf32>, vector<32x8xf32> -> vector<128x8xf32>
    %cst_22 = arith.constant dense<0.000000e+00> : vector<128x128xf32>
    %51 = tpu.matmul %40, %45, %cst_22 {dimension_numbers = #tpu.dot_dimension_numbers<[1], [1], [0], [0], [0, 0, 1, 0], [], []>} : vector<128x8xf32>, vector<128x8xf32>, vector<128x128xf32> -> vector<128x128xf32>
    %52 = arith.addf %51, %1 : vector<128x128xf32>
    %cst_23 = arith.constant dense<0xFF800000> : vector<128xf32>
    %53 = vector.multi_reduction <maximumf>, %52, %cst_23 [1] : vector<128x128xf32> to vector<128xf32>
    %54 = vector.shape_cast %53 : vector<128xf32> to vector<128x1xf32>
    %55 = vector.broadcast %54 : vector<128x1xf32> to vector<128x128xf32>
    %56 = arith.subf %52, %55 : vector<128x128xf32>
    %57 = math.exp %56 : vector<128x128xf32>
    %cst_24 = arith.constant dense<0.000000e+00> : vector<128xf32>
    %58 = vector.multi_reduction <add>, %57, %cst_24 [1] : vector<128x128xf32> to vector<128xf32>
    %59 = vector.shape_cast %58 : vector<128xf32> to vector<128x1xf32>
    %60 = tpu.reciprocal %59 {approx = true} : vector<128x1xf32> -> vector<128x1xf32>
    %61 = vector.broadcast %60 : vector<128x1xf32> to vector<128x128xf32>
    %62 = arith.mulf %57, %61 : vector<128x128xf32>
    %cst_25 = arith.constant dense<0.000000e+00> : vector<128x8xf32>
    %63 = tpu.matmul %62, %50, %cst_25 {dimension_numbers = #tpu.dot_dimension_numbers<[1], [0], [0], [1], [0, 0, 1, 1], [], []>} : vector<128x128xf32>, vector<128x8xf32>, vector<128x8xf32> -> vector<128x8xf32>
    %64 = vector.extract_strided_slice %63 {offsets = [0, 0], sizes = [32, 8], strides = [1, 1]} : vector<128x8xf32> to vector<32x8xf32>
    %65 = vector.extract_strided_slice %63 {offsets = [32, 0], sizes = [32, 8], strides = [1, 1]} : vector<128x8xf32> to vector<32x8xf32>
    %66 = vector.extract_strided_slice %63 {offsets = [64, 0], sizes = [32, 8], strides = [1, 1]} : vector<128x8xf32> to vector<32x8xf32>
    %67 = vector.extract_strided_slice %63 {offsets = [96, 0], sizes = [32, 8], strides = [1, 1]} : vector<128x8xf32> to vector<32x8xf32>
    %68 = tpu.concatenate %64, %65, %66, %67 in 1 : vector<32x8xf32>, vector<32x8xf32>, vector<32x8xf32>, vector<32x8xf32> -> vector<32x32xf32>
    %cst_26 = arith.constant dense<0.000000e+00> : vector<32x32xf32>
    %69 = tpu.matmul %68, %33, %cst_26 {dimension_numbers = #tpu.dot_dimension_numbers<[1], [0], [0], [1], [0, 0, 1, 1], [], []>} : vector<32x32xf32>, vector<32x32xf32>, vector<32x32xf32> -> vector<32x32xf32>
    %70 = arith.addf %26, %69 : vector<32x32xf32>
    %cst_27 = arith.constant dense<0.000000e+00> : vector<32x1xf32>
    %71 = tpu.matmul %70, %0, %cst_27 {dimension_numbers = #tpu.dot_dimension_numbers<[1], [0], [0], [1], [0, 0, 1, 1], [], []>} : vector<32x32xf32>, vector<32x1xf32>, vector<32x1xf32> -> vector<32x1xf32>
    %72 = arith.mulf %70, %70 : vector<32x32xf32>
    %cst_28 = arith.constant dense<0.000000e+00> : vector<32x1xf32>
    %73 = tpu.matmul %72, %0, %cst_28 {dimension_numbers = #tpu.dot_dimension_numbers<[1], [0], [0], [1], [0, 0, 1, 1], [], []>} : vector<32x32xf32>, vector<32x1xf32>, vector<32x1xf32> -> vector<32x1xf32>
    %74 = arith.mulf %71, %71 : vector<32x1xf32>
    %75 = arith.subf %73, %74 : vector<32x1xf32>
    %cst_29 = arith.constant 0.000000e+00 : f32
    %76 = vector.broadcast %cst_29 : f32 to vector<32x1xf32>
    %77 = arith.maximumf %75, %76 : vector<32x1xf32>
    %78 = vector.broadcast %71 : vector<32x1xf32> to vector<32x32xf32>
    %79 = arith.subf %70, %78 : vector<32x32xf32>
    %cst_30 = arith.constant 9.99999997E-7 : f32
    %80 = vector.broadcast %cst_30 : f32 to vector<32x1xf32>
    %81 = arith.addf %77, %80 : vector<32x1xf32>
    %82 = math.rsqrt %81 : vector<32x1xf32>
    %83 = vector.broadcast %82 : vector<32x1xf32> to vector<32x32xf32>
    %84 = arith.mulf %79, %83 : vector<32x32xf32>
    %85 = vector.broadcast %34 : vector<1x32xf32> to vector<32x32xf32>
    %86 = arith.mulf %84, %85 : vector<32x32xf32>
    %87 = vector.broadcast %35 : vector<1x32xf32> to vector<32x32xf32>
    %88 = arith.addf %86, %87 : vector<32x32xf32>
    %c0_31 = arith.constant 0 : index
    %c128_32 = arith.constant 128 : index
    %89 = vector.load %arg3[%c0_31, %c128_32] : memref<32x1088xf32, #tpu.memory_space<vmem>>, vector<32x64xf32>
    %c2 = arith.constant 2 : index
    %c0_33 = arith.constant 0 : index
    %90 = vector.load %arg6[%c2, %c0_33] : memref<32x64xf32, #tpu.memory_space<vmem>>, vector<1x64xf32>
    %c0_34 = arith.constant 0 : index
    %c0_35 = arith.constant 0 : index
    %91 = vector.load %arg4[%c0_34, %c0_35] : memref<64x128xf32, #tpu.memory_space<vmem>>, vector<64x32xf32>
    %c3 = arith.constant 3 : index
    %c0_36 = arith.constant 0 : index
    %92 = vector.load %arg6[%c3, %c0_36] : memref<32x64xf32, #tpu.memory_space<vmem>>, vector<1x32xf32>
    %c4 = arith.constant 4 : index
    %c0_37 = arith.constant 0 : index
    %93 = vector.load %arg6[%c4, %c0_37] : memref<32x64xf32, #tpu.memory_space<vmem>>, vector<1x32xf32>
    %c5 = arith.constant 5 : index
    %c0_38 = arith.constant 0 : index
    %94 = vector.load %arg6[%c5, %c0_38] : memref<32x64xf32, #tpu.memory_space<vmem>>, vector<1x32xf32>
    %cst_39 = arith.constant dense<0.000000e+00> : vector<32x64xf32>
    %95 = tpu.matmul %88, %89, %cst_39 {dimension_numbers = #tpu.dot_dimension_numbers<[1], [0], [0], [1], [0, 0, 1, 1], [], []>} : vector<32x32xf32>, vector<32x64xf32>, vector<32x64xf32> -> vector<32x64xf32>
    %96 = vector.broadcast %90 : vector<1x64xf32> to vector<32x64xf32>
    %97 = arith.addf %95, %96 : vector<32x64xf32>
    %cst_40 = arith.constant 0.000000e+00 : f32
    %98 = vector.broadcast %cst_40 : f32 to vector<32x64xf32>
    %99 = arith.maximumf %97, %98 : vector<32x64xf32>
    %cst_41 = arith.constant dense<0.000000e+00> : vector<32x32xf32>
    %100 = tpu.matmul %99, %91, %cst_41 {dimension_numbers = #tpu.dot_dimension_numbers<[1], [0], [0], [1], [0, 0, 1, 1], [], []>} : vector<32x64xf32>, vector<64x32xf32>, vector<32x32xf32> -> vector<32x32xf32>
    %101 = vector.broadcast %92 : vector<1x32xf32> to vector<32x32xf32>
    %102 = arith.addf %100, %101 : vector<32x32xf32>
    %103 = arith.addf %102, %88 : vector<32x32xf32>
    %cst_42 = arith.constant dense<0.000000e+00> : vector<32x1xf32>
    %104 = tpu.matmul %103, %0, %cst_42 {dimension_numbers = #tpu.dot_dimension_numbers<[1], [0], [0], [1], [0, 0, 1, 1], [], []>} : vector<32x32xf32>, vector<32x1xf32>, vector<32x1xf32> -> vector<32x1xf32>
    %105 = arith.mulf %103, %103 : vector<32x32xf32>
    %cst_43 = arith.constant dense<0.000000e+00> : vector<32x1xf32>
    %106 = tpu.matmul %105, %0, %cst_43 {dimension_numbers = #tpu.dot_dimension_numbers<[1], [0], [0], [1], [0, 0, 1, 1], [], []>} : vector<32x32xf32>, vector<32x1xf32>, vector<32x1xf32> -> vector<32x1xf32>
    %107 = arith.mulf %104, %104 : vector<32x1xf32>
    %108 = arith.subf %106, %107 : vector<32x1xf32>
    %cst_44 = arith.constant 0.000000e+00 : f32
    %109 = vector.broadcast %cst_44 : f32 to vector<32x1xf32>
    %110 = arith.maximumf %108, %109 : vector<32x1xf32>
    %111 = vector.broadcast %104 : vector<32x1xf32> to vector<32x32xf32>
    %112 = arith.subf %103, %111 : vector<32x32xf32>
    %cst_45 = arith.constant 9.99999997E-7 : f32
    %113 = vector.broadcast %cst_45 : f32 to vector<32x1xf32>
    %114 = arith.addf %110, %113 : vector<32x1xf32>
    %115 = math.rsqrt %114 : vector<32x1xf32>
    %116 = vector.broadcast %115 : vector<32x1xf32> to vector<32x32xf32>
    %117 = arith.mulf %112, %116 : vector<32x32xf32>
    %118 = vector.broadcast %93 : vector<1x32xf32> to vector<32x32xf32>
    %119 = arith.mulf %117, %118 : vector<32x32xf32>
    %120 = vector.broadcast %94 : vector<1x32xf32> to vector<32x32xf32>
    %121 = arith.addf %119, %120 : vector<32x32xf32>
    %c0_46 = arith.constant 0 : index
    %c192 = arith.constant 192 : index
    %122 = vector.load %arg3[%c0_46, %c192] : memref<32x1088xf32, #tpu.memory_space<vmem>>, vector<32x96xf32>
    %cst_47 = arith.constant dense<0.000000e+00> : vector<32x96xf32>
    %123 = tpu.matmul %121, %122, %cst_47 {dimension_numbers = #tpu.dot_dimension_numbers<[1], [0], [0], [1], [0, 0, 1, 1], [], []>} : vector<32x32xf32>, vector<32x96xf32>, vector<32x96xf32> -> vector<32x96xf32>
    %124 = vector.extract_strided_slice %123 {offsets = [0, 0], sizes = [32, 32], strides = [1, 1]} : vector<32x96xf32> to vector<32x32xf32>
    %125 = vector.extract_strided_slice %123 {offsets = [0, 32], sizes = [32, 32], strides = [1, 1]} : vector<32x96xf32> to vector<32x32xf32>
    %126 = vector.extract_strided_slice %123 {offsets = [0, 64], sizes = [32, 32], strides = [1, 1]} : vector<32x96xf32> to vector<32x32xf32>
    %c0_48 = arith.constant 0 : index
    %c288 = arith.constant 288 : index
    %127 = vector.load %arg3[%c0_48, %c288] : memref<32x1088xf32, #tpu.memory_space<vmem>>, vector<32x32xf32>
    %c6 = arith.constant 6 : index
    %c0_49 = arith.constant 0 : index
    %128 = vector.load %arg6[%c6, %c0_49] : memref<32x64xf32, #tpu.memory_space<vmem>>, vector<1x32xf32>
    %c7 = arith.constant 7 : index
    %c0_50 = arith.constant 0 : index
    %129 = vector.load %arg6[%c7, %c0_50] : memref<32x64xf32, #tpu.memory_space<vmem>>, vector<1x32xf32>
    %130 = vector.extract_strided_slice %124 {offsets = [0, 0], sizes = [32, 8], strides = [1, 1]} : vector<32x32xf32> to vector<32x8xf32>
    %131 = vector.extract_strided_slice %124 {offsets = [0, 8], sizes = [32, 8], strides = [1, 1]} : vector<32x32xf32> to vector<32x8xf32>
    %132 = vector.extract_strided_slice %124 {offsets = [0, 16], sizes = [32, 8], strides = [1, 1]} : vector<32x32xf32> to vector<32x8xf32>
    %133 = vector.extract_strided_slice %124 {offsets = [0, 24], sizes = [32, 8], strides = [1, 1]} : vector<32x32xf32> to vector<32x8xf32>
    %134 = tpu.concatenate %130, %131, %132, %133 in 0 : vector<32x8xf32>, vector<32x8xf32>, vector<32x8xf32>, vector<32x8xf32> -> vector<128x8xf32>
    %135 = vector.extract_strided_slice %125 {offsets = [0, 0], sizes = [32, 8], strides = [1, 1]} : vector<32x32xf32> to vector<32x8xf32>
    %136 = vector.extract_strided_slice %125 {offsets = [0, 8], sizes = [32, 8], strides = [1, 1]} : vector<32x32xf32> to vector<32x8xf32>
    %137 = vector.extract_strided_slice %125 {offsets = [0, 16], sizes = [32, 8], strides = [1, 1]} : vector<32x32xf32> to vector<32x8xf32>
    %138 = vector.extract_strided_slice %125 {offsets = [0, 24], sizes = [32, 8], strides = [1, 1]} : vector<32x32xf32> to vector<32x8xf32>
    %139 = tpu.concatenate %135, %136, %137, %138 in 0 : vector<32x8xf32>, vector<32x8xf32>, vector<32x8xf32>, vector<32x8xf32> -> vector<128x8xf32>
    %140 = vector.extract_strided_slice %126 {offsets = [0, 0], sizes = [32, 8], strides = [1, 1]} : vector<32x32xf32> to vector<32x8xf32>
    %141 = vector.extract_strided_slice %126 {offsets = [0, 8], sizes = [32, 8], strides = [1, 1]} : vector<32x32xf32> to vector<32x8xf32>
    %142 = vector.extract_strided_slice %126 {offsets = [0, 16], sizes = [32, 8], strides = [1, 1]} : vector<32x32xf32> to vector<32x8xf32>
    %143 = vector.extract_strided_slice %126 {offsets = [0, 24], sizes = [32, 8], strides = [1, 1]} : vector<32x32xf32> to vector<32x8xf32>
    %144 = tpu.concatenate %140, %141, %142, %143 in 0 : vector<32x8xf32>, vector<32x8xf32>, vector<32x8xf32>, vector<32x8xf32> -> vector<128x8xf32>
    %cst_51 = arith.constant dense<0.000000e+00> : vector<128x128xf32>
    %145 = tpu.matmul %134, %139, %cst_51 {dimension_numbers = #tpu.dot_dimension_numbers<[1], [1], [0], [0], [0, 0, 1, 0], [], []>} : vector<128x8xf32>, vector<128x8xf32>, vector<128x128xf32> -> vector<128x128xf32>
    %146 = arith.addf %145, %1 : vector<128x128xf32>
    %cst_52 = arith.constant dense<0xFF800000> : vector<128xf32>
    %147 = vector.multi_reduction <maximumf>, %146, %cst_52 [1] : vector<128x128xf32> to vector<128xf32>
    %148 = vector.shape_cast %147 : vector<128xf32> to vector<128x1xf32>
    %149 = vector.broadcast %148 : vector<128x1xf32> to vector<128x128xf32>
    %150 = arith.subf %146, %149 : vector<128x128xf32>
    %151 = math.exp %150 : vector<128x128xf32>
    %cst_53 = arith.constant dense<0.000000e+00> : vector<128xf32>
    %152 = vector.multi_reduction <add>, %151, %cst_53 [1] : vector<128x128xf32> to vector<128xf32>
    %153 = vector.shape_cast %152 : vector<128xf32> to vector<128x1xf32>
    %154 = tpu.reciprocal %153 {approx = true} : vector<128x1xf32> -> vector<128x1xf32>
    %155 = vector.broadcast %154 : vector<128x1xf32> to vector<128x128xf32>
    %156 = arith.mulf %151, %155 : vector<128x128xf32>
    %cst_54 = arith.constant dense<0.000000e+00> : vector<128x8xf32>
    %157 = tpu.matmul %156, %144, %cst_54 {dimension_numbers = #tpu.dot_dimension_numbers<[1], [0], [0], [1], [0, 0, 1, 1], [], []>} : vector<128x128xf32>, vector<128x8xf32>, vector<128x8xf32> -> vector<128x8xf32>
    %158 = vector.extract_strided_slice %157 {offsets = [0, 0], sizes = [32, 8], strides = [1, 1]} : vector<128x8xf32> to vector<32x8xf32>
    %159 = vector.extract_strided_slice %157 {offsets = [32, 0], sizes = [32, 8], strides = [1, 1]} : vector<128x8xf32> to vector<32x8xf32>
    %160 = vector.extract_strided_slice %157 {offsets = [64, 0], sizes = [32, 8], strides = [1, 1]} : vector<128x8xf32> to vector<32x8xf32>
    %161 = vector.extract_strided_slice %157 {offsets = [96, 0], sizes = [32, 8], strides = [1, 1]} : vector<128x8xf32> to vector<32x8xf32>
    %162 = tpu.concatenate %158, %159, %160, %161 in 1 : vector<32x8xf32>, vector<32x8xf32>, vector<32x8xf32>, vector<32x8xf32> -> vector<32x32xf32>
    %cst_55 = arith.constant dense<0.000000e+00> : vector<32x32xf32>
    %163 = tpu.matmul %162, %127, %cst_55 {dimension_numbers = #tpu.dot_dimension_numbers<[1], [0], [0], [1], [0, 0, 1, 1], [], []>} : vector<32x32xf32>, vector<32x32xf32>, vector<32x32xf32> -> vector<32x32xf32>
    %164 = arith.addf %121, %163 : vector<32x32xf32>
    %cst_56 = arith.constant dense<0.000000e+00> : vector<32x1xf32>
    %165 = tpu.matmul %164, %0, %cst_56 {dimension_numbers = #tpu.dot_dimension_numbers<[1], [0], [0], [1], [0, 0, 1, 1], [], []>} : vector<32x32xf32>, vector<32x1xf32>, vector<32x1xf32> -> vector<32x1xf32>
    %166 = arith.mulf %164, %164 : vector<32x32xf32>
    %cst_57 = arith.constant dense<0.000000e+00> : vector<32x1xf32>
    %167 = tpu.matmul %166, %0, %cst_57 {dimension_numbers = #tpu.dot_dimension_numbers<[1], [0], [0], [1], [0, 0, 1, 1], [], []>} : vector<32x32xf32>, vector<32x1xf32>, vector<32x1xf32> -> vector<32x1xf32>
    %168 = arith.mulf %165, %165 : vector<32x1xf32>
    %169 = arith.subf %167, %168 : vector<32x1xf32>
    %cst_58 = arith.constant 0.000000e+00 : f32
    %170 = vector.broadcast %cst_58 : f32 to vector<32x1xf32>
    %171 = arith.maximumf %169, %170 : vector<32x1xf32>
    %172 = vector.broadcast %165 : vector<32x1xf32> to vector<32x32xf32>
    %173 = arith.subf %164, %172 : vector<32x32xf32>
    %cst_59 = arith.constant 9.99999997E-7 : f32
    %174 = vector.broadcast %cst_59 : f32 to vector<32x1xf32>
    %175 = arith.addf %171, %174 : vector<32x1xf32>
    %176 = math.rsqrt %175 : vector<32x1xf32>
    %177 = vector.broadcast %176 : vector<32x1xf32> to vector<32x32xf32>
    %178 = arith.mulf %173, %177 : vector<32x32xf32>
    %179 = vector.broadcast %128 : vector<1x32xf32> to vector<32x32xf32>
    %180 = arith.mulf %178, %179 : vector<32x32xf32>
    %181 = vector.broadcast %129 : vector<1x32xf32> to vector<32x32xf32>
    %182 = arith.addf %180, %181 : vector<32x32xf32>
    %c0_60 = arith.constant 0 : index
    %c320 = arith.constant 320 : index
    %183 = vector.load %arg3[%c0_60, %c320] : memref<32x1088xf32, #tpu.memory_space<vmem>>, vector<32x64xf32>
    %c8 = arith.constant 8 : index
    %c0_61 = arith.constant 0 : index
    %184 = vector.load %arg6[%c8, %c0_61] : memref<32x64xf32, #tpu.memory_space<vmem>>, vector<1x64xf32>
    %c0_62 = arith.constant 0 : index
    %c32_63 = arith.constant 32 : index
    %185 = vector.load %arg4[%c0_62, %c32_63] : memref<64x128xf32, #tpu.memory_space<vmem>>, vector<64x32xf32>
    %c9 = arith.constant 9 : index
    %c0_64 = arith.constant 0 : index
    %186 = vector.load %arg6[%c9, %c0_64] : memref<32x64xf32, #tpu.memory_space<vmem>>, vector<1x32xf32>
    %c10 = arith.constant 10 : index
    %c0_65 = arith.constant 0 : index
    %187 = vector.load %arg6[%c10, %c0_65] : memref<32x64xf32, #tpu.memory_space<vmem>>, vector<1x32xf32>
    %c11 = arith.constant 11 : index
    %c0_66 = arith.constant 0 : index
    %188 = vector.load %arg6[%c11, %c0_66] : memref<32x64xf32, #tpu.memory_space<vmem>>, vector<1x32xf32>
    %cst_67 = arith.constant dense<0.000000e+00> : vector<32x64xf32>
    %189 = tpu.matmul %182, %183, %cst_67 {dimension_numbers = #tpu.dot_dimension_numbers<[1], [0], [0], [1], [0, 0, 1, 1], [], []>} : vector<32x32xf32>, vector<32x64xf32>, vector<32x64xf32> -> vector<32x64xf32>
    %190 = vector.broadcast %184 : vector<1x64xf32> to vector<32x64xf32>
    %191 = arith.addf %189, %190 : vector<32x64xf32>
    %cst_68 = arith.constant 0.000000e+00 : f32
    %192 = vector.broadcast %cst_68 : f32 to vector<32x64xf32>
    %193 = arith.maximumf %191, %192 : vector<32x64xf32>
    %cst_69 = arith.constant dense<0.000000e+00> : vector<32x32xf32>
    %194 = tpu.matmul %193, %185, %cst_69 {dimension_numbers = #tpu.dot_dimension_numbers<[1], [0], [0], [1], [0, 0, 1, 1], [], []>} : vector<32x64xf32>, vector<64x32xf32>, vector<32x32xf32> -> vector<32x32xf32>
    %195 = vector.broadcast %186 : vector<1x32xf32> to vector<32x32xf32>
    %196 = arith.addf %194, %195 : vector<32x32xf32>
    %197 = arith.addf %196, %182 : vector<32x32xf32>
    %cst_70 = arith.constant dense<0.000000e+00> : vector<32x1xf32>
    %198 = tpu.matmul %197, %0, %cst_70 {dimension_numbers = #tpu.dot_dimension_numbers<[1], [0], [0], [1], [0, 0, 1, 1], [], []>} : vector<32x32xf32>, vector<32x1xf32>, vector<32x1xf32> -> vector<32x1xf32>
    %199 = arith.mulf %197, %197 : vector<32x32xf32>
    %cst_71 = arith.constant dense<0.000000e+00> : vector<32x1xf32>
    %200 = tpu.matmul %199, %0, %cst_71 {dimension_numbers = #tpu.dot_dimension_numbers<[1], [0], [0], [1], [0, 0, 1, 1], [], []>} : vector<32x32xf32>, vector<32x1xf32>, vector<32x1xf32> -> vector<32x1xf32>
    %201 = arith.mulf %198, %198 : vector<32x1xf32>
    %202 = arith.subf %200, %201 : vector<32x1xf32>
    %cst_72 = arith.constant 0.000000e+00 : f32
    %203 = vector.broadcast %cst_72 : f32 to vector<32x1xf32>
    %204 = arith.maximumf %202, %203 : vector<32x1xf32>
    %205 = vector.broadcast %198 : vector<32x1xf32> to vector<32x32xf32>
    %206 = arith.subf %197, %205 : vector<32x32xf32>
    %cst_73 = arith.constant 9.99999997E-7 : f32
    %207 = vector.broadcast %cst_73 : f32 to vector<32x1xf32>
    %208 = arith.addf %204, %207 : vector<32x1xf32>
    %209 = math.rsqrt %208 : vector<32x1xf32>
    %210 = vector.broadcast %209 : vector<32x1xf32> to vector<32x32xf32>
    %211 = arith.mulf %206, %210 : vector<32x32xf32>
    %212 = vector.broadcast %187 : vector<1x32xf32> to vector<32x32xf32>
    %213 = arith.mulf %211, %212 : vector<32x32xf32>
    %214 = vector.broadcast %188 : vector<1x32xf32> to vector<32x32xf32>
    %215 = arith.addf %213, %214 : vector<32x32xf32>
    %c0_74 = arith.constant 0 : index
    %c384 = arith.constant 384 : index
    %216 = vector.load %arg3[%c0_74, %c384] : memref<32x1088xf32, #tpu.memory_space<vmem>>, vector<32x64xf32>
    %cst_75 = arith.constant dense<0.000000e+00> : vector<32x64xf32>
    %217 = tpu.matmul %215, %216, %cst_75 {dimension_numbers = #tpu.dot_dimension_numbers<[1], [0], [0], [1], [0, 0, 1, 1], [], []>} : vector<32x32xf32>, vector<32x64xf32>, vector<32x64xf32> -> vector<32x64xf32>
    %c12 = arith.constant 12 : index
    %c0_76 = arith.constant 0 : index
    %218 = vector.load %arg6[%c12, %c0_76] : memref<32x64xf32, #tpu.memory_space<vmem>>, vector<1x64xf32>
    %219 = vector.broadcast %218 : vector<1x64xf32> to vector<32x64xf32>
    %220 = arith.addf %217, %219 : vector<32x64xf32>
    %221 = vector.extract_strided_slice %220 {offsets = [0, 0], sizes = [32, 32], strides = [1, 1]} : vector<32x64xf32> to vector<32x32xf32>
    %222 = vector.extract_strided_slice %220 {offsets = [0, 32], sizes = [32, 32], strides = [1, 1]} : vector<32x64xf32> to vector<32x32xf32>
    %cst_77 = arith.constant 5.000000e-01 : f32
    %223 = vector.broadcast %cst_77 : f32 to vector<32x32xf32>
    %224 = arith.mulf %223, %222 : vector<32x32xf32>
    %225 = math.exp %224 : vector<32x32xf32>
    %c0_78 = arith.constant 0 : index
    %c0_79 = arith.constant 0 : index
    %226 = vector.load %arg2[%c0_78, %c0_79] : memref<32x32xf32, #tpu.memory_space<vmem>>, vector<32x32xf32>
    %227 = arith.mulf %225, %226 : vector<32x32xf32>
    %228 = arith.addf %221, %227 : vector<32x32xf32>
    %c0_80 = arith.constant 0 : index
    %c96_81 = arith.constant 96 : index
    %229 = vector.load %arg7[%c0_80, %c96_81] : memref<64x128xf32, #tpu.memory_space<vmem>>, vector<32x1xf32>
    %cst_82 = arith.constant 1.000000e+00 : f32
    %230 = vector.broadcast %cst_82 : f32 to vector<32x32xf32>
    %231 = arith.addf %230, %222 : vector<32x32xf32>
    %232 = arith.mulf %221, %221 : vector<32x32xf32>
    %233 = arith.subf %231, %232 : vector<32x32xf32>
    %234 = math.exp %222 : vector<32x32xf32>
    %235 = arith.subf %233, %234 : vector<32x32xf32>
    %236 = vector.broadcast %229 : vector<32x1xf32> to vector<32x32xf32>
    %237 = arith.mulf %235, %236 : vector<32x32xf32>
    %238 = vector.shape_cast %237 : vector<32x32xf32> to vector<1x32x32xf32>
    %cst_83 = arith.constant dense<0.000000e+00> : vector<1xf32>
    %239 = vector.multi_reduction <add>, %238, %cst_83 [1, 2] : vector<1x32x32xf32> to vector<1xf32>
    %240 = vector.shape_cast %239 : vector<1xf32> to vector<1x1x1xf32>
    %241 = vector.extract %240[0, 0, 0] : f32 from vector<1x1x1xf32>
    %242 = vector.broadcast %241 : f32 to vector<1x1xf32>
    %cst_84 = arith.constant -8.68055562E-4 : f32
    %243 = vector.broadcast %cst_84 : f32 to vector<1x1xf32>
    %244 = arith.mulf %243, %242 : vector<1x1xf32>
    %c0_85 = arith.constant 0 : index
    %c0_86 = arith.constant 0 : index
    %245 = vector.load %arg9[%c0_85, %c0_86] : memref<1x1xf32, #tpu.memory_space<vmem>>, vector<1x1xf32>
    tpu.vector_store %arg9[%c0_85, %c0_86], %244 {strides = array<i32>} : memref<1x1xf32, #tpu.memory_space<vmem>>, vector<1x1xf32>,
    %c0_87 = arith.constant 0 : index
    %c960 = arith.constant 960 : index
    %246 = vector.load %arg3[%c0_87, %c960] : memref<32x1088xf32, #tpu.memory_space<vmem>>, vector<32x128xf32>
    %cst_88 = arith.constant dense<0.000000e+00> : vector<32x128xf32>
    %247 = tpu.matmul %228, %246, %cst_88 {dimension_numbers = #tpu.dot_dimension_numbers<[1], [0], [0], [1], [0, 0, 1, 1], [], []>} : vector<32x32xf32>, vector<32x128xf32>, vector<32x128xf32> -> vector<32x128xf32>
    %c0_89 = arith.constant 0 : index
    %c448 = arith.constant 448 : index
    %248 = vector.load %arg3[%c0_89, %c448] : memref<32x1088xf32, #tpu.memory_space<vmem>>, vector<32x96xf32>
    %cst_90 = arith.constant dense<0.000000e+00> : vector<32x96xf32>
    %249 = tpu.matmul %27, %248, %cst_90 {dimension_numbers = #tpu.dot_dimension_numbers<[1], [0], [0], [1], [0, 0, 1, 1], [], []>} : vector<32x32xf32>, vector<32x96xf32>, vector<32x96xf32> -> vector<32x96xf32>
    %250 = vector.extract_strided_slice %249 {offsets = [0, 0], sizes = [32, 32], strides = [1, 1]} : vector<32x96xf32> to vector<32x32xf32>
    %251 = vector.extract_strided_slice %249 {offsets = [0, 32], sizes = [32, 32], strides = [1, 1]} : vector<32x96xf32> to vector<32x32xf32>
    %252 = vector.extract_strided_slice %249 {offsets = [0, 64], sizes = [32, 32], strides = [1, 1]} : vector<32x96xf32> to vector<32x32xf32>
    %c0_91 = arith.constant 0 : index
    %c544 = arith.constant 544 : index
    %253 = vector.load %arg3[%c0_91, %c544] : memref<32x1088xf32, #tpu.memory_space<vmem>>, vector<32x32xf32>
    %c13 = arith.constant 13 : index
    %c0_92 = arith.constant 0 : index
    %254 = vector.load %arg6[%c13, %c0_92] : memref<32x64xf32, #tpu.memory_space<vmem>>, vector<1x32xf32>
    %c14 = arith.constant 14 : index
    %c0_93 = arith.constant 0 : index
    %255 = vector.load %arg6[%c14, %c0_93] : memref<32x64xf32, #tpu.memory_space<vmem>>, vector<1x32xf32>
    %256 = vector.extract_strided_slice %250 {offsets = [0, 0], sizes = [32, 8], strides = [1, 1]} : vector<32x32xf32> to vector<32x8xf32>
    %257 = vector.extract_strided_slice %250 {offsets = [0, 8], sizes = [32, 8], strides = [1, 1]} : vector<32x32xf32> to vector<32x8xf32>
    %258 = vector.extract_strided_slice %250 {offsets = [0, 16], sizes = [32, 8], strides = [1, 1]} : vector<32x32xf32> to vector<32x8xf32>
    %259 = vector.extract_strided_slice %250 {offsets = [0, 24], sizes = [32, 8], strides = [1, 1]} : vector<32x32xf32> to vector<32x8xf32>
    %260 = tpu.concatenate %256, %257, %258, %259 in 0 : vector<32x8xf32>, vector<32x8xf32>, vector<32x8xf32>, vector<32x8xf32> -> vector<128x8xf32>
    %261 = vector.extract_strided_slice %251 {offsets = [0, 0], sizes = [32, 8], strides = [1, 1]} : vector<32x32xf32> to vector<32x8xf32>
    %262 = vector.extract_strided_slice %251 {offsets = [0, 8], sizes = [32, 8], strides = [1, 1]} : vector<32x32xf32> to vector<32x8xf32>
    %263 = vector.extract_strided_slice %251 {offsets = [0, 16], sizes = [32, 8], strides = [1, 1]} : vector<32x32xf32> to vector<32x8xf32>
    %264 = vector.extract_strided_slice %251 {offsets = [0, 24], sizes = [32, 8], strides = [1, 1]} : vector<32x32xf32> to vector<32x8xf32>
    %265 = tpu.concatenate %261, %262, %263, %264 in 0 : vector<32x8xf32>, vector<32x8xf32>, vector<32x8xf32>, vector<32x8xf32> -> vector<128x8xf32>
    %266 = vector.extract_strided_slice %252 {offsets = [0, 0], sizes = [32, 8], strides = [1, 1]} : vector<32x32xf32> to vector<32x8xf32>
    %267 = vector.extract_strided_slice %252 {offsets = [0, 8], sizes = [32, 8], strides = [1, 1]} : vector<32x32xf32> to vector<32x8xf32>
    %268 = vector.extract_strided_slice %252 {offsets = [0, 16], sizes = [32, 8], strides = [1, 1]} : vector<32x32xf32> to vector<32x8xf32>
    %269 = vector.extract_strided_slice %252 {offsets = [0, 24], sizes = [32, 8], strides = [1, 1]} : vector<32x32xf32> to vector<32x8xf32>
    %270 = tpu.concatenate %266, %267, %268, %269 in 0 : vector<32x8xf32>, vector<32x8xf32>, vector<32x8xf32>, vector<32x8xf32> -> vector<128x8xf32>
    %cst_94 = arith.constant dense<0.000000e+00> : vector<128x128xf32>
    %271 = tpu.matmul %260, %265, %cst_94 {dimension_numbers = #tpu.dot_dimension_numbers<[1], [1], [0], [0], [0, 0, 1, 0], [], []>} : vector<128x8xf32>, vector<128x8xf32>, vector<128x128xf32> -> vector<128x128xf32>
    %272 = arith.addf %271, %2 : vector<128x128xf32>
    %cst_95 = arith.constant dense<0xFF800000> : vector<128xf32>
    %273 = vector.multi_reduction <maximumf>, %272, %cst_95 [1] : vector<128x128xf32> to vector<128xf32>
    %274 = vector.shape_cast %273 : vector<128xf32> to vector<128x1xf32>
    %275 = vector.broadcast %274 : vector<128x1xf32> to vector<128x128xf32>
    %276 = arith.subf %272, %275 : vector<128x128xf32>
    %277 = math.exp %276 : vector<128x128xf32>
    %cst_96 = arith.constant dense<0.000000e+00> : vector<128xf32>
    %278 = vector.multi_reduction <add>, %277, %cst_96 [1] : vector<128x128xf32> to vector<128xf32>
    %279 = vector.shape_cast %278 : vector<128xf32> to vector<128x1xf32>
    %280 = tpu.reciprocal %279 {approx = true} : vector<128x1xf32> -> vector<128x1xf32>
    %281 = vector.broadcast %280 : vector<128x1xf32> to vector<128x128xf32>
    %282 = arith.mulf %277, %281 : vector<128x128xf32>
    %cst_97 = arith.constant dense<0.000000e+00> : vector<128x8xf32>
    %283 = tpu.matmul %282, %270, %cst_97 {dimension_numbers = #tpu.dot_dimension_numbers<[1], [0], [0], [1], [0, 0, 1, 1], [], []>} : vector<128x128xf32>, vector<128x8xf32>, vector<128x8xf32> -> vector<128x8xf32>
    %284 = vector.extract_strided_slice %283 {offsets = [0, 0], sizes = [32, 8], strides = [1, 1]} : vector<128x8xf32> to vector<32x8xf32>
    %285 = vector.extract_strided_slice %283 {offsets = [32, 0], sizes = [32, 8], strides = [1, 1]} : vector<128x8xf32> to vector<32x8xf32>
    %286 = vector.extract_strided_slice %283 {offsets = [64, 0], sizes = [32, 8], strides = [1, 1]} : vector<128x8xf32> to vector<32x8xf32>
    %287 = vector.extract_strided_slice %283 {offsets = [96, 0], sizes = [32, 8], strides = [1, 1]} : vector<128x8xf32> to vector<32x8xf32>
    %288 = tpu.concatenate %284, %285, %286, %287 in 1 : vector<32x8xf32>, vector<32x8xf32>, vector<32x8xf32>, vector<32x8xf32> -> vector<32x32xf32>
    %cst_98 = arith.constant dense<0.000000e+00> : vector<32x32xf32>
    %289 = tpu.matmul %288, %253, %cst_98 {dimension_numbers = #tpu.dot_dimension_numbers<[1], [0], [0], [1], [0, 0, 1, 1], [], []>} : vector<32x32xf32>, vector<32x32xf32>, vector<32x32xf32> -> vector<32x32xf32>
    %290 = arith.addf %27, %289 : vector<32x32xf32>
    %cst_99 = arith.constant dense<0.000000e+00> : vector<32x1xf32>
    %291 = tpu.matmul %290, %0, %cst_99 {dimension_numbers = #tpu.dot_dimension_numbers<[1], [0], [0], [1], [0, 0, 1, 1], [], []>} : vector<32x32xf32>, vector<32x1xf32>, vector<32x1xf32> -> vector<32x1xf32>
    %292 = arith.mulf %290, %290 : vector<32x32xf32>
    %cst_100 = arith.constant dense<0.000000e+00> : vector<32x1xf32>
    %293 = tpu.matmul %292, %0, %cst_100 {dimension_numbers = #tpu.dot_dimension_numbers<[1], [0], [0], [1], [0, 0, 1, 1], [], []>} : vector<32x32xf32>, vector<32x1xf32>, vector<32x1xf32> -> vector<32x1xf32>
    %294 = arith.mulf %291, %291 : vector<32x1xf32>
    %295 = arith.subf %293, %294 : vector<32x1xf32>
    %cst_101 = arith.constant 0.000000e+00 : f32
    %296 = vector.broadcast %cst_101 : f32 to vector<32x1xf32>
    %297 = arith.maximumf %295, %296 : vector<32x1xf32>
    %298 = vector.broadcast %291 : vector<32x1xf32> to vector<32x32xf32>
    %299 = arith.subf %290, %298 : vector<32x32xf32>
    %cst_102 = arith.constant 9.99999997E-7 : f32
    %300 = vector.broadcast %cst_102 : f32 to vector<32x1xf32>
    %301 = arith.addf %297, %300 : vector<32x1xf32>
    %302 = math.rsqrt %301 : vector<32x1xf32>
    %303 = vector.broadcast %302 : vector<32x1xf32> to vector<32x32xf32>
    %304 = arith.mulf %299, %303 : vector<32x32xf32>
    %305 = vector.broadcast %254 : vector<1x32xf32> to vector<32x32xf32>
    %306 = arith.mulf %304, %305 : vector<32x32xf32>
    %307 = vector.broadcast %255 : vector<1x32xf32> to vector<32x32xf32>
    %308 = arith.addf %306, %307 : vector<32x32xf32>
    %c0_103 = arith.constant 0 : index
    %c576 = arith.constant 576 : index
    %309 = vector.load %arg3[%c0_103, %c576] : memref<32x1088xf32, #tpu.memory_space<vmem>>, vector<32x32xf32>
    %cst_104 = arith.constant dense<0.000000e+00> : vector<32x32xf32>
    %310 = tpu.matmul %308, %309, %cst_104 {dimension_numbers = #tpu.dot_dimension_numbers<[1], [0], [0], [1], [0, 0, 1, 1], [], []>} : vector<32x32xf32>, vector<32x32xf32>, vector<32x32xf32> -> vector<32x32xf32>
    %311 = vector.extract_strided_slice %247 {offsets = [0, 0], sizes = [32, 32], strides = [1, 1]} : vector<32x128xf32> to vector<32x32xf32>
    %312 = vector.extract_strided_slice %247 {offsets = [0, 32], sizes = [32, 32], strides = [1, 1]} : vector<32x128xf32> to vector<32x32xf32>
    %c0_105 = arith.constant 0 : index
    %c608 = arith.constant 608 : index
    %313 = vector.load %arg3[%c0_105, %c608] : memref<32x1088xf32, #tpu.memory_space<vmem>>, vector<32x32xf32>
    %c15 = arith.constant 15 : index
    %c0_106 = arith.constant 0 : index
    %314 = vector.load %arg6[%c15, %c0_106] : memref<32x64xf32, #tpu.memory_space<vmem>>, vector<1x32xf32>
    %c16 = arith.constant 16 : index
    %c0_107 = arith.constant 0 : index
    %315 = vector.load %arg6[%c16, %c0_107] : memref<32x64xf32, #tpu.memory_space<vmem>>, vector<1x32xf32>
    %316 = vector.extract_strided_slice %310 {offsets = [0, 0], sizes = [32, 8], strides = [1, 1]} : vector<32x32xf32> to vector<32x8xf32>
    %317 = vector.extract_strided_slice %310 {offsets = [0, 8], sizes = [32, 8], strides = [1, 1]} : vector<32x32xf32> to vector<32x8xf32>
    %318 = vector.extract_strided_slice %310 {offsets = [0, 16], sizes = [32, 8], strides = [1, 1]} : vector<32x32xf32> to vector<32x8xf32>
    %319 = vector.extract_strided_slice %310 {offsets = [0, 24], sizes = [32, 8], strides = [1, 1]} : vector<32x32xf32> to vector<32x8xf32>
    %320 = tpu.concatenate %316, %317, %318, %319 in 0 : vector<32x8xf32>, vector<32x8xf32>, vector<32x8xf32>, vector<32x8xf32> -> vector<128x8xf32>
    %321 = vector.extract_strided_slice %311 {offsets = [0, 0], sizes = [32, 8], strides = [1, 1]} : vector<32x32xf32> to vector<32x8xf32>
    %322 = vector.extract_strided_slice %311 {offsets = [0, 8], sizes = [32, 8], strides = [1, 1]} : vector<32x32xf32> to vector<32x8xf32>
    %323 = vector.extract_strided_slice %311 {offsets = [0, 16], sizes = [32, 8], strides = [1, 1]} : vector<32x32xf32> to vector<32x8xf32>
    %324 = vector.extract_strided_slice %311 {offsets = [0, 24], sizes = [32, 8], strides = [1, 1]} : vector<32x32xf32> to vector<32x8xf32>
    %325 = tpu.concatenate %321, %322, %323, %324 in 0 : vector<32x8xf32>, vector<32x8xf32>, vector<32x8xf32>, vector<32x8xf32> -> vector<128x8xf32>
    %326 = vector.extract_strided_slice %312 {offsets = [0, 0], sizes = [32, 8], strides = [1, 1]} : vector<32x32xf32> to vector<32x8xf32>
    %327 = vector.extract_strided_slice %312 {offsets = [0, 8], sizes = [32, 8], strides = [1, 1]} : vector<32x32xf32> to vector<32x8xf32>
    %328 = vector.extract_strided_slice %312 {offsets = [0, 16], sizes = [32, 8], strides = [1, 1]} : vector<32x32xf32> to vector<32x8xf32>
    %329 = vector.extract_strided_slice %312 {offsets = [0, 24], sizes = [32, 8], strides = [1, 1]} : vector<32x32xf32> to vector<32x8xf32>
    %330 = tpu.concatenate %326, %327, %328, %329 in 0 : vector<32x8xf32>, vector<32x8xf32>, vector<32x8xf32>, vector<32x8xf32> -> vector<128x8xf32>
    %cst_108 = arith.constant dense<0.000000e+00> : vector<128x128xf32>
    %331 = tpu.matmul %320, %325, %cst_108 {dimension_numbers = #tpu.dot_dimension_numbers<[1], [1], [0], [0], [0, 0, 1, 0], [], []>} : vector<128x8xf32>, vector<128x8xf32>, vector<128x128xf32> -> vector<128x128xf32>
    %332 = arith.addf %331, %1 : vector<128x128xf32>
    %cst_109 = arith.constant dense<0xFF800000> : vector<128xf32>
    %333 = vector.multi_reduction <maximumf>, %332, %cst_109 [1] : vector<128x128xf32> to vector<128xf32>
    %334 = vector.shape_cast %333 : vector<128xf32> to vector<128x1xf32>
    %335 = vector.broadcast %334 : vector<128x1xf32> to vector<128x128xf32>
    %336 = arith.subf %332, %335 : vector<128x128xf32>
    %337 = math.exp %336 : vector<128x128xf32>
    %cst_110 = arith.constant dense<0.000000e+00> : vector<128xf32>
    %338 = vector.multi_reduction <add>, %337, %cst_110 [1] : vector<128x128xf32> to vector<128xf32>
    %339 = vector.shape_cast %338 : vector<128xf32> to vector<128x1xf32>
    %340 = tpu.reciprocal %339 {approx = true} : vector<128x1xf32> -> vector<128x1xf32>
    %341 = vector.broadcast %340 : vector<128x1xf32> to vector<128x128xf32>
    %342 = arith.mulf %337, %341 : vector<128x128xf32>
    %cst_111 = arith.constant dense<0.000000e+00> : vector<128x8xf32>
    %343 = tpu.matmul %342, %330, %cst_111 {dimension_numbers = #tpu.dot_dimension_numbers<[1], [0], [0], [1], [0, 0, 1, 1], [], []>} : vector<128x128xf32>, vector<128x8xf32>, vector<128x8xf32> -> vector<128x8xf32>
    %344 = vector.extract_strided_slice %343 {offsets = [0, 0], sizes = [32, 8], strides = [1, 1]} : vector<128x8xf32> to vector<32x8xf32>
    %345 = vector.extract_strided_slice %343 {offsets = [32, 0], sizes = [32, 8], strides = [1, 1]} : vector<128x8xf32> to vector<32x8xf32>
    %346 = vector.extract_strided_slice %343 {offsets = [64, 0], sizes = [32, 8], strides = [1, 1]} : vector<128x8xf32> to vector<32x8xf32>
    %347 = vector.extract_strided_slice %343 {offsets = [96, 0], sizes = [32, 8], strides = [1, 1]} : vector<128x8xf32> to vector<32x8xf32>
    %348 = tpu.concatenate %344, %345, %346, %347 in 1 : vector<32x8xf32>, vector<32x8xf32>, vector<32x8xf32>, vector<32x8xf32> -> vector<32x32xf32>
    %cst_112 = arith.constant dense<0.000000e+00> : vector<32x32xf32>
    %349 = tpu.matmul %348, %313, %cst_112 {dimension_numbers = #tpu.dot_dimension_numbers<[1], [0], [0], [1], [0, 0, 1, 1], [], []>} : vector<32x32xf32>, vector<32x32xf32>, vector<32x32xf32> -> vector<32x32xf32>
    %350 = arith.addf %308, %349 : vector<32x32xf32>
    %cst_113 = arith.constant dense<0.000000e+00> : vector<32x1xf32>
    %351 = tpu.matmul %350, %0, %cst_113 {dimension_numbers = #tpu.dot_dimension_numbers<[1], [0], [0], [1], [0, 0, 1, 1], [], []>} : vector<32x32xf32>, vector<32x1xf32>, vector<32x1xf32> -> vector<32x1xf32>
    %352 = arith.mulf %350, %350 : vector<32x32xf32>
    %cst_114 = arith.constant dense<0.000000e+00> : vector<32x1xf32>
    %353 = tpu.matmul %352, %0, %cst_114 {dimension_numbers = #tpu.dot_dimension_numbers<[1], [0], [0], [1], [0, 0, 1, 1], [], []>} : vector<32x32xf32>, vector<32x1xf32>, vector<32x1xf32> -> vector<32x1xf32>
    %354 = arith.mulf %351, %351 : vector<32x1xf32>
    %355 = arith.subf %353, %354 : vector<32x1xf32>
    %cst_115 = arith.constant 0.000000e+00 : f32
    %356 = vector.broadcast %cst_115 : f32 to vector<32x1xf32>
    %357 = arith.maximumf %355, %356 : vector<32x1xf32>
    %358 = vector.broadcast %351 : vector<32x1xf32> to vector<32x32xf32>
    %359 = arith.subf %350, %358 : vector<32x32xf32>
    %cst_116 = arith.constant 9.99999997E-7 : f32
    %360 = vector.broadcast %cst_116 : f32 to vector<32x1xf32>
    %361 = arith.addf %357, %360 : vector<32x1xf32>
    %362 = math.rsqrt %361 : vector<32x1xf32>
    %363 = vector.broadcast %362 : vector<32x1xf32> to vector<32x32xf32>
    %364 = arith.mulf %359, %363 : vector<32x32xf32>
    %365 = vector.broadcast %314 : vector<1x32xf32> to vector<32x32xf32>
    %366 = arith.mulf %364, %365 : vector<32x32xf32>
    %367 = vector.broadcast %315 : vector<1x32xf32> to vector<32x32xf32>
    %368 = arith.addf %366, %367 : vector<32x32xf32>
    %c0_117 = arith.constant 0 : index
    %c640 = arith.constant 640 : index
    %369 = vector.load %arg3[%c0_117, %c640] : memref<32x1088xf32, #tpu.memory_space<vmem>>, vector<32x64xf32>
    %c17 = arith.constant 17 : index
    %c0_118 = arith.constant 0 : index
    %370 = vector.load %arg6[%c17, %c0_118] : memref<32x64xf32, #tpu.memory_space<vmem>>, vector<1x64xf32>
    %c0_119 = arith.constant 0 : index
    %c64_120 = arith.constant 64 : index
    %371 = vector.load %arg4[%c0_119, %c64_120] : memref<64x128xf32, #tpu.memory_space<vmem>>, vector<64x32xf32>
    %c18 = arith.constant 18 : index
    %c0_121 = arith.constant 0 : index
    %372 = vector.load %arg6[%c18, %c0_121] : memref<32x64xf32, #tpu.memory_space<vmem>>, vector<1x32xf32>
    %c19 = arith.constant 19 : index
    %c0_122 = arith.constant 0 : index
    %373 = vector.load %arg6[%c19, %c0_122] : memref<32x64xf32, #tpu.memory_space<vmem>>, vector<1x32xf32>
    %c20 = arith.constant 20 : index
    %c0_123 = arith.constant 0 : index
    %374 = vector.load %arg6[%c20, %c0_123] : memref<32x64xf32, #tpu.memory_space<vmem>>, vector<1x32xf32>
    %cst_124 = arith.constant dense<0.000000e+00> : vector<32x64xf32>
    %375 = tpu.matmul %368, %369, %cst_124 {dimension_numbers = #tpu.dot_dimension_numbers<[1], [0], [0], [1], [0, 0, 1, 1], [], []>} : vector<32x32xf32>, vector<32x64xf32>, vector<32x64xf32> -> vector<32x64xf32>
    %376 = vector.broadcast %370 : vector<1x64xf32> to vector<32x64xf32>
    %377 = arith.addf %375, %376 : vector<32x64xf32>
    %cst_125 = arith.constant 0.000000e+00 : f32
    %378 = vector.broadcast %cst_125 : f32 to vector<32x64xf32>
    %379 = arith.maximumf %377, %378 : vector<32x64xf32>
    %cst_126 = arith.constant dense<0.000000e+00> : vector<32x32xf32>
    %380 = tpu.matmul %379, %371, %cst_126 {dimension_numbers = #tpu.dot_dimension_numbers<[1], [0], [0], [1], [0, 0, 1, 1], [], []>} : vector<32x64xf32>, vector<64x32xf32>, vector<32x32xf32> -> vector<32x32xf32>
    %381 = vector.broadcast %372 : vector<1x32xf32> to vector<32x32xf32>
    %382 = arith.addf %380, %381 : vector<32x32xf32>
    %383 = arith.addf %382, %368 : vector<32x32xf32>
    %cst_127 = arith.constant dense<0.000000e+00> : vector<32x1xf32>
    %384 = tpu.matmul %383, %0, %cst_127 {dimension_numbers = #tpu.dot_dimension_numbers<[1], [0], [0], [1], [0, 0, 1, 1], [], []>} : vector<32x32xf32>, vector<32x1xf32>, vector<32x1xf32> -> vector<32x1xf32>
    %385 = arith.mulf %383, %383 : vector<32x32xf32>
    %cst_128 = arith.constant dense<0.000000e+00> : vector<32x1xf32>
    %386 = tpu.matmul %385, %0, %cst_128 {dimension_numbers = #tpu.dot_dimension_numbers<[1], [0], [0], [1], [0, 0, 1, 1], [], []>} : vector<32x32xf32>, vector<32x1xf32>, vector<32x1xf32> -> vector<32x1xf32>
    %387 = arith.mulf %384, %384 : vector<32x1xf32>
    %388 = arith.subf %386, %387 : vector<32x1xf32>
    %cst_129 = arith.constant 0.000000e+00 : f32
    %389 = vector.broadcast %cst_129 : f32 to vector<32x1xf32>
    %390 = arith.maximumf %388, %389 : vector<32x1xf32>
    %391 = vector.broadcast %384 : vector<32x1xf32> to vector<32x32xf32>
    %392 = arith.subf %383, %391 : vector<32x32xf32>
    %cst_130 = arith.constant 9.99999997E-7 : f32
    %393 = vector.broadcast %cst_130 : f32 to vector<32x1xf32>
    %394 = arith.addf %390, %393 : vector<32x1xf32>
    %395 = math.rsqrt %394 : vector<32x1xf32>
    %396 = vector.broadcast %395 : vector<32x1xf32> to vector<32x32xf32>
    %397 = arith.mulf %392, %396 : vector<32x32xf32>
    %398 = vector.broadcast %373 : vector<1x32xf32> to vector<32x32xf32>
    %399 = arith.mulf %397, %398 : vector<32x32xf32>
    %400 = vector.broadcast %374 : vector<1x32xf32> to vector<32x32xf32>
    %401 = arith.addf %399, %400 : vector<32x32xf32>
    %c0_131 = arith.constant 0 : index
    %c704 = arith.constant 704 : index
    %402 = vector.load %arg3[%c0_131, %c704] : memref<32x1088xf32, #tpu.memory_space<vmem>>, vector<32x96xf32>
    %cst_132 = arith.constant dense<0.000000e+00> : vector<32x96xf32>
    %403 = tpu.matmul %401, %402, %cst_132 {dimension_numbers = #tpu.dot_dimension_numbers<[1], [0], [0], [1], [0, 0, 1, 1], [], []>} : vector<32x32xf32>, vector<32x96xf32>, vector<32x96xf32> -> vector<32x96xf32>
    %404 = vector.extract_strided_slice %403 {offsets = [0, 0], sizes = [32, 32], strides = [1, 1]} : vector<32x96xf32> to vector<32x32xf32>
    %405 = vector.extract_strided_slice %403 {offsets = [0, 32], sizes = [32, 32], strides = [1, 1]} : vector<32x96xf32> to vector<32x32xf32>
    %406 = vector.extract_strided_slice %403 {offsets = [0, 64], sizes = [32, 32], strides = [1, 1]} : vector<32x96xf32> to vector<32x32xf32>
    %c0_133 = arith.constant 0 : index
    %c800 = arith.constant 800 : index
    %407 = vector.load %arg3[%c0_133, %c800] : memref<32x1088xf32, #tpu.memory_space<vmem>>, vector<32x32xf32>
    %c21 = arith.constant 21 : index
    %c0_134 = arith.constant 0 : index
    %408 = vector.load %arg6[%c21, %c0_134] : memref<32x64xf32, #tpu.memory_space<vmem>>, vector<1x32xf32>
    %c22 = arith.constant 22 : index
    %c0_135 = arith.constant 0 : index
    %409 = vector.load %arg6[%c22, %c0_135] : memref<32x64xf32, #tpu.memory_space<vmem>>, vector<1x32xf32>
    %410 = vector.extract_strided_slice %404 {offsets = [0, 0], sizes = [32, 8], strides = [1, 1]} : vector<32x32xf32> to vector<32x8xf32>
    %411 = vector.extract_strided_slice %404 {offsets = [0, 8], sizes = [32, 8], strides = [1, 1]} : vector<32x32xf32> to vector<32x8xf32>
    %412 = vector.extract_strided_slice %404 {offsets = [0, 16], sizes = [32, 8], strides = [1, 1]} : vector<32x32xf32> to vector<32x8xf32>
    %413 = vector.extract_strided_slice %404 {offsets = [0, 24], sizes = [32, 8], strides = [1, 1]} : vector<32x32xf32> to vector<32x8xf32>
    %414 = tpu.concatenate %410, %411, %412, %413 in 0 : vector<32x8xf32>, vector<32x8xf32>, vector<32x8xf32>, vector<32x8xf32> -> vector<128x8xf32>
    %415 = vector.extract_strided_slice %405 {offsets = [0, 0], sizes = [32, 8], strides = [1, 1]} : vector<32x32xf32> to vector<32x8xf32>
    %416 = vector.extract_strided_slice %405 {offsets = [0, 8], sizes = [32, 8], strides = [1, 1]} : vector<32x32xf32> to vector<32x8xf32>
    %417 = vector.extract_strided_slice %405 {offsets = [0, 16], sizes = [32, 8], strides = [1, 1]} : vector<32x32xf32> to vector<32x8xf32>
    %418 = vector.extract_strided_slice %405 {offsets = [0, 24], sizes = [32, 8], strides = [1, 1]} : vector<32x32xf32> to vector<32x8xf32>
    %419 = tpu.concatenate %415, %416, %417, %418 in 0 : vector<32x8xf32>, vector<32x8xf32>, vector<32x8xf32>, vector<32x8xf32> -> vector<128x8xf32>
    %420 = vector.extract_strided_slice %406 {offsets = [0, 0], sizes = [32, 8], strides = [1, 1]} : vector<32x32xf32> to vector<32x8xf32>
    %421 = vector.extract_strided_slice %406 {offsets = [0, 8], sizes = [32, 8], strides = [1, 1]} : vector<32x32xf32> to vector<32x8xf32>
    %422 = vector.extract_strided_slice %406 {offsets = [0, 16], sizes = [32, 8], strides = [1, 1]} : vector<32x32xf32> to vector<32x8xf32>
    %423 = vector.extract_strided_slice %406 {offsets = [0, 24], sizes = [32, 8], strides = [1, 1]} : vector<32x32xf32> to vector<32x8xf32>
    %424 = tpu.concatenate %420, %421, %422, %423 in 0 : vector<32x8xf32>, vector<32x8xf32>, vector<32x8xf32>, vector<32x8xf32> -> vector<128x8xf32>
    %cst_136 = arith.constant dense<0.000000e+00> : vector<128x128xf32>
    %425 = tpu.matmul %414, %419, %cst_136 {dimension_numbers = #tpu.dot_dimension_numbers<[1], [1], [0], [0], [0, 0, 1, 0], [], []>} : vector<128x8xf32>, vector<128x8xf32>, vector<128x128xf32> -> vector<128x128xf32>
    %426 = arith.addf %425, %2 : vector<128x128xf32>
    %cst_137 = arith.constant dense<0xFF800000> : vector<128xf32>
    %427 = vector.multi_reduction <maximumf>, %426, %cst_137 [1] : vector<128x128xf32> to vector<128xf32>
    %428 = vector.shape_cast %427 : vector<128xf32> to vector<128x1xf32>
    %429 = vector.broadcast %428 : vector<128x1xf32> to vector<128x128xf32>
    %430 = arith.subf %426, %429 : vector<128x128xf32>
    %431 = math.exp %430 : vector<128x128xf32>
    %cst_138 = arith.constant dense<0.000000e+00> : vector<128xf32>
    %432 = vector.multi_reduction <add>, %431, %cst_138 [1] : vector<128x128xf32> to vector<128xf32>
    %433 = vector.shape_cast %432 : vector<128xf32> to vector<128x1xf32>
    %434 = tpu.reciprocal %433 {approx = true} : vector<128x1xf32> -> vector<128x1xf32>
    %435 = vector.broadcast %434 : vector<128x1xf32> to vector<128x128xf32>
    %436 = arith.mulf %431, %435 : vector<128x128xf32>
    %cst_139 = arith.constant dense<0.000000e+00> : vector<128x8xf32>
    %437 = tpu.matmul %436, %424, %cst_139 {dimension_numbers = #tpu.dot_dimension_numbers<[1], [0], [0], [1], [0, 0, 1, 1], [], []>} : vector<128x128xf32>, vector<128x8xf32>, vector<128x8xf32> -> vector<128x8xf32>
    %438 = vector.extract_strided_slice %437 {offsets = [0, 0], sizes = [32, 8], strides = [1, 1]} : vector<128x8xf32> to vector<32x8xf32>
    %439 = vector.extract_strided_slice %437 {offsets = [32, 0], sizes = [32, 8], strides = [1, 1]} : vector<128x8xf32> to vector<32x8xf32>
    %440 = vector.extract_strided_slice %437 {offsets = [64, 0], sizes = [32, 8], strides = [1, 1]} : vector<128x8xf32> to vector<32x8xf32>
    %441 = vector.extract_strided_slice %437 {offsets = [96, 0], sizes = [32, 8], strides = [1, 1]} : vector<128x8xf32> to vector<32x8xf32>
    %442 = tpu.concatenate %438, %439, %440, %441 in 1 : vector<32x8xf32>, vector<32x8xf32>, vector<32x8xf32>, vector<32x8xf32> -> vector<32x32xf32>
    %cst_140 = arith.constant dense<0.000000e+00> : vector<32x32xf32>
    %443 = tpu.matmul %442, %407, %cst_140 {dimension_numbers = #tpu.dot_dimension_numbers<[1], [0], [0], [1], [0, 0, 1, 1], [], []>} : vector<32x32xf32>, vector<32x32xf32>, vector<32x32xf32> -> vector<32x32xf32>
    %444 = arith.addf %401, %443 : vector<32x32xf32>
    %cst_141 = arith.constant dense<0.000000e+00> : vector<32x1xf32>
    %445 = tpu.matmul %444, %0, %cst_141 {dimension_numbers = #tpu.dot_dimension_numbers<[1], [0], [0], [1], [0, 0, 1, 1], [], []>} : vector<32x32xf32>, vector<32x1xf32>, vector<32x1xf32> -> vector<32x1xf32>
    %446 = arith.mulf %444, %444 : vector<32x32xf32>
    %cst_142 = arith.constant dense<0.000000e+00> : vector<32x1xf32>
    %447 = tpu.matmul %446, %0, %cst_142 {dimension_numbers = #tpu.dot_dimension_numbers<[1], [0], [0], [1], [0, 0, 1, 1], [], []>} : vector<32x32xf32>, vector<32x1xf32>, vector<32x1xf32> -> vector<32x1xf32>
    %448 = arith.mulf %445, %445 : vector<32x1xf32>
    %449 = arith.subf %447, %448 : vector<32x1xf32>
    %cst_143 = arith.constant 0.000000e+00 : f32
    %450 = vector.broadcast %cst_143 : f32 to vector<32x1xf32>
    %451 = arith.maximumf %449, %450 : vector<32x1xf32>
    %452 = vector.broadcast %445 : vector<32x1xf32> to vector<32x32xf32>
    %453 = arith.subf %444, %452 : vector<32x32xf32>
    %cst_144 = arith.constant 9.99999997E-7 : f32
    %454 = vector.broadcast %cst_144 : f32 to vector<32x1xf32>
    %455 = arith.addf %451, %454 : vector<32x1xf32>
    %456 = math.rsqrt %455 : vector<32x1xf32>
    %457 = vector.broadcast %456 : vector<32x1xf32> to vector<32x32xf32>
    %458 = arith.mulf %453, %457 : vector<32x32xf32>
    %459 = vector.broadcast %408 : vector<1x32xf32> to vector<32x32xf32>
    %460 = arith.mulf %458, %459 : vector<32x32xf32>
    %461 = vector.broadcast %409 : vector<1x32xf32> to vector<32x32xf32>
    %462 = arith.addf %460, %461 : vector<32x32xf32>
    %c0_145 = arith.constant 0 : index
    %c832 = arith.constant 832 : index
    %463 = vector.load %arg3[%c0_145, %c832] : memref<32x1088xf32, #tpu.memory_space<vmem>>, vector<32x32xf32>
    %cst_146 = arith.constant dense<0.000000e+00> : vector<32x32xf32>
    %464 = tpu.matmul %462, %463, %cst_146 {dimension_numbers = #tpu.dot_dimension_numbers<[1], [0], [0], [1], [0, 0, 1, 1], [], []>} : vector<32x32xf32>, vector<32x32xf32>, vector<32x32xf32> -> vector<32x32xf32>
    %465 = vector.extract_strided_slice %247 {offsets = [0, 64], sizes = [32, 32], strides = [1, 1]} : vector<32x128xf32> to vector<32x32xf32>
    %466 = vector.extract_strided_slice %247 {offsets = [0, 96], sizes = [32, 32], strides = [1, 1]} : vector<32x128xf32> to vector<32x32xf32>
    %c0_147 = arith.constant 0 : index
    %c864 = arith.constant 864 : index
    %467 = vector.load %arg3[%c0_147, %c864] : memref<32x1088xf32, #tpu.memory_space<vmem>>, vector<32x32xf32>
    %c23 = arith.constant 23 : index
    %c0_148 = arith.constant 0 : index
    %468 = vector.load %arg6[%c23, %c0_148] : memref<32x64xf32, #tpu.memory_space<vmem>>, vector<1x32xf32>
    %c24 = arith.constant 24 : index
    %c0_149 = arith.constant 0 : index
    %469 = vector.load %arg6[%c24, %c0_149] : memref<32x64xf32, #tpu.memory_space<vmem>>, vector<1x32xf32>
    %470 = vector.extract_strided_slice %464 {offsets = [0, 0], sizes = [32, 8], strides = [1, 1]} : vector<32x32xf32> to vector<32x8xf32>
    %471 = vector.extract_strided_slice %464 {offsets = [0, 8], sizes = [32, 8], strides = [1, 1]} : vector<32x32xf32> to vector<32x8xf32>
    %472 = vector.extract_strided_slice %464 {offsets = [0, 16], sizes = [32, 8], strides = [1, 1]} : vector<32x32xf32> to vector<32x8xf32>
    %473 = vector.extract_strided_slice %464 {offsets = [0, 24], sizes = [32, 8], strides = [1, 1]} : vector<32x32xf32> to vector<32x8xf32>
    %474 = tpu.concatenate %470, %471, %472, %473 in 0 : vector<32x8xf32>, vector<32x8xf32>, vector<32x8xf32>, vector<32x8xf32> -> vector<128x8xf32>
    %475 = vector.extract_strided_slice %465 {offsets = [0, 0], sizes = [32, 8], strides = [1, 1]} : vector<32x32xf32> to vector<32x8xf32>
    %476 = vector.extract_strided_slice %465 {offsets = [0, 8], sizes = [32, 8], strides = [1, 1]} : vector<32x32xf32> to vector<32x8xf32>
    %477 = vector.extract_strided_slice %465 {offsets = [0, 16], sizes = [32, 8], strides = [1, 1]} : vector<32x32xf32> to vector<32x8xf32>
    %478 = vector.extract_strided_slice %465 {offsets = [0, 24], sizes = [32, 8], strides = [1, 1]} : vector<32x32xf32> to vector<32x8xf32>
    %479 = tpu.concatenate %475, %476, %477, %478 in 0 : vector<32x8xf32>, vector<32x8xf32>, vector<32x8xf32>, vector<32x8xf32> -> vector<128x8xf32>
    %480 = vector.extract_strided_slice %466 {offsets = [0, 0], sizes = [32, 8], strides = [1, 1]} : vector<32x32xf32> to vector<32x8xf32>
    %481 = vector.extract_strided_slice %466 {offsets = [0, 8], sizes = [32, 8], strides = [1, 1]} : vector<32x32xf32> to vector<32x8xf32>
    %482 = vector.extract_strided_slice %466 {offsets = [0, 16], sizes = [32, 8], strides = [1, 1]} : vector<32x32xf32> to vector<32x8xf32>
    %483 = vector.extract_strided_slice %466 {offsets = [0, 24], sizes = [32, 8], strides = [1, 1]} : vector<32x32xf32> to vector<32x8xf32>
    %484 = tpu.concatenate %480, %481, %482, %483 in 0 : vector<32x8xf32>, vector<32x8xf32>, vector<32x8xf32>, vector<32x8xf32> -> vector<128x8xf32>
    %cst_150 = arith.constant dense<0.000000e+00> : vector<128x128xf32>
    %485 = tpu.matmul %474, %479, %cst_150 {dimension_numbers = #tpu.dot_dimension_numbers<[1], [1], [0], [0], [0, 0, 1, 0], [], []>} : vector<128x8xf32>, vector<128x8xf32>, vector<128x128xf32> -> vector<128x128xf32>
    %486 = arith.addf %485, %1 : vector<128x128xf32>
    %cst_151 = arith.constant dense<0xFF800000> : vector<128xf32>
    %487 = vector.multi_reduction <maximumf>, %486, %cst_151 [1] : vector<128x128xf32> to vector<128xf32>
    %488 = vector.shape_cast %487 : vector<128xf32> to vector<128x1xf32>
    %489 = vector.broadcast %488 : vector<128x1xf32> to vector<128x128xf32>
    %490 = arith.subf %486, %489 : vector<128x128xf32>
    %491 = math.exp %490 : vector<128x128xf32>
    %cst_152 = arith.constant dense<0.000000e+00> : vector<128xf32>
    %492 = vector.multi_reduction <add>, %491, %cst_152 [1] : vector<128x128xf32> to vector<128xf32>
    %493 = vector.shape_cast %492 : vector<128xf32> to vector<128x1xf32>
    %494 = tpu.reciprocal %493 {approx = true} : vector<128x1xf32> -> vector<128x1xf32>
    %495 = vector.broadcast %494 : vector<128x1xf32> to vector<128x128xf32>
    %496 = arith.mulf %491, %495 : vector<128x128xf32>
    %cst_153 = arith.constant dense<0.000000e+00> : vector<128x8xf32>
    %497 = tpu.matmul %496, %484, %cst_153 {dimension_numbers = #tpu.dot_dimension_numbers<[1], [0], [0], [1], [0, 0, 1, 1], [], []>} : vector<128x128xf32>, vector<128x8xf32>, vector<128x8xf32> -> vector<128x8xf32>
    %498 = vector.extract_strided_slice %497 {offsets = [0, 0], sizes = [32, 8], strides = [1, 1]} : vector<128x8xf32> to vector<32x8xf32>
    %499 = vector.extract_strided_slice %497 {offsets = [32, 0], sizes = [32, 8], strides = [1, 1]} : vector<128x8xf32> to vector<32x8xf32>
    %500 = vector.extract_strided_slice %497 {offsets = [64, 0], sizes = [32, 8], strides = [1, 1]} : vector<128x8xf32> to vector<32x8xf32>
    %501 = vector.extract_strided_slice %497 {offsets = [96, 0], sizes = [32, 8], strides = [1, 1]} : vector<128x8xf32> to vector<32x8xf32>
    %502 = tpu.concatenate %498, %499, %500, %501 in 1 : vector<32x8xf32>, vector<32x8xf32>, vector<32x8xf32>, vector<32x8xf32> -> vector<32x32xf32>
    %cst_154 = arith.constant dense<0.000000e+00> : vector<32x32xf32>
    %503 = tpu.matmul %502, %467, %cst_154 {dimension_numbers = #tpu.dot_dimension_numbers<[1], [0], [0], [1], [0, 0, 1, 1], [], []>} : vector<32x32xf32>, vector<32x32xf32>, vector<32x32xf32> -> vector<32x32xf32>
    %504 = arith.addf %462, %503 : vector<32x32xf32>
    %cst_155 = arith.constant dense<0.000000e+00> : vector<32x1xf32>
    %505 = tpu.matmul %504, %0, %cst_155 {dimension_numbers = #tpu.dot_dimension_numbers<[1], [0], [0], [1], [0, 0, 1, 1], [], []>} : vector<32x32xf32>, vector<32x1xf32>, vector<32x1xf32> -> vector<32x1xf32>
    %506 = arith.mulf %504, %504 : vector<32x32xf32>
    %cst_156 = arith.constant dense<0.000000e+00> : vector<32x1xf32>
    %507 = tpu.matmul %506, %0, %cst_156 {dimension_numbers = #tpu.dot_dimension_numbers<[1], [0], [0], [1], [0, 0, 1, 1], [], []>} : vector<32x32xf32>, vector<32x1xf32>, vector<32x1xf32> -> vector<32x1xf32>
    %508 = arith.mulf %505, %505 : vector<32x1xf32>
    %509 = arith.subf %507, %508 : vector<32x1xf32>
    %cst_157 = arith.constant 0.000000e+00 : f32
    %510 = vector.broadcast %cst_157 : f32 to vector<32x1xf32>
    %511 = arith.maximumf %509, %510 : vector<32x1xf32>
    %512 = vector.broadcast %505 : vector<32x1xf32> to vector<32x32xf32>
    %513 = arith.subf %504, %512 : vector<32x32xf32>
    %cst_158 = arith.constant 9.99999997E-7 : f32
    %514 = vector.broadcast %cst_158 : f32 to vector<32x1xf32>
    %515 = arith.addf %511, %514 : vector<32x1xf32>
    %516 = math.rsqrt %515 : vector<32x1xf32>
    %517 = vector.broadcast %516 : vector<32x1xf32> to vector<32x32xf32>
    %518 = arith.mulf %513, %517 : vector<32x32xf32>
    %519 = vector.broadcast %468 : vector<1x32xf32> to vector<32x32xf32>
    %520 = arith.mulf %518, %519 : vector<32x32xf32>
    %521 = vector.broadcast %469 : vector<1x32xf32> to vector<32x32xf32>
    %522 = arith.addf %520, %521 : vector<32x32xf32>
    %c0_159 = arith.constant 0 : index
    %c896 = arith.constant 896 : index
    %523 = vector.load %arg3[%c0_159, %c896] : memref<32x1088xf32, #tpu.memory_space<vmem>>, vector<32x64xf32>
    %c25 = arith.constant 25 : index
    %c0_160 = arith.constant 0 : index
    %524 = vector.load %arg6[%c25, %c0_160] : memref<32x64xf32, #tpu.memory_space<vmem>>, vector<1x64xf32>
    %c0_161 = arith.constant 0 : index
    %c96_162 = arith.constant 96 : index
    %525 = vector.load %arg4[%c0_161, %c96_162] : memref<64x128xf32, #tpu.memory_space<vmem>>, vector<64x32xf32>
    %c26 = arith.constant 26 : index
    %c0_163 = arith.constant 0 : index
    %526 = vector.load %arg6[%c26, %c0_163] : memref<32x64xf32, #tpu.memory_space<vmem>>, vector<1x32xf32>
    %c27 = arith.constant 27 : index
    %c0_164 = arith.constant 0 : index
    %527 = vector.load %arg6[%c27, %c0_164] : memref<32x64xf32, #tpu.memory_space<vmem>>, vector<1x32xf32>
    %c28 = arith.constant 28 : index
    %c0_165 = arith.constant 0 : index
    %528 = vector.load %arg6[%c28, %c0_165] : memref<32x64xf32, #tpu.memory_space<vmem>>, vector<1x32xf32>
    %cst_166 = arith.constant dense<0.000000e+00> : vector<32x64xf32>
    %529 = tpu.matmul %522, %523, %cst_166 {dimension_numbers = #tpu.dot_dimension_numbers<[1], [0], [0], [1], [0, 0, 1, 1], [], []>} : vector<32x32xf32>, vector<32x64xf32>, vector<32x64xf32> -> vector<32x64xf32>
    %530 = vector.broadcast %524 : vector<1x64xf32> to vector<32x64xf32>
    %531 = arith.addf %529, %530 : vector<32x64xf32>
    %cst_167 = arith.constant 0.000000e+00 : f32
    %532 = vector.broadcast %cst_167 : f32 to vector<32x64xf32>
    %533 = arith.maximumf %531, %532 : vector<32x64xf32>
    %cst_168 = arith.constant dense<0.000000e+00> : vector<32x32xf32>
    %534 = tpu.matmul %533, %525, %cst_168 {dimension_numbers = #tpu.dot_dimension_numbers<[1], [0], [0], [1], [0, 0, 1, 1], [], []>} : vector<32x64xf32>, vector<64x32xf32>, vector<32x32xf32> -> vector<32x32xf32>
    %535 = vector.broadcast %526 : vector<1x32xf32> to vector<32x32xf32>
    %536 = arith.addf %534, %535 : vector<32x32xf32>
    %537 = arith.addf %536, %522 : vector<32x32xf32>
    %cst_169 = arith.constant dense<0.000000e+00> : vector<32x1xf32>
    %538 = tpu.matmul %537, %0, %cst_169 {dimension_numbers = #tpu.dot_dimension_numbers<[1], [0], [0], [1], [0, 0, 1, 1], [], []>} : vector<32x32xf32>, vector<32x1xf32>, vector<32x1xf32> -> vector<32x1xf32>
    %539 = arith.mulf %537, %537 : vector<32x32xf32>
    %cst_170 = arith.constant dense<0.000000e+00> : vector<32x1xf32>
    %540 = tpu.matmul %539, %0, %cst_170 {dimension_numbers = #tpu.dot_dimension_numbers<[1], [0], [0], [1], [0, 0, 1, 1], [], []>} : vector<32x32xf32>, vector<32x1xf32>, vector<32x1xf32> -> vector<32x1xf32>
    %541 = arith.mulf %538, %538 : vector<32x1xf32>
    %542 = arith.subf %540, %541 : vector<32x1xf32>
    %cst_171 = arith.constant 0.000000e+00 : f32
    %543 = vector.broadcast %cst_171 : f32 to vector<32x1xf32>
    %544 = arith.maximumf %542, %543 : vector<32x1xf32>
    %545 = vector.broadcast %538 : vector<32x1xf32> to vector<32x32xf32>
    %546 = arith.subf %537, %545 : vector<32x32xf32>
    %cst_172 = arith.constant 9.99999997E-7 : f32
    %547 = vector.broadcast %cst_172 : f32 to vector<32x1xf32>
    %548 = arith.addf %544, %547 : vector<32x1xf32>
    %549 = math.rsqrt %548 : vector<32x1xf32>
    %550 = vector.broadcast %549 : vector<32x1xf32> to vector<32x32xf32>
    %551 = arith.mulf %546, %550 : vector<32x32xf32>
    %552 = vector.broadcast %527 : vector<1x32xf32> to vector<32x32xf32>
    %553 = arith.mulf %551, %552 : vector<32x32xf32>
    %554 = vector.broadcast %528 : vector<1x32xf32> to vector<32x32xf32>
    %555 = arith.addf %553, %554 : vector<32x32xf32>
    %c0_173 = arith.constant 0 : index
    %c32_174 = arith.constant 32 : index
    %556 = vector.load %arg5[%c0_173, %c32_174] : memref<288x48xf32, #tpu.memory_space<vmem>>, vector<288x16xf32>
    %557 = vector.extract_strided_slice %555 {offsets = [0, 0], sizes = [16, 32], strides = [1, 1]} : vector<32x32xf32> to vector<16x32xf32>
    %558 = vector.extract_strided_slice %555 {offsets = [16, 0], sizes = [16, 32], strides = [1, 1]} : vector<32x32xf32> to vector<16x32xf32>
    %559 = vector.extract_strided_slice %557 {offsets = [0, 0], sizes = [1, 32], strides = [1, 1]} : vector<16x32xf32> to vector<1x32xf32>
    %560 = vector.extract_strided_slice %558 {offsets = [0, 0], sizes = [1, 32], strides = [1, 1]} : vector<16x32xf32> to vector<1x32xf32>
    %561 = tpu.concatenate %559, %560 in 0 : vector<1x32xf32>, vector<1x32xf32> -> vector<2x32xf32>
    %562 = vector.extract_strided_slice %556 {offsets = [0, 0], sizes = [32, 16], strides = [1, 1]} : vector<288x16xf32> to vector<32x16xf32>
    %cst_175 = arith.constant dense<0.000000e+00> : vector<2x16xf32>
    %563 = tpu.matmul %561, %562, %cst_175 {dimension_numbers = #tpu.dot_dimension_numbers<[1], [0], [0], [1], [0, 0, 1, 1], [], []>} : vector<2x32xf32>, vector<32x16xf32>, vector<2x16xf32> -> vector<2x16xf32>
    %564 = vector.extract_strided_slice %557 {offsets = [1, 0], sizes = [1, 32], strides = [1, 1]} : vector<16x32xf32> to vector<1x32xf32>
    %565 = vector.extract_strided_slice %558 {offsets = [1, 0], sizes = [1, 32], strides = [1, 1]} : vector<16x32xf32> to vector<1x32xf32>
    %566 = tpu.concatenate %564, %565 in 0 : vector<1x32xf32>, vector<1x32xf32> -> vector<2x32xf32>
    %567 = vector.extract_strided_slice %556 {offsets = [32, 0], sizes = [32, 16], strides = [1, 1]} : vector<288x16xf32> to vector<32x16xf32>
    %cst_176 = arith.constant dense<0.000000e+00> : vector<2x16xf32>
    %568 = tpu.matmul %566, %567, %cst_176 {dimension_numbers = #tpu.dot_dimension_numbers<[1], [0], [0], [1], [0, 0, 1, 1], [], []>} : vector<2x32xf32>, vector<32x16xf32>, vector<2x16xf32> -> vector<2x16xf32>
    %569 = arith.addf %563, %568 : vector<2x16xf32>
    %570 = vector.extract_strided_slice %557 {offsets = [2, 0], sizes = [1, 32], strides = [1, 1]} : vector<16x32xf32> to vector<1x32xf32>
    %571 = vector.extract_strided_slice %558 {offsets = [2, 0], sizes = [1, 32], strides = [1, 1]} : vector<16x32xf32> to vector<1x32xf32>
    %572 = tpu.concatenate %570, %571 in 0 : vector<1x32xf32>, vector<1x32xf32> -> vector<2x32xf32>
    %573 = vector.extract_strided_slice %556 {offsets = [64, 0], sizes = [32, 16], strides = [1, 1]} : vector<288x16xf32> to vector<32x16xf32>
    %cst_177 = arith.constant dense<0.000000e+00> : vector<2x16xf32>
    %574 = tpu.matmul %572, %573, %cst_177 {dimension_numbers = #tpu.dot_dimension_numbers<[1], [0], [0], [1], [0, 0, 1, 1], [], []>} : vector<2x32xf32>, vector<32x16xf32>, vector<2x16xf32> -> vector<2x16xf32>
    %575 = arith.addf %569, %574 : vector<2x16xf32>
    %576 = vector.extract_strided_slice %557 {offsets = [3, 0], sizes = [1, 32], strides = [1, 1]} : vector<16x32xf32> to vector<1x32xf32>
    %577 = vector.extract_strided_slice %558 {offsets = [3, 0], sizes = [1, 32], strides = [1, 1]} : vector<16x32xf32> to vector<1x32xf32>
    %578 = tpu.concatenate %576, %577 in 0 : vector<1x32xf32>, vector<1x32xf32> -> vector<2x32xf32>
    %579 = vector.extract_strided_slice %556 {offsets = [96, 0], sizes = [32, 16], strides = [1, 1]} : vector<288x16xf32> to vector<32x16xf32>
    %cst_178 = arith.constant dense<0.000000e+00> : vector<2x16xf32>
    %580 = tpu.matmul %578, %579, %cst_178 {dimension_numbers = #tpu.dot_dimension_numbers<[1], [0], [0], [1], [0, 0, 1, 1], [], []>} : vector<2x32xf32>, vector<32x16xf32>, vector<2x16xf32> -> vector<2x16xf32>
    %581 = arith.addf %575, %580 : vector<2x16xf32>
    %582 = vector.extract_strided_slice %557 {offsets = [4, 0], sizes = [1, 32], strides = [1, 1]} : vector<16x32xf32> to vector<1x32xf32>
    %583 = vector.extract_strided_slice %558 {offsets = [4, 0], sizes = [1, 32], strides = [1, 1]} : vector<16x32xf32> to vector<1x32xf32>
    %584 = tpu.concatenate %582, %583 in 0 : vector<1x32xf32>, vector<1x32xf32> -> vector<2x32xf32>
    %585 = vector.extract_strided_slice %556 {offsets = [128, 0], sizes = [32, 16], strides = [1, 1]} : vector<288x16xf32> to vector<32x16xf32>
    %cst_179 = arith.constant dense<0.000000e+00> : vector<2x16xf32>
    %586 = tpu.matmul %584, %585, %cst_179 {dimension_numbers = #tpu.dot_dimension_numbers<[1], [0], [0], [1], [0, 0, 1, 1], [], []>} : vector<2x32xf32>, vector<32x16xf32>, vector<2x16xf32> -> vector<2x16xf32>
    %587 = arith.addf %581, %586 : vector<2x16xf32>
    %588 = vector.extract_strided_slice %557 {offsets = [5, 0], sizes = [1, 32], strides = [1, 1]} : vector<16x32xf32> to vector<1x32xf32>
    %589 = vector.extract_strided_slice %558 {offsets = [5, 0], sizes = [1, 32], strides = [1, 1]} : vector<16x32xf32> to vector<1x32xf32>
    %590 = tpu.concatenate %588, %589 in 0 : vector<1x32xf32>, vector<1x32xf32> -> vector<2x32xf32>
    %591 = vector.extract_strided_slice %556 {offsets = [160, 0], sizes = [32, 16], strides = [1, 1]} : vector<288x16xf32> to vector<32x16xf32>
    %cst_180 = arith.constant dense<0.000000e+00> : vector<2x16xf32>
    %592 = tpu.matmul %590, %591, %cst_180 {dimension_numbers = #tpu.dot_dimension_numbers<[1], [0], [0], [1], [0, 0, 1, 1], [], []>} : vector<2x32xf32>, vector<32x16xf32>, vector<2x16xf32> -> vector<2x16xf32>
    %593 = arith.addf %587, %592 : vector<2x16xf32>
    %594 = vector.extract_strided_slice %557 {offsets = [6, 0], sizes = [1, 32], strides = [1, 1]} : vector<16x32xf32> to vector<1x32xf32>
    %595 = vector.extract_strided_slice %558 {offsets = [6, 0], sizes = [1, 32], strides = [1, 1]} : vector<16x32xf32> to vector<1x32xf32>
    %596 = tpu.concatenate %594, %595 in 0 : vector<1x32xf32>, vector<1x32xf32> -> vector<2x32xf32>
    %597 = vector.extract_strided_slice %556 {offsets = [192, 0], sizes = [32, 16], strides = [1, 1]} : vector<288x16xf32> to vector<32x16xf32>
    %cst_181 = arith.constant dense<0.000000e+00> : vector<2x16xf32>
    %598 = tpu.matmul %596, %597, %cst_181 {dimension_numbers = #tpu.dot_dimension_numbers<[1], [0], [0], [1], [0, 0, 1, 1], [], []>} : vector<2x32xf32>, vector<32x16xf32>, vector<2x16xf32> -> vector<2x16xf32>
    %599 = arith.addf %593, %598 : vector<2x16xf32>
    %600 = vector.extract_strided_slice %557 {offsets = [7, 0], sizes = [1, 32], strides = [1, 1]} : vector<16x32xf32> to vector<1x32xf32>
    %601 = vector.extract_strided_slice %558 {offsets = [7, 0], sizes = [1, 32], strides = [1, 1]} : vector<16x32xf32> to vector<1x32xf32>
    %602 = tpu.concatenate %600, %601 in 0 : vector<1x32xf32>, vector<1x32xf32> -> vector<2x32xf32>
    %603 = vector.extract_strided_slice %556 {offsets = [224, 0], sizes = [32, 16], strides = [1, 1]} : vector<288x16xf32> to vector<32x16xf32>
    %cst_182 = arith.constant dense<0.000000e+00> : vector<2x16xf32>
    %604 = tpu.matmul %602, %603, %cst_182 {dimension_numbers = #tpu.dot_dimension_numbers<[1], [0], [0], [1], [0, 0, 1, 1], [], []>} : vector<2x32xf32>, vector<32x16xf32>, vector<2x16xf32> -> vector<2x16xf32>
    %605 = arith.addf %599, %604 : vector<2x16xf32>
    %606 = vector.extract_strided_slice %557 {offsets = [8, 0], sizes = [1, 32], strides = [1, 1]} : vector<16x32xf32> to vector<1x32xf32>
    %607 = vector.extract_strided_slice %558 {offsets = [8, 0], sizes = [1, 32], strides = [1, 1]} : vector<16x32xf32> to vector<1x32xf32>
    %608 = tpu.concatenate %606, %607 in 0 : vector<1x32xf32>, vector<1x32xf32> -> vector<2x32xf32>
    %609 = vector.extract_strided_slice %556 {offsets = [256, 0], sizes = [32, 16], strides = [1, 1]} : vector<288x16xf32> to vector<32x16xf32>
    %cst_183 = arith.constant dense<0.000000e+00> : vector<2x16xf32>
    %610 = tpu.matmul %608, %609, %cst_183 {dimension_numbers = #tpu.dot_dimension_numbers<[1], [0], [0], [1], [0, 0, 1, 1], [], []>} : vector<2x32xf32>, vector<32x16xf32>, vector<2x16xf32> -> vector<2x16xf32>
    %611 = arith.addf %605, %610 : vector<2x16xf32>
    %c29 = arith.constant 29 : index
    %c0_184 = arith.constant 0 : index
    %612 = vector.load %arg6[%c29, %c0_184] : memref<32x64xf32, #tpu.memory_space<vmem>>, vector<1x16xf32>
    %613 = vector.broadcast %612 : vector<1x16xf32> to vector<2x16xf32>
    %614 = arith.addf %611, %613 : vector<2x16xf32>
    %c0_185 = arith.constant 0 : index
    %c0_186 = arith.constant 0 : index
    %615 = vector.load %arg8[%c0_185, %c0_186] : memref<2x16xf32, #tpu.memory_space<vmem>>, vector<2x16xf32>
    tpu.vector_store %arg8[%c0_185, %c0_186], %614 {strides = array<i32>} : memref<2x16xf32, #tpu.memory_space<vmem>>, vector<2x16xf32>,
    return
  }
}

</mosaic_0001>

<llo_original>
// kernel: mul.34
$region0: #{mul.34}
  %s0 = inlined_call_operand.vmem [shape: f32[2,3,3], index: 0, kind: input, shape index: {}]
  %s1 = inlined_call_operand.vmem [shape: f32[2,9], index: 1, kind: output, shape index: {}]
  $region1: #{mul.34} parent=0
    #allocation0 [shape = 'u8[4096]{0}', space=vmem, size = 0x1000, scoped, tag = 'scoped mem for output reshape']
    #allocation1 [shape = 'u8[8192]{0}', space=vmem, size = 0x2000, scoped, tag = 'scoped mem for input reshape']
    %s3 = ssub.s32 16, 1
    %s4 = scalar_lea.vmem %s0, 4
    %v5 = vld [vmem:[%s4] sm:%s3]
    %s6 = scalar_lea.vmem [#allocation1], 8
    %7 = vst [vmem:[%s6] sm:%s3] %v5
    %v8 = vld [vmem:[%s0] sm:%s3]
    %9 = vst [vmem:[#allocation1] sm:%s3] %v8
    %s10 = smov 3
    %v11 = vld [vmem:[#allocation1] ss:$8 sm:%s10]
    %vm12 = vcmask 23552
    %13 = vst.msk [vmem:[#allocation0] sm:$0x3] %vm12, %v11
    %s14 = scalar_lea.vmem [#allocation1], 2
    %s15 = smov 3
    %v16 = vld [vmem:[%s14] ss:$8 sm:%s15]
    %17 = vrot.lane.b32.xlu0 %v16, 6
    %v18 = vpop.permute.xlu0 %17
    %vm19 = vcmask 72752
    %20 = vst.msk [vmem:[#allocation0] sm:$0x3] %vm19, %v18
    %s21 = scalar_lea.vmem [#allocation1], 1
    %s22 = smov 3
    %v23 = vld [vmem:[%s21] ss:$8 sm:%s22]
    %24 = vrot.lane.b32.xlu0 %v23, 3
    %v25 = vpop.permute.xlu0 %24
    %vm26 = vcmask 48152
    %27 = vst.msk [vmem:[#allocation0] sm:$0x3] %vm26, %v25
    %s29 = ssub.s32 4, 1
    %v30 = vld [vmem:[#allocation0] sm:%s29]
    %s32 = ssub.s32 4, 1
    %33 = vst [vmem:[%s1] sm:%s32] %v30

// kernel: transformer_forward.1
$region0: #{transformer_forward.1}
  #allocation0 [shape = 'u32[]', space=smem, size = 0x4, offset = 0x4, fixed_abs, tag = 'smem constant byte address 0x4 - core index']
  #allocation1 [shape = 'u32[72,128]{1,0:T(1,128)}', space=vmem, size = 0x9000, scoped, tag = 'internal scratch']
  %s0 = inlined_call_operand.vmem [shape: f32[64,288], index: 0, kind: input, shape index: {}]
  %s1 = inlined_call_operand.vmem [shape: f32[128,256], index: 1, kind: input, shape index: {}]
  %s2 = inlined_call_operand.vmem [shape: f32[32,32], index: 2, kind: input, shape index: {}]
  %s3 = inlined_call_operand.vmem [shape: f32[32,1088], index: 3, kind: input, shape index: {}]
  %s4 = inlined_call_operand.vmem [shape: f32[64,128], index: 4, kind: input, shape index: {}]
  %s5 = inlined_call_operand.vmem [shape: f32[288,48], index: 5, kind: input, shape index: {}]
  %s6 = inlined_call_operand.vmem [shape: f32[32,64], index: 6, kind: input, shape index: {}]
  %s7 = inlined_call_operand.vmem [shape: f32[64,128], index: 7, kind: input, shape index: {}]
  %s8 = inlined_call_operand.vmem [shape: f32[2,16], index: 8, kind: output, shape index: {0}]
  %s9 = inlined_call_operand.hbm [shape: f32[1,1], index: 9, kind: output, shape index: {1}]
  %10 = xla_tuple %s8, %s9
  %s11 = sld [smem:[#allocation0]]
  $region50: #{transformer_forward.1} parent=0
    _
  %s13 = ssub.s32 1, %s11
  %s14 = scalar_select 0, %s13, %s11
  $region1: #{transformer_forward.1} parent=0
    #allocation2 [shape = 'u8[512]{0}', space=vmem, size = 0x400, scoped, tag = 'output window, operand 1, single buffered']
    #allocation3 [shape = 's32[1]{0}', space=sflag, size = 0x4, scoped, tag = 'scoped memory for transformer_forward.1']
    %15 = vsyncpa [#allocation3], 0
    // Predicated region
    $region2: #{transformer_forward.1} parent=1 // pred_check
      _
    $region3: #{transformer_forward.1} parent=1 // pred_check_branch
      %17 = sbr.rel (0) target = $region5
    $region4: #{transformer_forward.1} parent=1 // pred_region
      _
    $region5: #{transformer_forward.1} parent=1 // pred_fallthru
      _
    // Predicated region
    $region6: #{transformer_forward.1} parent=1 // pred_check
      _
    $region7: #{transformer_forward.1} parent=1 // pred_check_branch
      %19 = sbr.rel (0) target = $region9
    $region8: #{transformer_forward.1} parent=1 // pred_region
      _
    $region9: #{transformer_forward.1} parent=1 // pred_fallthru
      _
    // Predicated region
    $region10: #{transformer_forward.1} parent=1 // pred_check
      _
    $region11: #{transformer_forward.1} parent=1 // pred_check_branch
      %21 = sbr.rel (0) target = $region13
    $region12: #{transformer_forward.1} parent=1 // pred_region
      _
    $region13: #{transformer_forward.1} parent=1 // pred_fallthru
      _
    // Predicated region
    $region14: #{transformer_forward.1} parent=1 // pred_check
      _
    $region15: #{transformer_forward.1} parent=1 // pred_check_branch
      %23 = sbr.rel (0) target = $region17
    $region16: #{transformer_forward.1} parent=1 // pred_region
      _
    $region17: #{transformer_forward.1} parent=1 // pred_fallthru
      _
    // Predicated region
    $region18: #{transformer_forward.1} parent=1 // pred_check
      _
    $region19: #{transformer_forward.1} parent=1 // pred_check_branch
      %25 = sbr.rel (0) target = $region21
    $region20: #{transformer_forward.1} parent=1 // pred_region
      _
    $region21: #{transformer_forward.1} parent=1 // pred_fallthru
      _
    // Predicated region
    $region22: #{transformer_forward.1} parent=1 // pred_check
      _
    $region23: #{transformer_forward.1} parent=1 // pred_check_branch
      %27 = sbr.rel (0) target = $region25
    $region24: #{transformer_forward.1} parent=1 // pred_region
      _
    $region25: #{transformer_forward.1} parent=1 // pred_fallthru
      _
    // Predicated region
    $region26: #{transformer_forward.1} parent=1 // pred_check
      _
    $region27: #{transformer_forward.1} parent=1 // pred_check_branch
      %29 = sbr.rel (0) target = $region29
    $region28: #{transformer_forward.1} parent=1 // pred_region
      _
    $region29: #{transformer_forward.1} parent=1 // pred_fallthru
      _
    // Predicated region
    $region30: #{transformer_forward.1} parent=1 // pred_check
      _
    $region31: #{transformer_forward.1} parent=1 // pred_check_branch
      %31 = sbr.rel (0) target = $region33
    $region32: #{transformer_forward.1} parent=1 // pred_region
      _
    $region33: #{transformer_forward.1} parent=1 // pred_fallthru
      _
    %v32 = vld [vmem:[%s1] sm:$0xff]
    %v33 = vld [vmem:[%s1 + $0x10] sm:$0xff]
    %v34 = vld [vmem:[%s1 + $0x20] sm:$0xff]
    %v35 = vld [vmem:[%s1 + $0x30] sm:$0xff]
    %v36 = vld [vmem:[%s1 + $0x40] sm:$0xff]
    %v37 = vld [vmem:[%s1 + $0x50] sm:$0xff]
    %v38 = vld [vmem:[%s1 + $0x60] sm:$0xff]
    %v39 = vld [vmem:[%s1 + $0x70] sm:$0xff]
    %v40 = vld [vmem:[%s1 + $0x80] sm:$0xff]
    %v41 = vld [vmem:[%s1 + $0x90] sm:$0xff]
    %v42 = vld [vmem:[%s1 + $0xa0] sm:$0xff]
    %v43 = vld [vmem:[%s1 + $0xb0] sm:$0xff]
    %v44 = vld [vmem:[%s1 + $0xc0] sm:$0xff]
    %v45 = vld [vmem:[%s1 + $0xd0] sm:$0xff]
    %v46 = vld [vmem:[%s1 + $0xe0] sm:$0xff]
    %v47 = vld [vmem:[%s1 + $0xf0] sm:$0xff]
    %v48 = vld [vmem:[%s1 + $0x8] sm:$0xff]
    %v49 = vld [vmem:[%s1 + $0x18] sm:$0xff]
    %v50 = vld [vmem:[%s1 + $0x28] sm:$0xff]
    %v51 = vld [vmem:[%s1 + $0x38] sm:$0xff]
    %v52 = vld [vmem:[%s1 + $0x48] sm:$0xff]
    %v53 = vld [vmem:[%s1 + $0x58] sm:$0xff]
    %v54 = vld [vmem:[%s1 + $0x68] sm:$0xff]
    %v55 = vld [vmem:[%s1 + $0x78] sm:$0xff]
    %v56 = vld [vmem:[%s1 + $0x88] sm:$0xff]
    %v57 = vld [vmem:[%s1 + $0x98] sm:$0xff]
    %v58 = vld [vmem:[%s1 + $0xa8] sm:$0xff]
    %v59 = vld [vmem:[%s1 + $0xb8] sm:$0xff]
    %v60 = vld [vmem:[%s1 + $0xc8] sm:$0xff]
    %v61 = vld [vmem:[%s1 + $0xd8] sm:$0xff]
    %v62 = vld [vmem:[%s1 + $0xe8] sm:$0xff]
    %v63 = vld [vmem:[%s1 + $0xf8] sm:$0xff]
    %v64 = vld [vmem:[%s0] sm:$0xff]
    %v65 = vld [vmem:[%s0 + $0x8] sm:$0xff]
    %v66 = vld [vmem:[%s0 + $0x10] sm:$0xff]
    %v67 = vld [vmem:[%s0 + $0x18] sm:$0xff]
    %v68 = vld [vmem:[%s0 + $0x20] sm:$0xff]
    %v69 = vld [vmem:[%s0 + $0x28] sm:$0xff]
    %v70 = vld [vmem:[%s0 + $0x30] sm:$0xff]
    %v71 = vld [vmem:[%s0 + $0x38] sm:$0xff]
    %v72 = vld [vmem:[%s0 + $0x40] sm:$0xff]
    %v73 = vld [vmem:[%s0 + $0x48] sm:$0xff]
    %v74 = vld [vmem:[%s0 + $0x50] sm:$0xff]
    %v75 = vld [vmem:[%s0 + $0x58] sm:$0xff]
    %v76 = vld [vmem:[%s0 + $0x60] sm:$0xff]
    %v77 = vld [vmem:[%s0 + $0x68] sm:$0xff]
    %v78 = vld [vmem:[%s0 + $0x70] sm:$0xff]
    %v79 = vld [vmem:[%s0 + $0x78] sm:$0xff]
    %v80 = vld [vmem:[%s0 + $0x80] sm:$0xff]
    %v81 = vld [vmem:[%s0 + $0x88] sm:$0xff]
    %v82 = vld [vmem:[%s0 + $0x90] sm:$0xff]
    %v83 = vld [vmem:[%s0 + $0x98] sm:$0xff]
    %v84 = vld [vmem:[%s0 + $0xa0] sm:$0xff]
    %v85 = vld [vmem:[%s0 + $0xa8] sm:$0xff]
    %v86 = vld [vmem:[%s0 + $0xb0] sm:$0xff]
    %v87 = vld [vmem:[%s0 + $0xb8] sm:$0xff]
    %v88 = vld [vmem:[%s5] sm:$0xff]
    %v89 = vld [vmem:[%s5 + $0x8] sm:$0xff]
    %v90 = vld [vmem:[%s5 + $0x10] sm:$0xff]
    %v91 = vld [vmem:[%s5 + $0x18] sm:$0xff]
    %v92 = vld [vmem:[%s5 + $0x20] sm:$0xff]
    %v93 = vld [vmem:[%s5 + $0x28] sm:$0xff]
    %v94 = vld [vmem:[%s5 + $0x30] sm:$0xff]
    %v95 = vld [vmem:[%s5 + $0x38] sm:$0xff]
    %v96 = vld [vmem:[%s5 + $0x40] sm:$0xff]
    %v97 = vld [vmem:[%s5 + $0x48] sm:$0xff]
    %v98 = vld [vmem:[%s5 + $0x50] sm:$0xff]
    %v99 = vld [vmem:[%s5 + $0x58] sm:$0xff]
    %v100 = vld [vmem:[%s5 + $0x60] sm:$0xff]
    %v101 = vld [vmem:[%s5 + $0x68] sm:$0xff]
    %v102 = vld [vmem:[%s5 + $0x70] sm:$0xff]
    %v103 = vld [vmem:[%s5 + $0x78] sm:$0xff]
    %v104 = vld [vmem:[%s5 + $0x80] sm:$0xff]
    %v105 = vld [vmem:[%s5 + $0x88] sm:$0xff]
    %v106 = vld [vmem:[%s5 + $0x90] sm:$0xff]
    %v107 = vld [vmem:[%s5 + $0x98] sm:$0xff]
    %v108 = vld [vmem:[%s5 + $0xa0] sm:$0xff]
    %v109 = vld [vmem:[%s5 + $0xa8] sm:$0xff]
    %v110 = vld [vmem:[%s5 + $0xb0] sm:$0xff]
    %v111 = vld [vmem:[%s5 + $0xb8] sm:$0xff]
    %v112 = vld [vmem:[%s5 + $0xc0] sm:$0xff]
    %v113 = vld [vmem:[%s5 + $0xc8] sm:$0xff]
    %v114 = vld [vmem:[%s5 + $0xd0] sm:$0xff]
    %v115 = vld [vmem:[%s5 + $0xd8] sm:$0xff]
    %v116 = vld [vmem:[%s5 + $0xe0] sm:$0xff]
    %v117 = vld [vmem:[%s5 + $0xe8] sm:$0xff]
    %v118 = vld [vmem:[%s5 + $0xf0] sm:$0xff]
    %v119 = vld [vmem:[%s5 + $0xf8] sm:$0xff]
    %v120 = vld [vmem:[%s5 + $0x100] sm:$0xff]
    %v121 = vld [vmem:[%s5 + $0x108] sm:$0xff]
    %v122 = vld [vmem:[%s5 + $0x110] sm:$0xff]
    %v123 = vld [vmem:[%s5 + $0x118] sm:$0xff]
    %v124 = vld [vmem:[%s7] sm:$0xff]
    %v125 = vld [vmem:[%s7 + $0x8] sm:$0xff]
    %v126 = vld [vmem:[%s7 + $0x10] sm:$0xff]
    %v127 = vld [vmem:[%s7 + $0x18] sm:$0xff]
    %v128 = vld [vmem:[%s7 + $0x20] sm:$0xff]
    %v129 = vld [vmem:[%s7 + $0x28] sm:$0xff]
    %v130 = vld [vmem:[%s7 + $0x30] sm:$0xff]
    %v131 = vld [vmem:[%s7 + $0x38] sm:$0xff]
    %vm132 = vcmask 261120
    %v134 = vsel %vm132, %v66, 0
    %v137 = vsel %vm132, %v69, 0
    %v140 = vsel %vm132, %v72, 0
    %v143 = vsel %vm132, %v75, 0
    %v146 = vsel %vm132, %v78, 0
    %v149 = vsel %vm132, %v81, 0
    %v152 = vsel %vm132, %v84, 0
    %v155 = vsel %vm132, %v87, 0
    %157 = vmatpush.msra.mxu0 %v103
    %158 = vmatpush.msra.mxu0 %v102
    %159 = vmatpush.msra.mxu0 %v101
    %160 = vmatpush.msra.mxu0 %v100
    %161 = vmatpush.msra.mxu0 %v99
    %162 = vmatpush.msra.mxu0 %v98
    %163 = vmatpush.msra.mxu0 %v97
    %164 = vmatpush.msra.mxu0 %v96
    %165 = vmatpush.msra.mxu0 %v95
    %166 = vmatpush.msra.mxu0 %v94
    %167 = vmatpush.msra.mxu0 %v93
    %168 = vmatpush.msra.mxu0 %v92
    %169 = vmatpush.msra.mxu0 %v91
    %170 = vmatpush.msra.mxu0 %v90
    %171 = vmatpush.msra.mxu0 %v89
    %172 = vmatpush.msra.mxu0 %v88
    %173 = vmatmul.f32.gmra.mxu0 %v64
    %v174 = vpop.f32.mrf.mxu0
    %v175 = vadd.f32 %v124, %v174
    %176 = vmatmul.f32.gmra.mxu0 %v67
    %v177 = vpop.f32.mrf.mxu0
    %v178 = vadd.f32 %v125, %v177
    %179 = vmatmul.f32.gmra.mxu0 %v70
    %v180 = vpop.f32.mrf.mxu0
    %v181 = vadd.f32 %v126, %v180
    %182 = vmatmul.f32.gmra.mxu0 %v73
    %v183 = vpop.f32.mrf.mxu0
    %v184 = vadd.f32 %v127, %v183
    %185 = vmatmul.f32.gmra.mxu0 %v76
    %v186 = vpop.f32.mrf.mxu0
    %v187 = vadd.f32 %v128, %v186
    %188 = vmatmul.f32.gmra.mxu0 %v79
    %v189 = vpop.f32.mrf.mxu0
    %v190 = vadd.f32 %v129, %v189
    %191 = vmatmul.f32.gmra.mxu0 %v82
    %v192 = vpop.f32.mrf.mxu0
    %v193 = vadd.f32 %v130, %v192
    %194 = vmatmul.f32.gmra.mxu0 %v85
    %v195 = vpop.f32.mrf.mxu0
    %v196 = vadd.f32 %v131, %v195
    %197 = vdwg.mxu0
    %198 = vmatpush.msra.mxu0 %v119
    %199 = vmatpush.msra.mxu0 %v118
    %200 = vmatpush.msra.mxu0 %v117
    %201 = vmatpush.msra.mxu0 %v116
    %202 = vmatpush.msra.mxu0 %v115
    %203 = vmatpush.msra.mxu0 %v114
    %204 = vmatpush.msra.mxu0 %v113
    %205 = vmatpush.msra.mxu0 %v112
    %206 = vmatpush.msra.mxu0 %v111
    %207 = vmatpush.msra.mxu0 %v110
    %208 = vmatpush.msra.mxu0 %v109
    %209 = vmatpush.msra.mxu0 %v108
    %210 = vmatpush.msra.mxu0 %v107
    %211 = vmatpush.msra.mxu0 %v106
    %212 = vmatpush.msra.mxu0 %v105
    %213 = vmatpush.msra.mxu0 %v104
    %214 = vmatmul.f32.gmra.mxu0 %v65
    %v215 = vpop.f32.mrf.mxu0
    %v216 = vadd.f32 %v175, %v215
    %217 = vmatmul.f32.gmra.mxu0 %v68
    %v218 = vpop.f32.mrf.mxu0
    %v219 = vadd.f32 %v178, %v218
    %220 = vmatmul.f32.gmra.mxu0 %v71
    %v221 = vpop.f32.mrf.mxu0
    %v222 = vadd.f32 %v181, %v221
    %223 = vmatmul.f32.gmra.mxu0 %v74
    %v224 = vpop.f32.mrf.mxu0
    %v225 = vadd.f32 %v184, %v224
    %226 = vmatmul.f32.gmra.mxu0 %v77
    %v227 = vpop.f32.mrf.mxu0
    %v228 = vadd.f32 %v187, %v227
    %229 = vmatmul.f32.gmra.mxu0 %v80
    %v230 = vpop.f32.mrf.mxu0
    %v231 = vadd.f32 %v190, %v230
    %232 = vmatmul.f32.gmra.mxu0 %v83
    %v233 = vpop.f32.mrf.mxu0
    %v234 = vadd.f32 %v193, %v233
    %235 = vmatmul.f32.gmra.mxu0 %v86
    %v236 = vpop.f32.mrf.mxu0
    %v237 = vadd.f32 %v196, %v236
    %238 = vdwg.mxu0
    %239 = vmatpush.msra.mxu0 0.0
    %240 = vmatpush.msra.mxu0 0.0
    %241 = vmatpush.msra.mxu0 0.0
    %242 = vmatpush.msra.mxu0 0.0
    %243 = vmatpush.msra.mxu0 0.0
    %244 = vmatpush.msra.mxu0 0.0
    %245 = vmatpush.msra.mxu0 0.0
    %246 = vmatpush.msra.mxu0 0.0
    %247 = vmatpush.msra.mxu0 0.0
    %248 = vmatpush.msra.mxu0 0.0
    %249 = vmatpush.msra.mxu0 0.0
    %250 = vmatpush.msra.mxu0 0.0
    %251 = vmatpush.msra.mxu0 %v123
    %252 = vmatpush.msra.mxu0 %v122
    %253 = vmatpush.msra.mxu0 %v121
    %254 = vmatpush.msra.mxu0 %v120
    %255 = vmatmul.f32.gmra.mxu0 %v134
    %v256 = vpop.f32.mrf.mxu0
    %v257 = vadd.f32 %v216, %v256
    %258 = vmatmul.f32.gmra.mxu0 %v137
    %v259 = vpop.f32.mrf.mxu0
    %v260 = vadd.f32 %v219, %v259
    %261 = vmatmul.f32.gmra.mxu0 %v140
    %v262 = vpop.f32.mrf.mxu0
    %v263 = vadd.f32 %v222, %v262
    %264 = vmatmul.f32.gmra.mxu0 %v143
    %v265 = vpop.f32.mrf.mxu0
    %v266 = vadd.f32 %v225, %v265
    %267 = vmatmul.f32.gmra.mxu0 %v146
    %v268 = vpop.f32.mrf.mxu0
    %v269 = vadd.f32 %v228, %v268
    %270 = vmatmul.f32.gmra.mxu0 %v149
    %v271 = vpop.f32.mrf.mxu0
    %v272 = vadd.f32 %v231, %v271
    %273 = vmatmul.f32.gmra.mxu0 %v152
    %v274 = vpop.f32.mrf.mxu0
    %v275 = vadd.f32 %v234, %v274
    %276 = vmatmul.f32.gmra.mxu0 %v155
    %v277 = vpop.f32.mrf.mxu0
    %v278 = vadd.f32 %v237, %v277
    %279 = vdwg.mxu0
    %v281 = vsel %vm132, %v257, 0
    %v284 = vsel %vm132, %v260, 0
    %v287 = vsel %vm132, %v263, 0
    %v290 = vsel %vm132, %v266, 0
    %v293 = vsel %vm132, %v269, 0
    %v296 = vsel %vm132, %v272, 0
    %v299 = vsel %vm132, %v275, 0
    %v302 = vsel %vm132, %v278, 0
    %304 = vmatpush.msra.mxu0 0.0
    %305 = vmatpush.msra.mxu0 0.0
    %306 = vmatpush.msra.mxu0 0.0
    %307 = vmatpush.msra.mxu0 0.0
    %308 = vmatpush.msra.mxu0 0.0
    %309 = vmatpush.msra.mxu0 0.0
    %310 = vmatpush.msra.mxu0 0.0
    %311 = vmatpush.msra.mxu0 0.0
    %312 = vmatpush.msra.mxu0 0.0
    %313 = vmatpush.msra.mxu0 0.0
    %314 = vmatpush.msra.mxu0 0.0
    %315 = vmatpush.msra.mxu0 0.0
    %316 = vmatpush.msra.mxu0 0.03125
    %317 = vmatpush.msra.mxu0 0.03125
    %318 = vmatpush.msra.mxu0 0.03125
    %319 = vmatpush.msra.mxu0 0.03125
    %320 = vmatmul.f32.gmra.mxu0 %v281
    %v321 = vpop.f32.mrf.mxu0
    %v322 = vadd.f32 0.0, %v321
    %323 = vmatmul.f32.gmra.mxu0 %v284
    %v324 = vpop.f32.mrf.mxu0
    %v325 = vadd.f32 0.0, %v324
    %326 = vmatmul.f32.gmra.mxu0 %v287
    %v327 = vpop.f32.mrf.mxu0
    %v328 = vadd.f32 0.0, %v327
    %329 = vmatmul.f32.gmra.mxu0 %v290
    %v330 = vpop.f32.mrf.mxu0
    %v331 = vadd.f32 0.0, %v330
    %332 = vmatmul.f32.gmra.mxu0 %v293
    %v333 = vpop.f32.mrf.mxu0
    %v334 = vadd.f32 0.0, %v333
    %335 = vmatmul.f32.gmra.mxu0 %v296
    %v336 = vpop.f32.mrf.mxu0
    %v337 = vadd.f32 0.0, %v336
    %338 = vmatmul.f32.gmra.mxu0 %v299
    %v339 = vpop.f32.mrf.mxu0
    %v340 = vadd.f32 0.0, %v339
    %341 = vmatmul.f32.gmra.mxu0 %v302
    %v342 = vpop.f32.mrf.mxu0
    %v343 = vadd.f32 0.0, %v342
    %344 = vdwg.mxu0
    %v345 = vmul.f32 %v257, %v257
    %v346 = vmul.f32 %v260, %v260
    %v347 = vmul.f32 %v263, %v263
    %v348 = vmul.f32 %v266, %v266
    %v349 = vmul.f32 %v269, %v269
    %v350 = vmul.f32 %v272, %v272
    %v351 = vmul.f32 %v275, %v275
    %v352 = vmul.f32 %v278, %v278
    %v354 = vsel %vm132, %v345, 0
    %v357 = vsel %vm132, %v346, 0
    %v360 = vsel %vm132, %v347, 0
    %v363 = vsel %vm132, %v348, 0
    %v366 = vsel %vm132, %v349, 0
    %v369 = vsel %vm132, %v350, 0
    %v372 = vsel %vm132, %v351, 0
    %v375 = vsel %vm132, %v352, 0
    %377 = vmatpush.msra.mxu0 0.0
    %378 = vmatpush.msra.mxu0 0.0
    %379 = vmatpush.msra.mxu0 0.0
    %380 = vmatpush.msra.mxu0 0.0
    %381 = vmatpush.msra.mxu0 0.0
    %382 = vmatpush.msra.mxu0 0.0
    %383 = vmatpush.msra.mxu0 0.0
    %384 = vmatpush.msra.mxu0 0.0
    %385 = vmatpush.msra.mxu0 0.0
    %386 = vmatpush.msra.mxu0 0.0
    %387 = vmatpush.msra.mxu0 0.0
    %388 = vmatpush.msra.mxu0 0.0
    %389 = vmatpush.msra.mxu0 0.03125
    %390 = vmatpush.msra.mxu0 0.03125
    %391 = vmatpush.msra.mxu0 0.03125
    %392 = vmatpush.msra.mxu0 0.03125
    %393 = vmatmul.f32.gmra.mxu0 %v354
    %v394 = vpop.f32.mrf.mxu0
    %v395 = vadd.f32 0.0, %v394
    %396 = vmatmul.f32.gmra.mxu0 %v357
    %v397 = vpop.f32.mrf.mxu0
    %v398 = vadd.f32 0.0, %v397
    %399 = vmatmul.f32.gmra.mxu0 %v360
    %v400 = vpop.f32.mrf.mxu0
    %v401 = vadd.f32 0.0, %v400
    %402 = vmatmul.f32.gmra.mxu0 %v363
    %v403 = vpop.f32.mrf.mxu0
    %v404 = vadd.f32 0.0, %v403
    %405 = vmatmul.f32.gmra.mxu0 %v366
    %v406 = vpop.f32.mrf.mxu0
    %v407 = vadd.f32 0.0, %v406
    %408 = vmatmul.f32.gmra.mxu0 %v369
    %v409 = vpop.f32.mrf.mxu0
    %v410 = vadd.f32 0.0, %v409
    %411 = vmatmul.f32.gmra.mxu0 %v372
    %v412 = vpop.f32.mrf.mxu0
    %v413 = vadd.f32 0.0, %v412
    %414 = vmatmul.f32.gmra.mxu0 %v375
    %v415 = vpop.f32.mrf.mxu0
    %v416 = vadd.f32 0.0, %v415
    %417 = vdwg.mxu0
    %v418 = vmul.f32 %v322, %v322
    %v419 = vmul.f32 %v325, %v325
    %v420 = vmul.f32 %v328, %v328
    %v421 = vmul.f32 %v331, %v331
    %v422 = vmul.f32 %v334, %v334
    %v423 = vmul.f32 %v337, %v337
    %v424 = vmul.f32 %v340, %v340
    %v425 = vmul.f32 %v343, %v343
    %v426 = vsub.f32 %v395, %v418
    %v427 = vsub.f32 %v398, %v419
    %v428 = vsub.f32 %v401, %v420
    %v429 = vsub.f32 %v404, %v421
    %v430 = vsub.f32 %v407, %v422
    %v431 = vsub.f32 %v410, %v423
    %v432 = vsub.f32 %v413, %v424
    %v433 = vsub.f32 %v416, %v425
    %v434 = vmax.f32 %v426, 0.0
    %v435 = vmax.f32 %v427, 0.0
    %v436 = vmax.f32 %v428, 0.0
    %v437 = vmax.f32 %v429, 0.0
    %v438 = vmax.f32 %v430, 0.0
    %v439 = vmax.f32 %v431, 0.0
    %v440 = vmax.f32 %v432, 0.0
    %v441 = vmax.f32 %v433, 0.0
    %443 = vset.pattern.permute.xlu0 0
    %444 = vperm.xlu0 %443, %v322
    %v445 = vpop.permute.xlu0 %444
    %448 = vset.pattern.permute.xlu0 0
    %449 = vperm.xlu0 %448, %v325
    %v450 = vpop.permute.xlu0 %449
    %453 = vset.pattern.permute.xlu0 0
    %454 = vperm.xlu0 %453, %v328
    %v455 = vpop.permute.xlu0 %454
    %458 = vset.pattern.permute.xlu0 0
    %459 = vperm.xlu0 %458, %v331
    %v460 = vpop.permute.xlu0 %459
    %463 = vset.pattern.permute.xlu0 0
    %464 = vperm.xlu0 %463, %v334
    %v465 = vpop.permute.xlu0 %464
    %468 = vset.pattern.permute.xlu0 0
    %469 = vperm.xlu0 %468, %v337
    %v470 = vpop.permute.xlu0 %469
    %473 = vset.pattern.permute.xlu0 0
    %474 = vperm.xlu0 %473, %v340
    %v475 = vpop.permute.xlu0 %474
    %478 = vset.pattern.permute.xlu0 0
    %479 = vperm.xlu0 %478, %v343
    %v480 = vpop.permute.xlu0 %479
    %v482 = vsub.f32 %v257, %v445
    %v483 = vsub.f32 %v260, %v450
    %v484 = vsub.f32 %v263, %v455
    %v485 = vsub.f32 %v266, %v460
    %v486 = vsub.f32 %v269, %v465
    %v487 = vsub.f32 %v272, %v470
    %v488 = vsub.f32 %v275, %v475
    %v489 = vsub.f32 %v278, %v480
    %v490 = vadd.f32 %v434, 1e-06
    %v491 = vadd.f32 %v435, 1e-06
    %v492 = vadd.f32 %v436, 1e-06
    %v493 = vadd.f32 %v437, 1e-06
    %v494 = vadd.f32 %v438, 1e-06
    %v495 = vadd.f32 %v439, 1e-06
    %v496 = vadd.f32 %v440, 1e-06
    %v497 = vadd.f32 %v441, 1e-06
    %v498 = vrsqrt.pop %v490
    %v499 = vmul.f32 %v498, %v490
    %v500 = vmul.f32 %v499, %v498
    %v501 = vmul.f32 0.5, %v500
    %v502 = vsub.f32 1.5, %v501
    %v503 = vmul.f32 %v498, %v502
    %vm504 = vweird.f32 %v490
    %vm505 = vweird.f32 %v498
    %vm506 = vmor %vm504, %vm505
    %v507 = vsel %vm506, %v498, %v503
    %v508 = vrsqrt.pop %v491
    %v509 = vmul.f32 %v508, %v491
    %v510 = vmul.f32 %v509, %v508
    %v511 = vmul.f32 0.5, %v510
    %v512 = vsub.f32 1.5, %v511
    %v513 = vmul.f32 %v508, %v512
    %vm514 = vweird.f32 %v491
    %vm515 = vweird.f32 %v508
    %vm516 = vmor %vm514, %vm515
    %v517 = vsel %vm516, %v508, %v513
    %v518 = vrsqrt.pop %v492
    %v519 = vmul.f32 %v518, %v492
    %v520 = vmul.f32 %v519, %v518
    %v521 = vmul.f32 0.5, %v520
    %v522 = vsub.f32 1.5, %v521
    %v523 = vmul.f32 %v518, %v522
    %vm524 = vweird.f32 %v492
    %vm525 = vweird.f32 %v518
    %vm526 = vmor %vm524, %vm525
    %v527 = vsel %vm526, %v518, %v523
    %v528 = vrsqrt.pop %v493
    %v529 = vmul.f32 %v528, %v493
    %v530 = vmul.f32 %v529, %v528
    %v531 = vmul.f32 0.5, %v530
    %v532 = vsub.f32 1.5, %v531
    %v533 = vmul.f32 %v528, %v532
    %vm534 = vweird.f32 %v493
    %vm535 = vweird.f32 %v528
    %vm536 = vmor %vm534, %vm535
    %v537 = vsel %vm536, %v528, %v533
    %v538 = vrsqrt.pop %v494
    %v539 = vmul.f32 %v538, %v494
    %v540 = vmul.f32 %v539, %v538
    %v541 = vmul.f32 0.5, %v540
    %v542 = vsub.f32 1.5, %v541
    %v543 = vmul.f32 %v538, %v542
    %vm544 = vweird.f32 %v494
    %vm545 = vweird.f32 %v538
    %vm546 = vmor %vm544, %vm545
    %v547 = vsel %vm546, %v538, %v543
    %v548 = vrsqrt.pop %v495
    %v549 = vmul.f32 %v548, %v495
    %v550 = vmul.f32 %v549, %v548
    %v551 = vmul.f32 0.5, %v550
    %v552 = vsub.f32 1.5, %v551
    %v553 = vmul.f32 %v548, %v552
    %vm554 = vweird.f32 %v495
    %vm555 = vweird.f32 %v548
    %vm556 = vmor %vm554, %vm555
    %v557 = vsel %vm556, %v548, %v553
    %v558 = vrsqrt.pop %v496
    %v559 = vmul.f32 %v558, %v496
    %v560 = vmul.f32 %v559, %v558
    %v561 = vmul.f32 0.5, %v560
    %v562 = vsub.f32 1.5, %v561
    %v563 = vmul.f32 %v558, %v562
    %vm564 = vweird.f32 %v496
    %vm565 = vweird.f32 %v558
    %vm566 = vmor %vm564, %vm565
    %v567 = vsel %vm566, %v558, %v563
    %v568 = vrsqrt.pop %v497
    %v569 = vmul.f32 %v568, %v497
    %v570 = vmul.f32 %v569, %v568
    %v571 = vmul.f32 0.5, %v570
    %v572 = vsub.f32 1.5, %v571
    %v573 = vmul.f32 %v568, %v572
    %vm574 = vweird.f32 %v497
    %vm575 = vweird.f32 %v568
    %vm576 = vmor %vm574, %vm575
    %v577 = vsel %vm576, %v568, %v573
    %579 = vset.pattern.permute.xlu0 0
    %580 = vperm.xlu0 %579, %v507
    %v581 = vpop.permute.xlu0 %580
    %584 = vset.pattern.permute.xlu0 0
    %585 = vperm.xlu0 %584, %v517
    %v586 = vpop.permute.xlu0 %585
    %589 = vset.pattern.permute.xlu0 0
    %590 = vperm.xlu0 %589, %v527
    %v591 = vpop.permute.xlu0 %590
    %594 = vset.pattern.permute.xlu0 0
    %595 = vperm.xlu0 %594, %v537
    %v596 = vpop.permute.xlu0 %595
    %599 = vset.pattern.permute.xlu0 0
    %600 = vperm.xlu0 %599, %v547
    %v601 = vpop.permute.xlu0 %600
    %604 = vset.pattern.permute.xlu0 0
    %605 = vperm.xlu0 %604, %v557
    %v606 = vpop.permute.xlu0 %605
    %609 = vset.pattern.permute.xlu0 0
    %610 = vperm.xlu0 %609, %v567
    %v611 = vpop.permute.xlu0 %610
    %614 = vset.pattern.permute.xlu0 0
    %615 = vperm.xlu0 %614, %v577
    %v616 = vpop.permute.xlu0 %615
    %v618 = vmul.f32 %v482, %v581
    %v619 = vmul.f32 %v483, %v586
    %v620 = vmul.f32 %v484, %v591
    %v621 = vmul.f32 %v485, %v596
    %v622 = vmul.f32 %v486, %v601
    %v623 = vmul.f32 %v487, %v606
    %v624 = vmul.f32 %v488, %v611
    %v625 = vmul.f32 %v489, %v616
    %634 = vrot.lane.b32.xlu0 %v124, 96
    %v635 = vpop.permute.xlu0 %634
    %636 = vrot.lane.b32.xlu0 %v125, 96
    %v637 = vpop.permute.xlu0 %636
    %638 = vrot.lane.b32.xlu0 %v126, 96
    %v639 = vpop.permute.xlu0 %638
    %640 = vrot.lane.b32.xlu0 %v127, 96
    %v641 = vpop.permute.xlu0 %640
    %642 = vrot.lane.b32.xlu0 %v128, 96
    %v643 = vpop.permute.xlu0 %642
    %644 = vrot.lane.b32.xlu0 %v129, 96
    %v645 = vpop.permute.xlu0 %644
    %646 = vrot.lane.b32.xlu0 %v130, 96
    %v647 = vpop.permute.xlu0 %646
    %648 = vrot.lane.b32.xlu0 %v131, 96
    %v649 = vpop.permute.xlu0 %648
    %v658 = vmul.f32 %v618, %v635
    %v659 = vmul.f32 %v619, %v637
    %v660 = vmul.f32 %v620, %v639
    %v661 = vmul.f32 %v621, %v641
    %v662 = vmul.f32 %v622, %v643
    %v663 = vmul.f32 %v623, %v645
    %v664 = vmul.f32 %v624, %v647
    %v665 = vmul.f32 %v625, %v649
    %666 = vrot.lane.b32.xlu0 %v124, 64
    %v667 = vpop.permute.xlu0 %666
    %668 = vrot.lane.b32.xlu0 %v125, 64
    %v669 = vpop.permute.xlu0 %668
    %670 = vrot.lane.b32.xlu0 %v126, 64
    %v671 = vpop.permute.xlu0 %670
    %672 = vrot.lane.b32.xlu0 %v127, 64
    %v673 = vpop.permute.xlu0 %672
    %674 = vrot.lane.b32.xlu0 %v128, 64
    %v675 = vpop.permute.xlu0 %674
    %676 = vrot.lane.b32.xlu0 %v129, 64
    %v677 = vpop.permute.xlu0 %676
    %678 = vrot.lane.b32.xlu0 %v130, 64
    %v679 = vpop.permute.xlu0 %678
    %680 = vrot.lane.b32.xlu0 %v131, 64
    %v681 = vpop.permute.xlu0 %680
    %v690 = vadd.f32 %v658, %v667
    %v691 = vadd.f32 %v659, %v669
    %v692 = vadd.f32 %v660, %v671
    %v693 = vadd.f32 %v661, %v673
    %v694 = vadd.f32 %v662, %v675
    %v695 = vadd.f32 %v663, %v677
    %v696 = vadd.f32 %v664, %v679
    %v697 = vadd.f32 %v665, %v681
    %v698 = vld [vmem:[%s3] sm:$0xff]
    %v699 = vld [vmem:[%s3 + $0x48] sm:$0xff]
    %v700 = vld [vmem:[%s3 + $0x90] sm:$0xff]
    %v701 = vld [vmem:[%s3 + $0xd8] sm:$0xff]
    %v703 = vsel %vm132, %v690, 0
    %v706 = vsel %vm132, %v691, 0
    %v709 = vsel %vm132, %v692, 0
    %v712 = vsel %vm132, %v693, 0
    %714 = vmatpush.msra.mxu0 0.0
    %715 = vmatpush.msra.mxu0 0.0
    %716 = vmatpush.msra.mxu0 0.0
    %717 = vmatpush.msra.mxu0 0.0
    %718 = vmatpush.msra.mxu0 0.0
    %719 = vmatpush.msra.mxu0 0.0
    %720 = vmatpush.msra.mxu0 0.0
    %721 = vmatpush.msra.mxu0 0.0
    %722 = vmatpush.msra.mxu0 0.0
    %723 = vmatpush.msra.mxu0 0.0
    %724 = vmatpush.msra.mxu0 0.0
    %725 = vmatpush.msra.mxu0 0.0
    %726 = vmatpush.msra.mxu0 %v701
    %727 = vmatpush.msra.mxu0 %v700
    %728 = vmatpush.msra.mxu0 %v699
    %729 = vmatpush.msra.mxu0 %v698
    %730 = vmatmul.f32.gmra.mxu0 %v703
    %v731 = vpop.f32.mrf.mxu0
    %v732 = vadd.f32 0.0, %v731
    %733 = vmatmul.f32.gmra.mxu0 %v706
    %v734 = vpop.f32.mrf.mxu0
    %v735 = vadd.f32 0.0, %v734
    %736 = vmatmul.f32.gmra.mxu0 %v709
    %v737 = vpop.f32.mrf.mxu0
    %v738 = vadd.f32 0.0, %v737
    %739 = vmatmul.f32.gmra.mxu0 %v712
    %v740 = vpop.f32.mrf.mxu0
    %v741 = vadd.f32 0.0, %v740
    %742 = vdwg.mxu0
    %v743 = vld [vmem:[%s6] sm:$0x1]
    %v744 = vld [vmem:[%s6 + $0x1] sm:$0x1]
    %749 = vrot.lane.b32.xlu0 %v732, 120
    %v750 = vpop.permute.xlu0 %749
    %751 = vrot.lane.b32.xlu0 %v735, 120
    %v752 = vpop.permute.xlu0 %751
    %753 = vrot.lane.b32.xlu0 %v738, 120
    %v754 = vpop.permute.xlu0 %753
    %755 = vrot.lane.b32.xlu0 %v741, 120
    %v756 = vpop.permute.xlu0 %755
    %757 = vrot.lane.b32.xlu0 %v732, 112
    %v758 = vpop.permute.xlu0 %757
    %759 = vrot.lane.b32.xlu0 %v735, 112
    %v760 = vpop.permute.xlu0 %759
    %761 = vrot.lane.b32.xlu0 %v738, 112
    %v762 = vpop.permute.xlu0 %761
    %763 = vrot.lane.b32.xlu0 %v741, 112
    %v764 = vpop.permute.xlu0 %763
    %765 = vrot.lane.b32.xlu0 %v732, 104
    %v766 = vpop.permute.xlu0 %765
    %767 = vrot.lane.b32.xlu0 %v735, 104
    %v768 = vpop.permute.xlu0 %767
    %769 = vrot.lane.b32.xlu0 %v738, 104
    %v770 = vpop.permute.xlu0 %769
    %771 = vrot.lane.b32.xlu0 %v741, 104
    %v772 = vpop.permute.xlu0 %771
    %773 = vrot.lane.b32.xlu0 %v732, 96
    %v774 = vpop.permute.xlu0 %773
    %775 = vrot.lane.b32.xlu0 %v735, 96
    %v776 = vpop.permute.xlu0 %775
    %777 = vrot.lane.b32.xlu0 %v738, 96
    %v778 = vpop.permute.xlu0 %777
    %779 = vrot.lane.b32.xlu0 %v741, 96
    %v780 = vpop.permute.xlu0 %779
    %781 = vrot.lane.b32.xlu0 %v750, 96
    %v782 = vpop.permute.xlu0 %781
    %783 = vrot.lane.b32.xlu0 %v752, 96
    %v784 = vpop.permute.xlu0 %783
    %785 = vrot.lane.b32.xlu0 %v754, 96
    %v786 = vpop.permute.xlu0 %785
    %787 = vrot.lane.b32.xlu0 %v756, 96
    %v788 = vpop.permute.xlu0 %787
    %789 = vrot.lane.b32.xlu0 %v758, 96
    %v790 = vpop.permute.xlu0 %789
    %791 = vrot.lane.b32.xlu0 %v760, 96
    %v792 = vpop.permute.xlu0 %791
    %793 = vrot.lane.b32.xlu0 %v762, 96
    %v794 = vpop.permute.xlu0 %793
    %795 = vrot.lane.b32.xlu0 %v764, 96
    %v796 = vpop.permute.xlu0 %795
    %797 = vrot.lane.b32.xlu0 %v766, 96
    %v798 = vpop.permute.xlu0 %797
    %799 = vrot.lane.b32.xlu0 %v768, 96
    %v800 = vpop.permute.xlu0 %799
    %801 = vrot.lane.b32.xlu0 %v770, 96
    %v802 = vpop.permute.xlu0 %801
    %803 = vrot.lane.b32.xlu0 %v772, 96
    %v804 = vpop.permute.xlu0 %803
    %vm805 = vcmask 64512
    %v806 = vsel %vm805, %v732, 0
    %v808 = vsel %vm805, %v735, 0
    %v810 = vsel %vm805, %v738, 0
    %v812 = vsel %vm805, %v741, 0
    %v814 = vsel %vm805, %v750, 0
    %v816 = vsel %vm805, %v752, 0
    %v818 = vsel %vm805, %v754, 0
    %v820 = vsel %vm805, %v756, 0
    %v822 = vsel %vm805, %v758, 0
    %v824 = vsel %vm805, %v760, 0
    %v826 = vsel %vm805, %v762, 0
    %v828 = vsel %vm805, %v764, 0
    %v830 = vsel %vm805, %v766, 0
    %v832 = vsel %vm805, %v768, 0
    %v834 = vsel %vm805, %v770, 0
    %v836 = vsel %vm805, %v772, 0
    %v838 = vsel %vm805, %v774, 0
    %v840 = vsel %vm805, %v776, 0
    %v842 = vsel %vm805, %v778, 0
    %v844 = vsel %vm805, %v780, 0
    %v846 = vsel %vm805, %v782, 0
    %v848 = vsel %vm805, %v784, 0
    %v850 = vsel %vm805, %v786, 0
    %v852 = vsel %vm805, %v788, 0
    %v854 = vsel %vm805, %v790, 0
    %v856 = vsel %vm805, %v792, 0
    %v858 = vsel %vm805, %v794, 0
    %v860 = vsel %vm805, %v796, 0
    %v862 = vsel %vm805, %v798, 0
    %v864 = vsel %vm805, %v800, 0
    %v866 = vsel %vm805, %v802, 0
    %v868 = vsel %vm805, %v804, 0
    %870 = vmatpush.xpose.msra.mxu0 %v868
    %871 = vmatpush.xpose.msra.mxu0 %v866
    %872 = vmatpush.xpose.msra.mxu0 %v864
    %873 = vmatpush.xpose.msra.mxu0 %v862
    %874 = vmatpush.xpose.msra.mxu0 %v860
    %875 = vmatpush.xpose.msra.mxu0 %v858
    %876 = vmatpush.xpose.msra.mxu0 %v856
    %877 = vmatpush.xpose.msra.mxu0 %v854
    %878 = vmatpush.xpose.msra.mxu0 %v852
    %879 = vmatpush.xpose.msra.mxu0 %v850
    %880 = vmatpush.xpose.msra.mxu0 %v848
    %881 = vmatpush.xpose.msra.mxu0 %v846
    %882 = vmatpush.xpose.msra.mxu0 %v844
    %883 = vmatpush.xpose.msra.mxu0 %v842
    %884 = vmatpush.xpose.msra.mxu0 %v840
    %885 = vmatpush.xpose.msra.mxu0 %v838
    %886 = vmatmul.f32.gmra.mxu0 %v806
    %v887 = vpop.f32.mrf.mxu0
    %v888 = vadd.f32 %v32, %v887
    %889 = vmatmul.f32.gmra.mxu0 %v808
    %v890 = vpop.f32.mrf.mxu0
    %v891 = vadd.f32 %v33, %v890
    %892 = vmatmul.f32.gmra.mxu0 %v810
    %v893 = vpop.f32.mrf.mxu0
    %v894 = vadd.f32 %v34, %v893
    %895 = vmatmul.f32.gmra.mxu0 %v812
    %v896 = vpop.f32.mrf.mxu0
    %v897 = vadd.f32 %v35, %v896
    %898 = vmatmul.f32.gmra.mxu0 %v814
    %v899 = vpop.f32.mrf.mxu0
    %v900 = vadd.f32 %v36, %v899
    %901 = vmatmul.f32.gmra.mxu0 %v816
    %v902 = vpop.f32.mrf.mxu0
    %v903 = vadd.f32 %v37, %v902
    %904 = vmatmul.f32.gmra.mxu0 %v818
    %v905 = vpop.f32.mrf.mxu0
    %v906 = vadd.f32 %v38, %v905
    %907 = vmatmul.f32.gmra.mxu0 %v820
    %v908 = vpop.f32.mrf.mxu0
    %v909 = vadd.f32 %v39, %v908
    %910 = vmatmul.f32.gmra.mxu0 %v822
    %v911 = vpop.f32.mrf.mxu0
    %v912 = vadd.f32 %v40, %v911
    %913 = vmatmul.f32.gmra.mxu0 %v824
    %v914 = vpop.f32.mrf.mxu0
    %v915 = vadd.f32 %v41, %v914
    %916 = vmatmul.f32.gmra.mxu0 %v826
    %v917 = vpop.f32.mrf.mxu0
    %v918 = vadd.f32 %v42, %v917
    %919 = vmatmul.f32.gmra.mxu0 %v828
    %v920 = vpop.f32.mrf.mxu0
    %v921 = vadd.f32 %v43, %v920
    %922 = vmatmul.f32.gmra.mxu0 %v830
    %v923 = vpop.f32.mrf.mxu0
    %v924 = vadd.f32 %v44, %v923
    %925 = vmatmul.f32.gmra.mxu0 %v832
    %v926 = vpop.f32.mrf.mxu0
    %v927 = vadd.f32 %v45, %v926
    %928 = vmatmul.f32.gmra.mxu0 %v834
    %v929 = vpop.f32.mrf.mxu0
    %v930 = vadd.f32 %v46, %v929
    %931 = vmatmul.f32.gmra.mxu0 %v836
    %v932 = vpop.f32.mrf.mxu0
    %v933 = vadd.f32 %v47, %v932
    %934 = vdwg.mxu0
    %935 = vmax.xlane.f32.xlu0 %v888
    %v936 = vpop.xlane.xlu0 %935
    %937 = vmax.xlane.f32.xlu0 %v891
    %v938 = vpop.xlane.xlu0 %937
    %939 = vmax.xlane.f32.xlu0 %v894
    %v940 = vpop.xlane.xlu0 %939
    %941 = vmax.xlane.f32.xlu0 %v897
    %v942 = vpop.xlane.xlu0 %941
    %943 = vmax.xlane.f32.xlu0 %v900
    %v944 = vpop.xlane.xlu0 %943
    %945 = vmax.xlane.f32.xlu0 %v903
    %v946 = vpop.xlane.xlu0 %945
    %947 = vmax.xlane.f32.xlu0 %v906
    %v948 = vpop.xlane.xlu0 %947
    %949 = vmax.xlane.f32.xlu0 %v909
    %v950 = vpop.xlane.xlu0 %949
    %951 = vmax.xlane.f32.xlu0 %v912
    %v952 = vpop.xlane.xlu0 %951
    %953 = vmax.xlane.f32.xlu0 %v915
    %v954 = vpop.xlane.xlu0 %953
    %955 = vmax.xlane.f32.xlu0 %v918
    %v956 = vpop.xlane.xlu0 %955
    %957 = vmax.xlane.f32.xlu0 %v921
    %v958 = vpop.xlane.xlu0 %957
    %959 = vmax.xlane.f32.xlu0 %v924
    %v960 = vpop.xlane.xlu0 %959
    %961 = vmax.xlane.f32.xlu0 %v927
    %v962 = vpop.xlane.xlu0 %961
    %963 = vmax.xlane.f32.xlu0 %v930
    %v964 = vpop.xlane.xlu0 %963
    %965 = vmax.xlane.f32.xlu0 %v933
    %v966 = vpop.xlane.xlu0 %965
    %v967 = vsub.f32 %v888, %v936
    %v968 = vsub.f32 %v891, %v938
    %v969 = vsub.f32 %v894, %v940
    %v970 = vsub.f32 %v897, %v942
    %v971 = vsub.f32 %v900, %v944
    %v972 = vsub.f32 %v903, %v946
    %v973 = vsub.f32 %v906, %v948
    %v974 = vsub.f32 %v909, %v950
    %v975 = vsub.f32 %v912, %v952
    %v976 = vsub.f32 %v915, %v954
    %v977 = vsub.f32 %v918, %v956
    %v978 = vsub.f32 %v921, %v958
    %v979 = vsub.f32 %v924, %v960
    %v980 = vsub.f32 %v927, %v962
    %v981 = vsub.f32 %v930, %v964
    %v982 = vsub.f32 %v933, %v966
    %v983 = vmul.f32 %v967, 1.442695
    %v984 = vpow.pop %v983
    %v985 = vmul.f32 %v968, 1.442695
    %v986 = vpow.pop %v985
    %v987 = vmul.f32 %v969, 1.442695
    %v988 = vpow.pop %v987
    %v989 = vmul.f32 %v970, 1.442695
    %v990 = vpow.pop %v989
    %v991 = vmul.f32 %v971, 1.442695
    %v992 = vpow.pop %v991
    %v993 = vmul.f32 %v972, 1.442695
    %v994 = vpow.pop %v993
    %v995 = vmul.f32 %v973, 1.442695
    %v996 = vpow.pop %v995
    %v997 = vmul.f32 %v974, 1.442695
    %v998 = vpow.pop %v997
    %v999 = vmul.f32 %v975, 1.442695
    %v1000 = vpow.pop %v999
    %v1001 = vmul.f32 %v976, 1.442695
    %v1002 = vpow.pop %v1001
    %v1003 = vmul.f32 %v977, 1.442695
    %v1004 = vpow.pop %v1003
    %v1005 = vmul.f32 %v978, 1.442695
    %v1006 = vpow.pop %v1005
    %v1007 = vmul.f32 %v979, 1.442695
    %v1008 = vpow.pop %v1007
    %v1009 = vmul.f32 %v980, 1.442695
    %v1010 = vpow.pop %v1009
    %v1011 = vmul.f32 %v981, 1.442695
    %v1012 = vpow.pop %v1011
    %v1013 = vmul.f32 %v982, 1.442695
    %v1014 = vpow.pop %v1013
    %1015 = vadd.xlane.f32.xlu0 %v984
    %v1016 = vpop.xlane.xlu0 %1015
    %1017 = vadd.xlane.f32.xlu0 %v986
    %v1018 = vpop.xlane.xlu0 %1017
    %1019 = vadd.xlane.f32.xlu0 %v988
    %v1020 = vpop.xlane.xlu0 %1019
    %1021 = vadd.xlane.f32.xlu0 %v990
    %v1022 = vpop.xlane.xlu0 %1021
    %1023 = vadd.xlane.f32.xlu0 %v992
    %v1024 = vpop.xlane.xlu0 %1023
    %1025 = vadd.xlane.f32.xlu0 %v994
    %v1026 = vpop.xlane.xlu0 %1025
    %1027 = vadd.xlane.f32.xlu0 %v996
    %v1028 = vpop.xlane.xlu0 %1027
    %1029 = vadd.xlane.f32.xlu0 %v998
    %v1030 = vpop.xlane.xlu0 %1029
    %1031 = vadd.xlane.f32.xlu0 %v1000
    %v1032 = vpop.xlane.xlu0 %1031
    %1033 = vadd.xlane.f32.xlu0 %v1002
    %v1034 = vpop.xlane.xlu0 %1033
    %1035 = vadd.xlane.f32.xlu0 %v1004
    %v1036 = vpop.xlane.xlu0 %1035
    %1037 = vadd.xlane.f32.xlu0 %v1006
    %v1038 = vpop.xlane.xlu0 %1037
    %1039 = vadd.xlane.f32.xlu0 %v1008
    %v1040 = vpop.xlane.xlu0 %1039
    %1041 = vadd.xlane.f32.xlu0 %v1010
    %v1042 = vpop.xlane.xlu0 %1041
    %1043 = vadd.xlane.f32.xlu0 %v1012
    %v1044 = vpop.xlane.xlu0 %1043
    %1045 = vadd.xlane.f32.xlu0 %v1014
    %v1046 = vpop.xlane.xlu0 %1045
    %v1047 = vrcp.pop %v1016
    %v1048 = vrcp.pop %v1018
    %v1049 = vrcp.pop %v1020
    %v1050 = vrcp.pop %v1022
    %v1051 = vrcp.pop %v1024
    %v1052 = vrcp.pop %v1026
    %v1053 = vrcp.pop %v1028
    %v1054 = vrcp.pop %v1030
    %v1055 = vrcp.pop %v1032
    %v1056 = vrcp.pop %v1034
    %v1057 = vrcp.pop %v1036
    %v1058 = vrcp.pop %v1038
    %v1059 = vrcp.pop %v1040
    %v1060 = vrcp.pop %v1042
    %v1061 = vrcp.pop %v1044
    %v1062 = vrcp.pop %v1046
    %v1063 = vmul.f32 %v984, %v1047
    %v1064 = vmul.f32 %v986, %v1048
    %v1065 = vmul.f32 %v988, %v1049
    %v1066 = vmul.f32 %v990, %v1050
    %v1067 = vmul.f32 %v992, %v1051
    %v1068 = vmul.f32 %v994, %v1052
    %v1069 = vmul.f32 %v996, %v1053
    %v1070 = vmul.f32 %v998, %v1054
    %v1071 = vmul.f32 %v1000, %v1055
    %v1072 = vmul.f32 %v1002, %v1056
    %v1073 = vmul.f32 %v1004, %v1057
    %v1074 = vmul.f32 %v1006, %v1058
    %v1075 = vmul.f32 %v1008, %v1059
    %v1076 = vmul.f32 %v1010, %v1060
    %v1077 = vmul.f32 %v1012, %v1061
    %v1078 = vmul.f32 %v1014, %v1062
    %1079 = vrot.lane.b32.xlu0 %v732, 64
    %v1080 = vpop.permute.xlu0 %1079
    %1081 = vrot.lane.b32.xlu0 %v735, 64
    %v1082 = vpop.permute.xlu0 %1081
    %1083 = vrot.lane.b32.xlu0 %v738, 64
    %v1084 = vpop.permute.xlu0 %1083
    %1085 = vrot.lane.b32.xlu0 %v741, 64
    %v1086 = vpop.permute.xlu0 %1085
    %1087 = vrot.lane.b32.xlu0 %v750, 64
    %v1088 = vpop.permute.xlu0 %1087
    %1089 = vrot.lane.b32.xlu0 %v752, 64
    %v1090 = vpop.permute.xlu0 %1089
    %1091 = vrot.lane.b32.xlu0 %v754, 64
    %v1092 = vpop.permute.xlu0 %1091
    %1093 = vrot.lane.b32.xlu0 %v756, 64
    %v1094 = vpop.permute.xlu0 %1093
    %1095 = vrot.lane.b32.xlu0 %v758, 64
    %v1096 = vpop.permute.xlu0 %1095
    %1097 = vrot.lane.b32.xlu0 %v760, 64
    %v1098 = vpop.permute.xlu0 %1097
    %1099 = vrot.lane.b32.xlu0 %v762, 64
    %v1100 = vpop.permute.xlu0 %1099
    %1101 = vrot.lane.b32.xlu0 %v764, 64
    %v1102 = vpop.permute.xlu0 %1101
    %1103 = vrot.lane.b32.xlu0 %v766, 64
    %v1104 = vpop.permute.xlu0 %1103
    %1105 = vrot.lane.b32.xlu0 %v768, 64
    %v1106 = vpop.permute.xlu0 %1105
    %1107 = vrot.lane.b32.xlu0 %v770, 64
    %v1108 = vpop.permute.xlu0 %1107
    %1109 = vrot.lane.b32.xlu0 %v772, 64
    %v1110 = vpop.permute.xlu0 %1109
    %1127 = vmatpush.msra.mxu0 %v1110
    %1128 = vmatpush.msra.mxu0 %v1108
    %1129 = vmatpush.msra.mxu0 %v1106
    %1130 = vmatpush.msra.mxu0 %v1104
    %1131 = vmatpush.msra.mxu0 %v1102
    %1132 = vmatpush.msra.mxu0 %v1100
    %1133 = vmatpush.msra.mxu0 %v1098
    %1134 = vmatpush.msra.mxu0 %v1096
    %1135 = vmatpush.msra.mxu0 %v1094
    %1136 = vmatpush.msra.mxu0 %v1092
    %1137 = vmatpush.msra.mxu0 %v1090
    %1138 = vmatpush.msra.mxu0 %v1088
    %1139 = vmatpush.msra.mxu0 %v1086
    %1140 = vmatpush.msra.mxu0 %v1084
    %1141 = vmatpush.msra.mxu0 %v1082
    %1142 = vmatpush.msra.mxu0 %v1080
    %1143 = vmatmul.f32.gmra.mxu0 %v1063
    %v1144 = vpop.f32.mrf.mxu0
    %v1145 = vadd.f32 0.0, %v1144
    %1146 = vmatmul.f32.gmra.mxu0 %v1064
    %v1147 = vpop.f32.mrf.mxu0
    %v1148 = vadd.f32 0.0, %v1147
    %1149 = vmatmul.f32.gmra.mxu0 %v1065
    %v1150 = vpop.f32.mrf.mxu0
    %v1151 = vadd.f32 0.0, %v1150
    %1152 = vmatmul.f32.gmra.mxu0 %v1066
    %v1153 = vpop.f32.mrf.mxu0
    %v1154 = vadd.f32 0.0, %v1153
    %1155 = vmatmul.f32.gmra.mxu0 %v1067
    %v1156 = vpop.f32.mrf.mxu0
    %v1157 = vadd.f32 0.0, %v1156
    %1158 = vmatmul.f32.gmra.mxu0 %v1068
    %v1159 = vpop.f32.mrf.mxu0
    %v1160 = vadd.f32 0.0, %v1159
    %1161 = vmatmul.f32.gmra.mxu0 %v1069
    %v1162 = vpop.f32.mrf.mxu0
    %v1163 = vadd.f32 0.0, %v1162
    %1164 = vmatmul.f32.gmra.mxu0 %v1070
    %v1165 = vpop.f32.mrf.mxu0
    %v1166 = vadd.f32 0.0, %v1165
    %1167 = vmatmul.f32.gmra.mxu0 %v1071
    %v1168 = vpop.f32.mrf.mxu0
    %v1169 = vadd.f32 0.0, %v1168
    %1170 = vmatmul.f32.gmra.mxu0 %v1072
    %v1171 = vpop.f32.mrf.mxu0
    %v1172 = vadd.f32 0.0, %v1171
    %1173 = vmatmul.f32.gmra.mxu0 %v1073
    %v1174 = vpop.f32.mrf.mxu0
    %v1175 = vadd.f32 0.0, %v1174
    %1176 = vmatmul.f32.gmra.mxu0 %v1074
    %v1177 = vpop.f32.mrf.mxu0
    %v1178 = vadd.f32 0.0, %v1177
    %1179 = vmatmul.f32.gmra.mxu0 %v1075
    %v1180 = vpop.f32.mrf.mxu0
    %v1181 = vadd.f32 0.0, %v1180
    %1182 = vmatmul.f32.gmra.mxu0 %v1076
    %v1183 = vpop.f32.mrf.mxu0
    %v1184 = vadd.f32 0.0, %v1183
    %1185 = vmatmul.f32.gmra.mxu0 %v1077
    %v1186 = vpop.f32.mrf.mxu0
    %v1187 = vadd.f32 0.0, %v1186
    %1188 = vmatmul.f32.gmra.mxu0 %v1078
    %v1189 = vpop.f32.mrf.mxu0
    %v1190 = vadd.f32 0.0, %v1189
    %1191 = vdwg.mxu0
    %1196 = vrot.lane.b32.xlu0 %v1157, 8
    %v1197 = vpop.permute.xlu0 %1196
    %1198 = vrot.lane.b32.xlu0 %v1160, 8
    %v1199 = vpop.permute.xlu0 %1198
    %1200 = vrot.lane.b32.xlu0 %v1163, 8
    %v1201 = vpop.permute.xlu0 %1200
    %1202 = vrot.lane.b32.xlu0 %v1166, 8
    %v1203 = vpop.permute.xlu0 %1202
    %1212 = vrot.lane.b32.xlu0 %v1169, 16
    %v1213 = vpop.permute.xlu0 %1212
    %1214 = vrot.lane.b32.xlu0 %v1172, 16
    %v1215 = vpop.permute.xlu0 %1214
    %1216 = vrot.lane.b32.xlu0 %v1175, 16
    %v1217 = vpop.permute.xlu0 %1216
    %1218 = vrot.lane.b32.xlu0 %v1178, 16
    %v1219 = vpop.permute.xlu0 %1218
    %1228 = vrot.lane.b32.xlu0 %v1181, 24
    %v1229 = vpop.permute.xlu0 %1228
    %1230 = vrot.lane.b32.xlu0 %v1184, 24
    %v1231 = vpop.permute.xlu0 %1230
    %1232 = vrot.lane.b32.xlu0 %v1187, 24
    %v1233 = vpop.permute.xlu0 %1232
    %1234 = vrot.lane.b32.xlu0 %v1190, 24
    %v1235 = vpop.permute.xlu0 %1234
    %v1240 = vsel %vm805, %v1145, %v1197
    %v1241 = vsel %vm805, %v1148, %v1199
    %v1242 = vsel %vm805, %v1151, %v1201
    %v1243 = vsel %vm805, %v1154, %v1203
    %vm1244 = vcmask 130048
    %v1245 = vsel %vm1244, %v1240, %v1213
    %v1246 = vsel %vm1244, %v1241, %v1215
    %v1247 = vsel %vm1244, %v1242, %v1217
    %v1248 = vsel %vm1244, %v1243, %v1219
    %vm1249 = vcmask 195584
    %v1250 = vsel %vm1249, %v1245, %v1229
    %v1251 = vsel %vm1249, %v1246, %v1231
    %v1252 = vsel %vm1249, %v1247, %v1233
    %v1253 = vsel %vm1249, %v1248, %v1235
    %1258 = vrot.lane.b32.xlu0 %v698, 32
    %v1259 = vpop.permute.xlu0 %1258
    %1260 = vrot.lane.b32.xlu0 %v699, 32
    %v1261 = vpop.permute.xlu0 %1260
    %1262 = vrot.lane.b32.xlu0 %v700, 32
    %v1263 = vpop.permute.xlu0 %1262
    %1264 = vrot.lane.b32.xlu0 %v701, 32
    %v1265 = vpop.permute.xlu0 %1264
    %v1271 = vsel %vm132, %v1250, 0
    %v1274 = vsel %vm132, %v1251, 0
    %v1277 = vsel %vm132, %v1252, 0
    %v1280 = vsel %vm132, %v1253, 0
    %1282 = vmatpush.msra.mxu0 0.0
    %1283 = vmatpush.msra.mxu0 0.0
    %1284 = vmatpush.msra.mxu0 0.0
    %1285 = vmatpush.msra.mxu0 0.0
    %1286 = vmatpush.msra.mxu0 0.0
    %1287 = vmatpush.msra.mxu0 0.0
    %1288 = vmatpush.msra.mxu0 0.0
    %1289 = vmatpush.msra.mxu0 0.0
    %1290 = vmatpush.msra.mxu0 0.0
    %1291 = vmatpush.msra.mxu0 0.0
    %1292 = vmatpush.msra.mxu0 0.0
    %1293 = vmatpush.msra.mxu0 0.0
    %1294 = vmatpush.msra.mxu0 %v1265
    %1295 = vmatpush.msra.mxu0 %v1263
    %1296 = vmatpush.msra.mxu0 %v1261
    %1297 = vmatpush.msra.mxu0 %v1259
    %1298 = vmatmul.f32.gmra.mxu0 %v1271
    %v1299 = vpop.f32.mrf.mxu0
    %v1300 = vadd.f32 0.0, %v1299
    %1301 = vmatmul.f32.gmra.mxu0 %v1274
    %v1302 = vpop.f32.mrf.mxu0
    %v1303 = vadd.f32 0.0, %v1302
    %1304 = vmatmul.f32.gmra.mxu0 %v1277
    %v1305 = vpop.f32.mrf.mxu0
    %v1306 = vadd.f32 0.0, %v1305
    %1307 = vmatmul.f32.gmra.mxu0 %v1280
    %v1308 = vpop.f32.mrf.mxu0
    %v1309 = vadd.f32 0.0, %v1308
    %1310 = vdwg.mxu0
    %v1311 = vadd.f32 %v690, %v1300
    %v1312 = vadd.f32 %v691, %v1303
    %v1313 = vadd.f32 %v692, %v1306
    %v1314 = vadd.f32 %v693, %v1309
    %v1316 = vsel %vm132, %v1311, 0
    %v1319 = vsel %vm132, %v1312, 0
    %v1322 = vsel %vm132, %v1313, 0
    %v1325 = vsel %vm132, %v1314, 0
    %1327 = vmatpush.msra.mxu0 0.0
    %1328 = vmatpush.msra.mxu0 0.0
    %1329 = vmatpush.msra.mxu0 0.0
    %1330 = vmatpush.msra.mxu0 0.0
    %1331 = vmatpush.msra.mxu0 0.0
    %1332 = vmatpush.msra.mxu0 0.0
    %1333 = vmatpush.msra.mxu0 0.0
    %1334 = vmatpush.msra.mxu0 0.0
    %1335 = vmatpush.msra.mxu0 0.0
    %1336 = vmatpush.msra.mxu0 0.0
    %1337 = vmatpush.msra.mxu0 0.0
    %1338 = vmatpush.msra.mxu0 0.0
    %1339 = vmatpush.msra.mxu0 0.03125
    %1340 = vmatpush.msra.mxu0 0.03125
    %1341 = vmatpush.msra.mxu0 0.03125
    %1342 = vmatpush.msra.mxu0 0.03125
    %1343 = vmatmul.f32.gmra.mxu0 %v1316
    %v1344 = vpop.f32.mrf.mxu0
    %v1345 = vadd.f32 0.0, %v1344
    %1346 = vmatmul.f32.gmra.mxu0 %v1319
    %v1347 = vpop.f32.mrf.mxu0
    %v1348 = vadd.f32 0.0, %v1347
    %1349 = vmatmul.f32.gmra.mxu0 %v1322
    %v1350 = vpop.f32.mrf.mxu0
    %v1351 = vadd.f32 0.0, %v1350
    %1352 = vmatmul.f32.gmra.mxu0 %v1325
    %v1353 = vpop.f32.mrf.mxu0
    %v1354 = vadd.f32 0.0, %v1353
    %1355 = vdwg.mxu0
    %v1356 = vmul.f32 %v1311, %v1311
    %v1357 = vmul.f32 %v1312, %v1312
    %v1358 = vmul.f32 %v1313, %v1313
    %v1359 = vmul.f32 %v1314, %v1314
    %v1361 = vsel %vm132, %v1356, 0
    %v1364 = vsel %vm132, %v1357, 0
    %v1367 = vsel %vm132, %v1358, 0
    %v1370 = vsel %vm132, %v1359, 0
    %1372 = vmatpush.msra.mxu0 0.0
    %1373 = vmatpush.msra.mxu0 0.0
    %1374 = vmatpush.msra.mxu0 0.0
    %1375 = vmatpush.msra.mxu0 0.0
    %1376 = vmatpush.msra.mxu0 0.0
    %1377 = vmatpush.msra.mxu0 0.0
    %1378 = vmatpush.msra.mxu0 0.0
    %1379 = vmatpush.msra.mxu0 0.0
    %1380 = vmatpush.msra.mxu0 0.0
    %1381 = vmatpush.msra.mxu0 0.0
    %1382 = vmatpush.msra.mxu0 0.0
    %1383 = vmatpush.msra.mxu0 0.0
    %1384 = vmatpush.msra.mxu0 0.03125
    %1385 = vmatpush.msra.mxu0 0.03125
    %1386 = vmatpush.msra.mxu0 0.03125
    %1387 = vmatpush.msra.mxu0 0.03125
    %1388 = vmatmul.f32.gmra.mxu0 %v1361
    %v1389 = vpop.f32.mrf.mxu0
    %v1390 = vadd.f32 0.0, %v1389
    %1391 = vmatmul.f32.gmra.mxu0 %v1364
    %v1392 = vpop.f32.mrf.mxu0
    %v1393 = vadd.f32 0.0, %v1392
    %1394 = vmatmul.f32.gmra.mxu0 %v1367
    %v1395 = vpop.f32.mrf.mxu0
    %v1396 = vadd.f32 0.0, %v1395
    %1397 = vmatmul.f32.gmra.mxu0 %v1370
    %v1398 = vpop.f32.mrf.mxu0
    %v1399 = vadd.f32 0.0, %v1398
    %1400 = vdwg.mxu0
    %v1401 = vmul.f32 %v1345, %v1345
    %v1402 = vmul.f32 %v1348, %v1348
    %v1403 = vmul.f32 %v1351, %v1351
    %v1404 = vmul.f32 %v1354, %v1354
    %v1405 = vsub.f32 %v1390, %v1401
    %v1406 = vsub.f32 %v1393, %v1402
    %v1407 = vsub.f32 %v1396, %v1403
    %v1408 = vsub.f32 %v1399, %v1404
    %v1409 = vmax.f32 %v1405, 0.0
    %v1410 = vmax.f32 %v1406, 0.0
    %v1411 = vmax.f32 %v1407, 0.0
    %v1412 = vmax.f32 %v1408, 0.0
    %1414 = vset.pattern.permute.xlu0 0
    %1415 = vperm.xlu0 %1414, %v1345
    %v1416 = vpop.permute.xlu0 %1415
    %1419 = vset.pattern.permute.xlu0 0
    %1420 = vperm.xlu0 %1419, %v1348
    %v1421 = vpop.permute.xlu0 %1420
    %1424 = vset.pattern.permute.xlu0 0
    %1425 = vperm.xlu0 %1424, %v1351
    %v1426 = vpop.permute.xlu0 %1425
    %1429 = vset.pattern.permute.xlu0 0
    %1430 = vperm.xlu0 %1429, %v1354
    %v1431 = vpop.permute.xlu0 %1430
    %v1433 = vsub.f32 %v1311, %v1416
    %v1434 = vsub.f32 %v1312, %v1421
    %v1435 = vsub.f32 %v1313, %v1426
    %v1436 = vsub.f32 %v1314, %v1431
    %v1437 = vadd.f32 %v1409, 1e-06
    %v1438 = vadd.f32 %v1410, 1e-06
    %v1439 = vadd.f32 %v1411, 1e-06
    %v1440 = vadd.f32 %v1412, 1e-06
    %v1441 = vrsqrt.pop %v1437
    %v1442 = vmul.f32 %v1441, %v1437
    %v1443 = vmul.f32 %v1442, %v1441
    %v1444 = vmul.f32 0.5, %v1443
    %v1445 = vsub.f32 1.5, %v1444
    %v1446 = vmul.f32 %v1441, %v1445
    %vm1447 = vweird.f32 %v1437
    %vm1448 = vweird.f32 %v1441
    %vm1449 = vmor %vm1447, %vm1448
    %v1450 = vsel %vm1449, %v1441, %v1446
    %v1451 = vrsqrt.pop %v1438
    %v1452 = vmul.f32 %v1451, %v1438
    %v1453 = vmul.f32 %v1452, %v1451
    %v1454 = vmul.f32 0.5, %v1453
    %v1455 = vsub.f32 1.5, %v1454
    %v1456 = vmul.f32 %v1451, %v1455
    %vm1457 = vweird.f32 %v1438
    %vm1458 = vweird.f32 %v1451
    %vm1459 = vmor %vm1457, %vm1458
    %v1460 = vsel %vm1459, %v1451, %v1456
    %v1461 = vrsqrt.pop %v1439
    %v1462 = vmul.f32 %v1461, %v1439
    %v1463 = vmul.f32 %v1462, %v1461
    %v1464 = vmul.f32 0.5, %v1463
    %v1465 = vsub.f32 1.5, %v1464
    %v1466 = vmul.f32 %v1461, %v1465
    %vm1467 = vweird.f32 %v1439
    %vm1468 = vweird.f32 %v1461
    %vm1469 = vmor %vm1467, %vm1468
    %v1470 = vsel %vm1469, %v1461, %v1466
    %v1471 = vrsqrt.pop %v1440
    %v1472 = vmul.f32 %v1471, %v1440
    %v1473 = vmul.f32 %v1472, %v1471
    %v1474 = vmul.f32 0.5, %v1473
    %v1475 = vsub.f32 1.5, %v1474
    %v1476 = vmul.f32 %v1471, %v1475
    %vm1477 = vweird.f32 %v1440
    %vm1478 = vweird.f32 %v1471
    %vm1479 = vmor %vm1477, %vm1478
    %v1480 = vsel %vm1479, %v1471, %v1476
    %1482 = vset.pattern.permute.xlu0 0
    %1483 = vperm.xlu0 %1482, %v1450
    %v1484 = vpop.permute.xlu0 %1483
    %1487 = vset.pattern.permute.xlu0 0
    %1488 = vperm.xlu0 %1487, %v1460
    %v1489 = vpop.permute.xlu0 %1488
    %1492 = vset.pattern.permute.xlu0 0
    %1493 = vperm.xlu0 %1492, %v1470
    %v1494 = vpop.permute.xlu0 %1493
    %1497 = vset.pattern.permute.xlu0 0
    %1498 = vperm.xlu0 %1497, %v1480
    %v1499 = vpop.permute.xlu0 %1498
    %v1501 = vmul.f32 %v1433, %v1484
    %v1502 = vmul.f32 %v1434, %v1489
    %v1503 = vmul.f32 %v1435, %v1494
    %v1504 = vmul.f32 %v1436, %v1499
    %v1505 = vperm.slane %v743, 0
    %v1506 = vmul.f32 %v1501, %v1505
    %v1507 = vmul.f32 %v1502, %v1505
    %v1508 = vmul.f32 %v1503, %v1505
    %v1509 = vmul.f32 %v1504, %v1505
    %v1510 = vperm.slane %v744, 0
    %v1511 = vadd.f32 %v1506, %v1510
    %v1512 = vadd.f32 %v1507, %v1510
    %v1513 = vadd.f32 %v1508, %v1510
    %v1514 = vadd.f32 %v1509, %v1510
    %v1515 = vld [vmem:[%s3 + $0x8] sm:$0xff]
    %v1516 = vld [vmem:[%s3 + $0x50] sm:$0xff]
    %v1517 = vld [vmem:[%s3 + $0x98] sm:$0xff]
    %v1518 = vld [vmem:[%s3 + $0xe0] sm:$0xff]
    %v1519 = vld [vmem:[%s6 + $0x2] sm:$0x1]
    %v1520 = vld [vmem:[%s4] sm:$0xff]
    %v1521 = vld [vmem:[%s4 + $0x8] sm:$0xff]
    %v1522 = vld [vmem:[%s4 + $0x10] sm:$0xff]
    %v1523 = vld [vmem:[%s4 + $0x18] sm:$0xff]
    %v1524 = vld [vmem:[%s4 + $0x20] sm:$0xff]
    %v1525 = vld [vmem:[%s4 + $0x28] sm:$0xff]
    %v1526 = vld [vmem:[%s4 + $0x30] sm:$0xff]
    %v1527 = vld [vmem:[%s4 + $0x38] sm:$0xff]
    %v1528 = vld [vmem:[%s6 + $0x3] sm:$0x1]
    %v1529 = vld [vmem:[%s6 + $0x4] sm:$0x1]
    %v1530 = vld [vmem:[%s6 + $0x5] sm:$0x1]
    %v1531 = vperm.slane %v1519, 0
    %v1533 = vsel %vm132, %v1511, 0
    %v1536 = vsel %vm132, %v1512, 0
    %v1539 = vsel %vm132, %v1513, 0
    %v1542 = vsel %vm132, %v1514, 0
    %1544 = vmatpush.msra.mxu0 0.0
    %1545 = vmatpush.msra.mxu0 0.0
    %1546 = vmatpush.msra.mxu0 0.0
    %1547 = vmatpush.msra.mxu0 0.0
    %1548 = vmatpush.msra.mxu0 0.0
    %1549 = vmatpush.msra.mxu0 0.0
    %1550 = vmatpush.msra.mxu0 0.0
    %1551 = vmatpush.msra.mxu0 0.0
    %1552 = vmatpush.msra.mxu0 0.0
    %1553 = vmatpush.msra.mxu0 0.0
    %1554 = vmatpush.msra.mxu0 0.0
    %1555 = vmatpush.msra.mxu0 0.0
    %1556 = vmatpush.msra.mxu0 %v1518
    %1557 = vmatpush.msra.mxu0 %v1517
    %1558 = vmatpush.msra.mxu0 %v1516
    %1559 = vmatpush.msra.mxu0 %v1515
    %1560 = vmatmul.f32.gmra.mxu0 %v1533
    %v1561 = vpop.f32.mrf.mxu0
    %v1562 = vadd.f32 %v1531, %v1561
    %1563 = vmatmul.f32.gmra.mxu0 %v1536
    %v1564 = vpop.f32.mrf.mxu0
    %v1565 = vadd.f32 %v1531, %v1564
    %1566 = vmatmul.f32.gmra.mxu0 %v1539
    %v1567 = vpop.f32.mrf.mxu0
    %v1568 = vadd.f32 %v1531, %v1567
    %1569 = vmatmul.f32.gmra.mxu0 %v1542
    %v1570 = vpop.f32.mrf.mxu0
    %v1571 = vadd.f32 %v1531, %v1570
    %1572 = vdwg.mxu0
    %v1573 = vmax.f32 %v1562, 0.0
    %v1574 = vmax.f32 %v1565, 0.0
    %v1575 = vmax.f32 %v1568, 0.0
    %v1576 = vmax.f32 %v1571, 0.0
    %v1577 = vperm.slane %v1528, 0
    %vm1578 = vcmask 523264
    %v1580 = vsel %vm1578, %v1573, 0
    %v1583 = vsel %vm1578, %v1574, 0
    %v1586 = vsel %vm1578, %v1575, 0
    %v1589 = vsel %vm1578, %v1576, 0
    %1591 = vmatpush.msra.mxu0 0.0
    %1592 = vmatpush.msra.mxu0 0.0
    %1593 = vmatpush.msra.mxu0 0.0
    %1594 = vmatpush.msra.mxu0 0.0
    %1595 = vmatpush.msra.mxu0 0.0
    %1596 = vmatpush.msra.mxu0 0.0
    %1597 = vmatpush.msra.mxu0 0.0
    %1598 = vmatpush.msra.mxu0 0.0
    %1599 = vmatpush.msra.mxu0 %v1527
    %1600 = vmatpush.msra.mxu0 %v1526
    %1601 = vmatpush.msra.mxu0 %v1525
    %1602 = vmatpush.msra.mxu0 %v1524
    %1603 = vmatpush.msra.mxu0 %v1523
    %1604 = vmatpush.msra.mxu0 %v1522
    %1605 = vmatpush.msra.mxu0 %v1521
    %1606 = vmatpush.msra.mxu0 %v1520
    %1607 = vmatmul.f32.gmra.mxu0 %v1580
    %v1608 = vpop.f32.mrf.mxu0
    %v1609 = vadd.f32 %v1577, %v1608
    %1610 = vmatmul.f32.gmra.mxu0 %v1583
    %v1611 = vpop.f32.mrf.mxu0
    %v1612 = vadd.f32 %v1577, %v1611
    %1613 = vmatmul.f32.gmra.mxu0 %v1586
    %v1614 = vpop.f32.mrf.mxu0
    %v1615 = vadd.f32 %v1577, %v1614
    %1616 = vmatmul.f32.gmra.mxu0 %v1589
    %v1617 = vpop.f32.mrf.mxu0
    %v1618 = vadd.f32 %v1577, %v1617
    %1619 = vdwg.mxu0
    %v1620 = vadd.f32 %v1609, %v1511
    %v1621 = vadd.f32 %v1612, %v1512
    %v1622 = vadd.f32 %v1615, %v1513
    %v1623 = vadd.f32 %v1618, %v1514
    %v1625 = vsel %vm132, %v1620, 0
    %v1628 = vsel %vm132, %v1621, 0
    %v1631 = vsel %vm132, %v1622, 0
    %v1634 = vsel %vm132, %v1623, 0
    %1636 = vmatpush.msra.mxu0 0.0
    %1637 = vmatpush.msra.mxu0 0.0
    %1638 = vmatpush.msra.mxu0 0.0
    %1639 = vmatpush.msra.mxu0 0.0
    %1640 = vmatpush.msra.mxu0 0.0
    %1641 = vmatpush.msra.mxu0 0.0
    %1642 = vmatpush.msra.mxu0 0.0
    %1643 = vmatpush.msra.mxu0 0.0
    %1644 = vmatpush.msra.mxu0 0.0
    %1645 = vmatpush.msra.mxu0 0.0
    %1646 = vmatpush.msra.mxu0 0.0
    %1647 = vmatpush.msra.mxu0 0.0
    %1648 = vmatpush.msra.mxu0 0.03125
    %1649 = vmatpush.msra.mxu0 0.03125
    %1650 = vmatpush.msra.mxu0 0.03125
    %1651 = vmatpush.msra.mxu0 0.03125
    %1652 = vmatmul.f32.gmra.mxu0 %v1625
    %v1653 = vpop.f32.mrf.mxu0
    %v1654 = vadd.f32 0.0, %v1653
    %1655 = vmatmul.f32.gmra.mxu0 %v1628
    %v1656 = vpop.f32.mrf.mxu0
    %v1657 = vadd.f32 0.0, %v1656
    %1658 = vmatmul.f32.gmra.mxu0 %v1631
    %v1659 = vpop.f32.mrf.mxu0
    %v1660 = vadd.f32 0.0, %v1659
    %1661 = vmatmul.f32.gmra.mxu0 %v1634
    %v1662 = vpop.f32.mrf.mxu0
    %v1663 = vadd.f32 0.0, %v1662
    %1664 = vdwg.mxu0
    %v1665 = vmul.f32 %v1620, %v1620
    %v1666 = vmul.f32 %v1621, %v1621
    %v1667 = vmul.f32 %v1622, %v1622
    %v1668 = vmul.f32 %v1623, %v1623
    %v1670 = vsel %vm132, %v1665, 0
    %v1673 = vsel %vm132, %v1666, 0
    %v1676 = vsel %vm132, %v1667, 0
    %v1679 = vsel %vm132, %v1668, 0
    %1681 = vmatpush.msra.mxu0 0.0
    %1682 = vmatpush.msra.mxu0 0.0
    %1683 = vmatpush.msra.mxu0 0.0
    %1684 = vmatpush.msra.mxu0 0.0
    %1685 = vmatpush.msra.mxu0 0.0
    %1686 = vmatpush.msra.mxu0 0.0
    %1687 = vmatpush.msra.mxu0 0.0
    %1688 = vmatpush.msra.mxu0 0.0
    %1689 = vmatpush.msra.mxu0 0.0
    %1690 = vmatpush.msra.mxu0 0.0
    %1691 = vmatpush.msra.mxu0 0.0
    %1692 = vmatpush.msra.mxu0 0.0
    %1693 = vmatpush.msra.mxu0 0.03125
    %1694 = vmatpush.msra.mxu0 0.03125
    %1695 = vmatpush.msra.mxu0 0.03125
    %1696 = vmatpush.msra.mxu0 0.03125
    %1697 = vmatmul.f32.gmra.mxu0 %v1670
    %v1698 = vpop.f32.mrf.mxu0
    %v1699 = vadd.f32 0.0, %v1698
    %1700 = vmatmul.f32.gmra.mxu0 %v1673
    %v1701 = vpop.f32.mrf.mxu0
    %v1702 = vadd.f32 0.0, %v1701
    %1703 = vmatmul.f32.gmra.mxu0 %v1676
    %v1704 = vpop.f32.mrf.mxu0
    %v1705 = vadd.f32 0.0, %v1704
    %1706 = vmatmul.f32.gmra.mxu0 %v1679
    %v1707 = vpop.f32.mrf.mxu0
    %v1708 = vadd.f32 0.0, %v1707
    %1709 = vdwg.mxu0
    %v1710 = vmul.f32 %v1654, %v1654
    %v1711 = vmul.f32 %v1657, %v1657
    %v1712 = vmul.f32 %v1660, %v1660
    %v1713 = vmul.f32 %v1663, %v1663
    %v1714 = vsub.f32 %v1699, %v1710
    %v1715 = vsub.f32 %v1702, %v1711
    %v1716 = vsub.f32 %v1705, %v1712
    %v1717 = vsub.f32 %v1708, %v1713
    %v1718 = vmax.f32 %v1714, 0.0
    %v1719 = vmax.f32 %v1715, 0.0
    %v1720 = vmax.f32 %v1716, 0.0
    %v1721 = vmax.f32 %v1717, 0.0
    %1723 = vset.pattern.permute.xlu0 0
    %1724 = vperm.xlu0 %1723, %v1654
    %v1725 = vpop.permute.xlu0 %1724
    %1728 = vset.pattern.permute.xlu0 0
    %1729 = vperm.xlu0 %1728, %v1657
    %v1730 = vpop.permute.xlu0 %1729
    %1733 = vset.pattern.permute.xlu0 0
    %1734 = vperm.xlu0 %1733, %v1660
    %v1735 = vpop.permute.xlu0 %1734
    %1738 = vset.pattern.permute.xlu0 0
    %1739 = vperm.xlu0 %1738, %v1663
    %v1740 = vpop.permute.xlu0 %1739
    %v1742 = vsub.f32 %v1620, %v1725
    %v1743 = vsub.f32 %v1621, %v1730
    %v1744 = vsub.f32 %v1622, %v1735
    %v1745 = vsub.f32 %v1623, %v1740
    %v1746 = vadd.f32 %v1718, 1e-06
    %v1747 = vadd.f32 %v1719, 1e-06
    %v1748 = vadd.f32 %v1720, 1e-06
    %v1749 = vadd.f32 %v1721, 1e-06
    %v1750 = vrsqrt.pop %v1746
    %v1751 = vmul.f32 %v1750, %v1746
    %v1752 = vmul.f32 %v1751, %v1750
    %v1753 = vmul.f32 0.5, %v1752
    %v1754 = vsub.f32 1.5, %v1753
    %v1755 = vmul.f32 %v1750, %v1754
    %vm1756 = vweird.f32 %v1746
    %vm1757 = vweird.f32 %v1750
    %vm1758 = vmor %vm1756, %vm1757
    %v1759 = vsel %vm1758, %v1750, %v1755
    %v1760 = vrsqrt.pop %v1747
    %v1761 = vmul.f32 %v1760, %v1747
    %v1762 = vmul.f32 %v1761, %v1760
    %v1763 = vmul.f32 0.5, %v1762
    %v1764 = vsub.f32 1.5, %v1763
    %v1765 = vmul.f32 %v1760, %v1764
    %vm1766 = vweird.f32 %v1747
    %vm1767 = vweird.f32 %v1760
    %vm1768 = vmor %vm1766, %vm1767
    %v1769 = vsel %vm1768, %v1760, %v1765
    %v1770 = vrsqrt.pop %v1748
    %v1771 = vmul.f32 %v1770, %v1748
    %v1772 = vmul.f32 %v1771, %v1770
    %v1773 = vmul.f32 0.5, %v1772
    %v1774 = vsub.f32 1.5, %v1773
    %v1775 = vmul.f32 %v1770, %v1774
    %vm1776 = vweird.f32 %v1748
    %vm1777 = vweird.f32 %v1770
    %vm1778 = vmor %vm1776, %vm1777
    %v1779 = vsel %vm1778, %v1770, %v1775
    %v1780 = vrsqrt.pop %v1749
    %v1781 = vmul.f32 %v1780, %v1749
    %v1782 = vmul.f32 %v1781, %v1780
    %v1783 = vmul.f32 0.5, %v1782
    %v1784 = vsub.f32 1.5, %v1783
    %v1785 = vmul.f32 %v1780, %v1784
    %vm1786 = vweird.f32 %v1749
    %vm1787 = vweird.f32 %v1780
    %vm1788 = vmor %vm1786, %vm1787
    %v1789 = vsel %vm1788, %v1780, %v1785
    %1791 = vset.pattern.permute.xlu0 0
    %1792 = vperm.xlu0 %1791, %v1759
    %v1793 = vpop.permute.xlu0 %1792
    %1796 = vset.pattern.permute.xlu0 0
    %1797 = vperm.xlu0 %1796, %v1769
    %v1798 = vpop.permute.xlu0 %1797
    %1801 = vset.pattern.permute.xlu0 0
    %1802 = vperm.xlu0 %1801, %v1779
    %v1803 = vpop.permute.xlu0 %1802
    %1806 = vset.pattern.permute.xlu0 0
    %1807 = vperm.xlu0 %1806, %v1789
    %v1808 = vpop.permute.xlu0 %1807
    %v1810 = vmul.f32 %v1742, %v1793
    %v1811 = vmul.f32 %v1743, %v1798
    %v1812 = vmul.f32 %v1744, %v1803
    %v1813 = vmul.f32 %v1745, %v1808
    %v1814 = vperm.slane %v1529, 0
    %v1815 = vmul.f32 %v1810, %v1814
    %v1816 = vmul.f32 %v1811, %v1814
    %v1817 = vmul.f32 %v1812, %v1814
    %v1818 = vmul.f32 %v1813, %v1814
    %v1819 = vperm.slane %v1530, 0
    %v1820 = vadd.f32 %v1815, %v1819
    %v1821 = vadd.f32 %v1816, %v1819
    %v1822 = vadd.f32 %v1817, %v1819
    %v1823 = vadd.f32 %v1818, %v1819
    %v1824 = vld [vmem:[%s3 + $0x8] sm:$0xff]
    %v1825 = vld [vmem:[%s3 + $0x10] sm:$0xff]
    %v1826 = vld [vmem:[%s3 + $0x50] sm:$0xff]
    %v1827 = vld [vmem:[%s3 + $0x58] sm:$0xff]
    %v1828 = vld [vmem:[%s3 + $0x98] sm:$0xff]
    %v1829 = vld [vmem:[%s3 + $0xa0] sm:$0xff]
    %v1830 = vld [vmem:[%s3 + $0xe0] sm:$0xff]
    %v1831 = vld [vmem:[%s3 + $0xe8] sm:$0xff]
    %1840 = vrot.lane.b32.xlu0 %v1824, 64
    %v1841 = vpop.permute.xlu0 %1840
    %1842 = vrot.lane.b32.xlu0 %v1825, 64
    %v1843 = vpop.permute.xlu0 %1842
    %1844 = vrot.lane.b32.xlu0 %v1826, 64
    %v1845 = vpop.permute.xlu0 %1844
    %1846 = vrot.lane.b32.xlu0 %v1827, 64
    %v1847 = vpop.permute.xlu0 %1846
    %1848 = vrot.lane.b32.xlu0 %v1828, 64
    %v1849 = vpop.permute.xlu0 %1848
    %1850 = vrot.lane.b32.xlu0 %v1829, 64
    %v1851 = vpop.permute.xlu0 %1850
    %1852 = vrot.lane.b32.xlu0 %v1830, 64
    %v1853 = vpop.permute.xlu0 %1852
    %1854 = vrot.lane.b32.xlu0 %v1831, 64
    %v1855 = vpop.permute.xlu0 %1854
    %v1856 = vsel %vm1578, %v1841, %v1843
    %v1857 = vsel %vm1578, %v1845, %v1847
    %v1858 = vsel %vm1578, %v1849, %v1851
    %v1859 = vsel %vm1578, %v1853, %v1855
    %v1865 = vsel %vm132, %v1820, 0
    %v1868 = vsel %vm132, %v1821, 0
    %v1871 = vsel %vm132, %v1822, 0
    %v1874 = vsel %vm132, %v1823, 0
    %1876 = vmatpush.msra.mxu0 0.0
    %1877 = vmatpush.msra.mxu0 0.0
    %1878 = vmatpush.msra.mxu0 0.0
    %1879 = vmatpush.msra.mxu0 0.0
    %1880 = vmatpush.msra.mxu0 0.0
    %1881 = vmatpush.msra.mxu0 0.0
    %1882 = vmatpush.msra.mxu0 0.0
    %1883 = vmatpush.msra.mxu0 0.0
    %1884 = vmatpush.msra.mxu0 0.0
    %1885 = vmatpush.msra.mxu0 0.0
    %1886 = vmatpush.msra.mxu0 0.0
    %1887 = vmatpush.msra.mxu0 0.0
    %1888 = vmatpush.msra.mxu0 %v1859
    %1889 = vmatpush.msra.mxu0 %v1858
    %1890 = vmatpush.msra.mxu0 %v1857
    %1891 = vmatpush.msra.mxu0 %v1856
    %1892 = vmatmul.f32.gmra.mxu0 %v1865
    %v1893 = vpop.f32.mrf.mxu0
    %v1894 = vadd.f32 0.0, %v1893
    %1895 = vmatmul.f32.gmra.mxu0 %v1868
    %v1896 = vpop.f32.mrf.mxu0
    %v1897 = vadd.f32 0.0, %v1896
    %1898 = vmatmul.f32.gmra.mxu0 %v1871
    %v1899 = vpop.f32.mrf.mxu0
    %v1900 = vadd.f32 0.0, %v1899
    %1901 = vmatmul.f32.gmra.mxu0 %v1874
    %v1902 = vpop.f32.mrf.mxu0
    %v1903 = vadd.f32 0.0, %v1902
    %1904 = vdwg.mxu0
    %v1905 = vld [vmem:[%s6 + $0x6] sm:$0x1]
    %v1906 = vld [vmem:[%s6 + $0x7] sm:$0x1]
    %1911 = vrot.lane.b32.xlu0 %v1894, 120
    %v1912 = vpop.permute.xlu0 %1911
    %1913 = vrot.lane.b32.xlu0 %v1897, 120
    %v1914 = vpop.permute.xlu0 %1913
    %1915 = vrot.lane.b32.xlu0 %v1900, 120
    %v1916 = vpop.permute.xlu0 %1915
    %1917 = vrot.lane.b32.xlu0 %v1903, 120
    %v1918 = vpop.permute.xlu0 %1917
    %1919 = vrot.lane.b32.xlu0 %v1894, 112
    %v1920 = vpop.permute.xlu0 %1919
    %1921 = vrot.lane.b32.xlu0 %v1897, 112
    %v1922 = vpop.permute.xlu0 %1921
    %1923 = vrot.lane.b32.xlu0 %v1900, 112
    %v1924 = vpop.permute.xlu0 %1923
    %1925 = vrot.lane.b32.xlu0 %v1903, 112
    %v1926 = vpop.permute.xlu0 %1925
    %1927 = vrot.lane.b32.xlu0 %v1894, 104
    %v1928 = vpop.permute.xlu0 %1927
    %1929 = vrot.lane.b32.xlu0 %v1897, 104
    %v1930 = vpop.permute.xlu0 %1929
    %1931 = vrot.lane.b32.xlu0 %v1900, 104
    %v1932 = vpop.permute.xlu0 %1931
    %1933 = vrot.lane.b32.xlu0 %v1903, 104
    %v1934 = vpop.permute.xlu0 %1933
    %1935 = vrot.lane.b32.xlu0 %v1894, 96
    %v1936 = vpop.permute.xlu0 %1935
    %1937 = vrot.lane.b32.xlu0 %v1897, 96
    %v1938 = vpop.permute.xlu0 %1937
    %1939 = vrot.lane.b32.xlu0 %v1900, 96
    %v1940 = vpop.permute.xlu0 %1939
    %1941 = vrot.lane.b32.xlu0 %v1903, 96
    %v1942 = vpop.permute.xlu0 %1941
    %1943 = vrot.lane.b32.xlu0 %v1912, 96
    %v1944 = vpop.permute.xlu0 %1943
    %1945 = vrot.lane.b32.xlu0 %v1914, 96
    %v1946 = vpop.permute.xlu0 %1945
    %1947 = vrot.lane.b32.xlu0 %v1916, 96
    %v1948 = vpop.permute.xlu0 %1947
    %1949 = vrot.lane.b32.xlu0 %v1918, 96
    %v1950 = vpop.permute.xlu0 %1949
    %1951 = vrot.lane.b32.xlu0 %v1920, 96
    %v1952 = vpop.permute.xlu0 %1951
    %1953 = vrot.lane.b32.xlu0 %v1922, 96
    %v1954 = vpop.permute.xlu0 %1953
    %1955 = vrot.lane.b32.xlu0 %v1924, 96
    %v1956 = vpop.permute.xlu0 %1955
    %1957 = vrot.lane.b32.xlu0 %v1926, 96
    %v1958 = vpop.permute.xlu0 %1957
    %1959 = vrot.lane.b32.xlu0 %v1928, 96
    %v1960 = vpop.permute.xlu0 %1959
    %1961 = vrot.lane.b32.xlu0 %v1930, 96
    %v1962 = vpop.permute.xlu0 %1961
    %1963 = vrot.lane.b32.xlu0 %v1932, 96
    %v1964 = vpop.permute.xlu0 %1963
    %1965 = vrot.lane.b32.xlu0 %v1934, 96
    %v1966 = vpop.permute.xlu0 %1965
    %v1967 = vsel %vm805, %v1894, 0
    %v1969 = vsel %vm805, %v1897, 0
    %v1971 = vsel %vm805, %v1900, 0
    %v1973 = vsel %vm805, %v1903, 0
    %v1975 = vsel %vm805, %v1912, 0
    %v1977 = vsel %vm805, %v1914, 0
    %v1979 = vsel %vm805, %v1916, 0
    %v1981 = vsel %vm805, %v1918, 0
    %v1983 = vsel %vm805, %v1920, 0
    %v1985 = vsel %vm805, %v1922, 0
    %v1987 = vsel %vm805, %v1924, 0
    %v1989 = vsel %vm805, %v1926, 0
    %v1991 = vsel %vm805, %v1928, 0
    %v1993 = vsel %vm805, %v1930, 0
    %v1995 = vsel %vm805, %v1932, 0
    %v1997 = vsel %vm805, %v1934, 0
    %v1999 = vsel %vm805, %v1936, 0
    %v2001 = vsel %vm805, %v1938, 0
    %v2003 = vsel %vm805, %v1940, 0
    %v2005 = vsel %vm805, %v1942, 0
    %v2007 = vsel %vm805, %v1944, 0
    %v2009 = vsel %vm805, %v1946, 0
    %v2011 = vsel %vm805, %v1948, 0
    %v2013 = vsel %vm805, %v1950, 0
    %v2015 = vsel %vm805, %v1952, 0
    %v2017 = vsel %vm805, %v1954, 0
    %v2019 = vsel %vm805, %v1956, 0
    %v2021 = vsel %vm805, %v1958, 0
    %v2023 = vsel %vm805, %v1960, 0
    %v2025 = vsel %vm805, %v1962, 0
    %v2027 = vsel %vm805, %v1964, 0
    %v2029 = vsel %vm805, %v1966, 0
    %2031 = vmatpush.xpose.msra.mxu0 %v2029
    %2032 = vmatpush.xpose.msra.mxu0 %v2027
    %2033 = vmatpush.xpose.msra.mxu0 %v2025
    %2034 = vmatpush.xpose.msra.mxu0 %v2023
    %2035 = vmatpush.xpose.msra.mxu0 %v2021
    %2036 = vmatpush.xpose.msra.mxu0 %v2019
    %2037 = vmatpush.xpose.msra.mxu0 %v2017
    %2038 = vmatpush.xpose.msra.mxu0 %v2015
    %2039 = vmatpush.xpose.msra.mxu0 %v2013
    %2040 = vmatpush.xpose.msra.mxu0 %v2011
    %2041 = vmatpush.xpose.msra.mxu0 %v2009
    %2042 = vmatpush.xpose.msra.mxu0 %v2007
    %2043 = vmatpush.xpose.msra.mxu0 %v2005
    %2044 = vmatpush.xpose.msra.mxu0 %v2003
    %2045 = vmatpush.xpose.msra.mxu0 %v2001
    %2046 = vmatpush.xpose.msra.mxu0 %v1999
    %2047 = vmatmul.f32.gmra.mxu0 %v1967
    %v2048 = vpop.f32.mrf.mxu0
    %v2049 = vadd.f32 %v32, %v2048
    %2050 = vmatmul.f32.gmra.mxu0 %v1969
    %v2051 = vpop.f32.mrf.mxu0
    %v2052 = vadd.f32 %v33, %v2051
    %2053 = vmatmul.f32.gmra.mxu0 %v1971
    %v2054 = vpop.f32.mrf.mxu0
    %v2055 = vadd.f32 %v34, %v2054
    %2056 = vmatmul.f32.gmra.mxu0 %v1973
    %v2057 = vpop.f32.mrf.mxu0
    %v2058 = vadd.f32 %v35, %v2057
    %2059 = vmatmul.f32.gmra.mxu0 %v1975
    %v2060 = vpop.f32.mrf.mxu0
    %v2061 = vadd.f32 %v36, %v2060
    %2062 = vmatmul.f32.gmra.mxu0 %v1977
    %v2063 = vpop.f32.mrf.mxu0
    %v2064 = vadd.f32 %v37, %v2063
    %2065 = vmatmul.f32.gmra.mxu0 %v1979
    %v2066 = vpop.f32.mrf.mxu0
    %v2067 = vadd.f32 %v38, %v2066
    %2068 = vmatmul.f32.gmra.mxu0 %v1981
    %v2069 = vpop.f32.mrf.mxu0
    %v2070 = vadd.f32 %v39, %v2069
    %2071 = vmatmul.f32.gmra.mxu0 %v1983
    %v2072 = vpop.f32.mrf.mxu0
    %v2073 = vadd.f32 %v40, %v2072
    %2074 = vmatmul.f32.gmra.mxu0 %v1985
    %v2075 = vpop.f32.mrf.mxu0
    %v2076 = vadd.f32 %v41, %v2075
    %2077 = vmatmul.f32.gmra.mxu0 %v1987
    %v2078 = vpop.f32.mrf.mxu0
    %v2079 = vadd.f32 %v42, %v2078
    %2080 = vmatmul.f32.gmra.mxu0 %v1989
    %v2081 = vpop.f32.mrf.mxu0
    %v2082 = vadd.f32 %v43, %v2081
    %2083 = vmatmul.f32.gmra.mxu0 %v1991
    %v2084 = vpop.f32.mrf.mxu0
    %v2085 = vadd.f32 %v44, %v2084
    %2086 = vmatmul.f32.gmra.mxu0 %v1993
    %v2087 = vpop.f32.mrf.mxu0
    %v2088 = vadd.f32 %v45, %v2087
    %2089 = vmatmul.f32.gmra.mxu0 %v1995
    %v2090 = vpop.f32.mrf.mxu0
    %v2091 = vadd.f32 %v46, %v2090
    %2092 = vmatmul.f32.gmra.mxu0 %v1997
    %v2093 = vpop.f32.mrf.mxu0
    %v2094 = vadd.f32 %v47, %v2093
    %2095 = vdwg.mxu0
    %2096 = vmax.xlane.f32.xlu0 %v2049
    %v2097 = vpop.xlane.xlu0 %2096
    %2098 = vmax.xlane.f32.xlu0 %v2052
    %v2099 = vpop.xlane.xlu0 %2098
    %2100 = vmax.xlane.f32.xlu0 %v2055
    %v2101 = vpop.xlane.xlu0 %2100
    %2102 = vmax.xlane.f32.xlu0 %v2058
    %v2103 = vpop.xlane.xlu0 %2102
    %2104 = vmax.xlane.f32.xlu0 %v2061
    %v2105 = vpop.xlane.xlu0 %2104
    %2106 = vmax.xlane.f32.xlu0 %v2064
    %v2107 = vpop.xlane.xlu0 %2106
    %2108 = vmax.xlane.f32.xlu0 %v2067
    %v2109 = vpop.xlane.xlu0 %2108
    %2110 = vmax.xlane.f32.xlu0 %v2070
    %v2111 = vpop.xlane.xlu0 %2110
    %2112 = vmax.xlane.f32.xlu0 %v2073
    %v2113 = vpop.xlane.xlu0 %2112
    %2114 = vmax.xlane.f32.xlu0 %v2076
    %v2115 = vpop.xlane.xlu0 %2114
    %2116 = vmax.xlane.f32.xlu0 %v2079
    %v2117 = vpop.xlane.xlu0 %2116
    %2118 = vmax.xlane.f32.xlu0 %v2082
    %v2119 = vpop.xlane.xlu0 %2118
    %2120 = vmax.xlane.f32.xlu0 %v2085
    %v2121 = vpop.xlane.xlu0 %2120
    %2122 = vmax.xlane.f32.xlu0 %v2088
    %v2123 = vpop.xlane.xlu0 %2122
    %2124 = vmax.xlane.f32.xlu0 %v2091
    %v2125 = vpop.xlane.xlu0 %2124
    %2126 = vmax.xlane.f32.xlu0 %v2094
    %v2127 = vpop.xlane.xlu0 %2126
    %v2128 = vsub.f32 %v2049, %v2097
    %v2129 = vsub.f32 %v2052, %v2099
    %v2130 = vsub.f32 %v2055, %v2101
    %v2131 = vsub.f32 %v2058, %v2103
    %v2132 = vsub.f32 %v2061, %v2105
    %v2133 = vsub.f32 %v2064, %v2107
    %v2134 = vsub.f32 %v2067, %v2109
    %v2135 = vsub.f32 %v2070, %v2111
    %v2136 = vsub.f32 %v2073, %v2113
    %v2137 = vsub.f32 %v2076, %v2115
    %v2138 = vsub.f32 %v2079, %v2117
    %v2139 = vsub.f32 %v2082, %v2119
    %v2140 = vsub.f32 %v2085, %v2121
    %v2141 = vsub.f32 %v2088, %v2123
    %v2142 = vsub.f32 %v2091, %v2125
    %v2143 = vsub.f32 %v2094, %v2127
    %v2144 = vmul.f32 %v2128, 1.442695
    %v2145 = vpow.pop %v2144
    %v2146 = vmul.f32 %v2129, 1.442695
    %v2147 = vpow.pop %v2146
    %v2148 = vmul.f32 %v2130, 1.442695
    %v2149 = vpow.pop %v2148
    %v2150 = vmul.f32 %v2131, 1.442695
    %v2151 = vpow.pop %v2150
    %v2152 = vmul.f32 %v2132, 1.442695
    %v2153 = vpow.pop %v2152
    %v2154 = vmul.f32 %v2133, 1.442695
    %v2155 = vpow.pop %v2154
    %v2156 = vmul.f32 %v2134, 1.442695
    %v2157 = vpow.pop %v2156
    %v2158 = vmul.f32 %v2135, 1.442695
    %v2159 = vpow.pop %v2158
    %v2160 = vmul.f32 %v2136, 1.442695
    %v2161 = vpow.pop %v2160
    %v2162 = vmul.f32 %v2137, 1.442695
    %v2163 = vpow.pop %v2162
    %v2164 = vmul.f32 %v2138, 1.442695
    %v2165 = vpow.pop %v2164
    %v2166 = vmul.f32 %v2139, 1.442695
    %v2167 = vpow.pop %v2166
    %v2168 = vmul.f32 %v2140, 1.442695
    %v2169 = vpow.pop %v2168
    %v2170 = vmul.f32 %v2141, 1.442695
    %v2171 = vpow.pop %v2170
    %v2172 = vmul.f32 %v2142, 1.442695
    %v2173 = vpow.pop %v2172
    %v2174 = vmul.f32 %v2143, 1.442695
    %v2175 = vpow.pop %v2174
    %2176 = vadd.xlane.f32.xlu0 %v2145
    %v2177 = vpop.xlane.xlu0 %2176
    %2178 = vadd.xlane.f32.xlu0 %v2147
    %v2179 = vpop.xlane.xlu0 %2178
    %2180 = vadd.xlane.f32.xlu0 %v2149
    %v2181 = vpop.xlane.xlu0 %2180
    %2182 = vadd.xlane.f32.xlu0 %v2151
    %v2183 = vpop.xlane.xlu0 %2182
    %2184 = vadd.xlane.f32.xlu0 %v2153
    %v2185 = vpop.xlane.xlu0 %2184
    %2186 = vadd.xlane.f32.xlu0 %v2155
    %v2187 = vpop.xlane.xlu0 %2186
    %2188 = vadd.xlane.f32.xlu0 %v2157
    %v2189 = vpop.xlane.xlu0 %2188
    %2190 = vadd.xlane.f32.xlu0 %v2159
    %v2191 = vpop.xlane.xlu0 %2190
    %2192 = vadd.xlane.f32.xlu0 %v2161
    %v2193 = vpop.xlane.xlu0 %2192
    %2194 = vadd.xlane.f32.xlu0 %v2163
    %v2195 = vpop.xlane.xlu0 %2194
    %2196 = vadd.xlane.f32.xlu0 %v2165
    %v2197 = vpop.xlane.xlu0 %2196
    %2198 = vadd.xlane.f32.xlu0 %v2167
    %v2199 = vpop.xlane.xlu0 %2198
    %2200 = vadd.xlane.f32.xlu0 %v2169
    %v2201 = vpop.xlane.xlu0 %2200
    %2202 = vadd.xlane.f32.xlu0 %v2171
    %v2203 = vpop.xlane.xlu0 %2202
    %2204 = vadd.xlane.f32.xlu0 %v2173
    %v2205 = vpop.xlane.xlu0 %2204
    %2206 = vadd.xlane.f32.xlu0 %v2175
    %v2207 = vpop.xlane.xlu0 %2206
    %v2208 = vrcp.pop %v2177
    %v2209 = vrcp.pop %v2179
    %v2210 = vrcp.pop %v2181
    %v2211 = vrcp.pop %v2183
    %v2212 = vrcp.pop %v2185
    %v2213 = vrcp.pop %v2187
    %v2214 = vrcp.pop %v2189
    %v2215 = vrcp.pop %v2191
    %v2216 = vrcp.pop %v2193
    %v2217 = vrcp.pop %v2195
    %v2218 = vrcp.pop %v2197
    %v2219 = vrcp.pop %v2199
    %v2220 = vrcp.pop %v2201
    %v2221 = vrcp.pop %v2203
    %v2222 = vrcp.pop %v2205
    %v2223 = vrcp.pop %v2207
    %v2224 = vmul.f32 %v2145, %v2208
    %v2225 = vmul.f32 %v2147, %v2209
    %v2226 = vmul.f32 %v2149, %v2210
    %v2227 = vmul.f32 %v2151, %v2211
    %v2228 = vmul.f32 %v2153, %v2212
    %v2229 = vmul.f32 %v2155, %v2213
    %v2230 = vmul.f32 %v2157, %v2214
    %v2231 = vmul.f32 %v2159, %v2215
    %v2232 = vmul.f32 %v2161, %v2216
    %v2233 = vmul.f32 %v2163, %v2217
    %v2234 = vmul.f32 %v2165, %v2218
    %v2235 = vmul.f32 %v2167, %v2219
    %v2236 = vmul.f32 %v2169, %v2220
    %v2237 = vmul.f32 %v2171, %v2221
    %v2238 = vmul.f32 %v2173, %v2222
    %v2239 = vmul.f32 %v2175, %v2223
    %2240 = vrot.lane.b32.xlu0 %v1894, 64
    %v2241 = vpop.permute.xlu0 %2240
    %2242 = vrot.lane.b32.xlu0 %v1897, 64
    %v2243 = vpop.permute.xlu0 %2242
    %2244 = vrot.lane.b32.xlu0 %v1900, 64
    %v2245 = vpop.permute.xlu0 %2244
    %2246 = vrot.lane.b32.xlu0 %v1903, 64
    %v2247 = vpop.permute.xlu0 %2246
    %2248 = vrot.lane.b32.xlu0 %v1912, 64
    %v2249 = vpop.permute.xlu0 %2248
    %2250 = vrot.lane.b32.xlu0 %v1914, 64
    %v2251 = vpop.permute.xlu0 %2250
    %2252 = vrot.lane.b32.xlu0 %v1916, 64
    %v2253 = vpop.permute.xlu0 %2252
    %2254 = vrot.lane.b32.xlu0 %v1918, 64
    %v2255 = vpop.permute.xlu0 %2254
    %2256 = vrot.lane.b32.xlu0 %v1920, 64
    %v2257 = vpop.permute.xlu0 %2256
    %2258 = vrot.lane.b32.xlu0 %v1922, 64
    %v2259 = vpop.permute.xlu0 %2258
    %2260 = vrot.lane.b32.xlu0 %v1924, 64
    %v2261 = vpop.permute.xlu0 %2260
    %2262 = vrot.lane.b32.xlu0 %v1926, 64
    %v2263 = vpop.permute.xlu0 %2262
    %2264 = vrot.lane.b32.xlu0 %v1928, 64
    %v2265 = vpop.permute.xlu0 %2264
    %2266 = vrot.lane.b32.xlu0 %v1930, 64
    %v2267 = vpop.permute.xlu0 %2266
    %2268 = vrot.lane.b32.xlu0 %v1932, 64
    %v2269 = vpop.permute.xlu0 %2268
    %2270 = vrot.lane.b32.xlu0 %v1934, 64
    %v2271 = vpop.permute.xlu0 %2270
    %2288 = vmatpush.msra.mxu0 %v2271
    %2289 = vmatpush.msra.mxu0 %v2269
    %2290 = vmatpush.msra.mxu0 %v2267
    %2291 = vmatpush.msra.mxu0 %v2265
    %2292 = vmatpush.msra.mxu0 %v2263
    %2293 = vmatpush.msra.mxu0 %v2261
    %2294 = vmatpush.msra.mxu0 %v2259
    %2295 = vmatpush.msra.mxu0 %v2257
    %2296 = vmatpush.msra.mxu0 %v2255
    %2297 = vmatpush.msra.mxu0 %v2253
    %2298 = vmatpush.msra.mxu0 %v2251
    %2299 = vmatpush.msra.mxu0 %v2249
    %2300 = vmatpush.msra.mxu0 %v2247
    %2301 = vmatpush.msra.mxu0 %v2245
    %2302 = vmatpush.msra.mxu0 %v2243
    %2303 = vmatpush.msra.mxu0 %v2241
    %2304 = vmatmul.f32.gmra.mxu0 %v2224
    %v2305 = vpop.f32.mrf.mxu0
    %v2306 = vadd.f32 0.0, %v2305
    %2307 = vmatmul.f32.gmra.mxu0 %v2225
    %v2308 = vpop.f32.mrf.mxu0
    %v2309 = vadd.f32 0.0, %v2308
    %2310 = vmatmul.f32.gmra.mxu0 %v2226
    %v2311 = vpop.f32.mrf.mxu0
    %v2312 = vadd.f32 0.0, %v2311
    %2313 = vmatmul.f32.gmra.mxu0 %v2227
    %v2314 = vpop.f32.mrf.mxu0
    %v2315 = vadd.f32 0.0, %v2314
    %2316 = vmatmul.f32.gmra.mxu0 %v2228
    %v2317 = vpop.f32.mrf.mxu0
    %v2318 = vadd.f32 0.0, %v2317
    %2319 = vmatmul.f32.gmra.mxu0 %v2229
    %v2320 = vpop.f32.mrf.mxu0
    %v2321 = vadd.f32 0.0, %v2320
    %2322 = vmatmul.f32.gmra.mxu0 %v2230
    %v2323 = vpop.f32.mrf.mxu0
    %v2324 = vadd.f32 0.0, %v2323
    %2325 = vmatmul.f32.gmra.mxu0 %v2231
    %v2326 = vpop.f32.mrf.mxu0
    %v2327 = vadd.f32 0.0, %v2326
    %2328 = vmatmul.f32.gmra.mxu0 %v2232
    %v2329 = vpop.f32.mrf.mxu0
    %v2330 = vadd.f32 0.0, %v2329
    %2331 = vmatmul.f32.gmra.mxu0 %v2233
    %v2332 = vpop.f32.mrf.mxu0
    %v2333 = vadd.f32 0.0, %v2332
    %2334 = vmatmul.f32.gmra.mxu0 %v2234
    %v2335 = vpop.f32.mrf.mxu0
    %v2336 = vadd.f32 0.0, %v2335
    %2337 = vmatmul.f32.gmra.mxu0 %v2235
    %v2338 = vpop.f32.mrf.mxu0
    %v2339 = vadd.f32 0.0, %v2338
    %2340 = vmatmul.f32.gmra.mxu0 %v2236
    %v2341 = vpop.f32.mrf.mxu0
    %v2342 = vadd.f32 0.0, %v2341
    %2343 = vmatmul.f32.gmra.mxu0 %v2237
    %v2344 = vpop.f32.mrf.mxu0
    %v2345 = vadd.f32 0.0, %v2344
    %2346 = vmatmul.f32.gmra.mxu0 %v2238
    %v2347 = vpop.f32.mrf.mxu0
    %v2348 = vadd.f32 0.0, %v2347
    %2349 = vmatmul.f32.gmra.mxu0 %v2239
    %v2350 = vpop.f32.mrf.mxu0
    %v2351 = vadd.f32 0.0, %v2350
    %2352 = vdwg.mxu0
    %2357 = vrot.lane.b32.xlu0 %v2318, 8
    %v2358 = vpop.permute.xlu0 %2357
    %2359 = vrot.lane.b32.xlu0 %v2321, 8
    %v2360 = vpop.permute.xlu0 %2359
    %2361 = vrot.lane.b32.xlu0 %v2324, 8
    %v2362 = vpop.permute.xlu0 %2361
    %2363 = vrot.lane.b32.xlu0 %v2327, 8
    %v2364 = vpop.permute.xlu0 %2363
    %2373 = vrot.lane.b32.xlu0 %v2330, 16
    %v2374 = vpop.permute.xlu0 %2373
    %2375 = vrot.lane.b32.xlu0 %v2333, 16
    %v2376 = vpop.permute.xlu0 %2375
    %2377 = vrot.lane.b32.xlu0 %v2336, 16
    %v2378 = vpop.permute.xlu0 %2377
    %2379 = vrot.lane.b32.xlu0 %v2339, 16
    %v2380 = vpop.permute.xlu0 %2379
    %2389 = vrot.lane.b32.xlu0 %v2342, 24
    %v2390 = vpop.permute.xlu0 %2389
    %2391 = vrot.lane.b32.xlu0 %v2345, 24
    %v2392 = vpop.permute.xlu0 %2391
    %2393 = vrot.lane.b32.xlu0 %v2348, 24
    %v2394 = vpop.permute.xlu0 %2393
    %2395 = vrot.lane.b32.xlu0 %v2351, 24
    %v2396 = vpop.permute.xlu0 %2395
    %v2401 = vsel %vm805, %v2306, %v2358
    %v2402 = vsel %vm805, %v2309, %v2360
    %v2403 = vsel %vm805, %v2312, %v2362
    %v2404 = vsel %vm805, %v2315, %v2364
    %v2405 = vsel %vm1244, %v2401, %v2374
    %v2406 = vsel %vm1244, %v2402, %v2376
    %v2407 = vsel %vm1244, %v2403, %v2378
    %v2408 = vsel %vm1244, %v2404, %v2380
    %v2409 = vsel %vm1249, %v2405, %v2390
    %v2410 = vsel %vm1249, %v2406, %v2392
    %v2411 = vsel %vm1249, %v2407, %v2394
    %v2412 = vsel %vm1249, %v2408, %v2396
    %2413 = vrot.lane.b32.xlu0 %v1825, 96
    %v2414 = vpop.permute.xlu0 %2413
    %2415 = vrot.lane.b32.xlu0 %v1827, 96
    %v2416 = vpop.permute.xlu0 %2415
    %2417 = vrot.lane.b32.xlu0 %v1829, 96
    %v2418 = vpop.permute.xlu0 %2417
    %2419 = vrot.lane.b32.xlu0 %v1831, 96
    %v2420 = vpop.permute.xlu0 %2419
    %v2426 = vsel %vm132, %v2409, 0
    %v2429 = vsel %vm132, %v2410, 0
    %v2432 = vsel %vm132, %v2411, 0
    %v2435 = vsel %vm132, %v2412, 0
    %2437 = vmatpush.msra.mxu0 0.0
    %2438 = vmatpush.msra.mxu0 0.0
    %2439 = vmatpush.msra.mxu0 0.0
    %2440 = vmatpush.msra.mxu0 0.0
    %2441 = vmatpush.msra.mxu0 0.0
    %2442 = vmatpush.msra.mxu0 0.0
    %2443 = vmatpush.msra.mxu0 0.0
    %2444 = vmatpush.msra.mxu0 0.0
    %2445 = vmatpush.msra.mxu0 0.0
    %2446 = vmatpush.msra.mxu0 0.0
    %2447 = vmatpush.msra.mxu0 0.0
    %2448 = vmatpush.msra.mxu0 0.0
    %2449 = vmatpush.msra.mxu0 %v2420
    %2450 = vmatpush.msra.mxu0 %v2418
    %2451 = vmatpush.msra.mxu0 %v2416
    %2452 = vmatpush.msra.mxu0 %v2414
    %2453 = vmatmul.f32.gmra.mxu0 %v2426
    %v2454 = vpop.f32.mrf.mxu0
    %v2455 = vadd.f32 0.0, %v2454
    %2456 = vmatmul.f32.gmra.mxu0 %v2429
    %v2457 = vpop.f32.mrf.mxu0
    %v2458 = vadd.f32 0.0, %v2457
    %2459 = vmatmul.f32.gmra.mxu0 %v2432
    %v2460 = vpop.f32.mrf.mxu0
    %v2461 = vadd.f32 0.0, %v2460
    %2462 = vmatmul.f32.gmra.mxu0 %v2435
    %v2463 = vpop.f32.mrf.mxu0
    %v2464 = vadd.f32 0.0, %v2463
    %2465 = vdwg.mxu0
    %v2466 = vadd.f32 %v1820, %v2455
    %v2467 = vadd.f32 %v1821, %v2458
    %v2468 = vadd.f32 %v1822, %v2461
    %v2469 = vadd.f32 %v1823, %v2464
    %v2471 = vsel %vm132, %v2466, 0
    %v2474 = vsel %vm132, %v2467, 0
    %v2477 = vsel %vm132, %v2468, 0
    %v2480 = vsel %vm132, %v2469, 0
    %2482 = vmatpush.msra.mxu0 0.0
    %2483 = vmatpush.msra.mxu0 0.0
    %2484 = vmatpush.msra.mxu0 0.0
    %2485 = vmatpush.msra.mxu0 0.0
    %2486 = vmatpush.msra.mxu0 0.0
    %2487 = vmatpush.msra.mxu0 0.0
    %2488 = vmatpush.msra.mxu0 0.0
    %2489 = vmatpush.msra.mxu0 0.0
    %2490 = vmatpush.msra.mxu0 0.0
    %2491 = vmatpush.msra.mxu0 0.0
    %2492 = vmatpush.msra.mxu0 0.0
    %2493 = vmatpush.msra.mxu0 0.0
    %2494 = vmatpush.msra.mxu0 0.03125
    %2495 = vmatpush.msra.mxu0 0.03125
    %2496 = vmatpush.msra.mxu0 0.03125
    %2497 = vmatpush.msra.mxu0 0.03125
    %2498 = vmatmul.f32.gmra.mxu0 %v2471
    %v2499 = vpop.f32.mrf.mxu0
    %v2500 = vadd.f32 0.0, %v2499
    %2501 = vmatmul.f32.gmra.mxu0 %v2474
    %v2502 = vpop.f32.mrf.mxu0
    %v2503 = vadd.f32 0.0, %v2502
    %2504 = vmatmul.f32.gmra.mxu0 %v2477
    %v2505 = vpop.f32.mrf.mxu0
    %v2506 = vadd.f32 0.0, %v2505
    %2507 = vmatmul.f32.gmra.mxu0 %v2480
    %v2508 = vpop.f32.mrf.mxu0
    %v2509 = vadd.f32 0.0, %v2508
    %2510 = vdwg.mxu0
    %v2511 = vmul.f32 %v2466, %v2466
    %v2512 = vmul.f32 %v2467, %v2467
    %v2513 = vmul.f32 %v2468, %v2468
    %v2514 = vmul.f32 %v2469, %v2469
    %v2516 = vsel %vm132, %v2511, 0
    %v2519 = vsel %vm132, %v2512, 0
    %v2522 = vsel %vm132, %v2513, 0
    %v2525 = vsel %vm132, %v2514, 0
    %2527 = vmatpush.msra.mxu0 0.0
    %2528 = vmatpush.msra.mxu0 0.0
    %2529 = vmatpush.msra.mxu0 0.0
    %2530 = vmatpush.msra.mxu0 0.0
    %2531 = vmatpush.msra.mxu0 0.0
    %2532 = vmatpush.msra.mxu0 0.0
    %2533 = vmatpush.msra.mxu0 0.0
    %2534 = vmatpush.msra.mxu0 0.0
    %2535 = vmatpush.msra.mxu0 0.0
    %2536 = vmatpush.msra.mxu0 0.0
    %2537 = vmatpush.msra.mxu0 0.0
    %2538 = vmatpush.msra.mxu0 0.0
    %2539 = vmatpush.msra.mxu0 0.03125
    %2540 = vmatpush.msra.mxu0 0.03125
    %2541 = vmatpush.msra.mxu0 0.03125
    %2542 = vmatpush.msra.mxu0 0.03125
    %2543 = vmatmul.f32.gmra.mxu0 %v2516
    %v2544 = vpop.f32.mrf.mxu0
    %v2545 = vadd.f32 0.0, %v2544
    %2546 = vmatmul.f32.gmra.mxu0 %v2519
    %v2547 = vpop.f32.mrf.mxu0
    %v2548 = vadd.f32 0.0, %v2547
    %2549 = vmatmul.f32.gmra.mxu0 %v2522
    %v2550 = vpop.f32.mrf.mxu0
    %v2551 = vadd.f32 0.0, %v2550
    %2552 = vmatmul.f32.gmra.mxu0 %v2525
    %v2553 = vpop.f32.mrf.mxu0
    %v2554 = vadd.f32 0.0, %v2553
    %2555 = vdwg.mxu0
    %v2556 = vmul.f32 %v2500, %v2500
    %v2557 = vmul.f32 %v2503, %v2503
    %v2558 = vmul.f32 %v2506, %v2506
    %v2559 = vmul.f32 %v2509, %v2509
    %v2560 = vsub.f32 %v2545, %v2556
    %v2561 = vsub.f32 %v2548, %v2557
    %v2562 = vsub.f32 %v2551, %v2558
    %v2563 = vsub.f32 %v2554, %v2559
    %v2564 = vmax.f32 %v2560, 0.0
    %v2565 = vmax.f32 %v2561, 0.0
    %v2566 = vmax.f32 %v2562, 0.0
    %v2567 = vmax.f32 %v2563, 0.0
    %2569 = vset.pattern.permute.xlu0 0
    %2570 = vperm.xlu0 %2569, %v2500
    %v2571 = vpop.permute.xlu0 %2570
    %2574 = vset.pattern.permute.xlu0 0
    %2575 = vperm.xlu0 %2574, %v2503
    %v2576 = vpop.permute.xlu0 %2575
    %2579 = vset.pattern.permute.xlu0 0
    %2580 = vperm.xlu0 %2579, %v2506
    %v2581 = vpop.permute.xlu0 %2580
    %2584 = vset.pattern.permute.xlu0 0
    %2585 = vperm.xlu0 %2584, %v2509
    %v2586 = vpop.permute.xlu0 %2585
    %v2588 = vsub.f32 %v2466, %v2571
    %v2589 = vsub.f32 %v2467, %v2576
    %v2590 = vsub.f32 %v2468, %v2581
    %v2591 = vsub.f32 %v2469, %v2586
    %v2592 = vadd.f32 %v2564, 1e-06
    %v2593 = vadd.f32 %v2565, 1e-06
    %v2594 = vadd.f32 %v2566, 1e-06
    %v2595 = vadd.f32 %v2567, 1e-06
    %v2596 = vrsqrt.pop %v2592
    %v2597 = vmul.f32 %v2596, %v2592
    %v2598 = vmul.f32 %v2597, %v2596
    %v2599 = vmul.f32 0.5, %v2598
    %v2600 = vsub.f32 1.5, %v2599
    %v2601 = vmul.f32 %v2596, %v2600
    %vm2602 = vweird.f32 %v2592
    %vm2603 = vweird.f32 %v2596
    %vm2604 = vmor %vm2602, %vm2603
    %v2605 = vsel %vm2604, %v2596, %v2601
    %v2606 = vrsqrt.pop %v2593
    %v2607 = vmul.f32 %v2606, %v2593
    %v2608 = vmul.f32 %v2607, %v2606
    %v2609 = vmul.f32 0.5, %v2608
    %v2610 = vsub.f32 1.5, %v2609
    %v2611 = vmul.f32 %v2606, %v2610
    %vm2612 = vweird.f32 %v2593
    %vm2613 = vweird.f32 %v2606
    %vm2614 = vmor %vm2612, %vm2613
    %v2615 = vsel %vm2614, %v2606, %v2611
    %v2616 = vrsqrt.pop %v2594
    %v2617 = vmul.f32 %v2616, %v2594
    %v2618 = vmul.f32 %v2617, %v2616
    %v2619 = vmul.f32 0.5, %v2618
    %v2620 = vsub.f32 1.5, %v2619
    %v2621 = vmul.f32 %v2616, %v2620
    %vm2622 = vweird.f32 %v2594
    %vm2623 = vweird.f32 %v2616
    %vm2624 = vmor %vm2622, %vm2623
    %v2625 = vsel %vm2624, %v2616, %v2621
    %v2626 = vrsqrt.pop %v2595
    %v2627 = vmul.f32 %v2626, %v2595
    %v2628 = vmul.f32 %v2627, %v2626
    %v2629 = vmul.f32 0.5, %v2628
    %v2630 = vsub.f32 1.5, %v2629
    %v2631 = vmul.f32 %v2626, %v2630
    %vm2632 = vweird.f32 %v2595
    %vm2633 = vweird.f32 %v2626
    %vm2634 = vmor %vm2632, %vm2633
    %v2635 = vsel %vm2634, %v2626, %v2631
    %2637 = vset.pattern.permute.xlu0 0
    %2638 = vperm.xlu0 %2637, %v2605
    %v2639 = vpop.permute.xlu0 %2638
    %2642 = vset.pattern.permute.xlu0 0
    %2643 = vperm.xlu0 %2642, %v2615
    %v2644 = vpop.permute.xlu0 %2643
    %2647 = vset.pattern.permute.xlu0 0
    %2648 = vperm.xlu0 %2647, %v2625
    %v2649 = vpop.permute.xlu0 %2648
    %2652 = vset.pattern.permute.xlu0 0
    %2653 = vperm.xlu0 %2652, %v2635
    %v2654 = vpop.permute.xlu0 %2653
    %v2656 = vmul.f32 %v2588, %v2639
    %v2657 = vmul.f32 %v2589, %v2644
    %v2658 = vmul.f32 %v2590, %v2649
    %v2659 = vmul.f32 %v2591, %v2654
    %v2660 = vperm.slane %v1905, 0
    %v2661 = vmul.f32 %v2656, %v2660
    %v2662 = vmul.f32 %v2657, %v2660
    %v2663 = vmul.f32 %v2658, %v2660
    %v2664 = vmul.f32 %v2659, %v2660
    %v2665 = vperm.slane %v1906, 0
    %v2666 = vadd.f32 %v2661, %v2665
    %v2667 = vadd.f32 %v2662, %v2665
    %v2668 = vadd.f32 %v2663, %v2665
    %v2669 = vadd.f32 %v2664, %v2665
    %v2670 = vld [vmem:[%s6 + $0x8] sm:$0x1]
    %v2671 = vld [vmem:[%s6 + $0x9] sm:$0x1]
    %v2672 = vld [vmem:[%s6 + $0xa] sm:$0x1]
    %v2673 = vld [vmem:[%s6 + $0xb] sm:$0x1]
    %v2674 = vperm.slane %v2670, 0
    %v2680 = vsel %vm132, %v2666, 0
    %v2683 = vsel %vm132, %v2667, 0
    %v2686 = vsel %vm132, %v2668, 0
    %v2689 = vsel %vm132, %v2669, 0
    %2691 = vmatpush.msra.mxu0 0.0
    %2692 = vmatpush.msra.mxu0 0.0
    %2693 = vmatpush.msra.mxu0 0.0
    %2694 = vmatpush.msra.mxu0 0.0
    %2695 = vmatpush.msra.mxu0 0.0
    %2696 = vmatpush.msra.mxu0 0.0
    %2697 = vmatpush.msra.mxu0 0.0
    %2698 = vmatpush.msra.mxu0 0.0
    %2699 = vmatpush.msra.mxu0 0.0
    %2700 = vmatpush.msra.mxu0 0.0
    %2701 = vmatpush.msra.mxu0 0.0
    %2702 = vmatpush.msra.mxu0 0.0
    %2703 = vmatpush.msra.mxu0 %v1855
    %2704 = vmatpush.msra.mxu0 %v1851
    %2705 = vmatpush.msra.mxu0 %v1847
    %2706 = vmatpush.msra.mxu0 %v1843
    %2707 = vmatmul.f32.gmra.mxu0 %v2680
    %v2708 = vpop.f32.mrf.mxu0
    %v2709 = vadd.f32 %v2674, %v2708
    %2710 = vmatmul.f32.gmra.mxu0 %v2683
    %v2711 = vpop.f32.mrf.mxu0
    %v2712 = vadd.f32 %v2674, %v2711
    %2713 = vmatmul.f32.gmra.mxu0 %v2686
    %v2714 = vpop.f32.mrf.mxu0
    %v2715 = vadd.f32 %v2674, %v2714
    %2716 = vmatmul.f32.gmra.mxu0 %v2689
    %v2717 = vpop.f32.mrf.mxu0
    %v2718 = vadd.f32 %v2674, %v2717
    %2719 = vdwg.mxu0
    %v2720 = vmax.f32 %v2709, 0.0
    %v2721 = vmax.f32 %v2712, 0.0
    %v2722 = vmax.f32 %v2715, 0.0
    %v2723 = vmax.f32 %v2718, 0.0
    %v2724 = vperm.slane %v2671, 0
    %2733 = vrot.lane.b32.xlu0 %v1520, 96
    %v2734 = vpop.permute.xlu0 %2733
    %2735 = vrot.lane.b32.xlu0 %v1521, 96
    %v2736 = vpop.permute.xlu0 %2735
    %2737 = vrot.lane.b32.xlu0 %v1522, 96
    %v2738 = vpop.permute.xlu0 %2737
    %2739 = vrot.lane.b32.xlu0 %v1523, 96
    %v2740 = vpop.permute.xlu0 %2739
    %2741 = vrot.lane.b32.xlu0 %v1524, 96
    %v2742 = vpop.permute.xlu0 %2741
    %2743 = vrot.lane.b32.xlu0 %v1525, 96
    %v2744 = vpop.permute.xlu0 %2743
    %2745 = vrot.lane.b32.xlu0 %v1526, 96
    %v2746 = vpop.permute.xlu0 %2745
    %2747 = vrot.lane.b32.xlu0 %v1527, 96
    %v2748 = vpop.permute.xlu0 %2747
    %v2758 = vsel %vm1578, %v2720, 0
    %v2761 = vsel %vm1578, %v2721, 0
    %v2764 = vsel %vm1578, %v2722, 0
    %v2767 = vsel %vm1578, %v2723, 0
    %2769 = vmatpush.msra.mxu0 0.0
    %2770 = vmatpush.msra.mxu0 0.0
    %2771 = vmatpush.msra.mxu0 0.0
    %2772 = vmatpush.msra.mxu0 0.0
    %2773 = vmatpush.msra.mxu0 0.0
    %2774 = vmatpush.msra.mxu0 0.0
    %2775 = vmatpush.msra.mxu0 0.0
    %2776 = vmatpush.msra.mxu0 0.0
    %2777 = vmatpush.msra.mxu0 %v2748
    %2778 = vmatpush.msra.mxu0 %v2746
    %2779 = vmatpush.msra.mxu0 %v2744
    %2780 = vmatpush.msra.mxu0 %v2742
    %2781 = vmatpush.msra.mxu0 %v2740
    %2782 = vmatpush.msra.mxu0 %v2738
    %2783 = vmatpush.msra.mxu0 %v2736
    %2784 = vmatpush.msra.mxu0 %v2734
    %2785 = vmatmul.f32.gmra.mxu0 %v2758
    %v2786 = vpop.f32.mrf.mxu0
    %v2787 = vadd.f32 %v2724, %v2786
    %2788 = vmatmul.f32.gmra.mxu0 %v2761
    %v2789 = vpop.f32.mrf.mxu0
    %v2790 = vadd.f32 %v2724, %v2789
    %2791 = vmatmul.f32.gmra.mxu0 %v2764
    %v2792 = vpop.f32.mrf.mxu0
    %v2793 = vadd.f32 %v2724, %v2792
    %2794 = vmatmul.f32.gmra.mxu0 %v2767
    %v2795 = vpop.f32.mrf.mxu0
    %v2796 = vadd.f32 %v2724, %v2795
    %2797 = vdwg.mxu0
    %v2798 = vadd.f32 %v2787, %v2666
    %v2799 = vadd.f32 %v2790, %v2667
    %v2800 = vadd.f32 %v2793, %v2668
    %v2801 = vadd.f32 %v2796, %v2669
    %v2803 = vsel %vm132, %v2798, 0
    %v2806 = vsel %vm132, %v2799, 0
    %v2809 = vsel %vm132, %v2800, 0
    %v2812 = vsel %vm132, %v2801, 0
    %2814 = vmatpush.msra.mxu0 0.0
    %2815 = vmatpush.msra.mxu0 0.0
    %2816 = vmatpush.msra.mxu0 0.0
    %2817 = vmatpush.msra.mxu0 0.0
    %2818 = vmatpush.msra.mxu0 0.0
    %2819 = vmatpush.msra.mxu0 0.0
    %2820 = vmatpush.msra.mxu0 0.0
    %2821 = vmatpush.msra.mxu0 0.0
    %2822 = vmatpush.msra.mxu0 0.0
    %2823 = vmatpush.msra.mxu0 0.0
    %2824 = vmatpush.msra.mxu0 0.0
    %2825 = vmatpush.msra.mxu0 0.0
    %2826 = vmatpush.msra.mxu0 0.03125
    %2827 = vmatpush.msra.mxu0 0.03125
    %2828 = vmatpush.msra.mxu0 0.03125
    %2829 = vmatpush.msra.mxu0 0.03125
    %2830 = vmatmul.f32.gmra.mxu0 %v2803
    %v2831 = vpop.f32.mrf.mxu0
    %v2832 = vadd.f32 0.0, %v2831
    %2833 = vmatmul.f32.gmra.mxu0 %v2806
    %v2834 = vpop.f32.mrf.mxu0
    %v2835 = vadd.f32 0.0, %v2834
    %2836 = vmatmul.f32.gmra.mxu0 %v2809
    %v2837 = vpop.f32.mrf.mxu0
    %v2838 = vadd.f32 0.0, %v2837
    %2839 = vmatmul.f32.gmra.mxu0 %v2812
    %v2840 = vpop.f32.mrf.mxu0
    %v2841 = vadd.f32 0.0, %v2840
    %2842 = vdwg.mxu0
    %v2843 = vmul.f32 %v2798, %v2798
    %v2844 = vmul.f32 %v2799, %v2799
    %v2845 = vmul.f32 %v2800, %v2800
    %v2846 = vmul.f32 %v2801, %v2801
    %v2848 = vsel %vm132, %v2843, 0
    %v2851 = vsel %vm132, %v2844, 0
    %v2854 = vsel %vm132, %v2845, 0
    %v2857 = vsel %vm132, %v2846, 0
    %2859 = vmatpush.msra.mxu0 0.0
    %2860 = vmatpush.msra.mxu0 0.0
    %2861 = vmatpush.msra.mxu0 0.0
    %2862 = vmatpush.msra.mxu0 0.0
    %2863 = vmatpush.msra.mxu0 0.0
    %2864 = vmatpush.msra.mxu0 0.0
    %2865 = vmatpush.msra.mxu0 0.0
    %2866 = vmatpush.msra.mxu0 0.0
    %2867 = vmatpush.msra.mxu0 0.0
    %2868 = vmatpush.msra.mxu0 0.0
    %2869 = vmatpush.msra.mxu0 0.0
    %2870 = vmatpush.msra.mxu0 0.0
    %2871 = vmatpush.msra.mxu0 0.03125
    %2872 = vmatpush.msra.mxu0 0.03125
    %2873 = vmatpush.msra.mxu0 0.03125
    %2874 = vmatpush.msra.mxu0 0.03125
    %2875 = vmatmul.f32.gmra.mxu0 %v2848
    %v2876 = vpop.f32.mrf.mxu0
    %v2877 = vadd.f32 0.0, %v2876
    %2878 = vmatmul.f32.gmra.mxu0 %v2851
    %v2879 = vpop.f32.mrf.mxu0
    %v2880 = vadd.f32 0.0, %v2879
    %2881 = vmatmul.f32.gmra.mxu0 %v2854
    %v2882 = vpop.f32.mrf.mxu0
    %v2883 = vadd.f32 0.0, %v2882
    %2884 = vmatmul.f32.gmra.mxu0 %v2857
    %v2885 = vpop.f32.mrf.mxu0
    %v2886 = vadd.f32 0.0, %v2885
    %2887 = vdwg.mxu0
    %v2888 = vmul.f32 %v2832, %v2832
    %v2889 = vmul.f32 %v2835, %v2835
    %v2890 = vmul.f32 %v2838, %v2838
    %v2891 = vmul.f32 %v2841, %v2841
    %v2892 = vsub.f32 %v2877, %v2888
    %v2893 = vsub.f32 %v2880, %v2889
    %v2894 = vsub.f32 %v2883, %v2890
    %v2895 = vsub.f32 %v2886, %v2891
    %v2896 = vmax.f32 %v2892, 0.0
    %v2897 = vmax.f32 %v2893, 0.0
    %v2898 = vmax.f32 %v2894, 0.0
    %v2899 = vmax.f32 %v2895, 0.0
    %2901 = vset.pattern.permute.xlu0 0
    %2902 = vperm.xlu0 %2901, %v2832
    %v2903 = vpop.permute.xlu0 %2902
    %2906 = vset.pattern.permute.xlu0 0
    %2907 = vperm.xlu0 %2906, %v2835
    %v2908 = vpop.permute.xlu0 %2907
    %2911 = vset.pattern.permute.xlu0 0
    %2912 = vperm.xlu0 %2911, %v2838
    %v2913 = vpop.permute.xlu0 %2912
    %2916 = vset.pattern.permute.xlu0 0
    %2917 = vperm.xlu0 %2916, %v2841
    %v2918 = vpop.permute.xlu0 %2917
    %v2920 = vsub.f32 %v2798, %v2903
    %v2921 = vsub.f32 %v2799, %v2908
    %v2922 = vsub.f32 %v2800, %v2913
    %v2923 = vsub.f32 %v2801, %v2918
    %v2924 = vadd.f32 %v2896, 1e-06
    %v2925 = vadd.f32 %v2897, 1e-06
    %v2926 = vadd.f32 %v2898, 1e-06
    %v2927 = vadd.f32 %v2899, 1e-06
    %v2928 = vrsqrt.pop %v2924
    %v2929 = vmul.f32 %v2928, %v2924
    %v2930 = vmul.f32 %v2929, %v2928
    %v2931 = vmul.f32 0.5, %v2930
    %v2932 = vsub.f32 1.5, %v2931
    %v2933 = vmul.f32 %v2928, %v2932
    %vm2934 = vweird.f32 %v2924
    %vm2935 = vweird.f32 %v2928
    %vm2936 = vmor %vm2934, %vm2935
    %v2937 = vsel %vm2936, %v2928, %v2933
    %v2938 = vrsqrt.pop %v2925
    %v2939 = vmul.f32 %v2938, %v2925
    %v2940 = vmul.f32 %v2939, %v2938
    %v2941 = vmul.f32 0.5, %v2940
    %v2942 = vsub.f32 1.5, %v2941
    %v2943 = vmul.f32 %v2938, %v2942
    %vm2944 = vweird.f32 %v2925
    %vm2945 = vweird.f32 %v2938
    %vm2946 = vmor %vm2944, %vm2945
    %v2947 = vsel %vm2946, %v2938, %v2943
    %v2948 = vrsqrt.pop %v2926
    %v2949 = vmul.f32 %v2948, %v2926
    %v2950 = vmul.f32 %v2949, %v2948
    %v2951 = vmul.f32 0.5, %v2950
    %v2952 = vsub.f32 1.5, %v2951
    %v2953 = vmul.f32 %v2948, %v2952
    %vm2954 = vweird.f32 %v2926
    %vm2955 = vweird.f32 %v2948
    %vm2956 = vmor %vm2954, %vm2955
    %v2957 = vsel %vm2956, %v2948, %v2953
    %v2958 = vrsqrt.pop %v2927
    %v2959 = vmul.f32 %v2958, %v2927
    %v2960 = vmul.f32 %v2959, %v2958
    %v2961 = vmul.f32 0.5, %v2960
    %v2962 = vsub.f32 1.5, %v2961
    %v2963 = vmul.f32 %v2958, %v2962
    %vm2964 = vweird.f32 %v2927
    %vm2965 = vweird.f32 %v2958
    %vm2966 = vmor %vm2964, %vm2965
    %v2967 = vsel %vm2966, %v2958, %v2963
    %2969 = vset.pattern.permute.xlu0 0
    %2970 = vperm.xlu0 %2969, %v2937
    %v2971 = vpop.permute.xlu0 %2970
    %2974 = vset.pattern.permute.xlu0 0
    %2975 = vperm.xlu0 %2974, %v2947
    %v2976 = vpop.permute.xlu0 %2975
    %2979 = vset.pattern.permute.xlu0 0
    %2980 = vperm.xlu0 %2979, %v2957
    %v2981 = vpop.permute.xlu0 %2980
    %2984 = vset.pattern.permute.xlu0 0
    %2985 = vperm.xlu0 %2984, %v2967
    %v2986 = vpop.permute.xlu0 %2985
    %v2988 = vmul.f32 %v2920, %v2971
    %v2989 = vmul.f32 %v2921, %v2976
    %v2990 = vmul.f32 %v2922, %v2981
    %v2991 = vmul.f32 %v2923, %v2986
    %v2992 = vperm.slane %v2672, 0
    %v2993 = vmul.f32 %v2988, %v2992
    %v2994 = vmul.f32 %v2989, %v2992
    %v2995 = vmul.f32 %v2990, %v2992
    %v2996 = vmul.f32 %v2991, %v2992
    %v2997 = vperm.slane %v2673, 0
    %v2998 = vadd.f32 %v2993, %v2997
    %v2999 = vadd.f32 %v2994, %v2997
    %v3000 = vadd.f32 %v2995, %v2997
    %v3001 = vadd.f32 %v2996, %v2997
    %v3002 = vld [vmem:[%s3 + $0x18] sm:$0xff]
    %v3003 = vld [vmem:[%s3 + $0x60] sm:$0xff]
    %v3004 = vld [vmem:[%s3 + $0xa8] sm:$0xff]
    %v3005 = vld [vmem:[%s3 + $0xf0] sm:$0xff]
    %v3006 = vld [vmem:[%s6 + $0xc] sm:$0x1]
    %v3007 = vperm.slane %v3006, 0
    %v3009 = vsel %vm132, %v2998, 0
    %v3012 = vsel %vm132, %v2999, 0
    %v3015 = vsel %vm132, %v3000, 0
    %v3018 = vsel %vm132, %v3001, 0
    %3020 = vmatpush.msra.mxu0 0.0
    %3021 = vmatpush.msra.mxu0 0.0
    %3022 = vmatpush.msra.mxu0 0.0
    %3023 = vmatpush.msra.mxu0 0.0
    %3024 = vmatpush.msra.mxu0 0.0
    %3025 = vmatpush.msra.mxu0 0.0
    %3026 = vmatpush.msra.mxu0 0.0
    %3027 = vmatpush.msra.mxu0 0.0
    %3028 = vmatpush.msra.mxu0 0.0
    %3029 = vmatpush.msra.mxu0 0.0
    %3030 = vmatpush.msra.mxu0 0.0
    %3031 = vmatpush.msra.mxu0 0.0
    %3032 = vmatpush.msra.mxu0 %v3005
    %3033 = vmatpush.msra.mxu0 %v3004
    %3034 = vmatpush.msra.mxu0 %v3003
    %3035 = vmatpush.msra.mxu0 %v3002
    %3036 = vmatmul.f32.gmra.mxu0 %v3009
    %v3037 = vpop.f32.mrf.mxu0
    %v3038 = vadd.f32 %v3007, %v3037
    %3039 = vmatmul.f32.gmra.mxu0 %v3012
    %v3040 = vpop.f32.mrf.mxu0
    %v3041 = vadd.f32 %v3007, %v3040
    %3042 = vmatmul.f32.gmra.mxu0 %v3015
    %v3043 = vpop.f32.mrf.mxu0
    %v3044 = vadd.f32 %v3007, %v3043
    %3045 = vmatmul.f32.gmra.mxu0 %v3018
    %v3046 = vpop.f32.mrf.mxu0
    %v3047 = vadd.f32 %v3007, %v3046
    %3048 = vdwg.mxu0
    %v3049 = vmul.f32 %v3038, 0.5
    %v3050 = vmul.f32 %v3041, 0.5
    %v3051 = vmul.f32 %v3044, 0.5
    %v3052 = vmul.f32 %v3047, 0.5
    %v3053 = vmul.f32 %v3049, 1.442695
    %v3054 = vpow.pop %v3053
    %v3055 = vmul.f32 %v3050, 1.442695
    %v3056 = vpow.pop %v3055
    %v3057 = vmul.f32 %v3051, 1.442695
    %v3058 = vpow.pop %v3057
    %v3059 = vmul.f32 %v3052, 1.442695
    %v3060 = vpow.pop %v3059
    %v3061 = vld [vmem:[%s2] sm:$0xff]
    %v3062 = vld [vmem:[%s2 + $0x8] sm:$0xff]
    %v3063 = vld [vmem:[%s2 + $0x10] sm:$0xff]
    %v3064 = vld [vmem:[%s2 + $0x18] sm:$0xff]
    %3069 = vrot.lane.b32.xlu0 %v3061, 32
    %v3070 = vpop.permute.xlu0 %3069
    %3071 = vrot.lane.b32.xlu0 %v3062, 32
    %v3072 = vpop.permute.xlu0 %3071
    %3073 = vrot.lane.b32.xlu0 %v3063, 32
    %v3074 = vpop.permute.xlu0 %3073
    %3075 = vrot.lane.b32.xlu0 %v3064, 32
    %v3076 = vpop.permute.xlu0 %3075
    %v3081 = vmul.f32 %v3054, %v3070
    %v3082 = vmul.f32 %v3056, %v3072
    %v3083 = vmul.f32 %v3058, %v3074
    %v3084 = vmul.f32 %v3060, %v3076
    %3089 = vrot.lane.b32.xlu0 %v3081, 96
    %v3090 = vpop.permute.xlu0 %3089
    %3091 = vrot.lane.b32.xlu0 %v3082, 96
    %v3092 = vpop.permute.xlu0 %3091
    %3093 = vrot.lane.b32.xlu0 %v3083, 96
    %v3094 = vpop.permute.xlu0 %3093
    %3095 = vrot.lane.b32.xlu0 %v3084, 96
    %v3096 = vpop.permute.xlu0 %3095
    %v3101 = vadd.f32 %v3038, %v3090
    %v3102 = vadd.f32 %v3041, %v3092
    %v3103 = vadd.f32 %v3044, %v3094
    %v3104 = vadd.f32 %v3047, %v3096
    %v3105 = vld [vmem:[%s7] sm:$0xff]
    %v3106 = vld [vmem:[%s7 + $0x8] sm:$0xff]
    %v3107 = vld [vmem:[%s7 + $0x10] sm:$0xff]
    %v3108 = vld [vmem:[%s7 + $0x18] sm:$0xff]
    %v3109 = vadd.f32 %v3038, 1.0
    %v3110 = vadd.f32 %v3041, 1.0
    %v3111 = vadd.f32 %v3044, 1.0
    %v3112 = vadd.f32 %v3047, 1.0
    %v3113 = vmul.f32 %v3038, %v3038
    %v3114 = vmul.f32 %v3041, %v3041
    %v3115 = vmul.f32 %v3044, %v3044
    %v3116 = vmul.f32 %v3047, %v3047
    %3121 = vrot.lane.b32.xlu0 %v3113, 32
    %v3122 = vpop.permute.xlu0 %3121
    %3123 = vrot.lane.b32.xlu0 %v3114, 32
    %v3124 = vpop.permute.xlu0 %3123
    %3125 = vrot.lane.b32.xlu0 %v3115, 32
    %v3126 = vpop.permute.xlu0 %3125
    %3127 = vrot.lane.b32.xlu0 %v3116, 32
    %v3128 = vpop.permute.xlu0 %3127
    %v3133 = vsub.f32 %v3109, %v3122
    %v3134 = vsub.f32 %v3110, %v3124
    %v3135 = vsub.f32 %v3111, %v3126
    %v3136 = vsub.f32 %v3112, %v3128
    %v3137 = vmul.f32 %v3038, 1.442695
    %v3138 = vpow.pop %v3137
    %v3139 = vmul.f32 %v3041, 1.442695
    %v3140 = vpow.pop %v3139
    %v3141 = vmul.f32 %v3044, 1.442695
    %v3142 = vpow.pop %v3141
    %v3143 = vmul.f32 %v3047, 1.442695
    %v3144 = vpow.pop %v3143
    %v3145 = vsub.f32 %v3133, %v3138
    %v3146 = vsub.f32 %v3134, %v3140
    %v3147 = vsub.f32 %v3135, %v3142
    %v3148 = vsub.f32 %v3136, %v3144
    %3150 = vset.pattern.permute.xlu0 96
    %3151 = vperm.xlu0 %3150, %v3105
    %v3152 = vpop.permute.xlu0 %3151
    %3155 = vset.pattern.permute.xlu0 96
    %3156 = vperm.xlu0 %3155, %v3106
    %v3157 = vpop.permute.xlu0 %3156
    %3160 = vset.pattern.permute.xlu0 96
    %3161 = vperm.xlu0 %3160, %v3107
    %v3162 = vpop.permute.xlu0 %3161
    %3165 = vset.pattern.permute.xlu0 96
    %3166 = vperm.xlu0 %3165, %v3108
    %v3167 = vpop.permute.xlu0 %3166
    %v3169 = vmul.f32 %v3145, %v3152
    %v3170 = vmul.f32 %v3146, %v3157
    %v3171 = vmul.f32 %v3147, %v3162
    %v3172 = vmul.f32 %v3148, %v3167
    %3177 = vrot.lane.b32.xlu0 %v3169, 96
    %v3178 = vpop.permute.xlu0 %3177
    %3179 = vrot.lane.b32.xlu0 %v3170, 96
    %v3180 = vpop.permute.xlu0 %3179
    %3181 = vrot.lane.b32.xlu0 %v3171, 96
    %v3182 = vpop.permute.xlu0 %3181
    %3183 = vrot.lane.b32.xlu0 %v3172, 96
    %v3184 = vpop.permute.xlu0 %3183
    %v3189 = vsel %vm132, %v3178, 0.0
    %v3190 = vsel %vm132, %v3180, 0.0
    %v3191 = vadd.f32 %v3189, %v3190
    %v3192 = vsel %vm132, %v3182, 0.0
    %v3193 = vadd.f32 %v3191, %v3192
    %v3194 = vsel %vm132, %v3184, 0.0
    %v3195 = vadd.f32 %v3193, %v3194
    %3196 = vadd.xlane.f32.xlu0 %v3195
    %v3197 = vpop.xlane.xlu0 %3196
    %v3198 = vrot.slane %v3197, 4
    %v3199 = vadd.f32 %v3197, %v3198
    %v3200 = vrot.slane %v3199, 2
    %v3201 = vadd.f32 %v3199, %v3200
    %v3202 = vrot.slane %v3201, 1
    %v3203 = vadd.f32 %v3201, %v3202
    %s3204 = vtos %v3203
    %v3205 = vstv %s3204
    %v3206 = vmul.f32 %v3205, -0.00086805556
    %vm3207 = vcmask 0
    %3208 = vst.msk [vmem:[#allocation2] sm:$0x1] %vm3207, %v3206
    %v3209 = vld [vmem:[%s3 + $0x38] sm:$0xff]
    %v3210 = vld [vmem:[%s3 + $0x40] sm:$0xff]
    %v3211 = vld [vmem:[%s3 + $0x80] sm:$0xff]
    %v3212 = vld [vmem:[%s3 + $0x88] sm:$0xff]
    %v3213 = vld [vmem:[%s3 + $0xc8] sm:$0xff]
    %v3214 = vld [vmem:[%s3 + $0xd0] sm:$0xff]
    %v3215 = vld [vmem:[%s3 + $0x110] sm:$0xff]
    %v3216 = vld [vmem:[%s3 + $0x118] sm:$0xff]
    %3225 = vrot.lane.b32.xlu0 %v3209, 64
    %v3226 = vpop.permute.xlu0 %3225
    %3227 = vrot.lane.b32.xlu0 %v3210, 64
    %v3228 = vpop.permute.xlu0 %3227
    %3229 = vrot.lane.b32.xlu0 %v3211, 64
    %v3230 = vpop.permute.xlu0 %3229
    %3231 = vrot.lane.b32.xlu0 %v3212, 64
    %v3232 = vpop.permute.xlu0 %3231
    %3233 = vrot.lane.b32.xlu0 %v3213, 64
    %v3234 = vpop.permute.xlu0 %3233
    %3235 = vrot.lane.b32.xlu0 %v3214, 64
    %v3236 = vpop.permute.xlu0 %3235
    %3237 = vrot.lane.b32.xlu0 %v3215, 64
    %v3238 = vpop.permute.xlu0 %3237
    %3239 = vrot.lane.b32.xlu0 %v3216, 64
    %v3240 = vpop.permute.xlu0 %3239
    %v3241 = vsel %vm1578, %v3226, %v3228
    %v3242 = vsel %vm1578, %v3230, %v3232
    %v3243 = vsel %vm1578, %v3234, %v3236
    %v3244 = vsel %vm1578, %v3238, %v3240
    %v3250 = vsel %vm132, %v3101, 0
    %v3253 = vsel %vm132, %v3102, 0
    %v3256 = vsel %vm132, %v3103, 0
    %v3259 = vsel %vm132, %v3104, 0
    %3261 = vmatpush.msra.mxu0 0.0
    %3262 = vmatpush.msra.mxu0 0.0
    %3263 = vmatpush.msra.mxu0 0.0
    %3264 = vmatpush.msra.mxu0 0.0
    %3265 = vmatpush.msra.mxu0 0.0
    %3266 = vmatpush.msra.mxu0 0.0
    %3267 = vmatpush.msra.mxu0 0.0
    %3268 = vmatpush.msra.mxu0 0.0
    %3269 = vmatpush.msra.mxu0 0.0
    %3270 = vmatpush.msra.mxu0 0.0
    %3271 = vmatpush.msra.mxu0 0.0
    %3272 = vmatpush.msra.mxu0 0.0
    %3273 = vmatpush.msra.mxu0 %v3244
    %3274 = vmatpush.msra.mxu0 %v3243
    %3275 = vmatpush.msra.mxu0 %v3242
    %3276 = vmatpush.msra.mxu0 %v3241
    %3277 = vmatmul.f32.gmra.mxu0 %v3250
    %v3278 = vpop.f32.mrf.mxu0
    %v3279 = vadd.f32 0.0, %v3278
    %3280 = vmatmul.f32.gmra.mxu0 %v3253
    %v3281 = vpop.f32.mrf.mxu0
    %v3282 = vadd.f32 0.0, %v3281
    %3283 = vmatmul.f32.gmra.mxu0 %v3256
    %v3284 = vpop.f32.mrf.mxu0
    %v3285 = vadd.f32 0.0, %v3284
    %3286 = vmatmul.f32.gmra.mxu0 %v3259
    %v3287 = vpop.f32.mrf.mxu0
    %v3288 = vadd.f32 0.0, %v3287
    %3289 = vdwg.mxu0
    %v3290 = vld [vmem:[%s3 + $0x18] sm:$0xff]
    %v3291 = vld [vmem:[%s3 + $0x20] sm:$0xff]
    %v3292 = vld [vmem:[%s3 + $0x60] sm:$0xff]
    %v3293 = vld [vmem:[%s3 + $0x68] sm:$0xff]
    %v3294 = vld [vmem:[%s3 + $0xa8] sm:$0xff]
    %v3295 = vld [vmem:[%s3 + $0xb0] sm:$0xff]
    %v3296 = vld [vmem:[%s3 + $0xf0] sm:$0xff]
    %v3297 = vld [vmem:[%s3 + $0xf8] sm:$0xff]
    %3306 = vrot.lane.b32.xlu0 %v3290, 64
    %v3307 = vpop.permute.xlu0 %3306
    %3308 = vrot.lane.b32.xlu0 %v3291, 64
    %v3309 = vpop.permute.xlu0 %3308
    %3310 = vrot.lane.b32.xlu0 %v3292, 64
    %v3311 = vpop.permute.xlu0 %3310
    %3312 = vrot.lane.b32.xlu0 %v3293, 64
    %v3313 = vpop.permute.xlu0 %3312
    %3314 = vrot.lane.b32.xlu0 %v3294, 64
    %v3315 = vpop.permute.xlu0 %3314
    %3316 = vrot.lane.b32.xlu0 %v3295, 64
    %v3317 = vpop.permute.xlu0 %3316
    %3318 = vrot.lane.b32.xlu0 %v3296, 64
    %v3319 = vpop.permute.xlu0 %3318
    %3320 = vrot.lane.b32.xlu0 %v3297, 64
    %v3321 = vpop.permute.xlu0 %3320
    %v3322 = vsel %vm1578, %v3307, %v3309
    %v3323 = vsel %vm1578, %v3311, %v3313
    %v3324 = vsel %vm1578, %v3315, %v3317
    %v3325 = vsel %vm1578, %v3319, %v3321
    %v3331 = vsel %vm132, %v694, 0
    %v3334 = vsel %vm132, %v695, 0
    %v3337 = vsel %vm132, %v696, 0
    %v3340 = vsel %vm132, %v697, 0
    %3342 = vmatpush.msra.mxu0 0.0
    %3343 = vmatpush.msra.mxu0 0.0
    %3344 = vmatpush.msra.mxu0 0.0
    %3345 = vmatpush.msra.mxu0 0.0
    %3346 = vmatpush.msra.mxu0 0.0
    %3347 = vmatpush.msra.mxu0 0.0
    %3348 = vmatpush.msra.mxu0 0.0
    %3349 = vmatpush.msra.mxu0 0.0
    %3350 = vmatpush.msra.mxu0 0.0
    %3351 = vmatpush.msra.mxu0 0.0
    %3352 = vmatpush.msra.mxu0 0.0
    %3353 = vmatpush.msra.mxu0 0.0
    %3354 = vmatpush.msra.mxu0 %v3325
    %3355 = vmatpush.msra.mxu0 %v3324
    %3356 = vmatpush.msra.mxu0 %v3323
    %3357 = vmatpush.msra.mxu0 %v3322
    %3358 = vmatmul.f32.gmra.mxu0 %v3331
    %v3359 = vpop.f32.mrf.mxu0
    %v3360 = vadd.f32 0.0, %v3359
    %3361 = vmatmul.f32.gmra.mxu0 %v3334
    %v3362 = vpop.f32.mrf.mxu0
    %v3363 = vadd.f32 0.0, %v3362
    %3364 = vmatmul.f32.gmra.mxu0 %v3337
    %v3365 = vpop.f32.mrf.mxu0
    %v3366 = vadd.f32 0.0, %v3365
    %3367 = vmatmul.f32.gmra.mxu0 %v3340
    %v3368 = vpop.f32.mrf.mxu0
    %v3369 = vadd.f32 0.0, %v3368
    %3370 = vdwg.mxu0
    %v3371 = vld [vmem:[%s6 + $0xd] sm:$0x1]
    %v3372 = vld [vmem:[%s6 + $0xe] sm:$0x1]
    %3377 = vrot.lane.b32.xlu0 %v3360, 120
    %v3378 = vpop.permute.xlu0 %3377
    %3379 = vrot.lane.b32.xlu0 %v3363, 120
    %v3380 = vpop.permute.xlu0 %3379
    %3381 = vrot.lane.b32.xlu0 %v3366, 120
    %v3382 = vpop.permute.xlu0 %3381
    %3383 = vrot.lane.b32.xlu0 %v3369, 120
    %v3384 = vpop.permute.xlu0 %3383
    %3385 = vrot.lane.b32.xlu0 %v3360, 112
    %v3386 = vpop.permute.xlu0 %3385
    %3387 = vrot.lane.b32.xlu0 %v3363, 112
    %v3388 = vpop.permute.xlu0 %3387
    %3389 = vrot.lane.b32.xlu0 %v3366, 112
    %v3390 = vpop.permute.xlu0 %3389
    %3391 = vrot.lane.b32.xlu0 %v3369, 112
    %v3392 = vpop.permute.xlu0 %3391
    %3393 = vrot.lane.b32.xlu0 %v3360, 104
    %v3394 = vpop.permute.xlu0 %3393
    %3395 = vrot.lane.b32.xlu0 %v3363, 104
    %v3396 = vpop.permute.xlu0 %3395
    %3397 = vrot.lane.b32.xlu0 %v3366, 104
    %v3398 = vpop.permute.xlu0 %3397
    %3399 = vrot.lane.b32.xlu0 %v3369, 104
    %v3400 = vpop.permute.xlu0 %3399
    %3401 = vrot.lane.b32.xlu0 %v3360, 96
    %v3402 = vpop.permute.xlu0 %3401
    %3403 = vrot.lane.b32.xlu0 %v3363, 96
    %v3404 = vpop.permute.xlu0 %3403
    %3405 = vrot.lane.b32.xlu0 %v3366, 96
    %v3406 = vpop.permute.xlu0 %3405
    %3407 = vrot.lane.b32.xlu0 %v3369, 96
    %v3408 = vpop.permute.xlu0 %3407
    %3409 = vrot.lane.b32.xlu0 %v3378, 96
    %v3410 = vpop.permute.xlu0 %3409
    %3411 = vrot.lane.b32.xlu0 %v3380, 96
    %v3412 = vpop.permute.xlu0 %3411
    %3413 = vrot.lane.b32.xlu0 %v3382, 96
    %v3414 = vpop.permute.xlu0 %3413
    %3415 = vrot.lane.b32.xlu0 %v3384, 96
    %v3416 = vpop.permute.xlu0 %3415
    %3417 = vrot.lane.b32.xlu0 %v3386, 96
    %v3418 = vpop.permute.xlu0 %3417
    %3419 = vrot.lane.b32.xlu0 %v3388, 96
    %v3420 = vpop.permute.xlu0 %3419
    %3421 = vrot.lane.b32.xlu0 %v3390, 96
    %v3422 = vpop.permute.xlu0 %3421
    %3423 = vrot.lane.b32.xlu0 %v3392, 96
    %v3424 = vpop.permute.xlu0 %3423
    %3425 = vrot.lane.b32.xlu0 %v3394, 96
    %v3426 = vpop.permute.xlu0 %3425
    %3427 = vrot.lane.b32.xlu0 %v3396, 96
    %v3428 = vpop.permute.xlu0 %3427
    %3429 = vrot.lane.b32.xlu0 %v3398, 96
    %v3430 = vpop.permute.xlu0 %3429
    %3431 = vrot.lane.b32.xlu0 %v3400, 96
    %v3432 = vpop.permute.xlu0 %3431
    %v3433 = vsel %vm805, %v3360, 0
    %v3435 = vsel %vm805, %v3363, 0
    %v3437 = vsel %vm805, %v3366, 0
    %v3439 = vsel %vm805, %v3369, 0
    %v3441 = vsel %vm805, %v3378, 0
    %v3443 = vsel %vm805, %v3380, 0
    %v3445 = vsel %vm805, %v3382, 0
    %v3447 = vsel %vm805, %v3384, 0
    %v3449 = vsel %vm805, %v3386, 0
    %v3451 = vsel %vm805, %v3388, 0
    %v3453 = vsel %vm805, %v3390, 0
    %v3455 = vsel %vm805, %v3392, 0
    %v3457 = vsel %vm805, %v3394, 0
    %v3459 = vsel %vm805, %v3396, 0
    %v3461 = vsel %vm805, %v3398, 0
    %v3463 = vsel %vm805, %v3400, 0
    %v3465 = vsel %vm805, %v3402, 0
    %v3467 = vsel %vm805, %v3404, 0
    %v3469 = vsel %vm805, %v3406, 0
    %v3471 = vsel %vm805, %v3408, 0
    %v3473 = vsel %vm805, %v3410, 0
    %v3475 = vsel %vm805, %v3412, 0
    %v3477 = vsel %vm805, %v3414, 0
    %v3479 = vsel %vm805, %v3416, 0
    %v3481 = vsel %vm805, %v3418, 0
    %v3483 = vsel %vm805, %v3420, 0
    %v3485 = vsel %vm805, %v3422, 0
    %v3487 = vsel %vm805, %v3424, 0
    %v3489 = vsel %vm805, %v3426, 0
    %v3491 = vsel %vm805, %v3428, 0
    %v3493 = vsel %vm805, %v3430, 0
    %v3495 = vsel %vm805, %v3432, 0
    %3497 = vmatpush.xpose.msra.mxu0 %v3495
    %3498 = vmatpush.xpose.msra.mxu0 %v3493
    %3499 = vmatpush.xpose.msra.mxu0 %v3491
    %3500 = vmatpush.xpose.msra.mxu0 %v3489
    %3501 = vmatpush.xpose.msra.mxu0 %v3487
    %3502 = vmatpush.xpose.msra.mxu0 %v3485
    %3503 = vmatpush.xpose.msra.mxu0 %v3483
    %3504 = vmatpush.xpose.msra.mxu0 %v3481
    %3505 = vmatpush.xpose.msra.mxu0 %v3479
    %3506 = vmatpush.xpose.msra.mxu0 %v3477
    %3507 = vmatpush.xpose.msra.mxu0 %v3475
    %3508 = vmatpush.xpose.msra.mxu0 %v3473
    %3509 = vmatpush.xpose.msra.mxu0 %v3471
    %3510 = vmatpush.xpose.msra.mxu0 %v3469
    %3511 = vmatpush.xpose.msra.mxu0 %v3467
    %3512 = vmatpush.xpose.msra.mxu0 %v3465
    %3513 = vmatmul.f32.gmra.mxu0 %v3433
    %v3514 = vpop.f32.mrf.mxu0
    %v3515 = vadd.f32 %v48, %v3514
    %3516 = vmatmul.f32.gmra.mxu0 %v3435
    %v3517 = vpop.f32.mrf.mxu0
    %v3518 = vadd.f32 %v49, %v3517
    %3519 = vmatmul.f32.gmra.mxu0 %v3437
    %v3520 = vpop.f32.mrf.mxu0
    %v3521 = vadd.f32 %v50, %v3520
    %3522 = vmatmul.f32.gmra.mxu0 %v3439
    %v3523 = vpop.f32.mrf.mxu0
    %v3524 = vadd.f32 %v51, %v3523
    %3525 = vmatmul.f32.gmra.mxu0 %v3441
    %v3526 = vpop.f32.mrf.mxu0
    %v3527 = vadd.f32 %v52, %v3526
    %3528 = vmatmul.f32.gmra.mxu0 %v3443
    %v3529 = vpop.f32.mrf.mxu0
    %v3530 = vadd.f32 %v53, %v3529
    %3531 = vmatmul.f32.gmra.mxu0 %v3445
    %v3532 = vpop.f32.mrf.mxu0
    %v3533 = vadd.f32 %v54, %v3532
    %3534 = vmatmul.f32.gmra.mxu0 %v3447
    %v3535 = vpop.f32.mrf.mxu0
    %v3536 = vadd.f32 %v55, %v3535
    %3537 = vmatmul.f32.gmra.mxu0 %v3449
    %v3538 = vpop.f32.mrf.mxu0
    %v3539 = vadd.f32 %v56, %v3538
    %3540 = vmatmul.f32.gmra.mxu0 %v3451
    %v3541 = vpop.f32.mrf.mxu0
    %v3542 = vadd.f32 %v57, %v3541
    %3543 = vmatmul.f32.gmra.mxu0 %v3453
    %v3544 = vpop.f32.mrf.mxu0
    %v3545 = vadd.f32 %v58, %v3544
    %3546 = vmatmul.f32.gmra.mxu0 %v3455
    %v3547 = vpop.f32.mrf.mxu0
    %v3548 = vadd.f32 %v59, %v3547
    %3549 = vmatmul.f32.gmra.mxu0 %v3457
    %v3550 = vpop.f32.mrf.mxu0
    %v3551 = vadd.f32 %v60, %v3550
    %3552 = vmatmul.f32.gmra.mxu0 %v3459
    %v3553 = vpop.f32.mrf.mxu0
    %v3554 = vadd.f32 %v61, %v3553
    %3555 = vmatmul.f32.gmra.mxu0 %v3461
    %v3556 = vpop.f32.mrf.mxu0
    %v3557 = vadd.f32 %v62, %v3556
    %3558 = vmatmul.f32.gmra.mxu0 %v3463
    %v3559 = vpop.f32.mrf.mxu0
    %v3560 = vadd.f32 %v63, %v3559
    %3561 = vdwg.mxu0
    %3562 = vmax.xlane.f32.xlu0 %v3515
    %v3563 = vpop.xlane.xlu0 %3562
    %3564 = vmax.xlane.f32.xlu0 %v3518
    %v3565 = vpop.xlane.xlu0 %3564
    %3566 = vmax.xlane.f32.xlu0 %v3521
    %v3567 = vpop.xlane.xlu0 %3566
    %3568 = vmax.xlane.f32.xlu0 %v3524
    %v3569 = vpop.xlane.xlu0 %3568
    %3570 = vmax.xlane.f32.xlu0 %v3527
    %v3571 = vpop.xlane.xlu0 %3570
    %3572 = vmax.xlane.f32.xlu0 %v3530
    %v3573 = vpop.xlane.xlu0 %3572
    %3574 = vmax.xlane.f32.xlu0 %v3533
    %v3575 = vpop.xlane.xlu0 %3574
    %3576 = vmax.xlane.f32.xlu0 %v3536
    %v3577 = vpop.xlane.xlu0 %3576
    %3578 = vmax.xlane.f32.xlu0 %v3539
    %v3579 = vpop.xlane.xlu0 %3578
    %3580 = vmax.xlane.f32.xlu0 %v3542
    %v3581 = vpop.xlane.xlu0 %3580
    %3582 = vmax.xlane.f32.xlu0 %v3545
    %v3583 = vpop.xlane.xlu0 %3582
    %3584 = vmax.xlane.f32.xlu0 %v3548
    %v3585 = vpop.xlane.xlu0 %3584
    %3586 = vmax.xlane.f32.xlu0 %v3551
    %v3587 = vpop.xlane.xlu0 %3586
    %3588 = vmax.xlane.f32.xlu0 %v3554
    %v3589 = vpop.xlane.xlu0 %3588
    %3590 = vmax.xlane.f32.xlu0 %v3557
    %v3591 = vpop.xlane.xlu0 %3590
    %3592 = vmax.xlane.f32.xlu0 %v3560
    %v3593 = vpop.xlane.xlu0 %3592
    %v3594 = vsub.f32 %v3515, %v3563
    %v3595 = vsub.f32 %v3518, %v3565
    %v3596 = vsub.f32 %v3521, %v3567
    %v3597 = vsub.f32 %v3524, %v3569
    %v3598 = vsub.f32 %v3527, %v3571
    %v3599 = vsub.f32 %v3530, %v3573
    %v3600 = vsub.f32 %v3533, %v3575
    %v3601 = vsub.f32 %v3536, %v3577
    %v3602 = vsub.f32 %v3539, %v3579
    %v3603 = vsub.f32 %v3542, %v3581
    %v3604 = vsub.f32 %v3545, %v3583
    %v3605 = vsub.f32 %v3548, %v3585
    %v3606 = vsub.f32 %v3551, %v3587
    %v3607 = vsub.f32 %v3554, %v3589
    %v3608 = vsub.f32 %v3557, %v3591
    %v3609 = vsub.f32 %v3560, %v3593
    %v3610 = vmul.f32 %v3594, 1.442695
    %v3611 = vpow.pop %v3610
    %v3612 = vmul.f32 %v3595, 1.442695
    %v3613 = vpow.pop %v3612
    %v3614 = vmul.f32 %v3596, 1.442695
    %v3615 = vpow.pop %v3614
    %v3616 = vmul.f32 %v3597, 1.442695
    %v3617 = vpow.pop %v3616
    %v3618 = vmul.f32 %v3598, 1.442695
    %v3619 = vpow.pop %v3618
    %v3620 = vmul.f32 %v3599, 1.442695
    %v3621 = vpow.pop %v3620
    %v3622 = vmul.f32 %v3600, 1.442695
    %v3623 = vpow.pop %v3622
    %v3624 = vmul.f32 %v3601, 1.442695
    %v3625 = vpow.pop %v3624
    %v3626 = vmul.f32 %v3602, 1.442695
    %v3627 = vpow.pop %v3626
    %v3628 = vmul.f32 %v3603, 1.442695
    %v3629 = vpow.pop %v3628
    %v3630 = vmul.f32 %v3604, 1.442695
    %v3631 = vpow.pop %v3630
    %v3632 = vmul.f32 %v3605, 1.442695
    %v3633 = vpow.pop %v3632
    %v3634 = vmul.f32 %v3606, 1.442695
    %v3635 = vpow.pop %v3634
    %v3636 = vmul.f32 %v3607, 1.442695
    %v3637 = vpow.pop %v3636
    %v3638 = vmul.f32 %v3608, 1.442695
    %v3639 = vpow.pop %v3638
    %v3640 = vmul.f32 %v3609, 1.442695
    %v3641 = vpow.pop %v3640
    %3642 = vadd.xlane.f32.xlu0 %v3611
    %v3643 = vpop.xlane.xlu0 %3642
    %3644 = vadd.xlane.f32.xlu0 %v3613
    %v3645 = vpop.xlane.xlu0 %3644
    %3646 = vadd.xlane.f32.xlu0 %v3615
    %v3647 = vpop.xlane.xlu0 %3646
    %3648 = vadd.xlane.f32.xlu0 %v3617
    %v3649 = vpop.xlane.xlu0 %3648
    %3650 = vadd.xlane.f32.xlu0 %v3619
    %v3651 = vpop.xlane.xlu0 %3650
    %3652 = vadd.xlane.f32.xlu0 %v3621
    %v3653 = vpop.xlane.xlu0 %3652
    %3654 = vadd.xlane.f32.xlu0 %v3623
    %v3655 = vpop.xlane.xlu0 %3654
    %3656 = vadd.xlane.f32.xlu0 %v3625
    %v3657 = vpop.xlane.xlu0 %3656
    %3658 = vadd.xlane.f32.xlu0 %v3627
    %v3659 = vpop.xlane.xlu0 %3658
    %3660 = vadd.xlane.f32.xlu0 %v3629
    %v3661 = vpop.xlane.xlu0 %3660
    %3662 = vadd.xlane.f32.xlu0 %v3631
    %v3663 = vpop.xlane.xlu0 %3662
    %3664 = vadd.xlane.f32.xlu0 %v3633
    %v3665 = vpop.xlane.xlu0 %3664
    %3666 = vadd.xlane.f32.xlu0 %v3635
    %v3667 = vpop.xlane.xlu0 %3666
    %3668 = vadd.xlane.f32.xlu0 %v3637
    %v3669 = vpop.xlane.xlu0 %3668
    %3670 = vadd.xlane.f32.xlu0 %v3639
    %v3671 = vpop.xlane.xlu0 %3670
    %3672 = vadd.xlane.f32.xlu0 %v3641
    %v3673 = vpop.xlane.xlu0 %3672
    %v3674 = vrcp.pop %v3643
    %v3675 = vrcp.pop %v3645
    %v3676 = vrcp.pop %v3647
    %v3677 = vrcp.pop %v3649
    %v3678 = vrcp.pop %v3651
    %v3679 = vrcp.pop %v3653
    %v3680 = vrcp.pop %v3655
    %v3681 = vrcp.pop %v3657
    %v3682 = vrcp.pop %v3659
    %v3683 = vrcp.pop %v3661
    %v3684 = vrcp.pop %v3663
    %v3685 = vrcp.pop %v3665
    %v3686 = vrcp.pop %v3667
    %v3687 = vrcp.pop %v3669
    %v3688 = vrcp.pop %v3671
    %v3689 = vrcp.pop %v3673
    %v3690 = vmul.f32 %v3611, %v3674
    %v3691 = vmul.f32 %v3613, %v3675
    %v3692 = vmul.f32 %v3615, %v3676
    %v3693 = vmul.f32 %v3617, %v3677
    %v3694 = vmul.f32 %v3619, %v3678
    %v3695 = vmul.f32 %v3621, %v3679
    %v3696 = vmul.f32 %v3623, %v3680
    %v3697 = vmul.f32 %v3625, %v3681
    %v3698 = vmul.f32 %v3627, %v3682
    %v3699 = vmul.f32 %v3629, %v3683
    %v3700 = vmul.f32 %v3631, %v3684
    %v3701 = vmul.f32 %v3633, %v3685
    %v3702 = vmul.f32 %v3635, %v3686
    %v3703 = vmul.f32 %v3637, %v3687
    %v3704 = vmul.f32 %v3639, %v3688
    %v3705 = vmul.f32 %v3641, %v3689
    %3706 = vrot.lane.b32.xlu0 %v3360, 64
    %v3707 = vpop.permute.xlu0 %3706
    %3708 = vrot.lane.b32.xlu0 %v3363, 64
    %v3709 = vpop.permute.xlu0 %3708
    %3710 = vrot.lane.b32.xlu0 %v3366, 64
    %v3711 = vpop.permute.xlu0 %3710
    %3712 = vrot.lane.b32.xlu0 %v3369, 64
    %v3713 = vpop.permute.xlu0 %3712
    %3714 = vrot.lane.b32.xlu0 %v3378, 64
    %v3715 = vpop.permute.xlu0 %3714
    %3716 = vrot.lane.b32.xlu0 %v3380, 64
    %v3717 = vpop.permute.xlu0 %3716
    %3718 = vrot.lane.b32.xlu0 %v3382, 64
    %v3719 = vpop.permute.xlu0 %3718
    %3720 = vrot.lane.b32.xlu0 %v3384, 64
    %v3721 = vpop.permute.xlu0 %3720
    %3722 = vrot.lane.b32.xlu0 %v3386, 64
    %v3723 = vpop.permute.xlu0 %3722
    %3724 = vrot.lane.b32.xlu0 %v3388, 64
    %v3725 = vpop.permute.xlu0 %3724
    %3726 = vrot.lane.b32.xlu0 %v3390, 64
    %v3727 = vpop.permute.xlu0 %3726
    %3728 = vrot.lane.b32.xlu0 %v3392, 64
    %v3729 = vpop.permute.xlu0 %3728
    %3730 = vrot.lane.b32.xlu0 %v3394, 64
    %v3731 = vpop.permute.xlu0 %3730
    %3732 = vrot.lane.b32.xlu0 %v3396, 64
    %v3733 = vpop.permute.xlu0 %3732
    %3734 = vrot.lane.b32.xlu0 %v3398, 64
    %v3735 = vpop.permute.xlu0 %3734
    %3736 = vrot.lane.b32.xlu0 %v3400, 64
    %v3737 = vpop.permute.xlu0 %3736
    %3754 = vmatpush.msra.mxu0 %v3737
    %3755 = vmatpush.msra.mxu0 %v3735
    %3756 = vmatpush.msra.mxu0 %v3733
    %3757 = vmatpush.msra.mxu0 %v3731
    %3758 = vmatpush.msra.mxu0 %v3729
    %3759 = vmatpush.msra.mxu0 %v3727
    %3760 = vmatpush.msra.mxu0 %v3725
    %3761 = vmatpush.msra.mxu0 %v3723
    %3762 = vmatpush.msra.mxu0 %v3721
    %3763 = vmatpush.msra.mxu0 %v3719
    %3764 = vmatpush.msra.mxu0 %v3717
    %3765 = vmatpush.msra.mxu0 %v3715
    %3766 = vmatpush.msra.mxu0 %v3713
    %3767 = vmatpush.msra.mxu0 %v3711
    %3768 = vmatpush.msra.mxu0 %v3709
    %3769 = vmatpush.msra.mxu0 %v3707
    %3770 = vmatmul.f32.gmra.mxu0 %v3690
    %v3771 = vpop.f32.mrf.mxu0
    %v3772 = vadd.f32 0.0, %v3771
    %3773 = vmatmul.f32.gmra.mxu0 %v3691
    %v3774 = vpop.f32.mrf.mxu0
    %v3775 = vadd.f32 0.0, %v3774
    %3776 = vmatmul.f32.gmra.mxu0 %v3692
    %v3777 = vpop.f32.mrf.mxu0
    %v3778 = vadd.f32 0.0, %v3777
    %3779 = vmatmul.f32.gmra.mxu0 %v3693
    %v3780 = vpop.f32.mrf.mxu0
    %v3781 = vadd.f32 0.0, %v3780
    %3782 = vmatmul.f32.gmra.mxu0 %v3694
    %v3783 = vpop.f32.mrf.mxu0
    %v3784 = vadd.f32 0.0, %v3783
    %3785 = vmatmul.f32.gmra.mxu0 %v3695
    %v3786 = vpop.f32.mrf.mxu0
    %v3787 = vadd.f32 0.0, %v3786
    %3788 = vmatmul.f32.gmra.mxu0 %v3696
    %v3789 = vpop.f32.mrf.mxu0
    %v3790 = vadd.f32 0.0, %v3789
    %3791 = vmatmul.f32.gmra.mxu0 %v3697
    %v3792 = vpop.f32.mrf.mxu0
    %v3793 = vadd.f32 0.0, %v3792
    %3794 = vmatmul.f32.gmra.mxu0 %v3698
    %v3795 = vpop.f32.mrf.mxu0
    %v3796 = vadd.f32 0.0, %v3795
    %3797 = vmatmul.f32.gmra.mxu0 %v3699
    %v3798 = vpop.f32.mrf.mxu0
    %v3799 = vadd.f32 0.0, %v3798
    %3800 = vmatmul.f32.gmra.mxu0 %v3700
    %v3801 = vpop.f32.mrf.mxu0
    %v3802 = vadd.f32 0.0, %v3801
    %3803 = vmatmul.f32.gmra.mxu0 %v3701
    %v3804 = vpop.f32.mrf.mxu0
    %v3805 = vadd.f32 0.0, %v3804
    %3806 = vmatmul.f32.gmra.mxu0 %v3702
    %v3807 = vpop.f32.mrf.mxu0
    %v3808 = vadd.f32 0.0, %v3807
    %3809 = vmatmul.f32.gmra.mxu0 %v3703
    %v3810 = vpop.f32.mrf.mxu0
    %v3811 = vadd.f32 0.0, %v3810
    %3812 = vmatmul.f32.gmra.mxu0 %v3704
    %v3813 = vpop.f32.mrf.mxu0
    %v3814 = vadd.f32 0.0, %v3813
    %3815 = vmatmul.f32.gmra.mxu0 %v3705
    %v3816 = vpop.f32.mrf.mxu0
    %v3817 = vadd.f32 0.0, %v3816
    %3818 = vdwg.mxu0
    %3823 = vrot.lane.b32.xlu0 %v3784, 8
    %v3824 = vpop.permute.xlu0 %3823
    %3825 = vrot.lane.b32.xlu0 %v3787, 8
    %v3826 = vpop.permute.xlu0 %3825
    %3827 = vrot.lane.b32.xlu0 %v3790, 8
    %v3828 = vpop.permute.xlu0 %3827
    %3829 = vrot.lane.b32.xlu0 %v3793, 8
    %v3830 = vpop.permute.xlu0 %3829
    %3839 = vrot.lane.b32.xlu0 %v3796, 16
    %v3840 = vpop.permute.xlu0 %3839
    %3841 = vrot.lane.b32.xlu0 %v3799, 16
    %v3842 = vpop.permute.xlu0 %3841
    %3843 = vrot.lane.b32.xlu0 %v3802, 16
    %v3844 = vpop.permute.xlu0 %3843
    %3845 = vrot.lane.b32.xlu0 %v3805, 16
    %v3846 = vpop.permute.xlu0 %3845
    %3855 = vrot.lane.b32.xlu0 %v3808, 24
    %v3856 = vpop.permute.xlu0 %3855
    %3857 = vrot.lane.b32.xlu0 %v3811, 24
    %v3858 = vpop.permute.xlu0 %3857
    %3859 = vrot.lane.b32.xlu0 %v3814, 24
    %v3860 = vpop.permute.xlu0 %3859
    %3861 = vrot.lane.b32.xlu0 %v3817, 24
    %v3862 = vpop.permute.xlu0 %3861
    %v3867 = vsel %vm805, %v3772, %v3824
    %v3868 = vsel %vm805, %v3775, %v3826
    %v3869 = vsel %vm805, %v3778, %v3828
    %v3870 = vsel %vm805, %v3781, %v3830
    %v3871 = vsel %vm1244, %v3867, %v3840
    %v3872 = vsel %vm1244, %v3868, %v3842
    %v3873 = vsel %vm1244, %v3869, %v3844
    %v3874 = vsel %vm1244, %v3870, %v3846
    %v3875 = vsel %vm1249, %v3871, %v3856
    %v3876 = vsel %vm1249, %v3872, %v3858
    %v3877 = vsel %vm1249, %v3873, %v3860
    %v3878 = vsel %vm1249, %v3874, %v3862
    %3879 = vrot.lane.b32.xlu0 %v3291, 96
    %v3880 = vpop.permute.xlu0 %3879
    %3881 = vrot.lane.b32.xlu0 %v3293, 96
    %v3882 = vpop.permute.xlu0 %3881
    %3883 = vrot.lane.b32.xlu0 %v3295, 96
    %v3884 = vpop.permute.xlu0 %3883
    %3885 = vrot.lane.b32.xlu0 %v3297, 96
    %v3886 = vpop.permute.xlu0 %3885
    %v3892 = vsel %vm132, %v3875, 0
    %v3895 = vsel %vm132, %v3876, 0
    %v3898 = vsel %vm132, %v3877, 0
    %v3901 = vsel %vm132, %v3878, 0
    %3903 = vmatpush.msra.mxu0 0.0
    %3904 = vmatpush.msra.mxu0 0.0
    %3905 = vmatpush.msra.mxu0 0.0
    %3906 = vmatpush.msra.mxu0 0.0
    %3907 = vmatpush.msra.mxu0 0.0
    %3908 = vmatpush.msra.mxu0 0.0
    %3909 = vmatpush.msra.mxu0 0.0
    %3910 = vmatpush.msra.mxu0 0.0
    %3911 = vmatpush.msra.mxu0 0.0
    %3912 = vmatpush.msra.mxu0 0.0
    %3913 = vmatpush.msra.mxu0 0.0
    %3914 = vmatpush.msra.mxu0 0.0
    %3915 = vmatpush.msra.mxu0 %v3886
    %3916 = vmatpush.msra.mxu0 %v3884
    %3917 = vmatpush.msra.mxu0 %v3882
    %3918 = vmatpush.msra.mxu0 %v3880
    %3919 = vmatmul.f32.gmra.mxu0 %v3892
    %v3920 = vpop.f32.mrf.mxu0
    %v3921 = vadd.f32 0.0, %v3920
    %3922 = vmatmul.f32.gmra.mxu0 %v3895
    %v3923 = vpop.f32.mrf.mxu0
    %v3924 = vadd.f32 0.0, %v3923
    %3925 = vmatmul.f32.gmra.mxu0 %v3898
    %v3926 = vpop.f32.mrf.mxu0
    %v3927 = vadd.f32 0.0, %v3926
    %3928 = vmatmul.f32.gmra.mxu0 %v3901
    %v3929 = vpop.f32.mrf.mxu0
    %v3930 = vadd.f32 0.0, %v3929
    %3931 = vdwg.mxu0
    %v3932 = vadd.f32 %v694, %v3921
    %v3933 = vadd.f32 %v695, %v3924
    %v3934 = vadd.f32 %v696, %v3927
    %v3935 = vadd.f32 %v697, %v3930
    %v3937 = vsel %vm132, %v3932, 0
    %v3940 = vsel %vm132, %v3933, 0
    %v3943 = vsel %vm132, %v3934, 0
    %v3946 = vsel %vm132, %v3935, 0
    %3948 = vmatpush.msra.mxu0 0.0
    %3949 = vmatpush.msra.mxu0 0.0
    %3950 = vmatpush.msra.mxu0 0.0
    %3951 = vmatpush.msra.mxu0 0.0
    %3952 = vmatpush.msra.mxu0 0.0
    %3953 = vmatpush.msra.mxu0 0.0
    %3954 = vmatpush.msra.mxu0 0.0
    %3955 = vmatpush.msra.mxu0 0.0
    %3956 = vmatpush.msra.mxu0 0.0
    %3957 = vmatpush.msra.mxu0 0.0
    %3958 = vmatpush.msra.mxu0 0.0
    %3959 = vmatpush.msra.mxu0 0.0
    %3960 = vmatpush.msra.mxu0 0.03125
    %3961 = vmatpush.msra.mxu0 0.03125
    %3962 = vmatpush.msra.mxu0 0.03125
    %3963 = vmatpush.msra.mxu0 0.03125
    %3964 = vmatmul.f32.gmra.mxu0 %v3937
    %v3965 = vpop.f32.mrf.mxu0
    %v3966 = vadd.f32 0.0, %v3965
    %3967 = vmatmul.f32.gmra.mxu0 %v3940
    %v3968 = vpop.f32.mrf.mxu0
    %v3969 = vadd.f32 0.0, %v3968
    %3970 = vmatmul.f32.gmra.mxu0 %v3943
    %v3971 = vpop.f32.mrf.mxu0
    %v3972 = vadd.f32 0.0, %v3971
    %3973 = vmatmul.f32.gmra.mxu0 %v3946
    %v3974 = vpop.f32.mrf.mxu0
    %v3975 = vadd.f32 0.0, %v3974
    %3976 = vdwg.mxu0
    %v3977 = vmul.f32 %v3932, %v3932
    %v3978 = vmul.f32 %v3933, %v3933
    %v3979 = vmul.f32 %v3934, %v3934
    %v3980 = vmul.f32 %v3935, %v3935
    %v3982 = vsel %vm132, %v3977, 0
    %v3985 = vsel %vm132, %v3978, 0
    %v3988 = vsel %vm132, %v3979, 0
    %v3991 = vsel %vm132, %v3980, 0
    %3993 = vmatpush.msra.mxu0 0.0
    %3994 = vmatpush.msra.mxu0 0.0
    %3995 = vmatpush.msra.mxu0 0.0
    %3996 = vmatpush.msra.mxu0 0.0
    %3997 = vmatpush.msra.mxu0 0.0
    %3998 = vmatpush.msra.mxu0 0.0
    %3999 = vmatpush.msra.mxu0 0.0
    %4000 = vmatpush.msra.mxu0 0.0
    %4001 = vmatpush.msra.mxu0 0.0
    %4002 = vmatpush.msra.mxu0 0.0
    %4003 = vmatpush.msra.mxu0 0.0
    %4004 = vmatpush.msra.mxu0 0.0
    %4005 = vmatpush.msra.mxu0 0.03125
    %4006 = vmatpush.msra.mxu0 0.03125
    %4007 = vmatpush.msra.mxu0 0.03125
    %4008 = vmatpush.msra.mxu0 0.03125
    %4009 = vmatmul.f32.gmra.mxu0 %v3982
    %v4010 = vpop.f32.mrf.mxu0
    %v4011 = vadd.f32 0.0, %v4010
    %4012 = vmatmul.f32.gmra.mxu0 %v3985
    %v4013 = vpop.f32.mrf.mxu0
    %v4014 = vadd.f32 0.0, %v4013
    %4015 = vmatmul.f32.gmra.mxu0 %v3988
    %v4016 = vpop.f32.mrf.mxu0
    %v4017 = vadd.f32 0.0, %v4016
    %4018 = vmatmul.f32.gmra.mxu0 %v3991
    %v4019 = vpop.f32.mrf.mxu0
    %v4020 = vadd.f32 0.0, %v4019
    %4021 = vdwg.mxu0
    %v4022 = vmul.f32 %v3966, %v3966
    %v4023 = vmul.f32 %v3969, %v3969
    %v4024 = vmul.f32 %v3972, %v3972
    %v4025 = vmul.f32 %v3975, %v3975
    %v4026 = vsub.f32 %v4011, %v4022
    %v4027 = vsub.f32 %v4014, %v4023
    %v4028 = vsub.f32 %v4017, %v4024
    %v4029 = vsub.f32 %v4020, %v4025
    %v4030 = vmax.f32 %v4026, 0.0
    %v4031 = vmax.f32 %v4027, 0.0
    %v4032 = vmax.f32 %v4028, 0.0
    %v4033 = vmax.f32 %v4029, 0.0
    %4035 = vset.pattern.permute.xlu0 0
    %4036 = vperm.xlu0 %4035, %v3966
    %v4037 = vpop.permute.xlu0 %4036
    %4040 = vset.pattern.permute.xlu0 0
    %4041 = vperm.xlu0 %4040, %v3969
    %v4042 = vpop.permute.xlu0 %4041
    %4045 = vset.pattern.permute.xlu0 0
    %4046 = vperm.xlu0 %4045, %v3972
    %v4047 = vpop.permute.xlu0 %4046
    %4050 = vset.pattern.permute.xlu0 0
    %4051 = vperm.xlu0 %4050, %v3975
    %v4052 = vpop.permute.xlu0 %4051
    %v4054 = vsub.f32 %v3932, %v4037
    %v4055 = vsub.f32 %v3933, %v4042
    %v4056 = vsub.f32 %v3934, %v4047
    %v4057 = vsub.f32 %v3935, %v4052
    %v4058 = vadd.f32 %v4030, 1e-06
    %v4059 = vadd.f32 %v4031, 1e-06
    %v4060 = vadd.f32 %v4032, 1e-06
    %v4061 = vadd.f32 %v4033, 1e-06
    %v4062 = vrsqrt.pop %v4058
    %v4063 = vmul.f32 %v4062, %v4058
    %v4064 = vmul.f32 %v4063, %v4062
    %v4065 = vmul.f32 0.5, %v4064
    %v4066 = vsub.f32 1.5, %v4065
    %v4067 = vmul.f32 %v4062, %v4066
    %vm4068 = vweird.f32 %v4058
    %vm4069 = vweird.f32 %v4062
    %vm4070 = vmor %vm4068, %vm4069
    %v4071 = vsel %vm4070, %v4062, %v4067
    %v4072 = vrsqrt.pop %v4059
    %v4073 = vmul.f32 %v4072, %v4059
    %v4074 = vmul.f32 %v4073, %v4072
    %v4075 = vmul.f32 0.5, %v4074
    %v4076 = vsub.f32 1.5, %v4075
    %v4077 = vmul.f32 %v4072, %v4076
    %vm4078 = vweird.f32 %v4059
    %vm4079 = vweird.f32 %v4072
    %vm4080 = vmor %vm4078, %vm4079
    %v4081 = vsel %vm4080, %v4072, %v4077
    %v4082 = vrsqrt.pop %v4060
    %v4083 = vmul.f32 %v4082, %v4060
    %v4084 = vmul.f32 %v4083, %v4082
    %v4085 = vmul.f32 0.5, %v4084
    %v4086 = vsub.f32 1.5, %v4085
    %v4087 = vmul.f32 %v4082, %v4086
    %vm4088 = vweird.f32 %v4060
    %vm4089 = vweird.f32 %v4082
    %vm4090 = vmor %vm4088, %vm4089
    %v4091 = vsel %vm4090, %v4082, %v4087
    %v4092 = vrsqrt.pop %v4061
    %v4093 = vmul.f32 %v4092, %v4061
    %v4094 = vmul.f32 %v4093, %v4092
    %v4095 = vmul.f32 0.5, %v4094
    %v4096 = vsub.f32 1.5, %v4095
    %v4097 = vmul.f32 %v4092, %v4096
    %vm4098 = vweird.f32 %v4061
    %vm4099 = vweird.f32 %v4092
    %vm4100 = vmor %vm4098, %vm4099
    %v4101 = vsel %vm4100, %v4092, %v4097
    %4103 = vset.pattern.permute.xlu0 0
    %4104 = vperm.xlu0 %4103, %v4071
    %v4105 = vpop.permute.xlu0 %4104
    %4108 = vset.pattern.permute.xlu0 0
    %4109 = vperm.xlu0 %4108, %v4081
    %v4110 = vpop.permute.xlu0 %4109
    %4113 = vset.pattern.permute.xlu0 0
    %4114 = vperm.xlu0 %4113, %v4091
    %v4115 = vpop.permute.xlu0 %4114
    %4118 = vset.pattern.permute.xlu0 0
    %4119 = vperm.xlu0 %4118, %v4101
    %v4120 = vpop.permute.xlu0 %4119
    %v4122 = vmul.f32 %v4054, %v4105
    %v4123 = vmul.f32 %v4055, %v4110
    %v4124 = vmul.f32 %v4056, %v4115
    %v4125 = vmul.f32 %v4057, %v4120
    %v4126 = vperm.slane %v3371, 0
    %v4127 = vmul.f32 %v4122, %v4126
    %v4128 = vmul.f32 %v4123, %v4126
    %v4129 = vmul.f32 %v4124, %v4126
    %v4130 = vmul.f32 %v4125, %v4126
    %v4131 = vperm.slane %v3372, 0
    %v4132 = vadd.f32 %v4127, %v4131
    %v4133 = vadd.f32 %v4128, %v4131
    %v4134 = vadd.f32 %v4129, %v4131
    %v4135 = vadd.f32 %v4130, %v4131
    %v4141 = vsel %vm132, %v4132, 0
    %v4144 = vsel %vm132, %v4133, 0
    %v4147 = vsel %vm132, %v4134, 0
    %v4150 = vsel %vm132, %v4135, 0
    %4152 = vmatpush.msra.mxu0 0.0
    %4153 = vmatpush.msra.mxu0 0.0
    %4154 = vmatpush.msra.mxu0 0.0
    %4155 = vmatpush.msra.mxu0 0.0
    %4156 = vmatpush.msra.mxu0 0.0
    %4157 = vmatpush.msra.mxu0 0.0
    %4158 = vmatpush.msra.mxu0 0.0
    %4159 = vmatpush.msra.mxu0 0.0
    %4160 = vmatpush.msra.mxu0 0.0
    %4161 = vmatpush.msra.mxu0 0.0
    %4162 = vmatpush.msra.mxu0 0.0
    %4163 = vmatpush.msra.mxu0 0.0
    %4164 = vmatpush.msra.mxu0 %v3321
    %4165 = vmatpush.msra.mxu0 %v3317
    %4166 = vmatpush.msra.mxu0 %v3313
    %4167 = vmatpush.msra.mxu0 %v3309
    %4168 = vmatmul.f32.gmra.mxu0 %v4141
    %v4169 = vpop.f32.mrf.mxu0
    %v4170 = vadd.f32 0.0, %v4169
    %4171 = vmatmul.f32.gmra.mxu0 %v4144
    %v4172 = vpop.f32.mrf.mxu0
    %v4173 = vadd.f32 0.0, %v4172
    %4174 = vmatmul.f32.gmra.mxu0 %v4147
    %v4175 = vpop.f32.mrf.mxu0
    %v4176 = vadd.f32 0.0, %v4175
    %4177 = vmatmul.f32.gmra.mxu0 %v4150
    %v4178 = vpop.f32.mrf.mxu0
    %v4179 = vadd.f32 0.0, %v4178
    %4180 = vdwg.mxu0
    %v4181 = vld [vmem:[%s6 + $0xf] sm:$0x1]
    %v4182 = vld [vmem:[%s6 + $0x10] sm:$0x1]
    %4187 = vrot.lane.b32.xlu0 %v4170, 120
    %v4188 = vpop.permute.xlu0 %4187
    %4189 = vrot.lane.b32.xlu0 %v4173, 120
    %v4190 = vpop.permute.xlu0 %4189
    %4191 = vrot.lane.b32.xlu0 %v4176, 120
    %v4192 = vpop.permute.xlu0 %4191
    %4193 = vrot.lane.b32.xlu0 %v4179, 120
    %v4194 = vpop.permute.xlu0 %4193
    %4195 = vrot.lane.b32.xlu0 %v4170, 112
    %v4196 = vpop.permute.xlu0 %4195
    %4197 = vrot.lane.b32.xlu0 %v4173, 112
    %v4198 = vpop.permute.xlu0 %4197
    %4199 = vrot.lane.b32.xlu0 %v4176, 112
    %v4200 = vpop.permute.xlu0 %4199
    %4201 = vrot.lane.b32.xlu0 %v4179, 112
    %v4202 = vpop.permute.xlu0 %4201
    %4203 = vrot.lane.b32.xlu0 %v4170, 104
    %v4204 = vpop.permute.xlu0 %4203
    %4205 = vrot.lane.b32.xlu0 %v4173, 104
    %v4206 = vpop.permute.xlu0 %4205
    %4207 = vrot.lane.b32.xlu0 %v4176, 104
    %v4208 = vpop.permute.xlu0 %4207
    %4209 = vrot.lane.b32.xlu0 %v4179, 104
    %v4210 = vpop.permute.xlu0 %4209
    %4215 = vrot.lane.b32.xlu0 %v3279, 120
    %v4216 = vpop.permute.xlu0 %4215
    %4217 = vrot.lane.b32.xlu0 %v3282, 120
    %v4218 = vpop.permute.xlu0 %4217
    %4219 = vrot.lane.b32.xlu0 %v3285, 120
    %v4220 = vpop.permute.xlu0 %4219
    %4221 = vrot.lane.b32.xlu0 %v3288, 120
    %v4222 = vpop.permute.xlu0 %4221
    %4223 = vrot.lane.b32.xlu0 %v3279, 112
    %v4224 = vpop.permute.xlu0 %4223
    %4225 = vrot.lane.b32.xlu0 %v3282, 112
    %v4226 = vpop.permute.xlu0 %4225
    %4227 = vrot.lane.b32.xlu0 %v3285, 112
    %v4228 = vpop.permute.xlu0 %4227
    %4229 = vrot.lane.b32.xlu0 %v3288, 112
    %v4230 = vpop.permute.xlu0 %4229
    %4231 = vrot.lane.b32.xlu0 %v3279, 104
    %v4232 = vpop.permute.xlu0 %4231
    %4233 = vrot.lane.b32.xlu0 %v3282, 104
    %v4234 = vpop.permute.xlu0 %4233
    %4235 = vrot.lane.b32.xlu0 %v3285, 104
    %v4236 = vpop.permute.xlu0 %4235
    %4237 = vrot.lane.b32.xlu0 %v3288, 104
    %v4238 = vpop.permute.xlu0 %4237
    %v4239 = vsel %vm805, %v4170, 0
    %v4241 = vsel %vm805, %v4173, 0
    %v4243 = vsel %vm805, %v4176, 0
    %v4245 = vsel %vm805, %v4179, 0
    %v4247 = vsel %vm805, %v4188, 0
    %v4249 = vsel %vm805, %v4190, 0
    %v4251 = vsel %vm805, %v4192, 0
    %v4253 = vsel %vm805, %v4194, 0
    %v4255 = vsel %vm805, %v4196, 0
    %v4257 = vsel %vm805, %v4198, 0
    %v4259 = vsel %vm805, %v4200, 0
    %v4261 = vsel %vm805, %v4202, 0
    %v4263 = vsel %vm805, %v4204, 0
    %v4265 = vsel %vm805, %v4206, 0
    %v4267 = vsel %vm805, %v4208, 0
    %v4269 = vsel %vm805, %v4210, 0
    %v4271 = vsel %vm805, %v3279, 0
    %v4273 = vsel %vm805, %v3282, 0
    %v4275 = vsel %vm805, %v3285, 0
    %v4277 = vsel %vm805, %v3288, 0
    %v4279 = vsel %vm805, %v4216, 0
    %v4281 = vsel %vm805, %v4218, 0
    %v4283 = vsel %vm805, %v4220, 0
    %v4285 = vsel %vm805, %v4222, 0
    %v4287 = vsel %vm805, %v4224, 0
    %v4289 = vsel %vm805, %v4226, 0
    %v4291 = vsel %vm805, %v4228, 0
    %v4293 = vsel %vm805, %v4230, 0
    %v4295 = vsel %vm805, %v4232, 0
    %v4297 = vsel %vm805, %v4234, 0
    %v4299 = vsel %vm805, %v4236, 0
    %v4301 = vsel %vm805, %v4238, 0
    %4303 = vmatpush.xpose.msra.mxu0 %v4301
    %4304 = vmatpush.xpose.msra.mxu0 %v4299
    %4305 = vmatpush.xpose.msra.mxu0 %v4297
    %4306 = vmatpush.xpose.msra.mxu0 %v4295
    %4307 = vmatpush.xpose.msra.mxu0 %v4293
    %4308 = vmatpush.xpose.msra.mxu0 %v4291
    %4309 = vmatpush.xpose.msra.mxu0 %v4289
    %4310 = vmatpush.xpose.msra.mxu0 %v4287
    %4311 = vmatpush.xpose.msra.mxu0 %v4285
    %4312 = vmatpush.xpose.msra.mxu0 %v4283
    %4313 = vmatpush.xpose.msra.mxu0 %v4281
    %4314 = vmatpush.xpose.msra.mxu0 %v4279
    %4315 = vmatpush.xpose.msra.mxu0 %v4277
    %4316 = vmatpush.xpose.msra.mxu0 %v4275
    %4317 = vmatpush.xpose.msra.mxu0 %v4273
    %4318 = vmatpush.xpose.msra.mxu0 %v4271
    %4319 = vmatmul.f32.gmra.mxu0 %v4239
    %v4320 = vpop.f32.mrf.mxu0
    %v4321 = vadd.f32 %v32, %v4320
    %4322 = vmatmul.f32.gmra.mxu0 %v4241
    %v4323 = vpop.f32.mrf.mxu0
    %v4324 = vadd.f32 %v33, %v4323
    %4325 = vmatmul.f32.gmra.mxu0 %v4243
    %v4326 = vpop.f32.mrf.mxu0
    %v4327 = vadd.f32 %v34, %v4326
    %4328 = vmatmul.f32.gmra.mxu0 %v4245
    %v4329 = vpop.f32.mrf.mxu0
    %v4330 = vadd.f32 %v35, %v4329
    %4331 = vmatmul.f32.gmra.mxu0 %v4247
    %v4332 = vpop.f32.mrf.mxu0
    %v4333 = vadd.f32 %v36, %v4332
    %4334 = vmatmul.f32.gmra.mxu0 %v4249
    %v4335 = vpop.f32.mrf.mxu0
    %v4336 = vadd.f32 %v37, %v4335
    %4337 = vmatmul.f32.gmra.mxu0 %v4251
    %v4338 = vpop.f32.mrf.mxu0
    %v4339 = vadd.f32 %v38, %v4338
    %4340 = vmatmul.f32.gmra.mxu0 %v4253
    %v4341 = vpop.f32.mrf.mxu0
    %v4342 = vadd.f32 %v39, %v4341
    %4343 = vmatmul.f32.gmra.mxu0 %v4255
    %v4344 = vpop.f32.mrf.mxu0
    %v4345 = vadd.f32 %v40, %v4344
    %4346 = vmatmul.f32.gmra.mxu0 %v4257
    %v4347 = vpop.f32.mrf.mxu0
    %v4348 = vadd.f32 %v41, %v4347
    %4349 = vmatmul.f32.gmra.mxu0 %v4259
    %v4350 = vpop.f32.mrf.mxu0
    %v4351 = vadd.f32 %v42, %v4350
    %4352 = vmatmul.f32.gmra.mxu0 %v4261
    %v4353 = vpop.f32.mrf.mxu0
    %v4354 = vadd.f32 %v43, %v4353
    %4355 = vmatmul.f32.gmra.mxu0 %v4263
    %v4356 = vpop.f32.mrf.mxu0
    %v4357 = vadd.f32 %v44, %v4356
    %4358 = vmatmul.f32.gmra.mxu0 %v4265
    %v4359 = vpop.f32.mrf.mxu0
    %v4360 = vadd.f32 %v45, %v4359
    %4361 = vmatmul.f32.gmra.mxu0 %v4267
    %v4362 = vpop.f32.mrf.mxu0
    %v4363 = vadd.f32 %v46, %v4362
    %4364 = vmatmul.f32.gmra.mxu0 %v4269
    %v4365 = vpop.f32.mrf.mxu0
    %v4366 = vadd.f32 %v47, %v4365
    %4367 = vdwg.mxu0
    %4368 = vmax.xlane.f32.xlu0 %v4321
    %v4369 = vpop.xlane.xlu0 %4368
    %4370 = vmax.xlane.f32.xlu0 %v4324
    %v4371 = vpop.xlane.xlu0 %4370
    %4372 = vmax.xlane.f32.xlu0 %v4327
    %v4373 = vpop.xlane.xlu0 %4372
    %4374 = vmax.xlane.f32.xlu0 %v4330
    %v4375 = vpop.xlane.xlu0 %4374
    %4376 = vmax.xlane.f32.xlu0 %v4333
    %v4377 = vpop.xlane.xlu0 %4376
    %4378 = vmax.xlane.f32.xlu0 %v4336
    %v4379 = vpop.xlane.xlu0 %4378
    %4380 = vmax.xlane.f32.xlu0 %v4339
    %v4381 = vpop.xlane.xlu0 %4380
    %4382 = vmax.xlane.f32.xlu0 %v4342
    %v4383 = vpop.xlane.xlu0 %4382
    %4384 = vmax.xlane.f32.xlu0 %v4345
    %v4385 = vpop.xlane.xlu0 %4384
    %4386 = vmax.xlane.f32.xlu0 %v4348
    %v4387 = vpop.xlane.xlu0 %4386
    %4388 = vmax.xlane.f32.xlu0 %v4351
    %v4389 = vpop.xlane.xlu0 %4388
    %4390 = vmax.xlane.f32.xlu0 %v4354
    %v4391 = vpop.xlane.xlu0 %4390
    %4392 = vmax.xlane.f32.xlu0 %v4357
    %v4393 = vpop.xlane.xlu0 %4392
    %4394 = vmax.xlane.f32.xlu0 %v4360
    %v4395 = vpop.xlane.xlu0 %4394
    %4396 = vmax.xlane.f32.xlu0 %v4363
    %v4397 = vpop.xlane.xlu0 %4396
    %4398 = vmax.xlane.f32.xlu0 %v4366
    %v4399 = vpop.xlane.xlu0 %4398
    %v4400 = vsub.f32 %v4321, %v4369
    %v4401 = vsub.f32 %v4324, %v4371
    %v4402 = vsub.f32 %v4327, %v4373
    %v4403 = vsub.f32 %v4330, %v4375
    %v4404 = vsub.f32 %v4333, %v4377
    %v4405 = vsub.f32 %v4336, %v4379
    %v4406 = vsub.f32 %v4339, %v4381
    %v4407 = vsub.f32 %v4342, %v4383
    %v4408 = vsub.f32 %v4345, %v4385
    %v4409 = vsub.f32 %v4348, %v4387
    %v4410 = vsub.f32 %v4351, %v4389
    %v4411 = vsub.f32 %v4354, %v4391
    %v4412 = vsub.f32 %v4357, %v4393
    %v4413 = vsub.f32 %v4360, %v4395
    %v4414 = vsub.f32 %v4363, %v4397
    %v4415 = vsub.f32 %v4366, %v4399
    %v4416 = vmul.f32 %v4400, 1.442695
    %v4417 = vpow.pop %v4416
    %v4418 = vmul.f32 %v4401, 1.442695
    %v4419 = vpow.pop %v4418
    %v4420 = vmul.f32 %v4402, 1.442695
    %v4421 = vpow.pop %v4420
    %v4422 = vmul.f32 %v4403, 1.442695
    %v4423 = vpow.pop %v4422
    %v4424 = vmul.f32 %v4404, 1.442695
    %v4425 = vpow.pop %v4424
    %v4426 = vmul.f32 %v4405, 1.442695
    %v4427 = vpow.pop %v4426
    %v4428 = vmul.f32 %v4406, 1.442695
    %v4429 = vpow.pop %v4428
    %v4430 = vmul.f32 %v4407, 1.442695
    %v4431 = vpow.pop %v4430
    %v4432 = vmul.f32 %v4408, 1.442695
    %v4433 = vpow.pop %v4432
    %v4434 = vmul.f32 %v4409, 1.442695
    %v4435 = vpow.pop %v4434
    %v4436 = vmul.f32 %v4410, 1.442695
    %v4437 = vpow.pop %v4436
    %v4438 = vmul.f32 %v4411, 1.442695
    %v4439 = vpow.pop %v4438
    %v4440 = vmul.f32 %v4412, 1.442695
    %v4441 = vpow.pop %v4440
    %v4442 = vmul.f32 %v4413, 1.442695
    %v4443 = vpow.pop %v4442
    %v4444 = vmul.f32 %v4414, 1.442695
    %v4445 = vpow.pop %v4444
    %v4446 = vmul.f32 %v4415, 1.442695
    %v4447 = vpow.pop %v4446
    %4448 = vadd.xlane.f32.xlu0 %v4417
    %v4449 = vpop.xlane.xlu0 %4448
    %4450 = vadd.xlane.f32.xlu0 %v4419
    %v4451 = vpop.xlane.xlu0 %4450
    %4452 = vadd.xlane.f32.xlu0 %v4421
    %v4453 = vpop.xlane.xlu0 %4452
    %4454 = vadd.xlane.f32.xlu0 %v4423
    %v4455 = vpop.xlane.xlu0 %4454
    %4456 = vadd.xlane.f32.xlu0 %v4425
    %v4457 = vpop.xlane.xlu0 %4456
    %4458 = vadd.xlane.f32.xlu0 %v4427
    %v4459 = vpop.xlane.xlu0 %4458
    %4460 = vadd.xlane.f32.xlu0 %v4429
    %v4461 = vpop.xlane.xlu0 %4460
    %4462 = vadd.xlane.f32.xlu0 %v4431
    %v4463 = vpop.xlane.xlu0 %4462
    %4464 = vadd.xlane.f32.xlu0 %v4433
    %v4465 = vpop.xlane.xlu0 %4464
    %4466 = vadd.xlane.f32.xlu0 %v4435
    %v4467 = vpop.xlane.xlu0 %4466
    %4468 = vadd.xlane.f32.xlu0 %v4437
    %v4469 = vpop.xlane.xlu0 %4468
    %4470 = vadd.xlane.f32.xlu0 %v4439
    %v4471 = vpop.xlane.xlu0 %4470
    %4472 = vadd.xlane.f32.xlu0 %v4441
    %v4473 = vpop.xlane.xlu0 %4472
    %4474 = vadd.xlane.f32.xlu0 %v4443
    %v4475 = vpop.xlane.xlu0 %4474
    %4476 = vadd.xlane.f32.xlu0 %v4445
    %v4477 = vpop.xlane.xlu0 %4476
    %4478 = vadd.xlane.f32.xlu0 %v4447
    %v4479 = vpop.xlane.xlu0 %4478
    %v4480 = vrcp.pop %v4449
    %v4481 = vrcp.pop %v4451
    %v4482 = vrcp.pop %v4453
    %v4483 = vrcp.pop %v4455
    %v4484 = vrcp.pop %v4457
    %v4485 = vrcp.pop %v4459
    %v4486 = vrcp.pop %v4461
    %v4487 = vrcp.pop %v4463
    %v4488 = vrcp.pop %v4465
    %v4489 = vrcp.pop %v4467
    %v4490 = vrcp.pop %v4469
    %v4491 = vrcp.pop %v4471
    %v4492 = vrcp.pop %v4473
    %v4493 = vrcp.pop %v4475
    %v4494 = vrcp.pop %v4477
    %v4495 = vrcp.pop %v4479
    %v4496 = vmul.f32 %v4417, %v4480
    %v4497 = vmul.f32 %v4419, %v4481
    %v4498 = vmul.f32 %v4421, %v4482
    %v4499 = vmul.f32 %v4423, %v4483
    %v4500 = vmul.f32 %v4425, %v4484
    %v4501 = vmul.f32 %v4427, %v4485
    %v4502 = vmul.f32 %v4429, %v4486
    %v4503 = vmul.f32 %v4431, %v4487
    %v4504 = vmul.f32 %v4433, %v4488
    %v4505 = vmul.f32 %v4435, %v4489
    %v4506 = vmul.f32 %v4437, %v4490
    %v4507 = vmul.f32 %v4439, %v4491
    %v4508 = vmul.f32 %v4441, %v4492
    %v4509 = vmul.f32 %v4443, %v4493
    %v4510 = vmul.f32 %v4445, %v4494
    %v4511 = vmul.f32 %v4447, %v4495
    %4512 = vrot.lane.b32.xlu0 %v3279, 96
    %v4513 = vpop.permute.xlu0 %4512
    %4514 = vrot.lane.b32.xlu0 %v3282, 96
    %v4515 = vpop.permute.xlu0 %4514
    %4516 = vrot.lane.b32.xlu0 %v3285, 96
    %v4517 = vpop.permute.xlu0 %4516
    %4518 = vrot.lane.b32.xlu0 %v3288, 96
    %v4519 = vpop.permute.xlu0 %4518
    %4520 = vrot.lane.b32.xlu0 %v4216, 96
    %v4521 = vpop.permute.xlu0 %4520
    %4522 = vrot.lane.b32.xlu0 %v4218, 96
    %v4523 = vpop.permute.xlu0 %4522
    %4524 = vrot.lane.b32.xlu0 %v4220, 96
    %v4525 = vpop.permute.xlu0 %4524
    %4526 = vrot.lane.b32.xlu0 %v4222, 96
    %v4527 = vpop.permute.xlu0 %4526
    %4528 = vrot.lane.b32.xlu0 %v4224, 96
    %v4529 = vpop.permute.xlu0 %4528
    %4530 = vrot.lane.b32.xlu0 %v4226, 96
    %v4531 = vpop.permute.xlu0 %4530
    %4532 = vrot.lane.b32.xlu0 %v4228, 96
    %v4533 = vpop.permute.xlu0 %4532
    %4534 = vrot.lane.b32.xlu0 %v4230, 96
    %v4535 = vpop.permute.xlu0 %4534
    %4536 = vrot.lane.b32.xlu0 %v4232, 96
    %v4537 = vpop.permute.xlu0 %4536
    %4538 = vrot.lane.b32.xlu0 %v4234, 96
    %v4539 = vpop.permute.xlu0 %4538
    %4540 = vrot.lane.b32.xlu0 %v4236, 96
    %v4541 = vpop.permute.xlu0 %4540
    %4542 = vrot.lane.b32.xlu0 %v4238, 96
    %v4543 = vpop.permute.xlu0 %4542
    %4560 = vmatpush.msra.mxu0 %v4543
    %4561 = vmatpush.msra.mxu0 %v4541
    %4562 = vmatpush.msra.mxu0 %v4539
    %4563 = vmatpush.msra.mxu0 %v4537
    %4564 = vmatpush.msra.mxu0 %v4535
    %4565 = vmatpush.msra.mxu0 %v4533
    %4566 = vmatpush.msra.mxu0 %v4531
    %4567 = vmatpush.msra.mxu0 %v4529
    %4568 = vmatpush.msra.mxu0 %v4527
    %4569 = vmatpush.msra.mxu0 %v4525
    %4570 = vmatpush.msra.mxu0 %v4523
    %4571 = vmatpush.msra.mxu0 %v4521
    %4572 = vmatpush.msra.mxu0 %v4519
    %4573 = vmatpush.msra.mxu0 %v4517
    %4574 = vmatpush.msra.mxu0 %v4515
    %4575 = vmatpush.msra.mxu0 %v4513
    %4576 = vmatmul.f32.gmra.mxu0 %v4496
    %v4577 = vpop.f32.mrf.mxu0
    %v4578 = vadd.f32 0.0, %v4577
    %4579 = vmatmul.f32.gmra.mxu0 %v4497
    %v4580 = vpop.f32.mrf.mxu0
    %v4581 = vadd.f32 0.0, %v4580
    %4582 = vmatmul.f32.gmra.mxu0 %v4498
    %v4583 = vpop.f32.mrf.mxu0
    %v4584 = vadd.f32 0.0, %v4583
    %4585 = vmatmul.f32.gmra.mxu0 %v4499
    %v4586 = vpop.f32.mrf.mxu0
    %v4587 = vadd.f32 0.0, %v4586
    %4588 = vmatmul.f32.gmra.mxu0 %v4500
    %v4589 = vpop.f32.mrf.mxu0
    %v4590 = vadd.f32 0.0, %v4589
    %4591 = vmatmul.f32.gmra.mxu0 %v4501
    %v4592 = vpop.f32.mrf.mxu0
    %v4593 = vadd.f32 0.0, %v4592
    %4594 = vmatmul.f32.gmra.mxu0 %v4502
    %v4595 = vpop.f32.mrf.mxu0
    %v4596 = vadd.f32 0.0, %v4595
    %4597 = vmatmul.f32.gmra.mxu0 %v4503
    %v4598 = vpop.f32.mrf.mxu0
    %v4599 = vadd.f32 0.0, %v4598
    %4600 = vmatmul.f32.gmra.mxu0 %v4504
    %v4601 = vpop.f32.mrf.mxu0
    %v4602 = vadd.f32 0.0, %v4601
    %4603 = vmatmul.f32.gmra.mxu0 %v4505
    %v4604 = vpop.f32.mrf.mxu0
    %v4605 = vadd.f32 0.0, %v4604
    %4606 = vmatmul.f32.gmra.mxu0 %v4506
    %v4607 = vpop.f32.mrf.mxu0
    %v4608 = vadd.f32 0.0, %v4607
    %4609 = vmatmul.f32.gmra.mxu0 %v4507
    %v4610 = vpop.f32.mrf.mxu0
    %v4611 = vadd.f32 0.0, %v4610
    %4612 = vmatmul.f32.gmra.mxu0 %v4508
    %v4613 = vpop.f32.mrf.mxu0
    %v4614 = vadd.f32 0.0, %v4613
    %4615 = vmatmul.f32.gmra.mxu0 %v4509
    %v4616 = vpop.f32.mrf.mxu0
    %v4617 = vadd.f32 0.0, %v4616
    %4618 = vmatmul.f32.gmra.mxu0 %v4510
    %v4619 = vpop.f32.mrf.mxu0
    %v4620 = vadd.f32 0.0, %v4619
    %4621 = vmatmul.f32.gmra.mxu0 %v4511
    %v4622 = vpop.f32.mrf.mxu0
    %v4623 = vadd.f32 0.0, %v4622
    %4624 = vdwg.mxu0
    %4629 = vrot.lane.b32.xlu0 %v4590, 8
    %v4630 = vpop.permute.xlu0 %4629
    %4631 = vrot.lane.b32.xlu0 %v4593, 8
    %v4632 = vpop.permute.xlu0 %4631
    %4633 = vrot.lane.b32.xlu0 %v4596, 8
    %v4634 = vpop.permute.xlu0 %4633
    %4635 = vrot.lane.b32.xlu0 %v4599, 8
    %v4636 = vpop.permute.xlu0 %4635
    %4645 = vrot.lane.b32.xlu0 %v4602, 16
    %v4646 = vpop.permute.xlu0 %4645
    %4647 = vrot.lane.b32.xlu0 %v4605, 16
    %v4648 = vpop.permute.xlu0 %4647
    %4649 = vrot.lane.b32.xlu0 %v4608, 16
    %v4650 = vpop.permute.xlu0 %4649
    %4651 = vrot.lane.b32.xlu0 %v4611, 16
    %v4652 = vpop.permute.xlu0 %4651
    %4661 = vrot.lane.b32.xlu0 %v4614, 24
    %v4662 = vpop.permute.xlu0 %4661
    %4663 = vrot.lane.b32.xlu0 %v4617, 24
    %v4664 = vpop.permute.xlu0 %4663
    %4665 = vrot.lane.b32.xlu0 %v4620, 24
    %v4666 = vpop.permute.xlu0 %4665
    %4667 = vrot.lane.b32.xlu0 %v4623, 24
    %v4668 = vpop.permute.xlu0 %4667
    %v4673 = vsel %vm805, %v4578, %v4630
    %v4674 = vsel %vm805, %v4581, %v4632
    %v4675 = vsel %vm805, %v4584, %v4634
    %v4676 = vsel %vm805, %v4587, %v4636
    %v4677 = vsel %vm1244, %v4673, %v4646
    %v4678 = vsel %vm1244, %v4674, %v4648
    %v4679 = vsel %vm1244, %v4675, %v4650
    %v4680 = vsel %vm1244, %v4676, %v4652
    %v4681 = vsel %vm1249, %v4677, %v4662
    %v4682 = vsel %vm1249, %v4678, %v4664
    %v4683 = vsel %vm1249, %v4679, %v4666
    %v4684 = vsel %vm1249, %v4680, %v4668
    %4685 = vrot.lane.b32.xlu0 %v3291, 32
    %v4686 = vpop.permute.xlu0 %4685
    %4687 = vrot.lane.b32.xlu0 %v3293, 32
    %v4688 = vpop.permute.xlu0 %4687
    %4689 = vrot.lane.b32.xlu0 %v3295, 32
    %v4690 = vpop.permute.xlu0 %4689
    %4691 = vrot.lane.b32.xlu0 %v3297, 32
    %v4692 = vpop.permute.xlu0 %4691
    %v4698 = vsel %vm132, %v4681, 0
    %v4701 = vsel %vm132, %v4682, 0
    %v4704 = vsel %vm132, %v4683, 0
    %v4707 = vsel %vm132, %v4684, 0
    %4709 = vmatpush.msra.mxu0 0.0
    %4710 = vmatpush.msra.mxu0 0.0
    %4711 = vmatpush.msra.mxu0 0.0
    %4712 = vmatpush.msra.mxu0 0.0
    %4713 = vmatpush.msra.mxu0 0.0
    %4714 = vmatpush.msra.mxu0 0.0
    %4715 = vmatpush.msra.mxu0 0.0
    %4716 = vmatpush.msra.mxu0 0.0
    %4717 = vmatpush.msra.mxu0 0.0
    %4718 = vmatpush.msra.mxu0 0.0
    %4719 = vmatpush.msra.mxu0 0.0
    %4720 = vmatpush.msra.mxu0 0.0
    %4721 = vmatpush.msra.mxu0 %v4692
    %4722 = vmatpush.msra.mxu0 %v4690
    %4723 = vmatpush.msra.mxu0 %v4688
    %4724 = vmatpush.msra.mxu0 %v4686
    %4725 = vmatmul.f32.gmra.mxu0 %v4698
    %v4726 = vpop.f32.mrf.mxu0
    %v4727 = vadd.f32 0.0, %v4726
    %4728 = vmatmul.f32.gmra.mxu0 %v4701
    %v4729 = vpop.f32.mrf.mxu0
    %v4730 = vadd.f32 0.0, %v4729
    %4731 = vmatmul.f32.gmra.mxu0 %v4704
    %v4732 = vpop.f32.mrf.mxu0
    %v4733 = vadd.f32 0.0, %v4732
    %4734 = vmatmul.f32.gmra.mxu0 %v4707
    %v4735 = vpop.f32.mrf.mxu0
    %v4736 = vadd.f32 0.0, %v4735
    %4737 = vdwg.mxu0
    %v4738 = vadd.f32 %v4132, %v4727
    %v4739 = vadd.f32 %v4133, %v4730
    %v4740 = vadd.f32 %v4134, %v4733
    %v4741 = vadd.f32 %v4135, %v4736
    %v4743 = vsel %vm132, %v4738, 0
    %v4746 = vsel %vm132, %v4739, 0
    %v4749 = vsel %vm132, %v4740, 0
    %v4752 = vsel %vm132, %v4741, 0
    %4754 = vmatpush.msra.mxu0 0.0
    %4755 = vmatpush.msra.mxu0 0.0
    %4756 = vmatpush.msra.mxu0 0.0
    %4757 = vmatpush.msra.mxu0 0.0
    %4758 = vmatpush.msra.mxu0 0.0
    %4759 = vmatpush.msra.mxu0 0.0
    %4760 = vmatpush.msra.mxu0 0.0
    %4761 = vmatpush.msra.mxu0 0.0
    %4762 = vmatpush.msra.mxu0 0.0
    %4763 = vmatpush.msra.mxu0 0.0
    %4764 = vmatpush.msra.mxu0 0.0
    %4765 = vmatpush.msra.mxu0 0.0
    %4766 = vmatpush.msra.mxu0 0.03125
    %4767 = vmatpush.msra.mxu0 0.03125
    %4768 = vmatpush.msra.mxu0 0.03125
    %4769 = vmatpush.msra.mxu0 0.03125
    %4770 = vmatmul.f32.gmra.mxu0 %v4743
    %v4771 = vpop.f32.mrf.mxu0
    %v4772 = vadd.f32 0.0, %v4771
    %4773 = vmatmul.f32.gmra.mxu0 %v4746
    %v4774 = vpop.f32.mrf.mxu0
    %v4775 = vadd.f32 0.0, %v4774
    %4776 = vmatmul.f32.gmra.mxu0 %v4749
    %v4777 = vpop.f32.mrf.mxu0
    %v4778 = vadd.f32 0.0, %v4777
    %4779 = vmatmul.f32.gmra.mxu0 %v4752
    %v4780 = vpop.f32.mrf.mxu0
    %v4781 = vadd.f32 0.0, %v4780
    %4782 = vdwg.mxu0
    %v4783 = vmul.f32 %v4738, %v4738
    %v4784 = vmul.f32 %v4739, %v4739
    %v4785 = vmul.f32 %v4740, %v4740
    %v4786 = vmul.f32 %v4741, %v4741
    %v4788 = vsel %vm132, %v4783, 0
    %v4791 = vsel %vm132, %v4784, 0
    %v4794 = vsel %vm132, %v4785, 0
    %v4797 = vsel %vm132, %v4786, 0
    %4799 = vmatpush.msra.mxu0 0.0
    %4800 = vmatpush.msra.mxu0 0.0
    %4801 = vmatpush.msra.mxu0 0.0
    %4802 = vmatpush.msra.mxu0 0.0
    %4803 = vmatpush.msra.mxu0 0.0
    %4804 = vmatpush.msra.mxu0 0.0
    %4805 = vmatpush.msra.mxu0 0.0
    %4806 = vmatpush.msra.mxu0 0.0
    %4807 = vmatpush.msra.mxu0 0.0
    %4808 = vmatpush.msra.mxu0 0.0
    %4809 = vmatpush.msra.mxu0 0.0
    %4810 = vmatpush.msra.mxu0 0.0
    %4811 = vmatpush.msra.mxu0 0.03125
    %4812 = vmatpush.msra.mxu0 0.03125
    %4813 = vmatpush.msra.mxu0 0.03125
    %4814 = vmatpush.msra.mxu0 0.03125
    %4815 = vmatmul.f32.gmra.mxu0 %v4788
    %v4816 = vpop.f32.mrf.mxu0
    %v4817 = vadd.f32 0.0, %v4816
    %4818 = vmatmul.f32.gmra.mxu0 %v4791
    %v4819 = vpop.f32.mrf.mxu0
    %v4820 = vadd.f32 0.0, %v4819
    %4821 = vmatmul.f32.gmra.mxu0 %v4794
    %v4822 = vpop.f32.mrf.mxu0
    %v4823 = vadd.f32 0.0, %v4822
    %4824 = vmatmul.f32.gmra.mxu0 %v4797
    %v4825 = vpop.f32.mrf.mxu0
    %v4826 = vadd.f32 0.0, %v4825
    %4827 = vdwg.mxu0
    %v4828 = vmul.f32 %v4772, %v4772
    %v4829 = vmul.f32 %v4775, %v4775
    %v4830 = vmul.f32 %v4778, %v4778
    %v4831 = vmul.f32 %v4781, %v4781
    %v4832 = vsub.f32 %v4817, %v4828
    %v4833 = vsub.f32 %v4820, %v4829
    %v4834 = vsub.f32 %v4823, %v4830
    %v4835 = vsub.f32 %v4826, %v4831
    %v4836 = vmax.f32 %v4832, 0.0
    %v4837 = vmax.f32 %v4833, 0.0
    %v4838 = vmax.f32 %v4834, 0.0
    %v4839 = vmax.f32 %v4835, 0.0
    %4841 = vset.pattern.permute.xlu0 0
    %4842 = vperm.xlu0 %4841, %v4772
    %v4843 = vpop.permute.xlu0 %4842
    %4846 = vset.pattern.permute.xlu0 0
    %4847 = vperm.xlu0 %4846, %v4775
    %v4848 = vpop.permute.xlu0 %4847
    %4851 = vset.pattern.permute.xlu0 0
    %4852 = vperm.xlu0 %4851, %v4778
    %v4853 = vpop.permute.xlu0 %4852
    %4856 = vset.pattern.permute.xlu0 0
    %4857 = vperm.xlu0 %4856, %v4781
    %v4858 = vpop.permute.xlu0 %4857
    %v4860 = vsub.f32 %v4738, %v4843
    %v4861 = vsub.f32 %v4739, %v4848
    %v4862 = vsub.f32 %v4740, %v4853
    %v4863 = vsub.f32 %v4741, %v4858
    %v4864 = vadd.f32 %v4836, 1e-06
    %v4865 = vadd.f32 %v4837, 1e-06
    %v4866 = vadd.f32 %v4838, 1e-06
    %v4867 = vadd.f32 %v4839, 1e-06
    %v4868 = vrsqrt.pop %v4864
    %v4869 = vmul.f32 %v4868, %v4864
    %v4870 = vmul.f32 %v4869, %v4868
    %v4871 = vmul.f32 0.5, %v4870
    %v4872 = vsub.f32 1.5, %v4871
    %v4873 = vmul.f32 %v4868, %v4872
    %vm4874 = vweird.f32 %v4864
    %vm4875 = vweird.f32 %v4868
    %vm4876 = vmor %vm4874, %vm4875
    %v4877 = vsel %vm4876, %v4868, %v4873
    %v4878 = vrsqrt.pop %v4865
    %v4879 = vmul.f32 %v4878, %v4865
    %v4880 = vmul.f32 %v4879, %v4878
    %v4881 = vmul.f32 0.5, %v4880
    %v4882 = vsub.f32 1.5, %v4881
    %v4883 = vmul.f32 %v4878, %v4882
    %vm4884 = vweird.f32 %v4865
    %vm4885 = vweird.f32 %v4878
    %vm4886 = vmor %vm4884, %vm4885
    %v4887 = vsel %vm4886, %v4878, %v4883
    %v4888 = vrsqrt.pop %v4866
    %v4889 = vmul.f32 %v4888, %v4866
    %v4890 = vmul.f32 %v4889, %v4888
    %v4891 = vmul.f32 0.5, %v4890
    %v4892 = vsub.f32 1.5, %v4891
    %v4893 = vmul.f32 %v4888, %v4892
    %vm4894 = vweird.f32 %v4866
    %vm4895 = vweird.f32 %v4888
    %vm4896 = vmor %vm4894, %vm4895
    %v4897 = vsel %vm4896, %v4888, %v4893
    %v4898 = vrsqrt.pop %v4867
    %v4899 = vmul.f32 %v4898, %v4867
    %v4900 = vmul.f32 %v4899, %v4898
    %v4901 = vmul.f32 0.5, %v4900
    %v4902 = vsub.f32 1.5, %v4901
    %v4903 = vmul.f32 %v4898, %v4902
    %vm4904 = vweird.f32 %v4867
    %vm4905 = vweird.f32 %v4898
    %vm4906 = vmor %vm4904, %vm4905
    %v4907 = vsel %vm4906, %v4898, %v4903
    %4909 = vset.pattern.permute.xlu0 0
    %4910 = vperm.xlu0 %4909, %v4877
    %v4911 = vpop.permute.xlu0 %4910
    %4914 = vset.pattern.permute.xlu0 0
    %4915 = vperm.xlu0 %4914, %v4887
    %v4916 = vpop.permute.xlu0 %4915
    %4919 = vset.pattern.permute.xlu0 0
    %4920 = vperm.xlu0 %4919, %v4897
    %v4921 = vpop.permute.xlu0 %4920
    %4924 = vset.pattern.permute.xlu0 0
    %4925 = vperm.xlu0 %4924, %v4907
    %v4926 = vpop.permute.xlu0 %4925
    %v4928 = vmul.f32 %v4860, %v4911
    %v4929 = vmul.f32 %v4861, %v4916
    %v4930 = vmul.f32 %v4862, %v4921
    %v4931 = vmul.f32 %v4863, %v4926
    %v4932 = vperm.slane %v4181, 0
    %v4933 = vmul.f32 %v4928, %v4932
    %v4934 = vmul.f32 %v4929, %v4932
    %v4935 = vmul.f32 %v4930, %v4932
    %v4936 = vmul.f32 %v4931, %v4932
    %v4937 = vperm.slane %v4182, 0
    %v4938 = vadd.f32 %v4933, %v4937
    %v4939 = vadd.f32 %v4934, %v4937
    %v4940 = vadd.f32 %v4935, %v4937
    %v4941 = vadd.f32 %v4936, %v4937
    %v4942 = vld [vmem:[%s3 + $0x28] sm:$0xff]
    %v4943 = vld [vmem:[%s3 + $0x70] sm:$0xff]
    %v4944 = vld [vmem:[%s3 + $0xb8] sm:$0xff]
    %v4945 = vld [vmem:[%s3 + $0x100] sm:$0xff]
    %v4946 = vld [vmem:[%s6 + $0x11] sm:$0x1]
    %v4947 = vld [vmem:[%s4] sm:$0xff]
    %v4948 = vld [vmem:[%s4 + $0x8] sm:$0xff]
    %v4949 = vld [vmem:[%s4 + $0x10] sm:$0xff]
    %v4950 = vld [vmem:[%s4 + $0x18] sm:$0xff]
    %v4951 = vld [vmem:[%s4 + $0x20] sm:$0xff]
    %v4952 = vld [vmem:[%s4 + $0x28] sm:$0xff]
    %v4953 = vld [vmem:[%s4 + $0x30] sm:$0xff]
    %v4954 = vld [vmem:[%s4 + $0x38] sm:$0xff]
    %v4955 = vld [vmem:[%s6 + $0x12] sm:$0x1]
    %v4956 = vld [vmem:[%s6 + $0x13] sm:$0x1]
    %v4957 = vld [vmem:[%s6 + $0x14] sm:$0x1]
    %v4958 = vperm.slane %v4946, 0
    %v4960 = vsel %vm132, %v4938, 0
    %v4963 = vsel %vm132, %v4939, 0
    %v4966 = vsel %vm132, %v4940, 0
    %v4969 = vsel %vm132, %v4941, 0
    %4971 = vmatpush.msra.mxu0 0.0
    %4972 = vmatpush.msra.mxu0 0.0
    %4973 = vmatpush.msra.mxu0 0.0
    %4974 = vmatpush.msra.mxu0 0.0
    %4975 = vmatpush.msra.mxu0 0.0
    %4976 = vmatpush.msra.mxu0 0.0
    %4977 = vmatpush.msra.mxu0 0.0
    %4978 = vmatpush.msra.mxu0 0.0
    %4979 = vmatpush.msra.mxu0 0.0
    %4980 = vmatpush.msra.mxu0 0.0
    %4981 = vmatpush.msra.mxu0 0.0
    %4982 = vmatpush.msra.mxu0 0.0
    %4983 = vmatpush.msra.mxu0 %v4945
    %4984 = vmatpush.msra.mxu0 %v4944
    %4985 = vmatpush.msra.mxu0 %v4943
    %4986 = vmatpush.msra.mxu0 %v4942
    %4987 = vmatmul.f32.gmra.mxu0 %v4960
    %v4988 = vpop.f32.mrf.mxu0
    %v4989 = vadd.f32 %v4958, %v4988
    %4990 = vmatmul.f32.gmra.mxu0 %v4963
    %v4991 = vpop.f32.mrf.mxu0
    %v4992 = vadd.f32 %v4958, %v4991
    %4993 = vmatmul.f32.gmra.mxu0 %v4966
    %v4994 = vpop.f32.mrf.mxu0
    %v4995 = vadd.f32 %v4958, %v4994
    %4996 = vmatmul.f32.gmra.mxu0 %v4969
    %v4997 = vpop.f32.mrf.mxu0
    %v4998 = vadd.f32 %v4958, %v4997
    %4999 = vdwg.mxu0
    %v5000 = vmax.f32 %v4989, 0.0
    %v5001 = vmax.f32 %v4992, 0.0
    %v5002 = vmax.f32 %v4995, 0.0
    %v5003 = vmax.f32 %v4998, 0.0
    %v5004 = vperm.slane %v4955, 0
    %5013 = vrot.lane.b32.xlu0 %v4947, 64
    %v5014 = vpop.permute.xlu0 %5013
    %5015 = vrot.lane.b32.xlu0 %v4948, 64
    %v5016 = vpop.permute.xlu0 %5015
    %5017 = vrot.lane.b32.xlu0 %v4949, 64
    %v5018 = vpop.permute.xlu0 %5017
    %5019 = vrot.lane.b32.xlu0 %v4950, 64
    %v5020 = vpop.permute.xlu0 %5019
    %5021 = vrot.lane.b32.xlu0 %v4951, 64
    %v5022 = vpop.permute.xlu0 %5021
    %5023 = vrot.lane.b32.xlu0 %v4952, 64
    %v5024 = vpop.permute.xlu0 %5023
    %5025 = vrot.lane.b32.xlu0 %v4953, 64
    %v5026 = vpop.permute.xlu0 %5025
    %5027 = vrot.lane.b32.xlu0 %v4954, 64
    %v5028 = vpop.permute.xlu0 %5027
    %v5038 = vsel %vm1578, %v5000, 0
    %v5041 = vsel %vm1578, %v5001, 0
    %v5044 = vsel %vm1578, %v5002, 0
    %v5047 = vsel %vm1578, %v5003, 0
    %5049 = vmatpush.msra.mxu0 0.0
    %5050 = vmatpush.msra.mxu0 0.0
    %5051 = vmatpush.msra.mxu0 0.0
    %5052 = vmatpush.msra.mxu0 0.0
    %5053 = vmatpush.msra.mxu0 0.0
    %5054 = vmatpush.msra.mxu0 0.0
    %5055 = vmatpush.msra.mxu0 0.0
    %5056 = vmatpush.msra.mxu0 0.0
    %5057 = vmatpush.msra.mxu0 %v5028
    %5058 = vmatpush.msra.mxu0 %v5026
    %5059 = vmatpush.msra.mxu0 %v5024
    %5060 = vmatpush.msra.mxu0 %v5022
    %5061 = vmatpush.msra.mxu0 %v5020
    %5062 = vmatpush.msra.mxu0 %v5018
    %5063 = vmatpush.msra.mxu0 %v5016
    %5064 = vmatpush.msra.mxu0 %v5014
    %5065 = vmatmul.f32.gmra.mxu0 %v5038
    %v5066 = vpop.f32.mrf.mxu0
    %v5067 = vadd.f32 %v5004, %v5066
    %5068 = vmatmul.f32.gmra.mxu0 %v5041
    %v5069 = vpop.f32.mrf.mxu0
    %v5070 = vadd.f32 %v5004, %v5069
    %5071 = vmatmul.f32.gmra.mxu0 %v5044
    %v5072 = vpop.f32.mrf.mxu0
    %v5073 = vadd.f32 %v5004, %v5072
    %5074 = vmatmul.f32.gmra.mxu0 %v5047
    %v5075 = vpop.f32.mrf.mxu0
    %v5076 = vadd.f32 %v5004, %v5075
    %5077 = vdwg.mxu0
    %v5078 = vadd.f32 %v5067, %v4938
    %v5079 = vadd.f32 %v5070, %v4939
    %v5080 = vadd.f32 %v5073, %v4940
    %v5081 = vadd.f32 %v5076, %v4941
    %v5083 = vsel %vm132, %v5078, 0
    %v5086 = vsel %vm132, %v5079, 0
    %v5089 = vsel %vm132, %v5080, 0
    %v5092 = vsel %vm132, %v5081, 0
    %5094 = vmatpush.msra.mxu0 0.0
    %5095 = vmatpush.msra.mxu0 0.0
    %5096 = vmatpush.msra.mxu0 0.0
    %5097 = vmatpush.msra.mxu0 0.0
    %5098 = vmatpush.msra.mxu0 0.0
    %5099 = vmatpush.msra.mxu0 0.0
    %5100 = vmatpush.msra.mxu0 0.0
    %5101 = vmatpush.msra.mxu0 0.0
    %5102 = vmatpush.msra.mxu0 0.0
    %5103 = vmatpush.msra.mxu0 0.0
    %5104 = vmatpush.msra.mxu0 0.0
    %5105 = vmatpush.msra.mxu0 0.0
    %5106 = vmatpush.msra.mxu0 0.03125
    %5107 = vmatpush.msra.mxu0 0.03125
    %5108 = vmatpush.msra.mxu0 0.03125
    %5109 = vmatpush.msra.mxu0 0.03125
    %5110 = vmatmul.f32.gmra.mxu0 %v5083
    %v5111 = vpop.f32.mrf.mxu0
    %v5112 = vadd.f32 0.0, %v5111
    %5113 = vmatmul.f32.gmra.mxu0 %v5086
    %v5114 = vpop.f32.mrf.mxu0
    %v5115 = vadd.f32 0.0, %v5114
    %5116 = vmatmul.f32.gmra.mxu0 %v5089
    %v5117 = vpop.f32.mrf.mxu0
    %v5118 = vadd.f32 0.0, %v5117
    %5119 = vmatmul.f32.gmra.mxu0 %v5092
    %v5120 = vpop.f32.mrf.mxu0
    %v5121 = vadd.f32 0.0, %v5120
    %5122 = vdwg.mxu0
    %v5123 = vmul.f32 %v5078, %v5078
    %v5124 = vmul.f32 %v5079, %v5079
    %v5125 = vmul.f32 %v5080, %v5080
    %v5126 = vmul.f32 %v5081, %v5081
    %v5128 = vsel %vm132, %v5123, 0
    %v5131 = vsel %vm132, %v5124, 0
    %v5134 = vsel %vm132, %v5125, 0
    %v5137 = vsel %vm132, %v5126, 0
    %5139 = vmatpush.msra.mxu0 0.0
    %5140 = vmatpush.msra.mxu0 0.0
    %5141 = vmatpush.msra.mxu0 0.0
    %5142 = vmatpush.msra.mxu0 0.0
    %5143 = vmatpush.msra.mxu0 0.0
    %5144 = vmatpush.msra.mxu0 0.0
    %5145 = vmatpush.msra.mxu0 0.0
    %5146 = vmatpush.msra.mxu0 0.0
    %5147 = vmatpush.msra.mxu0 0.0
    %5148 = vmatpush.msra.mxu0 0.0
    %5149 = vmatpush.msra.mxu0 0.0
    %5150 = vmatpush.msra.mxu0 0.0
    %5151 = vmatpush.msra.mxu0 0.03125
    %5152 = vmatpush.msra.mxu0 0.03125
    %5153 = vmatpush.msra.mxu0 0.03125
    %5154 = vmatpush.msra.mxu0 0.03125
    %5155 = vmatmul.f32.gmra.mxu0 %v5128
    %v5156 = vpop.f32.mrf.mxu0
    %v5157 = vadd.f32 0.0, %v5156
    %5158 = vmatmul.f32.gmra.mxu0 %v5131
    %v5159 = vpop.f32.mrf.mxu0
    %v5160 = vadd.f32 0.0, %v5159
    %5161 = vmatmul.f32.gmra.mxu0 %v5134
    %v5162 = vpop.f32.mrf.mxu0
    %v5163 = vadd.f32 0.0, %v5162
    %5164 = vmatmul.f32.gmra.mxu0 %v5137
    %v5165 = vpop.f32.mrf.mxu0
    %v5166 = vadd.f32 0.0, %v5165
    %5167 = vdwg.mxu0
    %v5168 = vmul.f32 %v5112, %v5112
    %v5169 = vmul.f32 %v5115, %v5115
    %v5170 = vmul.f32 %v5118, %v5118
    %v5171 = vmul.f32 %v5121, %v5121
    %v5172 = vsub.f32 %v5157, %v5168
    %v5173 = vsub.f32 %v5160, %v5169
    %v5174 = vsub.f32 %v5163, %v5170
    %v5175 = vsub.f32 %v5166, %v5171
    %v5176 = vmax.f32 %v5172, 0.0
    %v5177 = vmax.f32 %v5173, 0.0
    %v5178 = vmax.f32 %v5174, 0.0
    %v5179 = vmax.f32 %v5175, 0.0
    %5181 = vset.pattern.permute.xlu0 0
    %5182 = vperm.xlu0 %5181, %v5112
    %v5183 = vpop.permute.xlu0 %5182
    %5186 = vset.pattern.permute.xlu0 0
    %5187 = vperm.xlu0 %5186, %v5115
    %v5188 = vpop.permute.xlu0 %5187
    %5191 = vset.pattern.permute.xlu0 0
    %5192 = vperm.xlu0 %5191, %v5118
    %v5193 = vpop.permute.xlu0 %5192
    %5196 = vset.pattern.permute.xlu0 0
    %5197 = vperm.xlu0 %5196, %v5121
    %v5198 = vpop.permute.xlu0 %5197
    %v5200 = vsub.f32 %v5078, %v5183
    %v5201 = vsub.f32 %v5079, %v5188
    %v5202 = vsub.f32 %v5080, %v5193
    %v5203 = vsub.f32 %v5081, %v5198
    %v5204 = vadd.f32 %v5176, 1e-06
    %v5205 = vadd.f32 %v5177, 1e-06
    %v5206 = vadd.f32 %v5178, 1e-06
    %v5207 = vadd.f32 %v5179, 1e-06
    %v5208 = vrsqrt.pop %v5204
    %v5209 = vmul.f32 %v5208, %v5204
    %v5210 = vmul.f32 %v5209, %v5208
    %v5211 = vmul.f32 0.5, %v5210
    %v5212 = vsub.f32 1.5, %v5211
    %v5213 = vmul.f32 %v5208, %v5212
    %vm5214 = vweird.f32 %v5204
    %vm5215 = vweird.f32 %v5208
    %vm5216 = vmor %vm5214, %vm5215
    %v5217 = vsel %vm5216, %v5208, %v5213
    %v5218 = vrsqrt.pop %v5205
    %v5219 = vmul.f32 %v5218, %v5205
    %v5220 = vmul.f32 %v5219, %v5218
    %v5221 = vmul.f32 0.5, %v5220
    %v5222 = vsub.f32 1.5, %v5221
    %v5223 = vmul.f32 %v5218, %v5222
    %vm5224 = vweird.f32 %v5205
    %vm5225 = vweird.f32 %v5218
    %vm5226 = vmor %vm5224, %vm5225
    %v5227 = vsel %vm5226, %v5218, %v5223
    %v5228 = vrsqrt.pop %v5206
    %v5229 = vmul.f32 %v5228, %v5206
    %v5230 = vmul.f32 %v5229, %v5228
    %v5231 = vmul.f32 0.5, %v5230
    %v5232 = vsub.f32 1.5, %v5231
    %v5233 = vmul.f32 %v5228, %v5232
    %vm5234 = vweird.f32 %v5206
    %vm5235 = vweird.f32 %v5228
    %vm5236 = vmor %vm5234, %vm5235
    %v5237 = vsel %vm5236, %v5228, %v5233
    %v5238 = vrsqrt.pop %v5207
    %v5239 = vmul.f32 %v5238, %v5207
    %v5240 = vmul.f32 %v5239, %v5238
    %v5241 = vmul.f32 0.5, %v5240
    %v5242 = vsub.f32 1.5, %v5241
    %v5243 = vmul.f32 %v5238, %v5242
    %vm5244 = vweird.f32 %v5207
    %vm5245 = vweird.f32 %v5238
    %vm5246 = vmor %vm5244, %vm5245
    %v5247 = vsel %vm5246, %v5238, %v5243
    %5249 = vset.pattern.permute.xlu0 0
    %5250 = vperm.xlu0 %5249, %v5217
    %v5251 = vpop.permute.xlu0 %5250
    %5254 = vset.pattern.permute.xlu0 0
    %5255 = vperm.xlu0 %5254, %v5227
    %v5256 = vpop.permute.xlu0 %5255
    %5259 = vset.pattern.permute.xlu0 0
    %5260 = vperm.xlu0 %5259, %v5237
    %v5261 = vpop.permute.xlu0 %5260
    %5264 = vset.pattern.permute.xlu0 0
    %5265 = vperm.xlu0 %5264, %v5247
    %v5266 = vpop.permute.xlu0 %5265
    %v5268 = vmul.f32 %v5200, %v5251
    %v5269 = vmul.f32 %v5201, %v5256
    %v5270 = vmul.f32 %v5202, %v5261
    %v5271 = vmul.f32 %v5203, %v5266
    %v5272 = vperm.slane %v4956, 0
    %v5273 = vmul.f32 %v5268, %v5272
    %v5274 = vmul.f32 %v5269, %v5272
    %v5275 = vmul.f32 %v5270, %v5272
    %v5276 = vmul.f32 %v5271, %v5272
    %v5277 = vperm.slane %v4957, 0
    %v5278 = vadd.f32 %v5273, %v5277
    %v5279 = vadd.f32 %v5274, %v5277
    %v5280 = vadd.f32 %v5275, %v5277
    %v5281 = vadd.f32 %v5276, %v5277
    %v5282 = vld [vmem:[%s3 + $0x28] sm:$0xff]
    %v5283 = vld [vmem:[%s3 + $0x30] sm:$0xff]
    %v5284 = vld [vmem:[%s3 + $0x70] sm:$0xff]
    %v5285 = vld [vmem:[%s3 + $0x78] sm:$0xff]
    %v5286 = vld [vmem:[%s3 + $0xb8] sm:$0xff]
    %v5287 = vld [vmem:[%s3 + $0xc0] sm:$0xff]
    %v5288 = vld [vmem:[%s3 + $0x100] sm:$0xff]
    %v5289 = vld [vmem:[%s3 + $0x108] sm:$0xff]
    %5298 = vrot.lane.b32.xlu0 %v5282, 64
    %v5299 = vpop.permute.xlu0 %5298
    %5300 = vrot.lane.b32.xlu0 %v5283, 64
    %v5301 = vpop.permute.xlu0 %5300
    %5302 = vrot.lane.b32.xlu0 %v5284, 64
    %v5303 = vpop.permute.xlu0 %5302
    %5304 = vrot.lane.b32.xlu0 %v5285, 64
    %v5305 = vpop.permute.xlu0 %5304
    %5306 = vrot.lane.b32.xlu0 %v5286, 64
    %v5307 = vpop.permute.xlu0 %5306
    %5308 = vrot.lane.b32.xlu0 %v5287, 64
    %v5309 = vpop.permute.xlu0 %5308
    %5310 = vrot.lane.b32.xlu0 %v5288, 64
    %v5311 = vpop.permute.xlu0 %5310
    %5312 = vrot.lane.b32.xlu0 %v5289, 64
    %v5313 = vpop.permute.xlu0 %5312
    %v5314 = vsel %vm1578, %v5299, %v5301
    %v5315 = vsel %vm1578, %v5303, %v5305
    %v5316 = vsel %vm1578, %v5307, %v5309
    %v5317 = vsel %vm1578, %v5311, %v5313
    %v5323 = vsel %vm132, %v5278, 0
    %v5326 = vsel %vm132, %v5279, 0
    %v5329 = vsel %vm132, %v5280, 0
    %v5332 = vsel %vm132, %v5281, 0
    %5334 = vmatpush.msra.mxu0 0.0
    %5335 = vmatpush.msra.mxu0 0.0
    %5336 = vmatpush.msra.mxu0 0.0
    %5337 = vmatpush.msra.mxu0 0.0
    %5338 = vmatpush.msra.mxu0 0.0
    %5339 = vmatpush.msra.mxu0 0.0
    %5340 = vmatpush.msra.mxu0 0.0
    %5341 = vmatpush.msra.mxu0 0.0
    %5342 = vmatpush.msra.mxu0 0.0
    %5343 = vmatpush.msra.mxu0 0.0
    %5344 = vmatpush.msra.mxu0 0.0
    %5345 = vmatpush.msra.mxu0 0.0
    %5346 = vmatpush.msra.mxu0 %v5317
    %5347 = vmatpush.msra.mxu0 %v5316
    %5348 = vmatpush.msra.mxu0 %v5315
    %5349 = vmatpush.msra.mxu0 %v5314
    %5350 = vmatmul.f32.gmra.mxu0 %v5323
    %v5351 = vpop.f32.mrf.mxu0
    %v5352 = vadd.f32 0.0, %v5351
    %5353 = vmatmul.f32.gmra.mxu0 %v5326
    %v5354 = vpop.f32.mrf.mxu0
    %v5355 = vadd.f32 0.0, %v5354
    %5356 = vmatmul.f32.gmra.mxu0 %v5329
    %v5357 = vpop.f32.mrf.mxu0
    %v5358 = vadd.f32 0.0, %v5357
    %5359 = vmatmul.f32.gmra.mxu0 %v5332
    %v5360 = vpop.f32.mrf.mxu0
    %v5361 = vadd.f32 0.0, %v5360
    %5362 = vdwg.mxu0
    %v5363 = vld [vmem:[%s6 + $0x15] sm:$0x1]
    %v5364 = vld [vmem:[%s6 + $0x16] sm:$0x1]
    %5369 = vrot.lane.b32.xlu0 %v5352, 120
    %v5370 = vpop.permute.xlu0 %5369
    %5371 = vrot.lane.b32.xlu0 %v5355, 120
    %v5372 = vpop.permute.xlu0 %5371
    %5373 = vrot.lane.b32.xlu0 %v5358, 120
    %v5374 = vpop.permute.xlu0 %5373
    %5375 = vrot.lane.b32.xlu0 %v5361, 120
    %v5376 = vpop.permute.xlu0 %5375
    %5377 = vrot.lane.b32.xlu0 %v5352, 112
    %v5378 = vpop.permute.xlu0 %5377
    %5379 = vrot.lane.b32.xlu0 %v5355, 112
    %v5380 = vpop.permute.xlu0 %5379
    %5381 = vrot.lane.b32.xlu0 %v5358, 112
    %v5382 = vpop.permute.xlu0 %5381
    %5383 = vrot.lane.b32.xlu0 %v5361, 112
    %v5384 = vpop.permute.xlu0 %5383
    %5385 = vrot.lane.b32.xlu0 %v5352, 104
    %v5386 = vpop.permute.xlu0 %5385
    %5387 = vrot.lane.b32.xlu0 %v5355, 104
    %v5388 = vpop.permute.xlu0 %5387
    %5389 = vrot.lane.b32.xlu0 %v5358, 104
    %v5390 = vpop.permute.xlu0 %5389
    %5391 = vrot.lane.b32.xlu0 %v5361, 104
    %v5392 = vpop.permute.xlu0 %5391
    %5393 = vrot.lane.b32.xlu0 %v5352, 96
    %v5394 = vpop.permute.xlu0 %5393
    %5395 = vrot.lane.b32.xlu0 %v5355, 96
    %v5396 = vpop.permute.xlu0 %5395
    %5397 = vrot.lane.b32.xlu0 %v5358, 96
    %v5398 = vpop.permute.xlu0 %5397
    %5399 = vrot.lane.b32.xlu0 %v5361, 96
    %v5400 = vpop.permute.xlu0 %5399
    %5401 = vrot.lane.b32.xlu0 %v5370, 96
    %v5402 = vpop.permute.xlu0 %5401
    %5403 = vrot.lane.b32.xlu0 %v5372, 96
    %v5404 = vpop.permute.xlu0 %5403
    %5405 = vrot.lane.b32.xlu0 %v5374, 96
    %v5406 = vpop.permute.xlu0 %5405
    %5407 = vrot.lane.b32.xlu0 %v5376, 96
    %v5408 = vpop.permute.xlu0 %5407
    %5409 = vrot.lane.b32.xlu0 %v5378, 96
    %v5410 = vpop.permute.xlu0 %5409
    %5411 = vrot.lane.b32.xlu0 %v5380, 96
    %v5412 = vpop.permute.xlu0 %5411
    %5413 = vrot.lane.b32.xlu0 %v5382, 96
    %v5414 = vpop.permute.xlu0 %5413
    %5415 = vrot.lane.b32.xlu0 %v5384, 96
    %v5416 = vpop.permute.xlu0 %5415
    %5417 = vrot.lane.b32.xlu0 %v5386, 96
    %v5418 = vpop.permute.xlu0 %5417
    %5419 = vrot.lane.b32.xlu0 %v5388, 96
    %v5420 = vpop.permute.xlu0 %5419
    %5421 = vrot.lane.b32.xlu0 %v5390, 96
    %v5422 = vpop.permute.xlu0 %5421
    %5423 = vrot.lane.b32.xlu0 %v5392, 96
    %v5424 = vpop.permute.xlu0 %5423
    %v5425 = vsel %vm805, %v5352, 0
    %v5427 = vsel %vm805, %v5355, 0
    %v5429 = vsel %vm805, %v5358, 0
    %v5431 = vsel %vm805, %v5361, 0
    %v5433 = vsel %vm805, %v5370, 0
    %v5435 = vsel %vm805, %v5372, 0
    %v5437 = vsel %vm805, %v5374, 0
    %v5439 = vsel %vm805, %v5376, 0
    %v5441 = vsel %vm805, %v5378, 0
    %v5443 = vsel %vm805, %v5380, 0
    %v5445 = vsel %vm805, %v5382, 0
    %v5447 = vsel %vm805, %v5384, 0
    %v5449 = vsel %vm805, %v5386, 0
    %v5451 = vsel %vm805, %v5388, 0
    %v5453 = vsel %vm805, %v5390, 0
    %v5455 = vsel %vm805, %v5392, 0
    %v5457 = vsel %vm805, %v5394, 0
    %v5459 = vsel %vm805, %v5396, 0
    %v5461 = vsel %vm805, %v5398, 0
    %v5463 = vsel %vm805, %v5400, 0
    %v5465 = vsel %vm805, %v5402, 0
    %v5467 = vsel %vm805, %v5404, 0
    %v5469 = vsel %vm805, %v5406, 0
    %v5471 = vsel %vm805, %v5408, 0
    %v5473 = vsel %vm805, %v5410, 0
    %v5475 = vsel %vm805, %v5412, 0
    %v5477 = vsel %vm805, %v5414, 0
    %v5479 = vsel %vm805, %v5416, 0
    %v5481 = vsel %vm805, %v5418, 0
    %v5483 = vsel %vm805, %v5420, 0
    %v5485 = vsel %vm805, %v5422, 0
    %v5487 = vsel %vm805, %v5424, 0
    %5489 = vmatpush.xpose.msra.mxu0 %v5487
    %5490 = vmatpush.xpose.msra.mxu0 %v5485
    %5491 = vmatpush.xpose.msra.mxu0 %v5483
    %5492 = vmatpush.xpose.msra.mxu0 %v5481
    %5493 = vmatpush.xpose.msra.mxu0 %v5479
    %5494 = vmatpush.xpose.msra.mxu0 %v5477
    %5495 = vmatpush.xpose.msra.mxu0 %v5475
    %5496 = vmatpush.xpose.msra.mxu0 %v5473
    %5497 = vmatpush.xpose.msra.mxu0 %v5471
    %5498 = vmatpush.xpose.msra.mxu0 %v5469
    %5499 = vmatpush.xpose.msra.mxu0 %v5467
    %5500 = vmatpush.xpose.msra.mxu0 %v5465
    %5501 = vmatpush.xpose.msra.mxu0 %v5463
    %5502 = vmatpush.xpose.msra.mxu0 %v5461
    %5503 = vmatpush.xpose.msra.mxu0 %v5459
    %5504 = vmatpush.xpose.msra.mxu0 %v5457
    %5505 = vmatmul.f32.gmra.mxu0 %v5425
    %v5506 = vpop.f32.mrf.mxu0
    %v5507 = vadd.f32 %v48, %v5506
    %5508 = vmatmul.f32.gmra.mxu0 %v5427
    %v5509 = vpop.f32.mrf.mxu0
    %v5510 = vadd.f32 %v49, %v5509
    %5511 = vmatmul.f32.gmra.mxu0 %v5429
    %v5512 = vpop.f32.mrf.mxu0
    %v5513 = vadd.f32 %v50, %v5512
    %5514 = vmatmul.f32.gmra.mxu0 %v5431
    %v5515 = vpop.f32.mrf.mxu0
    %v5516 = vadd.f32 %v51, %v5515
    %5517 = vmatmul.f32.gmra.mxu0 %v5433
    %v5518 = vpop.f32.mrf.mxu0
    %v5519 = vadd.f32 %v52, %v5518
    %5520 = vmatmul.f32.gmra.mxu0 %v5435
    %v5521 = vpop.f32.mrf.mxu0
    %v5522 = vadd.f32 %v53, %v5521
    %5523 = vmatmul.f32.gmra.mxu0 %v5437
    %v5524 = vpop.f32.mrf.mxu0
    %v5525 = vadd.f32 %v54, %v5524
    %5526 = vmatmul.f32.gmra.mxu0 %v5439
    %v5527 = vpop.f32.mrf.mxu0
    %v5528 = vadd.f32 %v55, %v5527
    %5529 = vmatmul.f32.gmra.mxu0 %v5441
    %v5530 = vpop.f32.mrf.mxu0
    %v5531 = vadd.f32 %v56, %v5530
    %5532 = vmatmul.f32.gmra.mxu0 %v5443
    %v5533 = vpop.f32.mrf.mxu0
    %v5534 = vadd.f32 %v57, %v5533
    %5535 = vmatmul.f32.gmra.mxu0 %v5445
    %v5536 = vpop.f32.mrf.mxu0
    %v5537 = vadd.f32 %v58, %v5536
    %5538 = vmatmul.f32.gmra.mxu0 %v5447
    %v5539 = vpop.f32.mrf.mxu0
    %v5540 = vadd.f32 %v59, %v5539
    %5541 = vmatmul.f32.gmra.mxu0 %v5449
    %v5542 = vpop.f32.mrf.mxu0
    %v5543 = vadd.f32 %v60, %v5542
    %5544 = vmatmul.f32.gmra.mxu0 %v5451
    %v5545 = vpop.f32.mrf.mxu0
    %v5546 = vadd.f32 %v61, %v5545
    %5547 = vmatmul.f32.gmra.mxu0 %v5453
    %v5548 = vpop.f32.mrf.mxu0
    %v5549 = vadd.f32 %v62, %v5548
    %5550 = vmatmul.f32.gmra.mxu0 %v5455
    %v5551 = vpop.f32.mrf.mxu0
    %v5552 = vadd.f32 %v63, %v5551
    %5553 = vdwg.mxu0
    %5554 = vmax.xlane.f32.xlu0 %v5507
    %v5555 = vpop.xlane.xlu0 %5554
    %5556 = vmax.xlane.f32.xlu0 %v5510
    %v5557 = vpop.xlane.xlu0 %5556
    %5558 = vmax.xlane.f32.xlu0 %v5513
    %v5559 = vpop.xlane.xlu0 %5558
    %5560 = vmax.xlane.f32.xlu0 %v5516
    %v5561 = vpop.xlane.xlu0 %5560
    %5562 = vmax.xlane.f32.xlu0 %v5519
    %v5563 = vpop.xlane.xlu0 %5562
    %5564 = vmax.xlane.f32.xlu0 %v5522
    %v5565 = vpop.xlane.xlu0 %5564
    %5566 = vmax.xlane.f32.xlu0 %v5525
    %v5567 = vpop.xlane.xlu0 %5566
    %5568 = vmax.xlane.f32.xlu0 %v5528
    %v5569 = vpop.xlane.xlu0 %5568
    %5570 = vmax.xlane.f32.xlu0 %v5531
    %v5571 = vpop.xlane.xlu0 %5570
    %5572 = vmax.xlane.f32.xlu0 %v5534
    %v5573 = vpop.xlane.xlu0 %5572
    %5574 = vmax.xlane.f32.xlu0 %v5537
    %v5575 = vpop.xlane.xlu0 %5574
    %5576 = vmax.xlane.f32.xlu0 %v5540
    %v5577 = vpop.xlane.xlu0 %5576
    %5578 = vmax.xlane.f32.xlu0 %v5543
    %v5579 = vpop.xlane.xlu0 %5578
    %5580 = vmax.xlane.f32.xlu0 %v5546
    %v5581 = vpop.xlane.xlu0 %5580
    %5582 = vmax.xlane.f32.xlu0 %v5549
    %v5583 = vpop.xlane.xlu0 %5582
    %5584 = vmax.xlane.f32.xlu0 %v5552
    %v5585 = vpop.xlane.xlu0 %5584
    %v5586 = vsub.f32 %v5507, %v5555
    %v5587 = vsub.f32 %v5510, %v5557
    %v5588 = vsub.f32 %v5513, %v5559
    %v5589 = vsub.f32 %v5516, %v5561
    %v5590 = vsub.f32 %v5519, %v5563
    %v5591 = vsub.f32 %v5522, %v5565
    %v5592 = vsub.f32 %v5525, %v5567
    %v5593 = vsub.f32 %v5528, %v5569
    %v5594 = vsub.f32 %v5531, %v5571
    %v5595 = vsub.f32 %v5534, %v5573
    %v5596 = vsub.f32 %v5537, %v5575
    %v5597 = vsub.f32 %v5540, %v5577
    %v5598 = vsub.f32 %v5543, %v5579
    %v5599 = vsub.f32 %v5546, %v5581
    %v5600 = vsub.f32 %v5549, %v5583
    %v5601 = vsub.f32 %v5552, %v5585
    %v5602 = vmul.f32 %v5586, 1.442695
    %v5603 = vpow.pop %v5602
    %v5604 = vmul.f32 %v5587, 1.442695
    %v5605 = vpow.pop %v5604
    %v5606 = vmul.f32 %v5588, 1.442695
    %v5607 = vpow.pop %v5606
    %v5608 = vmul.f32 %v5589, 1.442695
    %v5609 = vpow.pop %v5608
    %v5610 = vmul.f32 %v5590, 1.442695
    %v5611 = vpow.pop %v5610
    %v5612 = vmul.f32 %v5591, 1.442695
    %v5613 = vpow.pop %v5612
    %v5614 = vmul.f32 %v5592, 1.442695
    %v5615 = vpow.pop %v5614
    %v5616 = vmul.f32 %v5593, 1.442695
    %v5617 = vpow.pop %v5616
    %v5618 = vmul.f32 %v5594, 1.442695
    %v5619 = vpow.pop %v5618
    %v5620 = vmul.f32 %v5595, 1.442695
    %v5621 = vpow.pop %v5620
    %v5622 = vmul.f32 %v5596, 1.442695
    %v5623 = vpow.pop %v5622
    %v5624 = vmul.f32 %v5597, 1.442695
    %v5625 = vpow.pop %v5624
    %v5626 = vmul.f32 %v5598, 1.442695
    %v5627 = vpow.pop %v5626
    %v5628 = vmul.f32 %v5599, 1.442695
    %v5629 = vpow.pop %v5628
    %v5630 = vmul.f32 %v5600, 1.442695
    %v5631 = vpow.pop %v5630
    %v5632 = vmul.f32 %v5601, 1.442695
    %v5633 = vpow.pop %v5632
    %5634 = vadd.xlane.f32.xlu0 %v5603
    %v5635 = vpop.xlane.xlu0 %5634
    %5636 = vadd.xlane.f32.xlu0 %v5605
    %v5637 = vpop.xlane.xlu0 %5636
    %5638 = vadd.xlane.f32.xlu0 %v5607
    %v5639 = vpop.xlane.xlu0 %5638
    %5640 = vadd.xlane.f32.xlu0 %v5609
    %v5641 = vpop.xlane.xlu0 %5640
    %5642 = vadd.xlane.f32.xlu0 %v5611
    %v5643 = vpop.xlane.xlu0 %5642
    %5644 = vadd.xlane.f32.xlu0 %v5613
    %v5645 = vpop.xlane.xlu0 %5644
    %5646 = vadd.xlane.f32.xlu0 %v5615
    %v5647 = vpop.xlane.xlu0 %5646
    %5648 = vadd.xlane.f32.xlu0 %v5617
    %v5649 = vpop.xlane.xlu0 %5648
    %5650 = vadd.xlane.f32.xlu0 %v5619
    %v5651 = vpop.xlane.xlu0 %5650
    %5652 = vadd.xlane.f32.xlu0 %v5621
    %v5653 = vpop.xlane.xlu0 %5652
    %5654 = vadd.xlane.f32.xlu0 %v5623
    %v5655 = vpop.xlane.xlu0 %5654
    %5656 = vadd.xlane.f32.xlu0 %v5625
    %v5657 = vpop.xlane.xlu0 %5656
    %5658 = vadd.xlane.f32.xlu0 %v5627
    %v5659 = vpop.xlane.xlu0 %5658
    %5660 = vadd.xlane.f32.xlu0 %v5629
    %v5661 = vpop.xlane.xlu0 %5660
    %5662 = vadd.xlane.f32.xlu0 %v5631
    %v5663 = vpop.xlane.xlu0 %5662
    %5664 = vadd.xlane.f32.xlu0 %v5633
    %v5665 = vpop.xlane.xlu0 %5664
    %v5666 = vrcp.pop %v5635
    %v5667 = vrcp.pop %v5637
    %v5668 = vrcp.pop %v5639
    %v5669 = vrcp.pop %v5641
    %v5670 = vrcp.pop %v5643
    %v5671 = vrcp.pop %v5645
    %v5672 = vrcp.pop %v5647
    %v5673 = vrcp.pop %v5649
    %v5674 = vrcp.pop %v5651
    %v5675 = vrcp.pop %v5653
    %v5676 = vrcp.pop %v5655
    %v5677 = vrcp.pop %v5657
    %v5678 = vrcp.pop %v5659
    %v5679 = vrcp.pop %v5661
    %v5680 = vrcp.pop %v5663
    %v5681 = vrcp.pop %v5665
    %v5682 = vmul.f32 %v5603, %v5666
    %v5683 = vmul.f32 %v5605, %v5667
    %v5684 = vmul.f32 %v5607, %v5668
    %v5685 = vmul.f32 %v5609, %v5669
    %v5686 = vmul.f32 %v5611, %v5670
    %v5687 = vmul.f32 %v5613, %v5671
    %v5688 = vmul.f32 %v5615, %v5672
    %v5689 = vmul.f32 %v5617, %v5673
    %v5690 = vmul.f32 %v5619, %v5674
    %v5691 = vmul.f32 %v5621, %v5675
    %v5692 = vmul.f32 %v5623, %v5676
    %v5693 = vmul.f32 %v5625, %v5677
    %v5694 = vmul.f32 %v5627, %v5678
    %v5695 = vmul.f32 %v5629, %v5679
    %v5696 = vmul.f32 %v5631, %v5680
    %v5697 = vmul.f32 %v5633, %v5681
    %5698 = vrot.lane.b32.xlu0 %v5352, 64
    %v5699 = vpop.permute.xlu0 %5698
    %5700 = vrot.lane.b32.xlu0 %v5355, 64
    %v5701 = vpop.permute.xlu0 %5700
    %5702 = vrot.lane.b32.xlu0 %v5358, 64
    %v5703 = vpop.permute.xlu0 %5702
    %5704 = vrot.lane.b32.xlu0 %v5361, 64
    %v5705 = vpop.permute.xlu0 %5704
    %5706 = vrot.lane.b32.xlu0 %v5370, 64
    %v5707 = vpop.permute.xlu0 %5706
    %5708 = vrot.lane.b32.xlu0 %v5372, 64
    %v5709 = vpop.permute.xlu0 %5708
    %5710 = vrot.lane.b32.xlu0 %v5374, 64
    %v5711 = vpop.permute.xlu0 %5710
    %5712 = vrot.lane.b32.xlu0 %v5376, 64
    %v5713 = vpop.permute.xlu0 %5712
    %5714 = vrot.lane.b32.xlu0 %v5378, 64
    %v5715 = vpop.permute.xlu0 %5714
    %5716 = vrot.lane.b32.xlu0 %v5380, 64
    %v5717 = vpop.permute.xlu0 %5716
    %5718 = vrot.lane.b32.xlu0 %v5382, 64
    %v5719 = vpop.permute.xlu0 %5718
    %5720 = vrot.lane.b32.xlu0 %v5384, 64
    %v5721 = vpop.permute.xlu0 %5720
    %5722 = vrot.lane.b32.xlu0 %v5386, 64
    %v5723 = vpop.permute.xlu0 %5722
    %5724 = vrot.lane.b32.xlu0 %v5388, 64
    %v5725 = vpop.permute.xlu0 %5724
    %5726 = vrot.lane.b32.xlu0 %v5390, 64
    %v5727 = vpop.permute.xlu0 %5726
    %5728 = vrot.lane.b32.xlu0 %v5392, 64
    %v5729 = vpop.permute.xlu0 %5728
    %5746 = vmatpush.msra.mxu0 %v5729
    %5747 = vmatpush.msra.mxu0 %v5727
    %5748 = vmatpush.msra.mxu0 %v5725
    %5749 = vmatpush.msra.mxu0 %v5723
    %5750 = vmatpush.msra.mxu0 %v5721
    %5751 = vmatpush.msra.mxu0 %v5719
    %5752 = vmatpush.msra.mxu0 %v5717
    %5753 = vmatpush.msra.mxu0 %v5715
    %5754 = vmatpush.msra.mxu0 %v5713
    %5755 = vmatpush.msra.mxu0 %v5711
    %5756 = vmatpush.msra.mxu0 %v5709
    %5757 = vmatpush.msra.mxu0 %v5707
    %5758 = vmatpush.msra.mxu0 %v5705
    %5759 = vmatpush.msra.mxu0 %v5703
    %5760 = vmatpush.msra.mxu0 %v5701
    %5761 = vmatpush.msra.mxu0 %v5699
    %5762 = vmatmul.f32.gmra.mxu0 %v5682
    %v5763 = vpop.f32.mrf.mxu0
    %v5764 = vadd.f32 0.0, %v5763
    %5765 = vmatmul.f32.gmra.mxu0 %v5683
    %v5766 = vpop.f32.mrf.mxu0
    %v5767 = vadd.f32 0.0, %v5766
    %5768 = vmatmul.f32.gmra.mxu0 %v5684
    %v5769 = vpop.f32.mrf.mxu0
    %v5770 = vadd.f32 0.0, %v5769
    %5771 = vmatmul.f32.gmra.mxu0 %v5685
    %v5772 = vpop.f32.mrf.mxu0
    %v5773 = vadd.f32 0.0, %v5772
    %5774 = vmatmul.f32.gmra.mxu0 %v5686
    %v5775 = vpop.f32.mrf.mxu0
    %v5776 = vadd.f32 0.0, %v5775
    %5777 = vmatmul.f32.gmra.mxu0 %v5687
    %v5778 = vpop.f32.mrf.mxu0
    %v5779 = vadd.f32 0.0, %v5778
    %5780 = vmatmul.f32.gmra.mxu0 %v5688
    %v5781 = vpop.f32.mrf.mxu0
    %v5782 = vadd.f32 0.0, %v5781
    %5783 = vmatmul.f32.gmra.mxu0 %v5689
    %v5784 = vpop.f32.mrf.mxu0
    %v5785 = vadd.f32 0.0, %v5784
    %5786 = vmatmul.f32.gmra.mxu0 %v5690
    %v5787 = vpop.f32.mrf.mxu0
    %v5788 = vadd.f32 0.0, %v5787
    %5789 = vmatmul.f32.gmra.mxu0 %v5691
    %v5790 = vpop.f32.mrf.mxu0
    %v5791 = vadd.f32 0.0, %v5790
    %5792 = vmatmul.f32.gmra.mxu0 %v5692
    %v5793 = vpop.f32.mrf.mxu0
    %v5794 = vadd.f32 0.0, %v5793
    %5795 = vmatmul.f32.gmra.mxu0 %v5693
    %v5796 = vpop.f32.mrf.mxu0
    %v5797 = vadd.f32 0.0, %v5796
    %5798 = vmatmul.f32.gmra.mxu0 %v5694
    %v5799 = vpop.f32.mrf.mxu0
    %v5800 = vadd.f32 0.0, %v5799
    %5801 = vmatmul.f32.gmra.mxu0 %v5695
    %v5802 = vpop.f32.mrf.mxu0
    %v5803 = vadd.f32 0.0, %v5802
    %5804 = vmatmul.f32.gmra.mxu0 %v5696
    %v5805 = vpop.f32.mrf.mxu0
    %v5806 = vadd.f32 0.0, %v5805
    %5807 = vmatmul.f32.gmra.mxu0 %v5697
    %v5808 = vpop.f32.mrf.mxu0
    %v5809 = vadd.f32 0.0, %v5808
    %5810 = vdwg.mxu0
    %5815 = vrot.lane.b32.xlu0 %v5776, 8
    %v5816 = vpop.permute.xlu0 %5815
    %5817 = vrot.lane.b32.xlu0 %v5779, 8
    %v5818 = vpop.permute.xlu0 %5817
    %5819 = vrot.lane.b32.xlu0 %v5782, 8
    %v5820 = vpop.permute.xlu0 %5819
    %5821 = vrot.lane.b32.xlu0 %v5785, 8
    %v5822 = vpop.permute.xlu0 %5821
    %5831 = vrot.lane.b32.xlu0 %v5788, 16
    %v5832 = vpop.permute.xlu0 %5831
    %5833 = vrot.lane.b32.xlu0 %v5791, 16
    %v5834 = vpop.permute.xlu0 %5833
    %5835 = vrot.lane.b32.xlu0 %v5794, 16
    %v5836 = vpop.permute.xlu0 %5835
    %5837 = vrot.lane.b32.xlu0 %v5797, 16
    %v5838 = vpop.permute.xlu0 %5837
    %5847 = vrot.lane.b32.xlu0 %v5800, 24
    %v5848 = vpop.permute.xlu0 %5847
    %5849 = vrot.lane.b32.xlu0 %v5803, 24
    %v5850 = vpop.permute.xlu0 %5849
    %5851 = vrot.lane.b32.xlu0 %v5806, 24
    %v5852 = vpop.permute.xlu0 %5851
    %5853 = vrot.lane.b32.xlu0 %v5809, 24
    %v5854 = vpop.permute.xlu0 %5853
    %v5859 = vsel %vm805, %v5764, %v5816
    %v5860 = vsel %vm805, %v5767, %v5818
    %v5861 = vsel %vm805, %v5770, %v5820
    %v5862 = vsel %vm805, %v5773, %v5822
    %v5863 = vsel %vm1244, %v5859, %v5832
    %v5864 = vsel %vm1244, %v5860, %v5834
    %v5865 = vsel %vm1244, %v5861, %v5836
    %v5866 = vsel %vm1244, %v5862, %v5838
    %v5867 = vsel %vm1249, %v5863, %v5848
    %v5868 = vsel %vm1249, %v5864, %v5850
    %v5869 = vsel %vm1249, %v5865, %v5852
    %v5870 = vsel %vm1249, %v5866, %v5854
    %5871 = vrot.lane.b32.xlu0 %v5283, 96
    %v5872 = vpop.permute.xlu0 %5871
    %5873 = vrot.lane.b32.xlu0 %v5285, 96
    %v5874 = vpop.permute.xlu0 %5873
    %5875 = vrot.lane.b32.xlu0 %v5287, 96
    %v5876 = vpop.permute.xlu0 %5875
    %5877 = vrot.lane.b32.xlu0 %v5289, 96
    %v5878 = vpop.permute.xlu0 %5877
    %v5884 = vsel %vm132, %v5867, 0
    %v5887 = vsel %vm132, %v5868, 0
    %v5890 = vsel %vm132, %v5869, 0
    %v5893 = vsel %vm132, %v5870, 0
    %5895 = vmatpush.msra.mxu0 0.0
    %5896 = vmatpush.msra.mxu0 0.0
    %5897 = vmatpush.msra.mxu0 0.0
    %5898 = vmatpush.msra.mxu0 0.0
    %5899 = vmatpush.msra.mxu0 0.0
    %5900 = vmatpush.msra.mxu0 0.0
    %5901 = vmatpush.msra.mxu0 0.0
    %5902 = vmatpush.msra.mxu0 0.0
    %5903 = vmatpush.msra.mxu0 0.0
    %5904 = vmatpush.msra.mxu0 0.0
    %5905 = vmatpush.msra.mxu0 0.0
    %5906 = vmatpush.msra.mxu0 0.0
    %5907 = vmatpush.msra.mxu0 %v5878
    %5908 = vmatpush.msra.mxu0 %v5876
    %5909 = vmatpush.msra.mxu0 %v5874
    %5910 = vmatpush.msra.mxu0 %v5872
    %5911 = vmatmul.f32.gmra.mxu0 %v5884
    %v5912 = vpop.f32.mrf.mxu0
    %v5913 = vadd.f32 0.0, %v5912
    %5914 = vmatmul.f32.gmra.mxu0 %v5887
    %v5915 = vpop.f32.mrf.mxu0
    %v5916 = vadd.f32 0.0, %v5915
    %5917 = vmatmul.f32.gmra.mxu0 %v5890
    %v5918 = vpop.f32.mrf.mxu0
    %v5919 = vadd.f32 0.0, %v5918
    %5920 = vmatmul.f32.gmra.mxu0 %v5893
    %v5921 = vpop.f32.mrf.mxu0
    %v5922 = vadd.f32 0.0, %v5921
    %5923 = vdwg.mxu0
    %v5924 = vadd.f32 %v5278, %v5913
    %v5925 = vadd.f32 %v5279, %v5916
    %v5926 = vadd.f32 %v5280, %v5919
    %v5927 = vadd.f32 %v5281, %v5922
    %v5929 = vsel %vm132, %v5924, 0
    %v5932 = vsel %vm132, %v5925, 0
    %v5935 = vsel %vm132, %v5926, 0
    %v5938 = vsel %vm132, %v5927, 0
    %5940 = vmatpush.msra.mxu0 0.0
    %5941 = vmatpush.msra.mxu0 0.0
    %5942 = vmatpush.msra.mxu0 0.0
    %5943 = vmatpush.msra.mxu0 0.0
    %5944 = vmatpush.msra.mxu0 0.0
    %5945 = vmatpush.msra.mxu0 0.0
    %5946 = vmatpush.msra.mxu0 0.0
    %5947 = vmatpush.msra.mxu0 0.0
    %5948 = vmatpush.msra.mxu0 0.0
    %5949 = vmatpush.msra.mxu0 0.0
    %5950 = vmatpush.msra.mxu0 0.0
    %5951 = vmatpush.msra.mxu0 0.0
    %5952 = vmatpush.msra.mxu0 0.03125
    %5953 = vmatpush.msra.mxu0 0.03125
    %5954 = vmatpush.msra.mxu0 0.03125
    %5955 = vmatpush.msra.mxu0 0.03125
    %5956 = vmatmul.f32.gmra.mxu0 %v5929
    %v5957 = vpop.f32.mrf.mxu0
    %v5958 = vadd.f32 0.0, %v5957
    %5959 = vmatmul.f32.gmra.mxu0 %v5932
    %v5960 = vpop.f32.mrf.mxu0
    %v5961 = vadd.f32 0.0, %v5960
    %5962 = vmatmul.f32.gmra.mxu0 %v5935
    %v5963 = vpop.f32.mrf.mxu0
    %v5964 = vadd.f32 0.0, %v5963
    %5965 = vmatmul.f32.gmra.mxu0 %v5938
    %v5966 = vpop.f32.mrf.mxu0
    %v5967 = vadd.f32 0.0, %v5966
    %5968 = vdwg.mxu0
    %v5969 = vmul.f32 %v5924, %v5924
    %v5970 = vmul.f32 %v5925, %v5925
    %v5971 = vmul.f32 %v5926, %v5926
    %v5972 = vmul.f32 %v5927, %v5927
    %v5974 = vsel %vm132, %v5969, 0
    %v5977 = vsel %vm132, %v5970, 0
    %v5980 = vsel %vm132, %v5971, 0
    %v5983 = vsel %vm132, %v5972, 0
    %5985 = vmatpush.msra.mxu0 0.0
    %5986 = vmatpush.msra.mxu0 0.0
    %5987 = vmatpush.msra.mxu0 0.0
    %5988 = vmatpush.msra.mxu0 0.0
    %5989 = vmatpush.msra.mxu0 0.0
    %5990 = vmatpush.msra.mxu0 0.0
    %5991 = vmatpush.msra.mxu0 0.0
    %5992 = vmatpush.msra.mxu0 0.0
    %5993 = vmatpush.msra.mxu0 0.0
    %5994 = vmatpush.msra.mxu0 0.0
    %5995 = vmatpush.msra.mxu0 0.0
    %5996 = vmatpush.msra.mxu0 0.0
    %5997 = vmatpush.msra.mxu0 0.03125
    %5998 = vmatpush.msra.mxu0 0.03125
    %5999 = vmatpush.msra.mxu0 0.03125
    %6000 = vmatpush.msra.mxu0 0.03125
    %6001 = vmatmul.f32.gmra.mxu0 %v5974
    %v6002 = vpop.f32.mrf.mxu0
    %v6003 = vadd.f32 0.0, %v6002
    %6004 = vmatmul.f32.gmra.mxu0 %v5977
    %v6005 = vpop.f32.mrf.mxu0
    %v6006 = vadd.f32 0.0, %v6005
    %6007 = vmatmul.f32.gmra.mxu0 %v5980
    %v6008 = vpop.f32.mrf.mxu0
    %v6009 = vadd.f32 0.0, %v6008
    %6010 = vmatmul.f32.gmra.mxu0 %v5983
    %v6011 = vpop.f32.mrf.mxu0
    %v6012 = vadd.f32 0.0, %v6011
    %6013 = vdwg.mxu0
    %v6014 = vmul.f32 %v5958, %v5958
    %v6015 = vmul.f32 %v5961, %v5961
    %v6016 = vmul.f32 %v5964, %v5964
    %v6017 = vmul.f32 %v5967, %v5967
    %v6018 = vsub.f32 %v6003, %v6014
    %v6019 = vsub.f32 %v6006, %v6015
    %v6020 = vsub.f32 %v6009, %v6016
    %v6021 = vsub.f32 %v6012, %v6017
    %v6022 = vmax.f32 %v6018, 0.0
    %v6023 = vmax.f32 %v6019, 0.0
    %v6024 = vmax.f32 %v6020, 0.0
    %v6025 = vmax.f32 %v6021, 0.0
    %6027 = vset.pattern.permute.xlu0 0
    %6028 = vperm.xlu0 %6027, %v5958
    %v6029 = vpop.permute.xlu0 %6028
    %6032 = vset.pattern.permute.xlu0 0
    %6033 = vperm.xlu0 %6032, %v5961
    %v6034 = vpop.permute.xlu0 %6033
    %6037 = vset.pattern.permute.xlu0 0
    %6038 = vperm.xlu0 %6037, %v5964
    %v6039 = vpop.permute.xlu0 %6038
    %6042 = vset.pattern.permute.xlu0 0
    %6043 = vperm.xlu0 %6042, %v5967
    %v6044 = vpop.permute.xlu0 %6043
    %v6046 = vsub.f32 %v5924, %v6029
    %v6047 = vsub.f32 %v5925, %v6034
    %v6048 = vsub.f32 %v5926, %v6039
    %v6049 = vsub.f32 %v5927, %v6044
    %v6050 = vadd.f32 %v6022, 1e-06
    %v6051 = vadd.f32 %v6023, 1e-06
    %v6052 = vadd.f32 %v6024, 1e-06
    %v6053 = vadd.f32 %v6025, 1e-06
    %v6054 = vrsqrt.pop %v6050
    %v6055 = vmul.f32 %v6054, %v6050
    %v6056 = vmul.f32 %v6055, %v6054
    %v6057 = vmul.f32 0.5, %v6056
    %v6058 = vsub.f32 1.5, %v6057
    %v6059 = vmul.f32 %v6054, %v6058
    %vm6060 = vweird.f32 %v6050
    %vm6061 = vweird.f32 %v6054
    %vm6062 = vmor %vm6060, %vm6061
    %v6063 = vsel %vm6062, %v6054, %v6059
    %v6064 = vrsqrt.pop %v6051
    %v6065 = vmul.f32 %v6064, %v6051
    %v6066 = vmul.f32 %v6065, %v6064
    %v6067 = vmul.f32 0.5, %v6066
    %v6068 = vsub.f32 1.5, %v6067
    %v6069 = vmul.f32 %v6064, %v6068
    %vm6070 = vweird.f32 %v6051
    %vm6071 = vweird.f32 %v6064
    %vm6072 = vmor %vm6070, %vm6071
    %v6073 = vsel %vm6072, %v6064, %v6069
    %v6074 = vrsqrt.pop %v6052
    %v6075 = vmul.f32 %v6074, %v6052
    %v6076 = vmul.f32 %v6075, %v6074
    %v6077 = vmul.f32 0.5, %v6076
    %v6078 = vsub.f32 1.5, %v6077
    %v6079 = vmul.f32 %v6074, %v6078
    %vm6080 = vweird.f32 %v6052
    %vm6081 = vweird.f32 %v6074
    %vm6082 = vmor %vm6080, %vm6081
    %v6083 = vsel %vm6082, %v6074, %v6079
    %v6084 = vrsqrt.pop %v6053
    %v6085 = vmul.f32 %v6084, %v6053
    %v6086 = vmul.f32 %v6085, %v6084
    %v6087 = vmul.f32 0.5, %v6086
    %v6088 = vsub.f32 1.5, %v6087
    %v6089 = vmul.f32 %v6084, %v6088
    %vm6090 = vweird.f32 %v6053
    %vm6091 = vweird.f32 %v6084
    %vm6092 = vmor %vm6090, %vm6091
    %v6093 = vsel %vm6092, %v6084, %v6089
    %6095 = vset.pattern.permute.xlu0 0
    %6096 = vperm.xlu0 %6095, %v6063
    %v6097 = vpop.permute.xlu0 %6096
    %6100 = vset.pattern.permute.xlu0 0
    %6101 = vperm.xlu0 %6100, %v6073
    %v6102 = vpop.permute.xlu0 %6101
    %6105 = vset.pattern.permute.xlu0 0
    %6106 = vperm.xlu0 %6105, %v6083
    %v6107 = vpop.permute.xlu0 %6106
    %6110 = vset.pattern.permute.xlu0 0
    %6111 = vperm.xlu0 %6110, %v6093
    %v6112 = vpop.permute.xlu0 %6111
    %v6114 = vmul.f32 %v6046, %v6097
    %v6115 = vmul.f32 %v6047, %v6102
    %v6116 = vmul.f32 %v6048, %v6107
    %v6117 = vmul.f32 %v6049, %v6112
    %v6118 = vperm.slane %v5363, 0
    %v6119 = vmul.f32 %v6114, %v6118
    %v6120 = vmul.f32 %v6115, %v6118
    %v6121 = vmul.f32 %v6116, %v6118
    %v6122 = vmul.f32 %v6117, %v6118
    %v6123 = vperm.slane %v5364, 0
    %v6124 = vadd.f32 %v6119, %v6123
    %v6125 = vadd.f32 %v6120, %v6123
    %v6126 = vadd.f32 %v6121, %v6123
    %v6127 = vadd.f32 %v6122, %v6123
    %v6133 = vsel %vm132, %v6124, 0
    %v6136 = vsel %vm132, %v6125, 0
    %v6139 = vsel %vm132, %v6126, 0
    %v6142 = vsel %vm132, %v6127, 0
    %6144 = vmatpush.msra.mxu0 0.0
    %6145 = vmatpush.msra.mxu0 0.0
    %6146 = vmatpush.msra.mxu0 0.0
    %6147 = vmatpush.msra.mxu0 0.0
    %6148 = vmatpush.msra.mxu0 0.0
    %6149 = vmatpush.msra.mxu0 0.0
    %6150 = vmatpush.msra.mxu0 0.0
    %6151 = vmatpush.msra.mxu0 0.0
    %6152 = vmatpush.msra.mxu0 0.0
    %6153 = vmatpush.msra.mxu0 0.0
    %6154 = vmatpush.msra.mxu0 0.0
    %6155 = vmatpush.msra.mxu0 0.0
    %6156 = vmatpush.msra.mxu0 %v5313
    %6157 = vmatpush.msra.mxu0 %v5309
    %6158 = vmatpush.msra.mxu0 %v5305
    %6159 = vmatpush.msra.mxu0 %v5301
    %6160 = vmatmul.f32.gmra.mxu0 %v6133
    %v6161 = vpop.f32.mrf.mxu0
    %v6162 = vadd.f32 0.0, %v6161
    %6163 = vmatmul.f32.gmra.mxu0 %v6136
    %v6164 = vpop.f32.mrf.mxu0
    %v6165 = vadd.f32 0.0, %v6164
    %6166 = vmatmul.f32.gmra.mxu0 %v6139
    %v6167 = vpop.f32.mrf.mxu0
    %v6168 = vadd.f32 0.0, %v6167
    %6169 = vmatmul.f32.gmra.mxu0 %v6142
    %v6170 = vpop.f32.mrf.mxu0
    %v6171 = vadd.f32 0.0, %v6170
    %6172 = vdwg.mxu0
    %v6173 = vld [vmem:[%s6 + $0x17] sm:$0x1]
    %v6174 = vld [vmem:[%s6 + $0x18] sm:$0x1]
    %6179 = vrot.lane.b32.xlu0 %v6162, 120
    %v6180 = vpop.permute.xlu0 %6179
    %6181 = vrot.lane.b32.xlu0 %v6165, 120
    %v6182 = vpop.permute.xlu0 %6181
    %6183 = vrot.lane.b32.xlu0 %v6168, 120
    %v6184 = vpop.permute.xlu0 %6183
    %6185 = vrot.lane.b32.xlu0 %v6171, 120
    %v6186 = vpop.permute.xlu0 %6185
    %6187 = vrot.lane.b32.xlu0 %v6162, 112
    %v6188 = vpop.permute.xlu0 %6187
    %6189 = vrot.lane.b32.xlu0 %v6165, 112
    %v6190 = vpop.permute.xlu0 %6189
    %6191 = vrot.lane.b32.xlu0 %v6168, 112
    %v6192 = vpop.permute.xlu0 %6191
    %6193 = vrot.lane.b32.xlu0 %v6171, 112
    %v6194 = vpop.permute.xlu0 %6193
    %6195 = vrot.lane.b32.xlu0 %v6162, 104
    %v6196 = vpop.permute.xlu0 %6195
    %6197 = vrot.lane.b32.xlu0 %v6165, 104
    %v6198 = vpop.permute.xlu0 %6197
    %6199 = vrot.lane.b32.xlu0 %v6168, 104
    %v6200 = vpop.permute.xlu0 %6199
    %6201 = vrot.lane.b32.xlu0 %v6171, 104
    %v6202 = vpop.permute.xlu0 %6201
    %6203 = vrot.lane.b32.xlu0 %v3279, 64
    %v6204 = vpop.permute.xlu0 %6203
    %6205 = vrot.lane.b32.xlu0 %v3282, 64
    %v6206 = vpop.permute.xlu0 %6205
    %6207 = vrot.lane.b32.xlu0 %v3285, 64
    %v6208 = vpop.permute.xlu0 %6207
    %6209 = vrot.lane.b32.xlu0 %v3288, 64
    %v6210 = vpop.permute.xlu0 %6209
    %6211 = vrot.lane.b32.xlu0 %v4216, 64
    %v6212 = vpop.permute.xlu0 %6211
    %6213 = vrot.lane.b32.xlu0 %v4218, 64
    %v6214 = vpop.permute.xlu0 %6213
    %6215 = vrot.lane.b32.xlu0 %v4220, 64
    %v6216 = vpop.permute.xlu0 %6215
    %6217 = vrot.lane.b32.xlu0 %v4222, 64
    %v6218 = vpop.permute.xlu0 %6217
    %6219 = vrot.lane.b32.xlu0 %v4224, 64
    %v6220 = vpop.permute.xlu0 %6219
    %6221 = vrot.lane.b32.xlu0 %v4226, 64
    %v6222 = vpop.permute.xlu0 %6221
    %6223 = vrot.lane.b32.xlu0 %v4228, 64
    %v6224 = vpop.permute.xlu0 %6223
    %6225 = vrot.lane.b32.xlu0 %v4230, 64
    %v6226 = vpop.permute.xlu0 %6225
    %6227 = vrot.lane.b32.xlu0 %v4232, 64
    %v6228 = vpop.permute.xlu0 %6227
    %6229 = vrot.lane.b32.xlu0 %v4234, 64
    %v6230 = vpop.permute.xlu0 %6229
    %6231 = vrot.lane.b32.xlu0 %v4236, 64
    %v6232 = vpop.permute.xlu0 %6231
    %6233 = vrot.lane.b32.xlu0 %v4238, 64
    %v6234 = vpop.permute.xlu0 %6233
    %v6235 = vsel %vm805, %v6162, 0
    %v6237 = vsel %vm805, %v6165, 0
    %v6239 = vsel %vm805, %v6168, 0
    %v6241 = vsel %vm805, %v6171, 0
    %v6243 = vsel %vm805, %v6180, 0
    %v6245 = vsel %vm805, %v6182, 0
    %v6247 = vsel %vm805, %v6184, 0
    %v6249 = vsel %vm805, %v6186, 0
    %v6251 = vsel %vm805, %v6188, 0
    %v6253 = vsel %vm805, %v6190, 0
    %v6255 = vsel %vm805, %v6192, 0
    %v6257 = vsel %vm805, %v6194, 0
    %v6259 = vsel %vm805, %v6196, 0
    %v6261 = vsel %vm805, %v6198, 0
    %v6263 = vsel %vm805, %v6200, 0
    %v6265 = vsel %vm805, %v6202, 0
    %v6267 = vsel %vm805, %v6204, 0
    %v6269 = vsel %vm805, %v6206, 0
    %v6271 = vsel %vm805, %v6208, 0
    %v6273 = vsel %vm805, %v6210, 0
    %v6275 = vsel %vm805, %v6212, 0
    %v6277 = vsel %vm805, %v6214, 0
    %v6279 = vsel %vm805, %v6216, 0
    %v6281 = vsel %vm805, %v6218, 0
    %v6283 = vsel %vm805, %v6220, 0
    %v6285 = vsel %vm805, %v6222, 0
    %v6287 = vsel %vm805, %v6224, 0
    %v6289 = vsel %vm805, %v6226, 0
    %v6291 = vsel %vm805, %v6228, 0
    %v6293 = vsel %vm805, %v6230, 0
    %v6295 = vsel %vm805, %v6232, 0
    %v6297 = vsel %vm805, %v6234, 0
    %6299 = vmatpush.xpose.msra.mxu0 %v6297
    %6300 = vmatpush.xpose.msra.mxu0 %v6295
    %6301 = vmatpush.xpose.msra.mxu0 %v6293
    %6302 = vmatpush.xpose.msra.mxu0 %v6291
    %6303 = vmatpush.xpose.msra.mxu0 %v6289
    %6304 = vmatpush.xpose.msra.mxu0 %v6287
    %6305 = vmatpush.xpose.msra.mxu0 %v6285
    %6306 = vmatpush.xpose.msra.mxu0 %v6283
    %6307 = vmatpush.xpose.msra.mxu0 %v6281
    %6308 = vmatpush.xpose.msra.mxu0 %v6279
    %6309 = vmatpush.xpose.msra.mxu0 %v6277
    %6310 = vmatpush.xpose.msra.mxu0 %v6275
    %6311 = vmatpush.xpose.msra.mxu0 %v6273
    %6312 = vmatpush.xpose.msra.mxu0 %v6271
    %6313 = vmatpush.xpose.msra.mxu0 %v6269
    %6314 = vmatpush.xpose.msra.mxu0 %v6267
    %6315 = vmatmul.f32.gmra.mxu0 %v6235
    %v6316 = vpop.f32.mrf.mxu0
    %v6317 = vadd.f32 %v32, %v6316
    %6318 = vmatmul.f32.gmra.mxu0 %v6237
    %v6319 = vpop.f32.mrf.mxu0
    %v6320 = vadd.f32 %v33, %v6319
    %6321 = vmatmul.f32.gmra.mxu0 %v6239
    %v6322 = vpop.f32.mrf.mxu0
    %v6323 = vadd.f32 %v34, %v6322
    %6324 = vmatmul.f32.gmra.mxu0 %v6241
    %v6325 = vpop.f32.mrf.mxu0
    %v6326 = vadd.f32 %v35, %v6325
    %6327 = vmatmul.f32.gmra.mxu0 %v6243
    %v6328 = vpop.f32.mrf.mxu0
    %v6329 = vadd.f32 %v36, %v6328
    %6330 = vmatmul.f32.gmra.mxu0 %v6245
    %v6331 = vpop.f32.mrf.mxu0
    %v6332 = vadd.f32 %v37, %v6331
    %6333 = vmatmul.f32.gmra.mxu0 %v6247
    %v6334 = vpop.f32.mrf.mxu0
    %v6335 = vadd.f32 %v38, %v6334
    %6336 = vmatmul.f32.gmra.mxu0 %v6249
    %v6337 = vpop.f32.mrf.mxu0
    %v6338 = vadd.f32 %v39, %v6337
    %6339 = vmatmul.f32.gmra.mxu0 %v6251
    %v6340 = vpop.f32.mrf.mxu0
    %v6341 = vadd.f32 %v40, %v6340
    %6342 = vmatmul.f32.gmra.mxu0 %v6253
    %v6343 = vpop.f32.mrf.mxu0
    %v6344 = vadd.f32 %v41, %v6343
    %6345 = vmatmul.f32.gmra.mxu0 %v6255
    %v6346 = vpop.f32.mrf.mxu0
    %v6347 = vadd.f32 %v42, %v6346
    %6348 = vmatmul.f32.gmra.mxu0 %v6257
    %v6349 = vpop.f32.mrf.mxu0
    %v6350 = vadd.f32 %v43, %v6349
    %6351 = vmatmul.f32.gmra.mxu0 %v6259
    %v6352 = vpop.f32.mrf.mxu0
    %v6353 = vadd.f32 %v44, %v6352
    %6354 = vmatmul.f32.gmra.mxu0 %v6261
    %v6355 = vpop.f32.mrf.mxu0
    %v6356 = vadd.f32 %v45, %v6355
    %6357 = vmatmul.f32.gmra.mxu0 %v6263
    %v6358 = vpop.f32.mrf.mxu0
    %v6359 = vadd.f32 %v46, %v6358
    %6360 = vmatmul.f32.gmra.mxu0 %v6265
    %v6361 = vpop.f32.mrf.mxu0
    %v6362 = vadd.f32 %v47, %v6361
    %6363 = vdwg.mxu0
    %6364 = vmax.xlane.f32.xlu0 %v6317
    %v6365 = vpop.xlane.xlu0 %6364
    %6366 = vmax.xlane.f32.xlu0 %v6320
    %v6367 = vpop.xlane.xlu0 %6366
    %6368 = vmax.xlane.f32.xlu0 %v6323
    %v6369 = vpop.xlane.xlu0 %6368
    %6370 = vmax.xlane.f32.xlu0 %v6326
    %v6371 = vpop.xlane.xlu0 %6370
    %6372 = vmax.xlane.f32.xlu0 %v6329
    %v6373 = vpop.xlane.xlu0 %6372
    %6374 = vmax.xlane.f32.xlu0 %v6332
    %v6375 = vpop.xlane.xlu0 %6374
    %6376 = vmax.xlane.f32.xlu0 %v6335
    %v6377 = vpop.xlane.xlu0 %6376
    %6378 = vmax.xlane.f32.xlu0 %v6338
    %v6379 = vpop.xlane.xlu0 %6378
    %6380 = vmax.xlane.f32.xlu0 %v6341
    %v6381 = vpop.xlane.xlu0 %6380
    %6382 = vmax.xlane.f32.xlu0 %v6344
    %v6383 = vpop.xlane.xlu0 %6382
    %6384 = vmax.xlane.f32.xlu0 %v6347
    %v6385 = vpop.xlane.xlu0 %6384
    %6386 = vmax.xlane.f32.xlu0 %v6350
    %v6387 = vpop.xlane.xlu0 %6386
    %6388 = vmax.xlane.f32.xlu0 %v6353
    %v6389 = vpop.xlane.xlu0 %6388
    %6390 = vmax.xlane.f32.xlu0 %v6356
    %v6391 = vpop.xlane.xlu0 %6390
    %6392 = vmax.xlane.f32.xlu0 %v6359
    %v6393 = vpop.xlane.xlu0 %6392
    %6394 = vmax.xlane.f32.xlu0 %v6362
    %v6395 = vpop.xlane.xlu0 %6394
    %v6396 = vsub.f32 %v6317, %v6365
    %v6397 = vsub.f32 %v6320, %v6367
    %v6398 = vsub.f32 %v6323, %v6369
    %v6399 = vsub.f32 %v6326, %v6371
    %v6400 = vsub.f32 %v6329, %v6373
    %v6401 = vsub.f32 %v6332, %v6375
    %v6402 = vsub.f32 %v6335, %v6377
    %v6403 = vsub.f32 %v6338, %v6379
    %v6404 = vsub.f32 %v6341, %v6381
    %v6405 = vsub.f32 %v6344, %v6383
    %v6406 = vsub.f32 %v6347, %v6385
    %v6407 = vsub.f32 %v6350, %v6387
    %v6408 = vsub.f32 %v6353, %v6389
    %v6409 = vsub.f32 %v6356, %v6391
    %v6410 = vsub.f32 %v6359, %v6393
    %v6411 = vsub.f32 %v6362, %v6395
    %v6412 = vmul.f32 %v6396, 1.442695
    %v6413 = vpow.pop %v6412
    %v6414 = vmul.f32 %v6397, 1.442695
    %v6415 = vpow.pop %v6414
    %v6416 = vmul.f32 %v6398, 1.442695
    %v6417 = vpow.pop %v6416
    %v6418 = vmul.f32 %v6399, 1.442695
    %v6419 = vpow.pop %v6418
    %v6420 = vmul.f32 %v6400, 1.442695
    %v6421 = vpow.pop %v6420
    %v6422 = vmul.f32 %v6401, 1.442695
    %v6423 = vpow.pop %v6422
    %v6424 = vmul.f32 %v6402, 1.442695
    %v6425 = vpow.pop %v6424
    %v6426 = vmul.f32 %v6403, 1.442695
    %v6427 = vpow.pop %v6426
    %v6428 = vmul.f32 %v6404, 1.442695
    %v6429 = vpow.pop %v6428
    %v6430 = vmul.f32 %v6405, 1.442695
    %v6431 = vpow.pop %v6430
    %v6432 = vmul.f32 %v6406, 1.442695
    %v6433 = vpow.pop %v6432
    %v6434 = vmul.f32 %v6407, 1.442695
    %v6435 = vpow.pop %v6434
    %v6436 = vmul.f32 %v6408, 1.442695
    %v6437 = vpow.pop %v6436
    %v6438 = vmul.f32 %v6409, 1.442695
    %v6439 = vpow.pop %v6438
    %v6440 = vmul.f32 %v6410, 1.442695
    %v6441 = vpow.pop %v6440
    %v6442 = vmul.f32 %v6411, 1.442695
    %v6443 = vpow.pop %v6442
    %6444 = vadd.xlane.f32.xlu0 %v6413
    %v6445 = vpop.xlane.xlu0 %6444
    %6446 = vadd.xlane.f32.xlu0 %v6415
    %v6447 = vpop.xlane.xlu0 %6446
    %6448 = vadd.xlane.f32.xlu0 %v6417
    %v6449 = vpop.xlane.xlu0 %6448
    %6450 = vadd.xlane.f32.xlu0 %v6419
    %v6451 = vpop.xlane.xlu0 %6450
    %6452 = vadd.xlane.f32.xlu0 %v6421
    %v6453 = vpop.xlane.xlu0 %6452
    %6454 = vadd.xlane.f32.xlu0 %v6423
    %v6455 = vpop.xlane.xlu0 %6454
    %6456 = vadd.xlane.f32.xlu0 %v6425
    %v6457 = vpop.xlane.xlu0 %6456
    %6458 = vadd.xlane.f32.xlu0 %v6427
    %v6459 = vpop.xlane.xlu0 %6458
    %6460 = vadd.xlane.f32.xlu0 %v6429
    %v6461 = vpop.xlane.xlu0 %6460
    %6462 = vadd.xlane.f32.xlu0 %v6431
    %v6463 = vpop.xlane.xlu0 %6462
    %6464 = vadd.xlane.f32.xlu0 %v6433
    %v6465 = vpop.xlane.xlu0 %6464
    %6466 = vadd.xlane.f32.xlu0 %v6435
    %v6467 = vpop.xlane.xlu0 %6466
    %6468 = vadd.xlane.f32.xlu0 %v6437
    %v6469 = vpop.xlane.xlu0 %6468
    %6470 = vadd.xlane.f32.xlu0 %v6439
    %v6471 = vpop.xlane.xlu0 %6470
    %6472 = vadd.xlane.f32.xlu0 %v6441
    %v6473 = vpop.xlane.xlu0 %6472
    %6474 = vadd.xlane.f32.xlu0 %v6443
    %v6475 = vpop.xlane.xlu0 %6474
    %v6476 = vrcp.pop %v6445
    %v6477 = vrcp.pop %v6447
    %v6478 = vrcp.pop %v6449
    %v6479 = vrcp.pop %v6451
    %v6480 = vrcp.pop %v6453
    %v6481 = vrcp.pop %v6455
    %v6482 = vrcp.pop %v6457
    %v6483 = vrcp.pop %v6459
    %v6484 = vrcp.pop %v6461
    %v6485 = vrcp.pop %v6463
    %v6486 = vrcp.pop %v6465
    %v6487 = vrcp.pop %v6467
    %v6488 = vrcp.pop %v6469
    %v6489 = vrcp.pop %v6471
    %v6490 = vrcp.pop %v6473
    %v6491 = vrcp.pop %v6475
    %v6492 = vmul.f32 %v6413, %v6476
    %v6493 = vmul.f32 %v6415, %v6477
    %v6494 = vmul.f32 %v6417, %v6478
    %v6495 = vmul.f32 %v6419, %v6479
    %v6496 = vmul.f32 %v6421, %v6480
    %v6497 = vmul.f32 %v6423, %v6481
    %v6498 = vmul.f32 %v6425, %v6482
    %v6499 = vmul.f32 %v6427, %v6483
    %v6500 = vmul.f32 %v6429, %v6484
    %v6501 = vmul.f32 %v6431, %v6485
    %v6502 = vmul.f32 %v6433, %v6486
    %v6503 = vmul.f32 %v6435, %v6487
    %v6504 = vmul.f32 %v6437, %v6488
    %v6505 = vmul.f32 %v6439, %v6489
    %v6506 = vmul.f32 %v6441, %v6490
    %v6507 = vmul.f32 %v6443, %v6491
    %6508 = vrot.lane.b32.xlu0 %v3279, 32
    %v6509 = vpop.permute.xlu0 %6508
    %6510 = vrot.lane.b32.xlu0 %v3282, 32
    %v6511 = vpop.permute.xlu0 %6510
    %6512 = vrot.lane.b32.xlu0 %v3285, 32
    %v6513 = vpop.permute.xlu0 %6512
    %6514 = vrot.lane.b32.xlu0 %v3288, 32
    %v6515 = vpop.permute.xlu0 %6514
    %6516 = vrot.lane.b32.xlu0 %v4216, 32
    %v6517 = vpop.permute.xlu0 %6516
    %6518 = vrot.lane.b32.xlu0 %v4218, 32
    %v6519 = vpop.permute.xlu0 %6518
    %6520 = vrot.lane.b32.xlu0 %v4220, 32
    %v6521 = vpop.permute.xlu0 %6520
    %6522 = vrot.lane.b32.xlu0 %v4222, 32
    %v6523 = vpop.permute.xlu0 %6522
    %6524 = vrot.lane.b32.xlu0 %v4224, 32
    %v6525 = vpop.permute.xlu0 %6524
    %6526 = vrot.lane.b32.xlu0 %v4226, 32
    %v6527 = vpop.permute.xlu0 %6526
    %6528 = vrot.lane.b32.xlu0 %v4228, 32
    %v6529 = vpop.permute.xlu0 %6528
    %6530 = vrot.lane.b32.xlu0 %v4230, 32
    %v6531 = vpop.permute.xlu0 %6530
    %6532 = vrot.lane.b32.xlu0 %v4232, 32
    %v6533 = vpop.permute.xlu0 %6532
    %6534 = vrot.lane.b32.xlu0 %v4234, 32
    %v6535 = vpop.permute.xlu0 %6534
    %6536 = vrot.lane.b32.xlu0 %v4236, 32
    %v6537 = vpop.permute.xlu0 %6536
    %6538 = vrot.lane.b32.xlu0 %v4238, 32
    %v6539 = vpop.permute.xlu0 %6538
    %6556 = vmatpush.msra.mxu0 %v6539
    %6557 = vmatpush.msra.mxu0 %v6537
    %6558 = vmatpush.msra.mxu0 %v6535
    %6559 = vmatpush.msra.mxu0 %v6533
    %6560 = vmatpush.msra.mxu0 %v6531
    %6561 = vmatpush.msra.mxu0 %v6529
    %6562 = vmatpush.msra.mxu0 %v6527
    %6563 = vmatpush.msra.mxu0 %v6525
    %6564 = vmatpush.msra.mxu0 %v6523
    %6565 = vmatpush.msra.mxu0 %v6521
    %6566 = vmatpush.msra.mxu0 %v6519
    %6567 = vmatpush.msra.mxu0 %v6517
    %6568 = vmatpush.msra.mxu0 %v6515
    %6569 = vmatpush.msra.mxu0 %v6513
    %6570 = vmatpush.msra.mxu0 %v6511
    %6571 = vmatpush.msra.mxu0 %v6509
    %6572 = vmatmul.f32.gmra.mxu0 %v6492
    %v6573 = vpop.f32.mrf.mxu0
    %v6574 = vadd.f32 0.0, %v6573
    %6575 = vmatmul.f32.gmra.mxu0 %v6493
    %v6576 = vpop.f32.mrf.mxu0
    %v6577 = vadd.f32 0.0, %v6576
    %6578 = vmatmul.f32.gmra.mxu0 %v6494
    %v6579 = vpop.f32.mrf.mxu0
    %v6580 = vadd.f32 0.0, %v6579
    %6581 = vmatmul.f32.gmra.mxu0 %v6495
    %v6582 = vpop.f32.mrf.mxu0
    %v6583 = vadd.f32 0.0, %v6582
    %6584 = vmatmul.f32.gmra.mxu0 %v6496
    %v6585 = vpop.f32.mrf.mxu0
    %v6586 = vadd.f32 0.0, %v6585
    %6587 = vmatmul.f32.gmra.mxu0 %v6497
    %v6588 = vpop.f32.mrf.mxu0
    %v6589 = vadd.f32 0.0, %v6588
    %6590 = vmatmul.f32.gmra.mxu0 %v6498
    %v6591 = vpop.f32.mrf.mxu0
    %v6592 = vadd.f32 0.0, %v6591
    %6593 = vmatmul.f32.gmra.mxu0 %v6499
    %v6594 = vpop.f32.mrf.mxu0
    %v6595 = vadd.f32 0.0, %v6594
    %6596 = vmatmul.f32.gmra.mxu0 %v6500
    %v6597 = vpop.f32.mrf.mxu0
    %v6598 = vadd.f32 0.0, %v6597
    %6599 = vmatmul.f32.gmra.mxu0 %v6501
    %v6600 = vpop.f32.mrf.mxu0
    %v6601 = vadd.f32 0.0, %v6600
    %6602 = vmatmul.f32.gmra.mxu0 %v6502
    %v6603 = vpop.f32.mrf.mxu0
    %v6604 = vadd.f32 0.0, %v6603
    %6605 = vmatmul.f32.gmra.mxu0 %v6503
    %v6606 = vpop.f32.mrf.mxu0
    %v6607 = vadd.f32 0.0, %v6606
    %6608 = vmatmul.f32.gmra.mxu0 %v6504
    %v6609 = vpop.f32.mrf.mxu0
    %v6610 = vadd.f32 0.0, %v6609
    %6611 = vmatmul.f32.gmra.mxu0 %v6505
    %v6612 = vpop.f32.mrf.mxu0
    %v6613 = vadd.f32 0.0, %v6612
    %6614 = vmatmul.f32.gmra.mxu0 %v6506
    %v6615 = vpop.f32.mrf.mxu0
    %v6616 = vadd.f32 0.0, %v6615
    %6617 = vmatmul.f32.gmra.mxu0 %v6507
    %v6618 = vpop.f32.mrf.mxu0
    %v6619 = vadd.f32 0.0, %v6618
    %6620 = vdwg.mxu0
    %6625 = vrot.lane.b32.xlu0 %v6586, 8
    %v6626 = vpop.permute.xlu0 %6625
    %6627 = vrot.lane.b32.xlu0 %v6589, 8
    %v6628 = vpop.permute.xlu0 %6627
    %6629 = vrot.lane.b32.xlu0 %v6592, 8
    %v6630 = vpop.permute.xlu0 %6629
    %6631 = vrot.lane.b32.xlu0 %v6595, 8
    %v6632 = vpop.permute.xlu0 %6631
    %6641 = vrot.lane.b32.xlu0 %v6598, 16
    %v6642 = vpop.permute.xlu0 %6641
    %6643 = vrot.lane.b32.xlu0 %v6601, 16
    %v6644 = vpop.permute.xlu0 %6643
    %6645 = vrot.lane.b32.xlu0 %v6604, 16
    %v6646 = vpop.permute.xlu0 %6645
    %6647 = vrot.lane.b32.xlu0 %v6607, 16
    %v6648 = vpop.permute.xlu0 %6647
    %6657 = vrot.lane.b32.xlu0 %v6610, 24
    %v6658 = vpop.permute.xlu0 %6657
    %6659 = vrot.lane.b32.xlu0 %v6613, 24
    %v6660 = vpop.permute.xlu0 %6659
    %6661 = vrot.lane.b32.xlu0 %v6616, 24
    %v6662 = vpop.permute.xlu0 %6661
    %6663 = vrot.lane.b32.xlu0 %v6619, 24
    %v6664 = vpop.permute.xlu0 %6663
    %v6669 = vsel %vm805, %v6574, %v6626
    %v6670 = vsel %vm805, %v6577, %v6628
    %v6671 = vsel %vm805, %v6580, %v6630
    %v6672 = vsel %vm805, %v6583, %v6632
    %v6673 = vsel %vm1244, %v6669, %v6642
    %v6674 = vsel %vm1244, %v6670, %v6644
    %v6675 = vsel %vm1244, %v6671, %v6646
    %v6676 = vsel %vm1244, %v6672, %v6648
    %v6677 = vsel %vm1249, %v6673, %v6658
    %v6678 = vsel %vm1249, %v6674, %v6660
    %v6679 = vsel %vm1249, %v6675, %v6662
    %v6680 = vsel %vm1249, %v6676, %v6664
    %6681 = vrot.lane.b32.xlu0 %v5283, 32
    %v6682 = vpop.permute.xlu0 %6681
    %6683 = vrot.lane.b32.xlu0 %v5285, 32
    %v6684 = vpop.permute.xlu0 %6683
    %6685 = vrot.lane.b32.xlu0 %v5287, 32
    %v6686 = vpop.permute.xlu0 %6685
    %6687 = vrot.lane.b32.xlu0 %v5289, 32
    %v6688 = vpop.permute.xlu0 %6687
    %v6694 = vsel %vm132, %v6677, 0
    %v6697 = vsel %vm132, %v6678, 0
    %v6700 = vsel %vm132, %v6679, 0
    %v6703 = vsel %vm132, %v6680, 0
    %6705 = vmatpush.msra.mxu0 0.0
    %6706 = vmatpush.msra.mxu0 0.0
    %6707 = vmatpush.msra.mxu0 0.0
    %6708 = vmatpush.msra.mxu0 0.0
    %6709 = vmatpush.msra.mxu0 0.0
    %6710 = vmatpush.msra.mxu0 0.0
    %6711 = vmatpush.msra.mxu0 0.0
    %6712 = vmatpush.msra.mxu0 0.0
    %6713 = vmatpush.msra.mxu0 0.0
    %6714 = vmatpush.msra.mxu0 0.0
    %6715 = vmatpush.msra.mxu0 0.0
    %6716 = vmatpush.msra.mxu0 0.0
    %6717 = vmatpush.msra.mxu0 %v6688
    %6718 = vmatpush.msra.mxu0 %v6686
    %6719 = vmatpush.msra.mxu0 %v6684
    %6720 = vmatpush.msra.mxu0 %v6682
    %6721 = vmatmul.f32.gmra.mxu0 %v6694
    %v6722 = vpop.f32.mrf.mxu0
    %v6723 = vadd.f32 0.0, %v6722
    %6724 = vmatmul.f32.gmra.mxu0 %v6697
    %v6725 = vpop.f32.mrf.mxu0
    %v6726 = vadd.f32 0.0, %v6725
    %6727 = vmatmul.f32.gmra.mxu0 %v6700
    %v6728 = vpop.f32.mrf.mxu0
    %v6729 = vadd.f32 0.0, %v6728
    %6730 = vmatmul.f32.gmra.mxu0 %v6703
    %v6731 = vpop.f32.mrf.mxu0
    %v6732 = vadd.f32 0.0, %v6731
    %6733 = vdwg.mxu0
    %v6734 = vadd.f32 %v6124, %v6723
    %v6735 = vadd.f32 %v6125, %v6726
    %v6736 = vadd.f32 %v6126, %v6729
    %v6737 = vadd.f32 %v6127, %v6732
    %v6739 = vsel %vm132, %v6734, 0
    %v6742 = vsel %vm132, %v6735, 0
    %v6745 = vsel %vm132, %v6736, 0
    %v6748 = vsel %vm132, %v6737, 0
    %6750 = vmatpush.msra.mxu0 0.0
    %6751 = vmatpush.msra.mxu0 0.0
    %6752 = vmatpush.msra.mxu0 0.0
    %6753 = vmatpush.msra.mxu0 0.0
    %6754 = vmatpush.msra.mxu0 0.0
    %6755 = vmatpush.msra.mxu0 0.0
    %6756 = vmatpush.msra.mxu0 0.0
    %6757 = vmatpush.msra.mxu0 0.0
    %6758 = vmatpush.msra.mxu0 0.0
    %6759 = vmatpush.msra.mxu0 0.0
    %6760 = vmatpush.msra.mxu0 0.0
    %6761 = vmatpush.msra.mxu0 0.0
    %6762 = vmatpush.msra.mxu0 0.03125
    %6763 = vmatpush.msra.mxu0 0.03125
    %6764 = vmatpush.msra.mxu0 0.03125
    %6765 = vmatpush.msra.mxu0 0.03125
    %6766 = vmatmul.f32.gmra.mxu0 %v6739
    %v6767 = vpop.f32.mrf.mxu0
    %v6768 = vadd.f32 0.0, %v6767
    %6769 = vmatmul.f32.gmra.mxu0 %v6742
    %v6770 = vpop.f32.mrf.mxu0
    %v6771 = vadd.f32 0.0, %v6770
    %6772 = vmatmul.f32.gmra.mxu0 %v6745
    %v6773 = vpop.f32.mrf.mxu0
    %v6774 = vadd.f32 0.0, %v6773
    %6775 = vmatmul.f32.gmra.mxu0 %v6748
    %v6776 = vpop.f32.mrf.mxu0
    %v6777 = vadd.f32 0.0, %v6776
    %6778 = vdwg.mxu0
    %v6779 = vmul.f32 %v6734, %v6734
    %v6780 = vmul.f32 %v6735, %v6735
    %v6781 = vmul.f32 %v6736, %v6736
    %v6782 = vmul.f32 %v6737, %v6737
    %v6784 = vsel %vm132, %v6779, 0
    %v6787 = vsel %vm132, %v6780, 0
    %v6790 = vsel %vm132, %v6781, 0
    %v6793 = vsel %vm132, %v6782, 0
    %6795 = vmatpush.msra.mxu0 0.0
    %6796 = vmatpush.msra.mxu0 0.0
    %6797 = vmatpush.msra.mxu0 0.0
    %6798 = vmatpush.msra.mxu0 0.0
    %6799 = vmatpush.msra.mxu0 0.0
    %6800 = vmatpush.msra.mxu0 0.0
    %6801 = vmatpush.msra.mxu0 0.0
    %6802 = vmatpush.msra.mxu0 0.0
    %6803 = vmatpush.msra.mxu0 0.0
    %6804 = vmatpush.msra.mxu0 0.0
    %6805 = vmatpush.msra.mxu0 0.0
    %6806 = vmatpush.msra.mxu0 0.0
    %6807 = vmatpush.msra.mxu0 0.03125
    %6808 = vmatpush.msra.mxu0 0.03125
    %6809 = vmatpush.msra.mxu0 0.03125
    %6810 = vmatpush.msra.mxu0 0.03125
    %6811 = vmatmul.f32.gmra.mxu0 %v6784
    %v6812 = vpop.f32.mrf.mxu0
    %v6813 = vadd.f32 0.0, %v6812
    %6814 = vmatmul.f32.gmra.mxu0 %v6787
    %v6815 = vpop.f32.mrf.mxu0
    %v6816 = vadd.f32 0.0, %v6815
    %6817 = vmatmul.f32.gmra.mxu0 %v6790
    %v6818 = vpop.f32.mrf.mxu0
    %v6819 = vadd.f32 0.0, %v6818
    %6820 = vmatmul.f32.gmra.mxu0 %v6793
    %v6821 = vpop.f32.mrf.mxu0
    %v6822 = vadd.f32 0.0, %v6821
    %6823 = vdwg.mxu0
    %v6824 = vmul.f32 %v6768, %v6768
    %v6825 = vmul.f32 %v6771, %v6771
    %v6826 = vmul.f32 %v6774, %v6774
    %v6827 = vmul.f32 %v6777, %v6777
    %v6828 = vsub.f32 %v6813, %v6824
    %v6829 = vsub.f32 %v6816, %v6825
    %v6830 = vsub.f32 %v6819, %v6826
    %v6831 = vsub.f32 %v6822, %v6827
    %v6832 = vmax.f32 %v6828, 0.0
    %v6833 = vmax.f32 %v6829, 0.0
    %v6834 = vmax.f32 %v6830, 0.0
    %v6835 = vmax.f32 %v6831, 0.0
    %6837 = vset.pattern.permute.xlu0 0
    %6838 = vperm.xlu0 %6837, %v6768
    %v6839 = vpop.permute.xlu0 %6838
    %6842 = vset.pattern.permute.xlu0 0
    %6843 = vperm.xlu0 %6842, %v6771
    %v6844 = vpop.permute.xlu0 %6843
    %6847 = vset.pattern.permute.xlu0 0
    %6848 = vperm.xlu0 %6847, %v6774
    %v6849 = vpop.permute.xlu0 %6848
    %6852 = vset.pattern.permute.xlu0 0
    %6853 = vperm.xlu0 %6852, %v6777
    %v6854 = vpop.permute.xlu0 %6853
    %v6856 = vsub.f32 %v6734, %v6839
    %v6857 = vsub.f32 %v6735, %v6844
    %v6858 = vsub.f32 %v6736, %v6849
    %v6859 = vsub.f32 %v6737, %v6854
    %v6860 = vadd.f32 %v6832, 1e-06
    %v6861 = vadd.f32 %v6833, 1e-06
    %v6862 = vadd.f32 %v6834, 1e-06
    %v6863 = vadd.f32 %v6835, 1e-06
    %v6864 = vrsqrt.pop %v6860
    %v6865 = vmul.f32 %v6864, %v6860
    %v6866 = vmul.f32 %v6865, %v6864
    %v6867 = vmul.f32 0.5, %v6866
    %v6868 = vsub.f32 1.5, %v6867
    %v6869 = vmul.f32 %v6864, %v6868
    %vm6870 = vweird.f32 %v6860
    %vm6871 = vweird.f32 %v6864
    %vm6872 = vmor %vm6870, %vm6871
    %v6873 = vsel %vm6872, %v6864, %v6869
    %v6874 = vrsqrt.pop %v6861
    %v6875 = vmul.f32 %v6874, %v6861
    %v6876 = vmul.f32 %v6875, %v6874
    %v6877 = vmul.f32 0.5, %v6876
    %v6878 = vsub.f32 1.5, %v6877
    %v6879 = vmul.f32 %v6874, %v6878
    %vm6880 = vweird.f32 %v6861
    %vm6881 = vweird.f32 %v6874
    %vm6882 = vmor %vm6880, %vm6881
    %v6883 = vsel %vm6882, %v6874, %v6879
    %v6884 = vrsqrt.pop %v6862
    %v6885 = vmul.f32 %v6884, %v6862
    %v6886 = vmul.f32 %v6885, %v6884
    %v6887 = vmul.f32 0.5, %v6886
    %v6888 = vsub.f32 1.5, %v6887
    %v6889 = vmul.f32 %v6884, %v6888
    %vm6890 = vweird.f32 %v6862
    %vm6891 = vweird.f32 %v6884
    %vm6892 = vmor %vm6890, %vm6891
    %v6893 = vsel %vm6892, %v6884, %v6889
    %v6894 = vrsqrt.pop %v6863
    %v6895 = vmul.f32 %v6894, %v6863
    %v6896 = vmul.f32 %v6895, %v6894
    %v6897 = vmul.f32 0.5, %v6896
    %v6898 = vsub.f32 1.5, %v6897
    %v6899 = vmul.f32 %v6894, %v6898
    %vm6900 = vweird.f32 %v6863
    %vm6901 = vweird.f32 %v6894
    %vm6902 = vmor %vm6900, %vm6901
    %v6903 = vsel %vm6902, %v6894, %v6899
    %6905 = vset.pattern.permute.xlu0 0
    %6906 = vperm.xlu0 %6905, %v6873
    %v6907 = vpop.permute.xlu0 %6906
    %6910 = vset.pattern.permute.xlu0 0
    %6911 = vperm.xlu0 %6910, %v6883
    %v6912 = vpop.permute.xlu0 %6911
    %6915 = vset.pattern.permute.xlu0 0
    %6916 = vperm.xlu0 %6915, %v6893
    %v6917 = vpop.permute.xlu0 %6916
    %6920 = vset.pattern.permute.xlu0 0
    %6921 = vperm.xlu0 %6920, %v6903
    %v6922 = vpop.permute.xlu0 %6921
    %v6924 = vmul.f32 %v6856, %v6907
    %v6925 = vmul.f32 %v6857, %v6912
    %v6926 = vmul.f32 %v6858, %v6917
    %v6927 = vmul.f32 %v6859, %v6922
    %v6928 = vperm.slane %v6173, 0
    %v6929 = vmul.f32 %v6924, %v6928
    %v6930 = vmul.f32 %v6925, %v6928
    %v6931 = vmul.f32 %v6926, %v6928
    %v6932 = vmul.f32 %v6927, %v6928
    %v6933 = vperm.slane %v6174, 0
    %v6934 = vadd.f32 %v6929, %v6933
    %v6935 = vadd.f32 %v6930, %v6933
    %v6936 = vadd.f32 %v6931, %v6933
    %v6937 = vadd.f32 %v6932, %v6933
    %v6938 = vld [vmem:[%s3 + $0x38] sm:$0xff]
    %v6939 = vld [vmem:[%s3 + $0x80] sm:$0xff]
    %v6940 = vld [vmem:[%s3 + $0xc8] sm:$0xff]
    %v6941 = vld [vmem:[%s3 + $0x110] sm:$0xff]
    %v6942 = vld [vmem:[%s6 + $0x19] sm:$0x1]
    %v6943 = vld [vmem:[%s6 + $0x1a] sm:$0x1]
    %v6944 = vld [vmem:[%s6 + $0x1b] sm:$0x1]
    %v6945 = vld [vmem:[%s6 + $0x1c] sm:$0x1]
    %v6946 = vperm.slane %v6942, 0
    %v6948 = vsel %vm132, %v6934, 0
    %v6951 = vsel %vm132, %v6935, 0
    %v6954 = vsel %vm132, %v6936, 0
    %v6957 = vsel %vm132, %v6937, 0
    %6959 = vmatpush.msra.mxu0 0.0
    %6960 = vmatpush.msra.mxu0 0.0
    %6961 = vmatpush.msra.mxu0 0.0
    %6962 = vmatpush.msra.mxu0 0.0
    %6963 = vmatpush.msra.mxu0 0.0
    %6964 = vmatpush.msra.mxu0 0.0
    %6965 = vmatpush.msra.mxu0 0.0
    %6966 = vmatpush.msra.mxu0 0.0
    %6967 = vmatpush.msra.mxu0 0.0
    %6968 = vmatpush.msra.mxu0 0.0
    %6969 = vmatpush.msra.mxu0 0.0
    %6970 = vmatpush.msra.mxu0 0.0
    %6971 = vmatpush.msra.mxu0 %v6941
    %6972 = vmatpush.msra.mxu0 %v6940
    %6973 = vmatpush.msra.mxu0 %v6939
    %6974 = vmatpush.msra.mxu0 %v6938
    %6975 = vmatmul.f32.gmra.mxu0 %v6948
    %v6976 = vpop.f32.mrf.mxu0
    %v6977 = vadd.f32 %v6946, %v6976
    %6978 = vmatmul.f32.gmra.mxu0 %v6951
    %v6979 = vpop.f32.mrf.mxu0
    %v6980 = vadd.f32 %v6946, %v6979
    %6981 = vmatmul.f32.gmra.mxu0 %v6954
    %v6982 = vpop.f32.mrf.mxu0
    %v6983 = vadd.f32 %v6946, %v6982
    %6984 = vmatmul.f32.gmra.mxu0 %v6957
    %v6985 = vpop.f32.mrf.mxu0
    %v6986 = vadd.f32 %v6946, %v6985
    %6987 = vdwg.mxu0
    %v6988 = vmax.f32 %v6977, 0.0
    %v6989 = vmax.f32 %v6980, 0.0
    %v6990 = vmax.f32 %v6983, 0.0
    %v6991 = vmax.f32 %v6986, 0.0
    %v6992 = vperm.slane %v6943, 0
    %6993 = vrot.lane.b32.xlu0 %v4947, 32
    %v6994 = vpop.permute.xlu0 %6993
    %6995 = vrot.lane.b32.xlu0 %v4948, 32
    %v6996 = vpop.permute.xlu0 %6995
    %6997 = vrot.lane.b32.xlu0 %v4949, 32
    %v6998 = vpop.permute.xlu0 %6997
    %6999 = vrot.lane.b32.xlu0 %v4950, 32
    %v7000 = vpop.permute.xlu0 %6999
    %7001 = vrot.lane.b32.xlu0 %v4951, 32
    %v7002 = vpop.permute.xlu0 %7001
    %7003 = vrot.lane.b32.xlu0 %v4952, 32
    %v7004 = vpop.permute.xlu0 %7003
    %7005 = vrot.lane.b32.xlu0 %v4953, 32
    %v7006 = vpop.permute.xlu0 %7005
    %7007 = vrot.lane.b32.xlu0 %v4954, 32
    %v7008 = vpop.permute.xlu0 %7007
    %v7018 = vsel %vm1578, %v6988, 0
    %v7021 = vsel %vm1578, %v6989, 0
    %v7024 = vsel %vm1578, %v6990, 0
    %v7027 = vsel %vm1578, %v6991, 0
    %7029 = vmatpush.msra.mxu0 0.0
    %7030 = vmatpush.msra.mxu0 0.0
    %7031 = vmatpush.msra.mxu0 0.0
    %7032 = vmatpush.msra.mxu0 0.0
    %7033 = vmatpush.msra.mxu0 0.0
    %7034 = vmatpush.msra.mxu0 0.0
    %7035 = vmatpush.msra.mxu0 0.0
    %7036 = vmatpush.msra.mxu0 0.0
    %7037 = vmatpush.msra.mxu0 %v7008
    %7038 = vmatpush.msra.mxu0 %v7006
    %7039 = vmatpush.msra.mxu0 %v7004
    %7040 = vmatpush.msra.mxu0 %v7002
    %7041 = vmatpush.msra.mxu0 %v7000
    %7042 = vmatpush.msra.mxu0 %v6998
    %7043 = vmatpush.msra.mxu0 %v6996
    %7044 = vmatpush.msra.mxu0 %v6994
    %7045 = vmatmul.f32.gmra.mxu0 %v7018
    %v7046 = vpop.f32.mrf.mxu0
    %v7047 = vadd.f32 %v6992, %v7046
    %7048 = vmatmul.f32.gmra.mxu0 %v7021
    %v7049 = vpop.f32.mrf.mxu0
    %v7050 = vadd.f32 %v6992, %v7049
    %7051 = vmatmul.f32.gmra.mxu0 %v7024
    %v7052 = vpop.f32.mrf.mxu0
    %v7053 = vadd.f32 %v6992, %v7052
    %7054 = vmatmul.f32.gmra.mxu0 %v7027
    %v7055 = vpop.f32.mrf.mxu0
    %v7056 = vadd.f32 %v6992, %v7055
    %7057 = vdwg.mxu0
    %v7058 = vadd.f32 %v7047, %v6934
    %v7059 = vadd.f32 %v7050, %v6935
    %v7060 = vadd.f32 %v7053, %v6936
    %v7061 = vadd.f32 %v7056, %v6937
    %v7063 = vsel %vm132, %v7058, 0
    %v7066 = vsel %vm132, %v7059, 0
    %v7069 = vsel %vm132, %v7060, 0
    %v7072 = vsel %vm132, %v7061, 0
    %7074 = vmatpush.msra.mxu0 0.0
    %7075 = vmatpush.msra.mxu0 0.0
    %7076 = vmatpush.msra.mxu0 0.0
    %7077 = vmatpush.msra.mxu0 0.0
    %7078 = vmatpush.msra.mxu0 0.0
    %7079 = vmatpush.msra.mxu0 0.0
    %7080 = vmatpush.msra.mxu0 0.0
    %7081 = vmatpush.msra.mxu0 0.0
    %7082 = vmatpush.msra.mxu0 0.0
    %7083 = vmatpush.msra.mxu0 0.0
    %7084 = vmatpush.msra.mxu0 0.0
    %7085 = vmatpush.msra.mxu0 0.0
    %7086 = vmatpush.msra.mxu0 0.03125
    %7087 = vmatpush.msra.mxu0 0.03125
    %7088 = vmatpush.msra.mxu0 0.03125
    %7089 = vmatpush.msra.mxu0 0.03125
    %7090 = vmatmul.f32.gmra.mxu0 %v7063
    %v7091 = vpop.f32.mrf.mxu0
    %v7092 = vadd.f32 0.0, %v7091
    %7093 = vmatmul.f32.gmra.mxu0 %v7066
    %v7094 = vpop.f32.mrf.mxu0
    %v7095 = vadd.f32 0.0, %v7094
    %7096 = vmatmul.f32.gmra.mxu0 %v7069
    %v7097 = vpop.f32.mrf.mxu0
    %v7098 = vadd.f32 0.0, %v7097
    %7099 = vmatmul.f32.gmra.mxu0 %v7072
    %v7100 = vpop.f32.mrf.mxu0
    %v7101 = vadd.f32 0.0, %v7100
    %7102 = vdwg.mxu0
    %v7103 = vmul.f32 %v7058, %v7058
    %v7104 = vmul.f32 %v7059, %v7059
    %v7105 = vmul.f32 %v7060, %v7060
    %v7106 = vmul.f32 %v7061, %v7061
    %v7108 = vsel %vm132, %v7103, 0
    %v7111 = vsel %vm132, %v7104, 0
    %v7114 = vsel %vm132, %v7105, 0
    %v7117 = vsel %vm132, %v7106, 0
    %7119 = vmatpush.msra.mxu0 0.0
    %7120 = vmatpush.msra.mxu0 0.0
    %7121 = vmatpush.msra.mxu0 0.0
    %7122 = vmatpush.msra.mxu0 0.0
    %7123 = vmatpush.msra.mxu0 0.0
    %7124 = vmatpush.msra.mxu0 0.0
    %7125 = vmatpush.msra.mxu0 0.0
    %7126 = vmatpush.msra.mxu0 0.0
    %7127 = vmatpush.msra.mxu0 0.0
    %7128 = vmatpush.msra.mxu0 0.0
    %7129 = vmatpush.msra.mxu0 0.0
    %7130 = vmatpush.msra.mxu0 0.0
    %7131 = vmatpush.msra.mxu0 0.03125
    %7132 = vmatpush.msra.mxu0 0.03125
    %7133 = vmatpush.msra.mxu0 0.03125
    %7134 = vmatpush.msra.mxu0 0.03125
    %7135 = vmatmul.f32.gmra.mxu0 %v7108
    %v7136 = vpop.f32.mrf.mxu0
    %v7137 = vadd.f32 0.0, %v7136
    %7138 = vmatmul.f32.gmra.mxu0 %v7111
    %v7139 = vpop.f32.mrf.mxu0
    %v7140 = vadd.f32 0.0, %v7139
    %7141 = vmatmul.f32.gmra.mxu0 %v7114
    %v7142 = vpop.f32.mrf.mxu0
    %v7143 = vadd.f32 0.0, %v7142
    %7144 = vmatmul.f32.gmra.mxu0 %v7117
    %v7145 = vpop.f32.mrf.mxu0
    %v7146 = vadd.f32 0.0, %v7145
    %7147 = vdwg.mxu0
    %v7148 = vmul.f32 %v7092, %v7092
    %v7149 = vmul.f32 %v7095, %v7095
    %v7150 = vmul.f32 %v7098, %v7098
    %v7151 = vmul.f32 %v7101, %v7101
    %v7152 = vsub.f32 %v7137, %v7148
    %v7153 = vsub.f32 %v7140, %v7149
    %v7154 = vsub.f32 %v7143, %v7150
    %v7155 = vsub.f32 %v7146, %v7151
    %v7156 = vmax.f32 %v7152, 0.0
    %v7157 = vmax.f32 %v7153, 0.0
    %v7158 = vmax.f32 %v7154, 0.0
    %v7159 = vmax.f32 %v7155, 0.0
    %7161 = vset.pattern.permute.xlu0 0
    %7162 = vperm.xlu0 %7161, %v7092
    %v7163 = vpop.permute.xlu0 %7162
    %7166 = vset.pattern.permute.xlu0 0
    %7167 = vperm.xlu0 %7166, %v7095
    %v7168 = vpop.permute.xlu0 %7167
    %7171 = vset.pattern.permute.xlu0 0
    %7172 = vperm.xlu0 %7171, %v7098
    %v7173 = vpop.permute.xlu0 %7172
    %7176 = vset.pattern.permute.xlu0 0
    %7177 = vperm.xlu0 %7176, %v7101
    %v7178 = vpop.permute.xlu0 %7177
    %v7180 = vsub.f32 %v7058, %v7163
    %v7181 = vsub.f32 %v7059, %v7168
    %v7182 = vsub.f32 %v7060, %v7173
    %v7183 = vsub.f32 %v7061, %v7178
    %v7184 = vadd.f32 %v7156, 1e-06
    %v7185 = vadd.f32 %v7157, 1e-06
    %v7186 = vadd.f32 %v7158, 1e-06
    %v7187 = vadd.f32 %v7159, 1e-06
    %v7188 = vrsqrt.pop %v7184
    %v7189 = vmul.f32 %v7188, %v7184
    %v7190 = vmul.f32 %v7189, %v7188
    %v7191 = vmul.f32 0.5, %v7190
    %v7192 = vsub.f32 1.5, %v7191
    %v7193 = vmul.f32 %v7188, %v7192
    %vm7194 = vweird.f32 %v7184
    %vm7195 = vweird.f32 %v7188
    %vm7196 = vmor %vm7194, %vm7195
    %v7197 = vsel %vm7196, %v7188, %v7193
    %v7198 = vrsqrt.pop %v7185
    %v7199 = vmul.f32 %v7198, %v7185
    %v7200 = vmul.f32 %v7199, %v7198
    %v7201 = vmul.f32 0.5, %v7200
    %v7202 = vsub.f32 1.5, %v7201
    %v7203 = vmul.f32 %v7198, %v7202
    %vm7204 = vweird.f32 %v7185
    %vm7205 = vweird.f32 %v7198
    %vm7206 = vmor %vm7204, %vm7205
    %v7207 = vsel %vm7206, %v7198, %v7203
    %v7208 = vrsqrt.pop %v7186
    %v7209 = vmul.f32 %v7208, %v7186
    %v7210 = vmul.f32 %v7209, %v7208
    %v7211 = vmul.f32 0.5, %v7210
    %v7212 = vsub.f32 1.5, %v7211
    %v7213 = vmul.f32 %v7208, %v7212
    %vm7214 = vweird.f32 %v7186
    %vm7215 = vweird.f32 %v7208
    %vm7216 = vmor %vm7214, %vm7215
    %v7217 = vsel %vm7216, %v7208, %v7213
    %v7218 = vrsqrt.pop %v7187
    %v7219 = vmul.f32 %v7218, %v7187
    %v7220 = vmul.f32 %v7219, %v7218
    %v7221 = vmul.f32 0.5, %v7220
    %v7222 = vsub.f32 1.5, %v7221
    %v7223 = vmul.f32 %v7218, %v7222
    %vm7224 = vweird.f32 %v7187
    %vm7225 = vweird.f32 %v7218
    %vm7226 = vmor %vm7224, %vm7225
    %v7227 = vsel %vm7226, %v7218, %v7223
    %7229 = vset.pattern.permute.xlu0 0
    %7230 = vperm.xlu0 %7229, %v7197
    %v7231 = vpop.permute.xlu0 %7230
    %7234 = vset.pattern.permute.xlu0 0
    %7235 = vperm.xlu0 %7234, %v7207
    %v7236 = vpop.permute.xlu0 %7235
    %7239 = vset.pattern.permute.xlu0 0
    %7240 = vperm.xlu0 %7239, %v7217
    %v7241 = vpop.permute.xlu0 %7240
    %7244 = vset.pattern.permute.xlu0 0
    %7245 = vperm.xlu0 %7244, %v7227
    %v7246 = vpop.permute.xlu0 %7245
    %v7248 = vmul.f32 %v7180, %v7231
    %v7249 = vmul.f32 %v7181, %v7236
    %v7250 = vmul.f32 %v7182, %v7241
    %v7251 = vmul.f32 %v7183, %v7246
    %v7252 = vperm.slane %v6944, 0
    %v7253 = vmul.f32 %v7248, %v7252
    %v7254 = vmul.f32 %v7249, %v7252
    %v7255 = vmul.f32 %v7250, %v7252
    %v7256 = vmul.f32 %v7251, %v7252
    %v7257 = vperm.slane %v6945, 0
    %v7258 = vadd.f32 %v7253, %v7257
    %v7259 = vadd.f32 %v7254, %v7257
    %v7260 = vadd.f32 %v7255, %v7257
    %v7261 = vadd.f32 %v7256, %v7257
    %v7262 = vld [vmem:[%s5] sm:$0xff]
    %v7263 = vld [vmem:[%s5 + $0x8] sm:$0xff]
    %v7264 = vld [vmem:[%s5 + $0x10] sm:$0xff]
    %v7265 = vld [vmem:[%s5 + $0x18] sm:$0xff]
    %v7266 = vld [vmem:[%s5 + $0x20] sm:$0xff]
    %v7267 = vld [vmem:[%s5 + $0x28] sm:$0xff]
    %v7268 = vld [vmem:[%s5 + $0x30] sm:$0xff]
    %v7269 = vld [vmem:[%s5 + $0x38] sm:$0xff]
    %v7270 = vld [vmem:[%s5 + $0x40] sm:$0xff]
    %v7271 = vld [vmem:[%s5 + $0x48] sm:$0xff]
    %v7272 = vld [vmem:[%s5 + $0x50] sm:$0xff]
    %v7273 = vld [vmem:[%s5 + $0x58] sm:$0xff]
    %v7274 = vld [vmem:[%s5 + $0x60] sm:$0xff]
    %v7275 = vld [vmem:[%s5 + $0x68] sm:$0xff]
    %v7276 = vld [vmem:[%s5 + $0x70] sm:$0xff]
    %v7277 = vld [vmem:[%s5 + $0x78] sm:$0xff]
    %v7278 = vld [vmem:[%s5 + $0x80] sm:$0xff]
    %v7279 = vld [vmem:[%s5 + $0x88] sm:$0xff]
    %v7280 = vld [vmem:[%s5 + $0x90] sm:$0xff]
    %v7281 = vld [vmem:[%s5 + $0x98] sm:$0xff]
    %v7282 = vld [vmem:[%s5 + $0xa0] sm:$0xff]
    %v7283 = vld [vmem:[%s5 + $0xa8] sm:$0xff]
    %v7284 = vld [vmem:[%s5 + $0xb0] sm:$0xff]
    %v7285 = vld [vmem:[%s5 + $0xb8] sm:$0xff]
    %v7286 = vld [vmem:[%s5 + $0xc0] sm:$0xff]
    %v7287 = vld [vmem:[%s5 + $0xc8] sm:$0xff]
    %v7288 = vld [vmem:[%s5 + $0xd0] sm:$0xff]
    %v7289 = vld [vmem:[%s5 + $0xd8] sm:$0xff]
    %v7290 = vld [vmem:[%s5 + $0xe0] sm:$0xff]
    %v7291 = vld [vmem:[%s5 + $0xe8] sm:$0xff]
    %v7292 = vld [vmem:[%s5 + $0xf0] sm:$0xff]
    %v7293 = vld [vmem:[%s5 + $0xf8] sm:$0xff]
    %v7294 = vld [vmem:[%s5 + $0x100] sm:$0xff]
    %v7295 = vld [vmem:[%s5 + $0x108] sm:$0xff]
    %v7296 = vld [vmem:[%s5 + $0x110] sm:$0xff]
    %v7297 = vld [vmem:[%s5 + $0x118] sm:$0xff]
    %v7299 = vrot.slane %v7260, 7
    %vm7301 = vcmask 1040384
    %v7302 = vsel %vm7301, %v7258, %v7299
    %v7304 = vrot.slane %v7258, 1
    %v7306 = vsel %vm7301, %v7304, %v7260
    %7311 = vrot.lane.b32.xlu0 %v7266, 96
    %v7312 = vpop.permute.xlu0 %7311
    %7313 = vrot.lane.b32.xlu0 %v7267, 96
    %v7314 = vpop.permute.xlu0 %7313
    %7315 = vrot.lane.b32.xlu0 %v7268, 96
    %v7316 = vpop.permute.xlu0 %7315
    %7317 = vrot.lane.b32.xlu0 %v7269, 96
    %v7318 = vpop.permute.xlu0 %7317
    %v7324 = vsel %vm132, %v7306, 0
    %7326 = vmatpush.msra.mxu0 0.0
    %7327 = vmatpush.msra.mxu0 0.0
    %7328 = vmatpush.msra.mxu0 0.0
    %7329 = vmatpush.msra.mxu0 0.0
    %7330 = vmatpush.msra.mxu0 0.0
    %7331 = vmatpush.msra.mxu0 0.0
    %7332 = vmatpush.msra.mxu0 0.0
    %7333 = vmatpush.msra.mxu0 0.0
    %7334 = vmatpush.msra.mxu0 0.0
    %7335 = vmatpush.msra.mxu0 0.0
    %7336 = vmatpush.msra.mxu0 0.0
    %7337 = vmatpush.msra.mxu0 0.0
    %7338 = vmatpush.msra.mxu0 %v7318
    %7339 = vmatpush.msra.mxu0 %v7316
    %7340 = vmatpush.msra.mxu0 %v7314
    %7341 = vmatpush.msra.mxu0 %v7312
    %7342 = vmatmul.f32.gmra.mxu0 %v7324
    %v7343 = vpop.f32.mrf.mxu0
    %v7344 = vadd.f32 0.0, %v7343
    %7345 = vdwg.mxu0
    %7350 = vrot.lane.b32.xlu0 %v7262, 96
    %v7351 = vpop.permute.xlu0 %7350
    %7352 = vrot.lane.b32.xlu0 %v7263, 96
    %v7353 = vpop.permute.xlu0 %7352
    %7354 = vrot.lane.b32.xlu0 %v7264, 96
    %v7355 = vpop.permute.xlu0 %7354
    %7356 = vrot.lane.b32.xlu0 %v7265, 96
    %v7357 = vpop.permute.xlu0 %7356
    %v7363 = vsel %vm132, %v7302, 0
    %7365 = vmatpush.msra.mxu0 0.0
    %7366 = vmatpush.msra.mxu0 0.0
    %7367 = vmatpush.msra.mxu0 0.0
    %7368 = vmatpush.msra.mxu0 0.0
    %7369 = vmatpush.msra.mxu0 0.0
    %7370 = vmatpush.msra.mxu0 0.0
    %7371 = vmatpush.msra.mxu0 0.0
    %7372 = vmatpush.msra.mxu0 0.0
    %7373 = vmatpush.msra.mxu0 0.0
    %7374 = vmatpush.msra.mxu0 0.0
    %7375 = vmatpush.msra.mxu0 0.0
    %7376 = vmatpush.msra.mxu0 0.0
    %7377 = vmatpush.msra.mxu0 %v7357
    %7378 = vmatpush.msra.mxu0 %v7355
    %7379 = vmatpush.msra.mxu0 %v7353
    %7380 = vmatpush.msra.mxu0 %v7351
    %7381 = vmatmul.f32.gmra.mxu0 %v7363
    %v7382 = vpop.f32.mrf.mxu0
    %v7383 = vadd.f32 %v7344, %v7382
    %7384 = vdwg.mxu0
    %v7385 = vrot.slane %v7258, 2
    %v7387 = vrot.slane %v7260, 1
    %v7389 = vsel %vm7301, %v7385, %v7387
    %7394 = vrot.lane.b32.xlu0 %v7270, 96
    %v7395 = vpop.permute.xlu0 %7394
    %7396 = vrot.lane.b32.xlu0 %v7271, 96
    %v7397 = vpop.permute.xlu0 %7396
    %7398 = vrot.lane.b32.xlu0 %v7272, 96
    %v7399 = vpop.permute.xlu0 %7398
    %7400 = vrot.lane.b32.xlu0 %v7273, 96
    %v7401 = vpop.permute.xlu0 %7400
    %v7407 = vsel %vm132, %v7389, 0
    %7409 = vmatpush.msra.mxu0 0.0
    %7410 = vmatpush.msra.mxu0 0.0
    %7411 = vmatpush.msra.mxu0 0.0
    %7412 = vmatpush.msra.mxu0 0.0
    %7413 = vmatpush.msra.mxu0 0.0
    %7414 = vmatpush.msra.mxu0 0.0
    %7415 = vmatpush.msra.mxu0 0.0
    %7416 = vmatpush.msra.mxu0 0.0
    %7417 = vmatpush.msra.mxu0 0.0
    %7418 = vmatpush.msra.mxu0 0.0
    %7419 = vmatpush.msra.mxu0 0.0
    %7420 = vmatpush.msra.mxu0 0.0
    %7421 = vmatpush.msra.mxu0 %v7401
    %7422 = vmatpush.msra.mxu0 %v7399
    %7423 = vmatpush.msra.mxu0 %v7397
    %7424 = vmatpush.msra.mxu0 %v7395
    %7425 = vmatmul.f32.gmra.mxu0 %v7407
    %v7426 = vpop.f32.mrf.mxu0
    %v7427 = vadd.f32 0.0, %v7426
    %7428 = vdwg.mxu0
    %v7429 = vadd.f32 %v7383, %v7427
    %v7430 = vrot.slane %v7258, 3
    %v7432 = vrot.slane %v7260, 2
    %v7434 = vsel %vm7301, %v7430, %v7432
    %7439 = vrot.lane.b32.xlu0 %v7274, 96
    %v7440 = vpop.permute.xlu0 %7439
    %7441 = vrot.lane.b32.xlu0 %v7275, 96
    %v7442 = vpop.permute.xlu0 %7441
    %7443 = vrot.lane.b32.xlu0 %v7276, 96
    %v7444 = vpop.permute.xlu0 %7443
    %7445 = vrot.lane.b32.xlu0 %v7277, 96
    %v7446 = vpop.permute.xlu0 %7445
    %v7452 = vsel %vm132, %v7434, 0
    %7454 = vmatpush.msra.mxu0 0.0
    %7455 = vmatpush.msra.mxu0 0.0
    %7456 = vmatpush.msra.mxu0 0.0
    %7457 = vmatpush.msra.mxu0 0.0
    %7458 = vmatpush.msra.mxu0 0.0
    %7459 = vmatpush.msra.mxu0 0.0
    %7460 = vmatpush.msra.mxu0 0.0
    %7461 = vmatpush.msra.mxu0 0.0
    %7462 = vmatpush.msra.mxu0 0.0
    %7463 = vmatpush.msra.mxu0 0.0
    %7464 = vmatpush.msra.mxu0 0.0
    %7465 = vmatpush.msra.mxu0 0.0
    %7466 = vmatpush.msra.mxu0 %v7446
    %7467 = vmatpush.msra.mxu0 %v7444
    %7468 = vmatpush.msra.mxu0 %v7442
    %7469 = vmatpush.msra.mxu0 %v7440
    %7470 = vmatmul.f32.gmra.mxu0 %v7452
    %v7471 = vpop.f32.mrf.mxu0
    %v7472 = vadd.f32 0.0, %v7471
    %7473 = vdwg.mxu0
    %v7474 = vadd.f32 %v7429, %v7472
    %v7475 = vrot.slane %v7258, 4
    %v7477 = vrot.slane %v7260, 3
    %v7479 = vsel %vm7301, %v7475, %v7477
    %7484 = vrot.lane.b32.xlu0 %v7278, 96
    %v7485 = vpop.permute.xlu0 %7484
    %7486 = vrot.lane.b32.xlu0 %v7279, 96
    %v7487 = vpop.permute.xlu0 %7486
    %7488 = vrot.lane.b32.xlu0 %v7280, 96
    %v7489 = vpop.permute.xlu0 %7488
    %7490 = vrot.lane.b32.xlu0 %v7281, 96
    %v7491 = vpop.permute.xlu0 %7490
    %v7497 = vsel %vm132, %v7479, 0
    %7499 = vmatpush.msra.mxu0 0.0
    %7500 = vmatpush.msra.mxu0 0.0
    %7501 = vmatpush.msra.mxu0 0.0
    %7502 = vmatpush.msra.mxu0 0.0
    %7503 = vmatpush.msra.mxu0 0.0
    %7504 = vmatpush.msra.mxu0 0.0
    %7505 = vmatpush.msra.mxu0 0.0
    %7506 = vmatpush.msra.mxu0 0.0
    %7507 = vmatpush.msra.mxu0 0.0
    %7508 = vmatpush.msra.mxu0 0.0
    %7509 = vmatpush.msra.mxu0 0.0
    %7510 = vmatpush.msra.mxu0 0.0
    %7511 = vmatpush.msra.mxu0 %v7491
    %7512 = vmatpush.msra.mxu0 %v7489
    %7513 = vmatpush.msra.mxu0 %v7487
    %7514 = vmatpush.msra.mxu0 %v7485
    %7515 = vmatmul.f32.gmra.mxu0 %v7497
    %v7516 = vpop.f32.mrf.mxu0
    %v7517 = vadd.f32 0.0, %v7516
    %7518 = vdwg.mxu0
    %v7519 = vadd.f32 %v7474, %v7517
    %v7520 = vrot.slane %v7258, 5
    %v7522 = vrot.slane %v7260, 4
    %v7524 = vsel %vm7301, %v7520, %v7522
    %7529 = vrot.lane.b32.xlu0 %v7282, 96
    %v7530 = vpop.permute.xlu0 %7529
    %7531 = vrot.lane.b32.xlu0 %v7283, 96
    %v7532 = vpop.permute.xlu0 %7531
    %7533 = vrot.lane.b32.xlu0 %v7284, 96
    %v7534 = vpop.permute.xlu0 %7533
    %7535 = vrot.lane.b32.xlu0 %v7285, 96
    %v7536 = vpop.permute.xlu0 %7535
    %v7542 = vsel %vm132, %v7524, 0
    %7544 = vmatpush.msra.mxu0 0.0
    %7545 = vmatpush.msra.mxu0 0.0
    %7546 = vmatpush.msra.mxu0 0.0
    %7547 = vmatpush.msra.mxu0 0.0
    %7548 = vmatpush.msra.mxu0 0.0
    %7549 = vmatpush.msra.mxu0 0.0
    %7550 = vmatpush.msra.mxu0 0.0
    %7551 = vmatpush.msra.mxu0 0.0
    %7552 = vmatpush.msra.mxu0 0.0
    %7553 = vmatpush.msra.mxu0 0.0
    %7554 = vmatpush.msra.mxu0 0.0
    %7555 = vmatpush.msra.mxu0 0.0
    %7556 = vmatpush.msra.mxu0 %v7536
    %7557 = vmatpush.msra.mxu0 %v7534
    %7558 = vmatpush.msra.mxu0 %v7532
    %7559 = vmatpush.msra.mxu0 %v7530
    %7560 = vmatmul.f32.gmra.mxu0 %v7542
    %v7561 = vpop.f32.mrf.mxu0
    %v7562 = vadd.f32 0.0, %v7561
    %7563 = vdwg.mxu0
    %v7564 = vadd.f32 %v7519, %v7562
    %v7565 = vrot.slane %v7258, 6
    %v7567 = vrot.slane %v7260, 5
    %v7569 = vsel %vm7301, %v7565, %v7567
    %7574 = vrot.lane.b32.xlu0 %v7286, 96
    %v7575 = vpop.permute.xlu0 %7574
    %7576 = vrot.lane.b32.xlu0 %v7287, 96
    %v7577 = vpop.permute.xlu0 %7576
    %7578 = vrot.lane.b32.xlu0 %v7288, 96
    %v7579 = vpop.permute.xlu0 %7578
    %7580 = vrot.lane.b32.xlu0 %v7289, 96
    %v7581 = vpop.permute.xlu0 %7580
    %v7587 = vsel %vm132, %v7569, 0
    %7589 = vmatpush.msra.mxu0 0.0
    %7590 = vmatpush.msra.mxu0 0.0
    %7591 = vmatpush.msra.mxu0 0.0
    %7592 = vmatpush.msra.mxu0 0.0
    %7593 = vmatpush.msra.mxu0 0.0
    %7594 = vmatpush.msra.mxu0 0.0
    %7595 = vmatpush.msra.mxu0 0.0
    %7596 = vmatpush.msra.mxu0 0.0
    %7597 = vmatpush.msra.mxu0 0.0
    %7598 = vmatpush.msra.mxu0 0.0
    %7599 = vmatpush.msra.mxu0 0.0
    %7600 = vmatpush.msra.mxu0 0.0
    %7601 = vmatpush.msra.mxu0 %v7581
    %7602 = vmatpush.msra.mxu0 %v7579
    %7603 = vmatpush.msra.mxu0 %v7577
    %7604 = vmatpush.msra.mxu0 %v7575
    %7605 = vmatmul.f32.gmra.mxu0 %v7587
    %v7606 = vpop.f32.mrf.mxu0
    %v7607 = vadd.f32 0.0, %v7606
    %7608 = vdwg.mxu0
    %v7609 = vadd.f32 %v7564, %v7607
    %v7610 = vrot.slane %v7258, 7
    %v7612 = vrot.slane %v7260, 6
    %v7614 = vsel %vm7301, %v7610, %v7612
    %7619 = vrot.lane.b32.xlu0 %v7290, 96
    %v7620 = vpop.permute.xlu0 %7619
    %7621 = vrot.lane.b32.xlu0 %v7291, 96
    %v7622 = vpop.permute.xlu0 %7621
    %7623 = vrot.lane.b32.xlu0 %v7292, 96
    %v7624 = vpop.permute.xlu0 %7623
    %7625 = vrot.lane.b32.xlu0 %v7293, 96
    %v7626 = vpop.permute.xlu0 %7625
    %v7632 = vsel %vm132, %v7614, 0
    %7634 = vmatpush.msra.mxu0 0.0
    %7635 = vmatpush.msra.mxu0 0.0
    %7636 = vmatpush.msra.mxu0 0.0
    %7637 = vmatpush.msra.mxu0 0.0
    %7638 = vmatpush.msra.mxu0 0.0
    %7639 = vmatpush.msra.mxu0 0.0
    %7640 = vmatpush.msra.mxu0 0.0
    %7641 = vmatpush.msra.mxu0 0.0
    %7642 = vmatpush.msra.mxu0 0.0
    %7643 = vmatpush.msra.mxu0 0.0
    %7644 = vmatpush.msra.mxu0 0.0
    %7645 = vmatpush.msra.mxu0 0.0
    %7646 = vmatpush.msra.mxu0 %v7626
    %7647 = vmatpush.msra.mxu0 %v7624
    %7648 = vmatpush.msra.mxu0 %v7622
    %7649 = vmatpush.msra.mxu0 %v7620
    %7650 = vmatmul.f32.gmra.mxu0 %v7632
    %v7651 = vpop.f32.mrf.mxu0
    %v7652 = vadd.f32 0.0, %v7651
    %7653 = vdwg.mxu0
    %v7654 = vadd.f32 %v7609, %v7652
    %v7656 = vrot.slane %v7261, 7
    %v7658 = vsel %vm7301, %v7259, %v7656
    %7663 = vrot.lane.b32.xlu0 %v7294, 96
    %v7664 = vpop.permute.xlu0 %7663
    %7665 = vrot.lane.b32.xlu0 %v7295, 96
    %v7666 = vpop.permute.xlu0 %7665
    %7667 = vrot.lane.b32.xlu0 %v7296, 96
    %v7668 = vpop.permute.xlu0 %7667
    %7669 = vrot.lane.b32.xlu0 %v7297, 96
    %v7670 = vpop.permute.xlu0 %7669
    %v7676 = vsel %vm132, %v7658, 0
    %7678 = vmatpush.msra.mxu0 0.0
    %7679 = vmatpush.msra.mxu0 0.0
    %7680 = vmatpush.msra.mxu0 0.0
    %7681 = vmatpush.msra.mxu0 0.0
    %7682 = vmatpush.msra.mxu0 0.0
    %7683 = vmatpush.msra.mxu0 0.0
    %7684 = vmatpush.msra.mxu0 0.0
    %7685 = vmatpush.msra.mxu0 0.0
    %7686 = vmatpush.msra.mxu0 0.0
    %7687 = vmatpush.msra.mxu0 0.0
    %7688 = vmatpush.msra.mxu0 0.0
    %7689 = vmatpush.msra.mxu0 0.0
    %7690 = vmatpush.msra.mxu0 %v7670
    %7691 = vmatpush.msra.mxu0 %v7668
    %7692 = vmatpush.msra.mxu0 %v7666
    %7693 = vmatpush.msra.mxu0 %v7664
    %7694 = vmatmul.f32.gmra.mxu0 %v7676
    %v7695 = vpop.f32.mrf.mxu0
    %v7696 = vadd.f32 0.0, %v7695
    %7697 = vdwg.mxu0
    %v7698 = vadd.f32 %v7654, %v7696
    %v7699 = vld [vmem:[%s6 + $0x1d] sm:$0x1]
    %v7700 = vperm.slane %v7699, 0
    %v7701 = vadd.f32 %v7698, %v7700
    %vm7702 = vcmask 123904
    %7703 = vst.msk [vmem:[%s8] sm:$0x3] %vm7702, %v7701
    // Predicated region
    $region34: #{transformer_forward.1} parent=1 // pred_check
      _
    $region35: #{transformer_forward.1} parent=1 // pred_check_branch
      %7705 = sbr.rel (0) target = $region37
    $region36: #{transformer_forward.1} parent=1 // pred_region
      _
    $region37: #{transformer_forward.1} parent=1 // pred_fallthru
      _
    // Predicated region
    $region38: #{transformer_forward.1} parent=1 // pred_check
      _
    $region39: #{transformer_forward.1} parent=1 // pred_check_branch
      %7707 = sbr.rel (0) target = $region41
    $region40: #{transformer_forward.1} parent=1 // pred_region
      %7709 = vsyncadd [#allocation3], 0
      %s7711 = sshll.u32 [#allocation2], 4
      %s7712 = int_to_ptr.vmem [resolvable:$true] %s7711
      %s7713 = sshll.u32 %s9, 4
      %s7714 = int_to_ptr.hbm [resolvable:$true] %s7713
      %7716 = dma.vmem_to_hbm [thread:$0]  %s7712, 16, %s7714, [#allocation3]
    $region41: #{transformer_forward.1} parent=1 // pred_fallthru
      _
    // Predicated region
    $region42: #{transformer_forward.1} parent=1 // pred_check
      _
    $region43: #{transformer_forward.1} parent=1 // pred_check_branch
      %7718 = sbr.rel (0) target = $region45
    $region44: #{transformer_forward.1} parent=1 // pred_region
      _
    $region45: #{transformer_forward.1} parent=1 // pred_fallthru
      _
    // Predicated region
    $region46: #{transformer_forward.1} parent=1 // pred_check
      _
    $region47: #{transformer_forward.1} parent=1 // pred_check_branch
      %7720 = sbr.rel (0) target = $region49
    $region48: #{transformer_forward.1} parent=1 // pred_region
      %7722 = dma.done [#allocation3], 16
    $region49: #{transformer_forward.1} parent=1 // pred_fallthru
      _
    %7723 = vsyncpa [#allocation3], 1

</llo_original>
